<compile_context>
chip_gen: v7x
topology: tpu7x:2x2x1
jax: 0.10.0
libtpu: 0.0.40
codegen_flags: <defaults>
</compile_context>

<pallas_src>
import functools
import inspect

import jax
import jax.numpy as jnp
from jax import lax
from jax.experimental import pallas as pl
from jax.experimental.pallas import tpu as pltpu

F32 = jnp.float32
BF16 = jnp.bfloat16
VMEM_SPEC = pl.BlockSpec(memory_space=pltpu.MemorySpace.VMEM)

_FORI_SUPPORTS_UNROLL = "unroll" in inspect.signature(lax.fori_loop).parameters


def _fori_unrolled(lo, hi, body, init):
    if _FORI_SUPPORTS_UNROLL:
        return lax.fori_loop(lo, hi, body, init, unroll=True)
    return lax.fori_loop(lo, hi, body, init)


# ----------------------------------------------------------------------------
# 1) PreNet: Linear -> ReLU -> Linear -> ReLU (dropout omitted)
# ----------------------------------------------------------------------------
def _prenet_kernel(x_ref, w1_ref, b1_ref, w2_ref, b2_ref, o_ref):
    x = x_ref[...]
    h = jnp.dot(x.astype(BF16), w1_ref[...], preferred_element_type=F32) + b1_ref[...]
    h = jnp.maximum(h, 0.0)
    # TODO(synk): PreNet uses F.dropout(p, training=True) (stochastic); omitted for determinism.
    h = jnp.dot(h.astype(BF16), w2_ref[...], preferred_element_type=F32) + b2_ref[...]
    o_ref[...] = jnp.maximum(h, 0.0)


def prenet(x, p):
    M = x.shape[0]
    C = p['fc1_w'].shape[1]
    return pl.pallas_call(
        _prenet_kernel,
        out_shape=jax.ShapeDtypeStruct((M, C), F32),
        in_specs=[VMEM_SPEC] * 5,
        out_specs=VMEM_SPEC,
    )(x, p['fc1_w'], p['fc1_b'], p['fc2_w'], p['fc2_b'])


# ----------------------------------------------------------------------------
# 2) Conv1d bank (k=1..K) + ReLU + BatchNorm + MaxPool1d(2, stride=1, pad=1)
#    Single kernel, single lane-dense (B, T, K*C) output.
# ----------------------------------------------------------------------------
def _bank_pool_kernel(x_ref, *rest, K, eps):
    # x_ref: (B, T, C); rest = w_1..w_K [(k*C, C) bf16], gamma (1,K*C), beta (1,K*C), o_ref
    w_refs = rest[:K]
    g_ref, beta_ref, o_ref = rest[K], rest[K + 1], rest[K + 2]

    x = x_ref[...]                                   # (B, T, C) f32
    B, T, C = x.shape
    pad_l, pad_r = K // 2, (K - 1) // 2

    parts = []
    if pad_l:
        parts.append(jnp.zeros((B, pad_l, C), F32))
    parts.append(x)
    if pad_r:
        parts.append(jnp.zeros((B, pad_r, C), F32))
    xp = jnp.concatenate(parts, axis=1) if len(parts) > 1 else x   # (B, T+K-1, C)

    outs = []
    for k in range(1, K + 1):                        # static unroll over bank convs
        base = pad_l - k // 2
        taps = [xp[:, base + j: base + j + T, :].reshape(B * T, C) for j in range(k)]
        xk = taps[0] if k == 1 else jnp.concatenate(taps, axis=-1)   # (B*T, k*C)
        outs.append(jnp.dot(xk.astype(BF16), w_refs[k - 1][...],
                            preferred_element_type=F32))             # (B*T, C)

    y = jnp.concatenate(outs, axis=-1)               # (B*T, K*C)
    y = jnp.maximum(y, 0.0)                          # ReLU before BN (BatchNormConv)
    mean = jnp.mean(y, axis=0, keepdims=True)        # BN training-mode batch stats
    var = jnp.mean(jnp.square(y - mean), axis=0, keepdims=True)
    y = (y - mean) * lax.rsqrt(var + eps) * g_ref[...] + beta_ref[...]

    y = y.reshape(B, T, K * C)
    # MaxPool1d(2, stride=1, pad=1) truncated to T: out[t] = max(y[t-1], y[t]); t=0 -> y[0]
    prev = jnp.concatenate([y[:, :1, :], y[:, :T - 1, :]], axis=1)
    o_ref[...] = jnp.maximum(y, prev)


def bank_maxpool(x_btc, p, K, eps=1e-5):
    B, T, C = x_btc.shape
    ws = [p[f'bank_w_{k}'] for k in range(1, K + 1)]
    return pl.pallas_call(
        functools.partial(_bank_pool_kernel, K=K, eps=eps),
        out_shape=jax.ShapeDtypeStruct((B, T, K * C), F32),
        in_specs=[VMEM_SPEC] * (1 + K + 2),
        out_specs=VMEM_SPEC,
    )(x_btc, *ws, p['bank_g'], p['bank_beta'])


# ----------------------------------------------------------------------------
# 3) Conv projections: conv3+ReLU+BN -> conv3+BN -> + residual (fused)
# ----------------------------------------------------------------------------
def _proj_kernel(x_ref, w1_ref, g1_ref, bt1_ref, w2_ref, g2_ref, bt2_ref,
                 res_ref, o_ref, *, eps):
    x = x_ref[...]                                   # (B, T, KC) f32
    B, T, _ = x.shape

    def conv3_bn(inp, w, gamma, beta, relu):
        Bb, Tt, Cin = inp.shape
        z = jnp.zeros((Bb, 1, Cin), F32)
        xp = jnp.concatenate([z, inp, z], axis=1)    # time pad 1/1 (done in VMEM)
        taps = jnp.concatenate(
            [xp[:, j:j + Tt, :].reshape(Bb * Tt, Cin) for j in range(3)], axis=-1)
        y = jnp.dot(taps.astype(BF16), w, preferred_element_type=F32)
        if relu:
            y = jnp.maximum(y, 0.0)
        mean = jnp.mean(y, axis=0, keepdims=True)
        var = jnp.mean(jnp.square(y - mean), axis=0, keepdims=True)
        return (y - mean) * lax.rsqrt(var + eps) * gamma + beta

    C = g1_ref.shape[-1]
    y1 = conv3_bn(x, w1_ref[...], g1_ref[...], bt1_ref[...], relu=True)     # (B*T, C)
    y2 = conv3_bn(y1.reshape(B, T, C), w2_ref[...], g2_ref[...], bt2_ref[...],
                  relu=False)                                               # (B*T, C)
    o_ref[...] = y2 + res_ref[...]


def projections(pooled, p, residual, eps=1e-5):
    B, T, _ = pooled.shape
    C = p['proj1_g'].shape[-1]
    return pl.pallas_call(
        functools.partial(_proj_kernel, eps=eps),
        out_shape=jax.ShapeDtypeStruct((B * T, C), F32),
        in_specs=[VMEM_SPEC] * 8,
        out_specs=VMEM_SPEC,
    )(pooled, p['proj1_w'], p['proj1_g'], p['proj1_beta'],
      p['proj2_w'], p['proj2_g'], p['proj2_beta'], residual)


# ----------------------------------------------------------------------------
# 4) Highway stack (all layers fused in one kernel)
# ----------------------------------------------------------------------------
def _highway_kernel(x_ref, w1_ref, b1_ref, w2_ref, b2_ref, o_ref, *, L):
    x = x_ref[...]
    for i in range(L):                               # static unroll over layers
        xb = x.astype(BF16)
        h = jnp.maximum(
            jnp.dot(xb, w1_ref[i], preferred_element_type=F32) + b1_ref[i], 0.0)
        g = jax.nn.sigmoid(
            jnp.dot(xb, w2_ref[i], preferred_element_type=F32) + b2_ref[i])
        x = g * h + (1.0 - g) * x
    o_ref[...] = x


def highways(x, p, L):
    M, C = x.shape
    return pl.pallas_call(
        functools.partial(_highway_kernel, L=L),
        out_shape=jax.ShapeDtypeStruct((M, C), F32),
        in_specs=[VMEM_SPEC] * 5,
        out_specs=VMEM_SPEC,
    )(x, p['hw_w1'], p['hw_b1'], p['hw_w2'], p['hw_b2'])


# ----------------------------------------------------------------------------
# 5) Bidirectional GRU
#    - input->hidden projection hoisted: one (T*B,C)x(C,6H) matmul for all steps,
#      both directions, all gates (gate order [r, z, n], cols [fwd | bwd]).
#    - recurrent step: one (B,H)x(H,3H) matmul per direction, fwd/bwd interleaved.
# ----------------------------------------------------------------------------
def _bigru_kernel(x_ref, wih_ref, bih_ref, whh_f_ref, bhh_f_ref,
                  whh_b_ref, bhh_b_ref, o_ref, xw_ref, fwd_ref, bwd_ref, *, H):
    T, B, C = x_ref.shape

    # Hoisted input-to-hidden matmul (all timesteps / directions / gates at once).
    xw = jnp.dot(x_ref[...].reshape(T * B, C).astype(BF16), wih_ref[...],
                 preferred_element_type=F32) + bih_ref[...]
    xw_ref[...] = xw.reshape(T, B, 6 * H)

    whh_f = whh_f_ref[...]
    whh_b = whh_b_ref[...]
    bhh_f = bhh_f_ref[...]
    bhh_b = bhh_b_ref[...]

    def gru_step(xg, h, whh, bhh):
        hg = jnp.dot(h.astype(BF16), whh, preferred_element_type=F32) + bhh  # (B, 3H)
        r = jax.nn.sigmoid(xg[:, 0:H] + hg[:, 0:H])
        z = jax.nn.sigmoid(xg[:, H:2 * H] + hg[:, H:2 * H])
        n = jnp.tanh(xg[:, 2 * H:3 * H] + r * hg[:, 2 * H:3 * H])
        return (1.0 - z) * n + z * h

    h0 = jnp.zeros((B, H), F32)

    def body(i, carry):
        hf, hb = carry
        tb = T - 1 - i
        xw_f = xw_ref[i]                              # (B, 6H)
        xw_b = xw_ref[tb]
        hf = gru_step(xw_f[:, 0:3 * H], hf, whh_f, bhh_f)
        hb = gru_step(xw_b[:, 3 * H:6 * H], hb, whh_b, bhh_b)
        fwd_ref[i] = hf
        bwd_ref[tb] = hb
        return hf, hb

    _fori_unrolled(0, T, body, (h0, h0))

    # Single lane-dense store of the concatenated result.
    o_ref[...] = jnp.concatenate([fwd_ref[...], bwd_ref[...]], axis=-1)


def bigru(x_btc, p):
    B, T, C = x_btc.shape
    H = C // 2
    x_tbc = jnp.transpose(x_btc, (1, 0, 2))           # (T, B, C)
    out = pl.pallas_call(
        functools.partial(_bigru_kernel, H=H),
        out_shape=jax.ShapeDtypeStruct((T, B, 2 * H), F32),
        in_specs=[VMEM_SPEC] * 7,
        out_specs=VMEM_SPEC,
        scratch_shapes=[pltpu.VMEM((T, B, 6 * H), F32),
                        pltpu.VMEM((T, B, H), F32),
                        pltpu.VMEM((T, B, H), F32)],
    )(x_tbc, p['gru_wih'], p['gru_bih'], p['gru_whh_f'], p['gru_bhh_f'],
      p['gru_whh_b'], p['gru_bhh_b'])
    return jnp.transpose(out, (1, 0, 2))              # (B, T, 2H)


# ----------------------------------------------------------------------------
# Parameter init (deterministic, synthetic; matmul weights stored bf16)
# ----------------------------------------------------------------------------
def init_params(key, num_chars, embed_dims, encoder_dims, K, num_highways):
    C = encoder_dims
    H = C // 2
    keys = iter(jax.random.split(key, 128))

    def nrm(shape, scale=0.1):
        return (scale * jax.random.normal(next(keys), shape)).astype(F32)

    p = {}
    p['embedding'] = nrm((num_chars, embed_dims), 1.0)
    # PreNet
    p['fc1_w'] = nrm((embed_dims, C)).astype(BF16); p['fc1_b'] = jnp.zeros((1, C), F32)
    p['fc2_w'] = nrm((C, C)).astype(BF16);          p['fc2_b'] = jnp.zeros((1, C), F32)
    # Conv bank (weights pre-reshaped to (k*Cin, Cout), taps concatenated along channels)
    for k in range(1, K + 1):
        p[f'bank_w_{k}'] = nrm((k * C, C)).astype(BF16)
    p['bank_g'] = jnp.ones((1, K * C), F32)
    p['bank_beta'] = jnp.zeros((1, K * C), F32)
    # Conv projections (kernel=3)
    p['proj1_w'] = nrm((3 * K * C, C)).astype(BF16)
    p['proj1_g'] = jnp.ones((1, C), F32); p['proj1_beta'] = jnp.zeros((1, C), F32)
    p['proj2_w'] = nrm((3 * C, C)).astype(BF16)
    p['proj2_g'] = jnp.ones((1, C), F32); p['proj2_beta'] = jnp.zeros((1, C), F32)
    # Highways (stacked)
    p['hw_w1'] = nrm((num_highways, C, C)).astype(BF16)
    p['hw_b1'] = jnp.zeros((num_highways, 1, C), F32)   # W1.bias.fill_(0.)
    p['hw_w2'] = nrm((num_highways, C, C)).astype(BF16)
    p['hw_b2'] = nrm((num_highways, 1, C))
    # BiGRU: gate order [r, z, n]; columns [fwd gates | bwd gates]
    p['gru_wih'] = nrm((C, 6 * H)).astype(BF16)
    p['gru_bih'] = nrm((1, 6 * H))
    p['gru_whh_f'] = nrm((H, 3 * H)).astype(BF16)
    p['gru_whh_b'] = nrm((H, 3 * H)).astype(BF16)
    p['gru_bhh_f'] = nrm((1, 3 * H))
    p['gru_bhh_b'] = nrm((1, 3 * H))
    return p


# ----------------------------------------------------------------------------
# Encoder forward (glue orchestrating the 5 fused Pallas kernels)
# ----------------------------------------------------------------------------
def encoder_forward(params, x_ids, *, K, num_highways):
    B, T = x_ids.shape
    C = params['fc1_w'].shape[1]

    # Embedding lookup (glue gather; tiny table)
    emb = params['embedding'][x_ids]                  # (B, T, E)
    E = emb.shape[-1]

    # PreNet (fused fc1+relu+fc2+relu)
    h = prenet(emb.reshape(B * T, E), params)         # (B*T, C)
    x_btc = h.reshape(B, T, C)                        # (B,T,C); torch's transpose_(1,2) absorbed
    residual = h                                      # CBHG residual = PreNet output

    # Conv bank + ReLU + BN + MaxPool (fused, lane-dense K*C output)
    pooled = bank_maxpool(x_btc, params, K)           # (B, T, K*C)

    # Conv projections + residual (fused)
    proj = projections(pooled, params, residual)      # (B*T, C)

    # Highway stack (fused)
    hw = highways(proj, params, num_highways)         # (B*T, C)

    # Bidirectional GRU (hidden = C//2 per direction, batch_first output)
    return bigru(hw.reshape(B, T, C), params)         # (B, T, C)


# ----------------------------------------------------------------------------
if __name__ == "__main__":
    num_chars, embed_dims, encoder_dims = 16, 32, 32
    K, num_highways, dropout = 4, 2, 0.5
    B, T = 2, 16

    key = jax.random.PRNGKey(0)
    pkey, xkey = jax.random.split(key)
    params = init_params(pkey, num_chars, embed_dims, encoder_dims, K, num_highways)
    x_ids = jax.random.randint(xkey, (B, T), 0, num_chars)

    fwd = jax.jit(functools.partial(encoder_forward, K=K, num_highways=num_highways))
    out = jax.block_until_ready(fwd(params, x_ids))

    assert out.shape == (B, T, encoder_dims), out.shape
    assert bool(jnp.all(jnp.isfinite(out)))
    print("KERNEL_OK")
</pallas_src>

<mosaic_0001>
module attributes {stable_mosaic.version = 11 : i64} {
  func.func @_bank_pool_kernel(%arg0: memref<2x16x32xf32, #tpu.memory_space<vmem>>, %arg1: memref<32x32xbf16, #tpu.memory_space<vmem>>, %arg2: memref<64x32xbf16, #tpu.memory_space<vmem>>, %arg3: memref<96x32xbf16, #tpu.memory_space<vmem>>, %arg4: memref<128x32xbf16, #tpu.memory_space<vmem>>, %arg5: memref<1x128xf32, #tpu.memory_space<vmem>>, %arg6: memref<1x128xf32, #tpu.memory_space<vmem>>, %arg7: memref<2x16x128xf32, #tpu.memory_space<vmem>>) attributes {dimension_semantics = [], scalar_prefetch = 0 : i64, scratch_operands = 0 : i64, tpu.core_type = #tpu.core_type<tc>} {
    %c0 = arith.constant 0 : index
    %c0_0 = arith.constant 0 : index
    %c0_1 = arith.constant 0 : index
    %0 = vector.load %arg0[%c0, %c0_0, %c0_1] : memref<2x16x32xf32, #tpu.memory_space<vmem>>, vector<2x16x32xf32>
    %cst = arith.constant 0.000000e+00 : f32
    %1 = vector.broadcast %cst : f32 to vector<2x2x32xf32>
    %cst_2 = arith.constant 0.000000e+00 : f32
    %2 = vector.broadcast %cst_2 : f32 to vector<2x1x32xf32>
    %3 = tpu.concatenate %1, %0, %2 in 1 : vector<2x2x32xf32>, vector<2x16x32xf32>, vector<2x1x32xf32> -> vector<2x19x32xf32>
    %4 = vector.extract_strided_slice %3 {offsets = [0, 2, 0], sizes = [2, 16, 32], strides = [1, 1, 1]} : vector<2x19x32xf32> to vector<2x16x32xf32>
    %5 = vector.shape_cast %4 : vector<2x16x32xf32> to vector<32x32xf32>
    %6 = arith.truncf %5 : vector<32x32xf32> to vector<32x32xbf16>
    %c0_3 = arith.constant 0 : index
    %c0_4 = arith.constant 0 : index
    %7 = vector.load %arg1[%c0_3, %c0_4] : memref<32x32xbf16, #tpu.memory_space<vmem>>, vector<32x32xbf16>
    %cst_5 = arith.constant dense<0.000000e+00> : vector<32x32xf32>
    %8 = tpu.matmul %6, %7, %cst_5 {dimension_numbers = #tpu.dot_dimension_numbers<[1], [0], [0], [1], [0, 0, 1, 1], [], []>} : vector<32x32xbf16>, vector<32x32xbf16>, vector<32x32xf32> -> vector<32x32xf32>
    %9 = vector.extract_strided_slice %3 {offsets = [0, 1, 0], sizes = [2, 16, 32], strides = [1, 1, 1]} : vector<2x19x32xf32> to vector<2x16x32xf32>
    %10 = vector.shape_cast %9 : vector<2x16x32xf32> to vector<32x32xf32>
    %11 = vector.extract_strided_slice %3 {offsets = [0, 2, 0], sizes = [2, 16, 32], strides = [1, 1, 1]} : vector<2x19x32xf32> to vector<2x16x32xf32>
    %12 = vector.shape_cast %11 : vector<2x16x32xf32> to vector<32x32xf32>
    %13 = tpu.concatenate %10, %12 in 1 : vector<32x32xf32>, vector<32x32xf32> -> vector<32x64xf32>
    %14 = arith.truncf %13 : vector<32x64xf32> to vector<32x64xbf16>
    %c0_6 = arith.constant 0 : index
    %c0_7 = arith.constant 0 : index
    %15 = vector.load %arg2[%c0_6, %c0_7] : memref<64x32xbf16, #tpu.memory_space<vmem>>, vector<64x32xbf16>
    %cst_8 = arith.constant dense<0.000000e+00> : vector<32x32xf32>
    %16 = tpu.matmul %14, %15, %cst_8 {dimension_numbers = #tpu.dot_dimension_numbers<[1], [0], [0], [1], [0, 0, 1, 1], [], []>} : vector<32x64xbf16>, vector<64x32xbf16>, vector<32x32xf32> -> vector<32x32xf32>
    %17 = vector.extract_strided_slice %3 {offsets = [0, 1, 0], sizes = [2, 16, 32], strides = [1, 1, 1]} : vector<2x19x32xf32> to vector<2x16x32xf32>
    %18 = vector.shape_cast %17 : vector<2x16x32xf32> to vector<32x32xf32>
    %19 = vector.extract_strided_slice %3 {offsets = [0, 2, 0], sizes = [2, 16, 32], strides = [1, 1, 1]} : vector<2x19x32xf32> to vector<2x16x32xf32>
    %20 = vector.shape_cast %19 : vector<2x16x32xf32> to vector<32x32xf32>
    %21 = vector.extract_strided_slice %3 {offsets = [0, 3, 0], sizes = [2, 16, 32], strides = [1, 1, 1]} : vector<2x19x32xf32> to vector<2x16x32xf32>
    %22 = vector.shape_cast %21 : vector<2x16x32xf32> to vector<32x32xf32>
    %23 = tpu.concatenate %18, %20, %22 in 1 : vector<32x32xf32>, vector<32x32xf32>, vector<32x32xf32> -> vector<32x96xf32>
    %24 = arith.truncf %23 : vector<32x96xf32> to vector<32x96xbf16>
    %c0_9 = arith.constant 0 : index
    %c0_10 = arith.constant 0 : index
    %25 = vector.load %arg3[%c0_9, %c0_10] : memref<96x32xbf16, #tpu.memory_space<vmem>>, vector<96x32xbf16>
    %cst_11 = arith.constant dense<0.000000e+00> : vector<32x32xf32>
    %26 = tpu.matmul %24, %25, %cst_11 {dimension_numbers = #tpu.dot_dimension_numbers<[1], [0], [0], [1], [0, 0, 1, 1], [], []>} : vector<32x96xbf16>, vector<96x32xbf16>, vector<32x32xf32> -> vector<32x32xf32>
    %27 = vector.extract_strided_slice %3 {offsets = [0, 0, 0], sizes = [2, 16, 32], strides = [1, 1, 1]} : vector<2x19x32xf32> to vector<2x16x32xf32>
    %28 = vector.shape_cast %27 : vector<2x16x32xf32> to vector<32x32xf32>
    %29 = vector.extract_strided_slice %3 {offsets = [0, 1, 0], sizes = [2, 16, 32], strides = [1, 1, 1]} : vector<2x19x32xf32> to vector<2x16x32xf32>
    %30 = vector.shape_cast %29 : vector<2x16x32xf32> to vector<32x32xf32>
    %31 = vector.extract_strided_slice %3 {offsets = [0, 2, 0], sizes = [2, 16, 32], strides = [1, 1, 1]} : vector<2x19x32xf32> to vector<2x16x32xf32>
    %32 = vector.shape_cast %31 : vector<2x16x32xf32> to vector<32x32xf32>
    %33 = vector.extract_strided_slice %3 {offsets = [0, 3, 0], sizes = [2, 16, 32], strides = [1, 1, 1]} : vector<2x19x32xf32> to vector<2x16x32xf32>
    %34 = vector.shape_cast %33 : vector<2x16x32xf32> to vector<32x32xf32>
    %35 = tpu.concatenate %28, %30, %32, %34 in 1 : vector<32x32xf32>, vector<32x32xf32>, vector<32x32xf32>, vector<32x32xf32> -> vector<32x128xf32>
    %36 = arith.truncf %35 : vector<32x128xf32> to vector<32x128xbf16>
    %c0_12 = arith.constant 0 : index
    %c0_13 = arith.constant 0 : index
    %37 = vector.load %arg4[%c0_12, %c0_13] : memref<128x32xbf16, #tpu.memory_space<vmem>>, vector<128x32xbf16>
    %cst_14 = arith.constant dense<0.000000e+00> : vector<32x32xf32>
    %38 = tpu.matmul %36, %37, %cst_14 {dimension_numbers = #tpu.dot_dimension_numbers<[1], [0], [0], [1], [0, 0, 1, 1], [], []>} : vector<32x128xbf16>, vector<128x32xbf16>, vector<32x32xf32> -> vector<32x32xf32>
    %39 = tpu.concatenate %8, %16, %26, %38 in 1 : vector<32x32xf32>, vector<32x32xf32>, vector<32x32xf32>, vector<32x32xf32> -> vector<32x128xf32>
    %cst_15 = arith.constant 0.000000e+00 : f32
    %40 = vector.broadcast %cst_15 : f32 to vector<32x128xf32>
    %41 = arith.maximumf %39, %40 : vector<32x128xf32>
    %cst_16 = arith.constant dense<0.000000e+00> : vector<128xf32>
    %42 = vector.multi_reduction <add>, %41, %cst_16 [0] : vector<32x128xf32> to vector<128xf32>
    %43 = vector.shape_cast %42 : vector<128xf32> to vector<1x128xf32>
    %cst_17 = arith.constant 3.200000e+01 : f32
    %44 = vector.broadcast %cst_17 : f32 to vector<1x128xf32>
    %45 = arith.divf %43, %44 : vector<1x128xf32>
    %46 = vector.broadcast %45 : vector<1x128xf32> to vector<32x128xf32>
    %47 = arith.subf %41, %46 : vector<32x128xf32>
    %48 = arith.mulf %47, %47 : vector<32x128xf32>
    %cst_18 = arith.constant dense<0.000000e+00> : vector<128xf32>
    %49 = vector.multi_reduction <add>, %48, %cst_18 [0] : vector<32x128xf32> to vector<128xf32>
    %50 = vector.shape_cast %49 : vector<128xf32> to vector<1x128xf32>
    %cst_19 = arith.constant 3.200000e+01 : f32
    %51 = vector.broadcast %cst_19 : f32 to vector<1x128xf32>
    %52 = arith.divf %50, %51 : vector<1x128xf32>
    %53 = vector.broadcast %45 : vector<1x128xf32> to vector<32x128xf32>
    %54 = arith.subf %41, %53 : vector<32x128xf32>
    %cst_20 = arith.constant 9.99999974E-6 : f32
    %55 = vector.broadcast %cst_20 : f32 to vector<1x128xf32>
    %56 = arith.addf %52, %55 : vector<1x128xf32>
    %57 = math.rsqrt %56 : vector<1x128xf32>
    %58 = vector.broadcast %57 : vector<1x128xf32> to vector<32x128xf32>
    %59 = arith.mulf %54, %58 : vector<32x128xf32>
    %c0_21 = arith.constant 0 : index
    %c0_22 = arith.constant 0 : index
    %60 = vector.load %arg5[%c0_21, %c0_22] : memref<1x128xf32, #tpu.memory_space<vmem>>, vector<1x128xf32>
    %61 = vector.broadcast %60 : vector<1x128xf32> to vector<32x128xf32>
    %62 = arith.mulf %59, %61 : vector<32x128xf32>
    %c0_23 = arith.constant 0 : index
    %c0_24 = arith.constant 0 : index
    %63 = vector.load %arg6[%c0_23, %c0_24] : memref<1x128xf32, #tpu.memory_space<vmem>>, vector<1x128xf32>
    %64 = vector.broadcast %63 : vector<1x128xf32> to vector<32x128xf32>
    %65 = arith.addf %62, %64 : vector<32x128xf32>
    %66 = vector.shape_cast %65 : vector<32x128xf32> to vector<2x16x128xf32>
    %67 = vector.extract_strided_slice %66 {offsets = [0, 0, 0], sizes = [2, 1, 128], strides = [1, 1, 1]} : vector<2x16x128xf32> to vector<2x1x128xf32>
    %68 = vector.extract_strided_slice %66 {offsets = [0, 0, 0], sizes = [2, 15, 128], strides = [1, 1, 1]} : vector<2x16x128xf32> to vector<2x15x128xf32>
    %69 = tpu.concatenate %67, %68 in 1 : vector<2x1x128xf32>, vector<2x15x128xf32> -> vector<2x16x128xf32>
    %70 = arith.maximumf %66, %69 : vector<2x16x128xf32>
    %c0_25 = arith.constant 0 : index
    %c0_26 = arith.constant 0 : index
    %c0_27 = arith.constant 0 : index
    %71 = vector.load %arg7[%c0_25, %c0_26, %c0_27] : memref<2x16x128xf32, #tpu.memory_space<vmem>>, vector<2x16x128xf32>
    tpu.vector_store %arg7[%c0_25, %c0_26, %c0_27], %70 {strides = array<i32>} : memref<2x16x128xf32, #tpu.memory_space<vmem>>, vector<2x16x128xf32>,
    return
  }
}

module attributes {stable_mosaic.version = 11 : i64} {
  func.func @_prenet_kernel(%arg0: memref<32x32xf32, #tpu.memory_space<vmem>>, %arg1: memref<32x32xbf16, #tpu.memory_space<vmem>>, %arg2: memref<1x32xf32, #tpu.memory_space<vmem>>, %arg3: memref<32x32xbf16, #tpu.memory_space<vmem>>, %arg4: memref<1x32xf32, #tpu.memory_space<vmem>>, %arg5: memref<32x32xf32, #tpu.memory_space<vmem>>) attributes {dimension_semantics = [], scalar_prefetch = 0 : i64, scratch_operands = 0 : i64, tpu.core_type = #tpu.core_type<tc>} {
    %c0 = arith.constant 0 : index
    %c0_0 = arith.constant 0 : index
    %0 = vector.load %arg0[%c0, %c0_0] : memref<32x32xf32, #tpu.memory_space<vmem>>, vector<32x32xf32>
    %1 = arith.truncf %0 : vector<32x32xf32> to vector<32x32xbf16>
    %c0_1 = arith.constant 0 : index
    %c0_2 = arith.constant 0 : index
    %2 = vector.load %arg1[%c0_1, %c0_2] : memref<32x32xbf16, #tpu.memory_space<vmem>>, vector<32x32xbf16>
    %cst = arith.constant dense<0.000000e+00> : vector<32x32xf32>
    %3 = tpu.matmul %1, %2, %cst {dimension_numbers = #tpu.dot_dimension_numbers<[1], [0], [0], [1], [0, 0, 1, 1], [], []>} : vector<32x32xbf16>, vector<32x32xbf16>, vector<32x32xf32> -> vector<32x32xf32>
    %c0_3 = arith.constant 0 : index
    %c0_4 = arith.constant 0 : index
    %4 = vector.load %arg2[%c0_3, %c0_4] : memref<1x32xf32, #tpu.memory_space<vmem>>, vector<1x32xf32>
    %5 = vector.broadcast %4 : vector<1x32xf32> to vector<32x32xf32>
    %6 = arith.addf %3, %5 : vector<32x32xf32>
    %cst_5 = arith.constant 0.000000e+00 : f32
    %7 = vector.broadcast %cst_5 : f32 to vector<32x32xf32>
    %8 = arith.maximumf %6, %7 : vector<32x32xf32>
    %9 = arith.truncf %8 : vector<32x32xf32> to vector<32x32xbf16>
    %c0_6 = arith.constant 0 : index
    %c0_7 = arith.constant 0 : index
    %10 = vector.load %arg3[%c0_6, %c0_7] : memref<32x32xbf16, #tpu.memory_space<vmem>>, vector<32x32xbf16>
    %cst_8 = arith.constant dense<0.000000e+00> : vector<32x32xf32>
    %11 = tpu.matmul %9, %10, %cst_8 {dimension_numbers = #tpu.dot_dimension_numbers<[1], [0], [0], [1], [0, 0, 1, 1], [], []>} : vector<32x32xbf16>, vector<32x32xbf16>, vector<32x32xf32> -> vector<32x32xf32>
    %c0_9 = arith.constant 0 : index
    %c0_10 = arith.constant 0 : index
    %12 = vector.load %arg4[%c0_9, %c0_10] : memref<1x32xf32, #tpu.memory_space<vmem>>, vector<1x32xf32>
    %13 = vector.broadcast %12 : vector<1x32xf32> to vector<32x32xf32>
    %14 = arith.addf %11, %13 : vector<32x32xf32>
    %cst_11 = arith.constant 0.000000e+00 : f32
    %15 = vector.broadcast %cst_11 : f32 to vector<32x32xf32>
    %16 = arith.maximumf %14, %15 : vector<32x32xf32>
    %c0_12 = arith.constant 0 : index
    %c0_13 = arith.constant 0 : index
    %17 = vector.load %arg5[%c0_12, %c0_13] : memref<32x32xf32, #tpu.memory_space<vmem>>, vector<32x32xf32>
    tpu.vector_store %arg5[%c0_12, %c0_13], %16 {strides = array<i32>} : memref<32x32xf32, #tpu.memory_space<vmem>>, vector<32x32xf32>,
    return
  }
}

module attributes {stable_mosaic.version = 11 : i64} {
  func.func @_highway_kernel(%arg0: memref<32x32xf32, #tpu.memory_space<vmem>>, %arg1: memref<2x32x32xbf16, #tpu.memory_space<vmem>>, %arg2: memref<2x1x32xf32, #tpu.memory_space<vmem>>, %arg3: memref<2x32x32xbf16, #tpu.memory_space<vmem>>, %arg4: memref<2x1x32xf32, #tpu.memory_space<vmem>>, %arg5: memref<32x32xf32, #tpu.memory_space<vmem>>) attributes {dimension_semantics = [], scalar_prefetch = 0 : i64, scratch_operands = 0 : i64, tpu.core_type = #tpu.core_type<tc>} {
    %c0 = arith.constant 0 : index
    %c0_0 = arith.constant 0 : index
    %0 = vector.load %arg0[%c0, %c0_0] : memref<32x32xf32, #tpu.memory_space<vmem>>, vector<32x32xf32>
    %1 = arith.truncf %0 : vector<32x32xf32> to vector<32x32xbf16>
    %c0_1 = arith.constant 0 : index
    %c0_2 = arith.constant 0 : index
    %c0_3 = arith.constant 0 : index
    %2 = vector.load %arg1[%c0_1, %c0_2, %c0_3] : memref<2x32x32xbf16, #tpu.memory_space<vmem>>, vector<1x32x32xbf16>
    %3 = vector.shape_cast %2 : vector<1x32x32xbf16> to vector<32x32xbf16>
    %cst = arith.constant dense<0.000000e+00> : vector<32x32xf32>
    %4 = tpu.matmul %1, %3, %cst {dimension_numbers = #tpu.dot_dimension_numbers<[1], [0], [0], [1], [0, 0, 1, 1], [], []>} : vector<32x32xbf16>, vector<32x32xbf16>, vector<32x32xf32> -> vector<32x32xf32>
    %c0_4 = arith.constant 0 : index
    %c0_5 = arith.constant 0 : index
    %c0_6 = arith.constant 0 : index
    %5 = vector.load %arg2[%c0_4, %c0_5, %c0_6] : memref<2x1x32xf32, #tpu.memory_space<vmem>>, vector<1x1x32xf32>
    %6 = vector.shape_cast %5 : vector<1x1x32xf32> to vector<1x32xf32>
    %7 = vector.broadcast %6 : vector<1x32xf32> to vector<32x32xf32>
    %8 = arith.addf %4, %7 : vector<32x32xf32>
    %cst_7 = arith.constant 0.000000e+00 : f32
    %9 = vector.broadcast %cst_7 : f32 to vector<32x32xf32>
    %10 = arith.maximumf %8, %9 : vector<32x32xf32>
    %c0_8 = arith.constant 0 : index
    %c0_9 = arith.constant 0 : index
    %c0_10 = arith.constant 0 : index
    %11 = vector.load %arg3[%c0_8, %c0_9, %c0_10] : memref<2x32x32xbf16, #tpu.memory_space<vmem>>, vector<1x32x32xbf16>
    %12 = vector.shape_cast %11 : vector<1x32x32xbf16> to vector<32x32xbf16>
    %cst_11 = arith.constant dense<0.000000e+00> : vector<32x32xf32>
    %13 = tpu.matmul %1, %12, %cst_11 {dimension_numbers = #tpu.dot_dimension_numbers<[1], [0], [0], [1], [0, 0, 1, 1], [], []>} : vector<32x32xbf16>, vector<32x32xbf16>, vector<32x32xf32> -> vector<32x32xf32>
    %c0_12 = arith.constant 0 : index
    %c0_13 = arith.constant 0 : index
    %c0_14 = arith.constant 0 : index
    %14 = vector.load %arg4[%c0_12, %c0_13, %c0_14] : memref<2x1x32xf32, #tpu.memory_space<vmem>>, vector<1x1x32xf32>
    %15 = vector.shape_cast %14 : vector<1x1x32xf32> to vector<1x32xf32>
    %16 = vector.broadcast %15 : vector<1x32xf32> to vector<32x32xf32>
    %17 = arith.addf %13, %16 : vector<32x32xf32>
    %18 = arith.negf %17 : vector<32x32xf32>
    %19 = math.exp %18 : vector<32x32xf32>
    %cst_15 = arith.constant 1.000000e+00 : f32
    %20 = vector.broadcast %cst_15 : f32 to vector<32x32xf32>
    %21 = arith.addf %20, %19 : vector<32x32xf32>
    %22 = arith.divf %20, %21 : vector<32x32xf32>
    %23 = arith.mulf %22, %10 : vector<32x32xf32>
    %cst_16 = arith.constant 1.000000e+00 : f32
    %24 = vector.broadcast %cst_16 : f32 to vector<32x32xf32>
    %25 = arith.subf %24, %22 : vector<32x32xf32>
    %26 = arith.mulf %25, %0 : vector<32x32xf32>
    %27 = arith.addf %23, %26 : vector<32x32xf32>
    %28 = arith.truncf %27 : vector<32x32xf32> to vector<32x32xbf16>
    %c1 = arith.constant 1 : index
    %c0_17 = arith.constant 0 : index
    %c0_18 = arith.constant 0 : index
    %29 = vector.load %arg1[%c1, %c0_17, %c0_18] : memref<2x32x32xbf16, #tpu.memory_space<vmem>>, vector<1x32x32xbf16>
    %30 = vector.shape_cast %29 : vector<1x32x32xbf16> to vector<32x32xbf16>
    %cst_19 = arith.constant dense<0.000000e+00> : vector<32x32xf32>
    %31 = tpu.matmul %28, %30, %cst_19 {dimension_numbers = #tpu.dot_dimension_numbers<[1], [0], [0], [1], [0, 0, 1, 1], [], []>} : vector<32x32xbf16>, vector<32x32xbf16>, vector<32x32xf32> -> vector<32x32xf32>
    %c1_20 = arith.constant 1 : index
    %c0_21 = arith.constant 0 : index
    %c0_22 = arith.constant 0 : index
    %32 = vector.load %arg2[%c1_20, %c0_21, %c0_22] : memref<2x1x32xf32, #tpu.memory_space<vmem>>, vector<1x1x32xf32>
    %33 = vector.shape_cast %32 : vector<1x1x32xf32> to vector<1x32xf32>
    %34 = vector.broadcast %33 : vector<1x32xf32> to vector<32x32xf32>
    %35 = arith.addf %31, %34 : vector<32x32xf32>
    %cst_23 = arith.constant 0.000000e+00 : f32
    %36 = vector.broadcast %cst_23 : f32 to vector<32x32xf32>
    %37 = arith.maximumf %35, %36 : vector<32x32xf32>
    %c1_24 = arith.constant 1 : index
    %c0_25 = arith.constant 0 : index
    %c0_26 = arith.constant 0 : index
    %38 = vector.load %arg3[%c1_24, %c0_25, %c0_26] : memref<2x32x32xbf16, #tpu.memory_space<vmem>>, vector<1x32x32xbf16>
    %39 = vector.shape_cast %38 : vector<1x32x32xbf16> to vector<32x32xbf16>
    %cst_27 = arith.constant dense<0.000000e+00> : vector<32x32xf32>
    %40 = tpu.matmul %28, %39, %cst_27 {dimension_numbers = #tpu.dot_dimension_numbers<[1], [0], [0], [1], [0, 0, 1, 1], [], []>} : vector<32x32xbf16>, vector<32x32xbf16>, vector<32x32xf32> -> vector<32x32xf32>
    %c1_28 = arith.constant 1 : index
    %c0_29 = arith.constant 0 : index
    %c0_30 = arith.constant 0 : index
    %41 = vector.load %arg4[%c1_28, %c0_29, %c0_30] : memref<2x1x32xf32, #tpu.memory_space<vmem>>, vector<1x1x32xf32>
    %42 = vector.shape_cast %41 : vector<1x1x32xf32> to vector<1x32xf32>
    %43 = vector.broadcast %42 : vector<1x32xf32> to vector<32x32xf32>
    %44 = arith.addf %40, %43 : vector<32x32xf32>
    %45 = arith.negf %44 : vector<32x32xf32>
    %46 = math.exp %45 : vector<32x32xf32>
    %cst_31 = arith.constant 1.000000e+00 : f32
    %47 = vector.broadcast %cst_31 : f32 to vector<32x32xf32>
    %48 = arith.addf %47, %46 : vector<32x32xf32>
    %49 = arith.divf %47, %48 : vector<32x32xf32>
    %50 = arith.mulf %49, %37 : vector<32x32xf32>
    %cst_32 = arith.constant 1.000000e+00 : f32
    %51 = vector.broadcast %cst_32 : f32 to vector<32x32xf32>
    %52 = arith.subf %51, %49 : vector<32x32xf32>
    %53 = arith.mulf %52, %27 : vector<32x32xf32>
    %54 = arith.addf %50, %53 : vector<32x32xf32>
    %c0_33 = arith.constant 0 : index
    %c0_34 = arith.constant 0 : index
    %55 = vector.load %arg5[%c0_33, %c0_34] : memref<32x32xf32, #tpu.memory_space<vmem>>, vector<32x32xf32>
    tpu.vector_store %arg5[%c0_33, %c0_34], %54 {strides = array<i32>} : memref<32x32xf32, #tpu.memory_space<vmem>>, vector<32x32xf32>,
    return
  }
}

module attributes {stable_mosaic.version = 11 : i64} {
  func.func @_proj_kernel(%arg0: memref<2x16x128xf32, #tpu.memory_space<vmem>>, %arg1: memref<384x32xbf16, #tpu.memory_space<vmem>>, %arg2: memref<1x32xf32, #tpu.memory_space<vmem>>, %arg3: memref<1x32xf32, #tpu.memory_space<vmem>>, %arg4: memref<96x32xbf16, #tpu.memory_space<vmem>>, %arg5: memref<1x32xf32, #tpu.memory_space<vmem>>, %arg6: memref<1x32xf32, #tpu.memory_space<vmem>>, %arg7: memref<32x32xf32, #tpu.memory_space<vmem>>, %arg8: memref<32x32xf32, #tpu.memory_space<vmem>>) attributes {dimension_semantics = [], scalar_prefetch = 0 : i64, scratch_operands = 0 : i64, tpu.core_type = #tpu.core_type<tc>} {
    %c0 = arith.constant 0 : index
    %c0_0 = arith.constant 0 : index
    %c0_1 = arith.constant 0 : index
    %0 = vector.load %arg0[%c0, %c0_0, %c0_1] : memref<2x16x128xf32, #tpu.memory_space<vmem>>, vector<2x16x128xf32>
    %c0_2 = arith.constant 0 : index
    %c0_3 = arith.constant 0 : index
    %1 = vector.load %arg1[%c0_2, %c0_3] : memref<384x32xbf16, #tpu.memory_space<vmem>>, vector<384x32xbf16>
    %c0_4 = arith.constant 0 : index
    %c0_5 = arith.constant 0 : index
    %2 = vector.load %arg2[%c0_4, %c0_5] : memref<1x32xf32, #tpu.memory_space<vmem>>, vector<1x32xf32>
    %c0_6 = arith.constant 0 : index
    %c0_7 = arith.constant 0 : index
    %3 = vector.load %arg3[%c0_6, %c0_7] : memref<1x32xf32, #tpu.memory_space<vmem>>, vector<1x32xf32>
    %cst = arith.constant 0.000000e+00 : f32
    %4 = vector.broadcast %cst : f32 to vector<2x1x128xf32>
    %5 = tpu.concatenate %4, %0, %4 in 1 : vector<2x1x128xf32>, vector<2x16x128xf32>, vector<2x1x128xf32> -> vector<2x18x128xf32>
    %6 = vector.extract_strided_slice %5 {offsets = [0, 0, 0], sizes = [2, 16, 128], strides = [1, 1, 1]} : vector<2x18x128xf32> to vector<2x16x128xf32>
    %7 = vector.shape_cast %6 : vector<2x16x128xf32> to vector<32x128xf32>
    %8 = vector.extract_strided_slice %5 {offsets = [0, 1, 0], sizes = [2, 16, 128], strides = [1, 1, 1]} : vector<2x18x128xf32> to vector<2x16x128xf32>
    %9 = vector.shape_cast %8 : vector<2x16x128xf32> to vector<32x128xf32>
    %10 = vector.extract_strided_slice %5 {offsets = [0, 2, 0], sizes = [2, 16, 128], strides = [1, 1, 1]} : vector<2x18x128xf32> to vector<2x16x128xf32>
    %11 = vector.shape_cast %10 : vector<2x16x128xf32> to vector<32x128xf32>
    %12 = tpu.concatenate %7, %9, %11 in 1 : vector<32x128xf32>, vector<32x128xf32>, vector<32x128xf32> -> vector<32x384xf32>
    %13 = arith.truncf %12 : vector<32x384xf32> to vector<32x384xbf16>
    %cst_8 = arith.constant dense<0.000000e+00> : vector<32x32xf32>
    %14 = tpu.matmul %13, %1, %cst_8 {dimension_numbers = #tpu.dot_dimension_numbers<[1], [0], [0], [1], [0, 0, 1, 1], [], []>} : vector<32x384xbf16>, vector<384x32xbf16>, vector<32x32xf32> -> vector<32x32xf32>
    %cst_9 = arith.constant 0.000000e+00 : f32
    %15 = vector.broadcast %cst_9 : f32 to vector<32x32xf32>
    %16 = arith.maximumf %14, %15 : vector<32x32xf32>
    %cst_10 = arith.constant dense<0.000000e+00> : vector<32xf32>
    %17 = vector.multi_reduction <add>, %16, %cst_10 [0] : vector<32x32xf32> to vector<32xf32>
    %18 = vector.shape_cast %17 : vector<32xf32> to vector<1x32xf32>
    %cst_11 = arith.constant 3.200000e+01 : f32
    %19 = vector.broadcast %cst_11 : f32 to vector<1x32xf32>
    %20 = arith.divf %18, %19 : vector<1x32xf32>
    %21 = vector.broadcast %20 : vector<1x32xf32> to vector<32x32xf32>
    %22 = arith.subf %16, %21 : vector<32x32xf32>
    %23 = arith.mulf %22, %22 : vector<32x32xf32>
    %cst_12 = arith.constant dense<0.000000e+00> : vector<32xf32>
    %24 = vector.multi_reduction <add>, %23, %cst_12 [0] : vector<32x32xf32> to vector<32xf32>
    %25 = vector.shape_cast %24 : vector<32xf32> to vector<1x32xf32>
    %cst_13 = arith.constant 3.200000e+01 : f32
    %26 = vector.broadcast %cst_13 : f32 to vector<1x32xf32>
    %27 = arith.divf %25, %26 : vector<1x32xf32>
    %28 = vector.broadcast %20 : vector<1x32xf32> to vector<32x32xf32>
    %29 = arith.subf %16, %28 : vector<32x32xf32>
    %cst_14 = arith.constant 9.99999974E-6 : f32
    %30 = vector.broadcast %cst_14 : f32 to vector<1x32xf32>
    %31 = arith.addf %27, %30 : vector<1x32xf32>
    %32 = math.rsqrt %31 : vector<1x32xf32>
    %33 = vector.broadcast %32 : vector<1x32xf32> to vector<32x32xf32>
    %34 = arith.mulf %29, %33 : vector<32x32xf32>
    %35 = vector.broadcast %2 : vector<1x32xf32> to vector<32x32xf32>
    %36 = arith.mulf %34, %35 : vector<32x32xf32>
    %37 = vector.broadcast %3 : vector<1x32xf32> to vector<32x32xf32>
    %38 = arith.addf %36, %37 : vector<32x32xf32>
    %39 = vector.shape_cast %38 : vector<32x32xf32> to vector<2x16x32xf32>
    %c0_15 = arith.constant 0 : index
    %c0_16 = arith.constant 0 : index
    %40 = vector.load %arg4[%c0_15, %c0_16] : memref<96x32xbf16, #tpu.memory_space<vmem>>, vector<96x32xbf16>
    %c0_17 = arith.constant 0 : index
    %c0_18 = arith.constant 0 : index
    %41 = vector.load %arg5[%c0_17, %c0_18] : memref<1x32xf32, #tpu.memory_space<vmem>>, vector<1x32xf32>
    %c0_19 = arith.constant 0 : index
    %c0_20 = arith.constant 0 : index
    %42 = vector.load %arg6[%c0_19, %c0_20] : memref<1x32xf32, #tpu.memory_space<vmem>>, vector<1x32xf32>
    %cst_21 = arith.constant 0.000000e+00 : f32
    %43 = vector.broadcast %cst_21 : f32 to vector<2x1x32xf32>
    %44 = tpu.concatenate %43, %39, %43 in 1 : vector<2x1x32xf32>, vector<2x16x32xf32>, vector<2x1x32xf32> -> vector<2x18x32xf32>
    %45 = vector.extract_strided_slice %44 {offsets = [0, 0, 0], sizes = [2, 16, 32], strides = [1, 1, 1]} : vector<2x18x32xf32> to vector<2x16x32xf32>
    %46 = vector.shape_cast %45 : vector<2x16x32xf32> to vector<32x32xf32>
    %47 = vector.extract_strided_slice %44 {offsets = [0, 1, 0], sizes = [2, 16, 32], strides = [1, 1, 1]} : vector<2x18x32xf32> to vector<2x16x32xf32>
    %48 = vector.shape_cast %47 : vector<2x16x32xf32> to vector<32x32xf32>
    %49 = vector.extract_strided_slice %44 {offsets = [0, 2, 0], sizes = [2, 16, 32], strides = [1, 1, 1]} : vector<2x18x32xf32> to vector<2x16x32xf32>
    %50 = vector.shape_cast %49 : vector<2x16x32xf32> to vector<32x32xf32>
    %51 = tpu.concatenate %46, %48, %50 in 1 : vector<32x32xf32>, vector<32x32xf32>, vector<32x32xf32> -> vector<32x96xf32>
    %52 = arith.truncf %51 : vector<32x96xf32> to vector<32x96xbf16>
    %cst_22 = arith.constant dense<0.000000e+00> : vector<32x32xf32>
    %53 = tpu.matmul %52, %40, %cst_22 {dimension_numbers = #tpu.dot_dimension_numbers<[1], [0], [0], [1], [0, 0, 1, 1], [], []>} : vector<32x96xbf16>, vector<96x32xbf16>, vector<32x32xf32> -> vector<32x32xf32>
    %cst_23 = arith.constant dense<0.000000e+00> : vector<32xf32>
    %54 = vector.multi_reduction <add>, %53, %cst_23 [0] : vector<32x32xf32> to vector<32xf32>
    %55 = vector.shape_cast %54 : vector<32xf32> to vector<1x32xf32>
    %cst_24 = arith.constant 3.200000e+01 : f32
    %56 = vector.broadcast %cst_24 : f32 to vector<1x32xf32>
    %57 = arith.divf %55, %56 : vector<1x32xf32>
    %58 = vector.broadcast %57 : vector<1x32xf32> to vector<32x32xf32>
    %59 = arith.subf %53, %58 : vector<32x32xf32>
    %60 = arith.mulf %59, %59 : vector<32x32xf32>
    %cst_25 = arith.constant dense<0.000000e+00> : vector<32xf32>
    %61 = vector.multi_reduction <add>, %60, %cst_25 [0] : vector<32x32xf32> to vector<32xf32>
    %62 = vector.shape_cast %61 : vector<32xf32> to vector<1x32xf32>
    %cst_26 = arith.constant 3.200000e+01 : f32
    %63 = vector.broadcast %cst_26 : f32 to vector<1x32xf32>
    %64 = arith.divf %62, %63 : vector<1x32xf32>
    %65 = vector.broadcast %57 : vector<1x32xf32> to vector<32x32xf32>
    %66 = arith.subf %53, %65 : vector<32x32xf32>
    %cst_27 = arith.constant 9.99999974E-6 : f32
    %67 = vector.broadcast %cst_27 : f32 to vector<1x32xf32>
    %68 = arith.addf %64, %67 : vector<1x32xf32>
    %69 = math.rsqrt %68 : vector<1x32xf32>
    %70 = vector.broadcast %69 : vector<1x32xf32> to vector<32x32xf32>
    %71 = arith.mulf %66, %70 : vector<32x32xf32>
    %72 = vector.broadcast %41 : vector<1x32xf32> to vector<32x32xf32>
    %73 = arith.mulf %71, %72 : vector<32x32xf32>
    %74 = vector.broadcast %42 : vector<1x32xf32> to vector<32x32xf32>
    %75 = arith.addf %73, %74 : vector<32x32xf32>
    %c0_28 = arith.constant 0 : index
    %c0_29 = arith.constant 0 : index
    %76 = vector.load %arg7[%c0_28, %c0_29] : memref<32x32xf32, #tpu.memory_space<vmem>>, vector<32x32xf32>
    %77 = arith.addf %75, %76 : vector<32x32xf32>
    %c0_30 = arith.constant 0 : index
    %c0_31 = arith.constant 0 : index
    %78 = vector.load %arg8[%c0_30, %c0_31] : memref<32x32xf32, #tpu.memory_space<vmem>>, vector<32x32xf32>
    tpu.vector_store %arg8[%c0_30, %c0_31], %77 {strides = array<i32>} : memref<32x32xf32, #tpu.memory_space<vmem>>, vector<32x32xf32>,
    return
  }
}

module attributes {stable_mosaic.version = 11 : i64} {
  func.func @_bigru_kernel(%arg0: memref<16x2x32xf32, #tpu.memory_space<vmem>>, %arg1: memref<32x96xbf16, #tpu.memory_space<vmem>>, %arg2: memref<1x96xf32, #tpu.memory_space<vmem>>, %arg3: memref<16x48xbf16, #tpu.memory_space<vmem>>, %arg4: memref<1x48xf32, #tpu.memory_space<vmem>>, %arg5: memref<16x48xbf16, #tpu.memory_space<vmem>>, %arg6: memref<1x48xf32, #tpu.memory_space<vmem>>, %arg7: memref<16x2x32xf32, #tpu.memory_space<vmem>>, %arg8: memref<16x2x96xf32, #tpu.memory_space<vmem>>, %arg9: memref<16x2x16xf32, #tpu.memory_space<vmem>>, %arg10: memref<16x2x16xf32, #tpu.memory_space<vmem>>) attributes {dimension_semantics = [], scalar_prefetch = 0 : i64, scratch_operands = 3 : i64, tpu.core_type = #tpu.core_type<tc>} {
    %c0 = arith.constant 0 : index
    %c0_0 = arith.constant 0 : index
    %c0_1 = arith.constant 0 : index
    %0 = vector.load %arg0[%c0, %c0_0, %c0_1] : memref<16x2x32xf32, #tpu.memory_space<vmem>>, vector<16x2x32xf32>
    %1 = vector.shape_cast %0 : vector<16x2x32xf32> to vector<32x32xf32>
    %2 = arith.truncf %1 : vector<32x32xf32> to vector<32x32xbf16>
    %c0_2 = arith.constant 0 : index
    %c0_3 = arith.constant 0 : index
    %3 = vector.load %arg1[%c0_2, %c0_3] : memref<32x96xbf16, #tpu.memory_space<vmem>>, vector<32x96xbf16>
    %cst = arith.constant dense<0.000000e+00> : vector<32x96xf32>
    %4 = tpu.matmul %2, %3, %cst {dimension_numbers = #tpu.dot_dimension_numbers<[1], [0], [0], [1], [0, 0, 1, 1], [], []>} : vector<32x32xbf16>, vector<32x96xbf16>, vector<32x96xf32> -> vector<32x96xf32>
    %c0_4 = arith.constant 0 : index
    %c0_5 = arith.constant 0 : index
    %5 = vector.load %arg2[%c0_4, %c0_5] : memref<1x96xf32, #tpu.memory_space<vmem>>, vector<1x96xf32>
    %6 = vector.broadcast %5 : vector<1x96xf32> to vector<32x96xf32>
    %7 = arith.addf %4, %6 : vector<32x96xf32>
    %8 = vector.shape_cast %7 : vector<32x96xf32> to vector<16x2x96xf32>
    %c0_6 = arith.constant 0 : index
    %c0_7 = arith.constant 0 : index
    %c0_8 = arith.constant 0 : index
    %9 = vector.load %arg8[%c0_6, %c0_7, %c0_8] : memref<16x2x96xf32, #tpu.memory_space<vmem>>, vector<16x2x96xf32>
    tpu.vector_store %arg8[%c0_6, %c0_7, %c0_8], %8 {strides = array<i32>} : memref<16x2x96xf32, #tpu.memory_space<vmem>>, vector<16x2x96xf32>,
    %c0_9 = arith.constant 0 : index
    %c0_10 = arith.constant 0 : index
    %10 = vector.load %arg3[%c0_9, %c0_10] : memref<16x48xbf16, #tpu.memory_space<vmem>>, vector<16x48xbf16>
    %c0_11 = arith.constant 0 : index
    %c0_12 = arith.constant 0 : index
    %11 = vector.load %arg5[%c0_11, %c0_12] : memref<16x48xbf16, #tpu.memory_space<vmem>>, vector<16x48xbf16>
    %c0_13 = arith.constant 0 : index
    %c0_14 = arith.constant 0 : index
    %12 = vector.load %arg4[%c0_13, %c0_14] : memref<1x48xf32, #tpu.memory_space<vmem>>, vector<1x48xf32>
    %c0_15 = arith.constant 0 : index
    %c0_16 = arith.constant 0 : index
    %13 = vector.load %arg6[%c0_15, %c0_16] : memref<1x48xf32, #tpu.memory_space<vmem>>, vector<1x48xf32>
    %cst_17 = arith.constant 0.000000e+00 : f32
    %14 = vector.broadcast %cst_17 : f32 to vector<2x16xf32>
    %c0_i32 = arith.constant 0 : i32
    %c15_i32 = arith.constant 15 : i32
    %15 = arith.subi %c15_i32, %c0_i32 : i32
    %16 = arith.index_cast %c0_i32 : i32 to index
    %c0_18 = arith.constant 0 : index
    %c0_19 = arith.constant 0 : index
    %17 = vector.load %arg8[%16, %c0_18, %c0_19] : memref<16x2x96xf32, #tpu.memory_space<vmem>>, vector<1x2x96xf32>
    %18 = vector.shape_cast %17 : vector<1x2x96xf32> to vector<2x96xf32>
    %19 = arith.index_cast %15 : i32 to index
    %c0_20 = arith.constant 0 : index
    %c0_21 = arith.constant 0 : index
    %20 = vector.load %arg8[%19, %c0_20, %c0_21] : memref<16x2x96xf32, #tpu.memory_space<vmem>>, vector<1x2x96xf32>
    %21 = vector.shape_cast %20 : vector<1x2x96xf32> to vector<2x96xf32>
    %22 = vector.extract_strided_slice %18 {offsets = [0, 0], sizes = [2, 48], strides = [1, 1]} : vector<2x96xf32> to vector<2x48xf32>
    %23 = arith.truncf %14 : vector<2x16xf32> to vector<2x16xbf16>
    %cst_22 = arith.constant dense<0.000000e+00> : vector<2x48xf32>
    %24 = tpu.matmul %23, %10, %cst_22 {dimension_numbers = #tpu.dot_dimension_numbers<[1], [0], [0], [1], [0, 0, 1, 1], [], []>} : vector<2x16xbf16>, vector<16x48xbf16>, vector<2x48xf32> -> vector<2x48xf32>
    %25 = vector.broadcast %12 : vector<1x48xf32> to vector<2x48xf32>
    %26 = arith.addf %24, %25 : vector<2x48xf32>
    %27 = vector.extract_strided_slice %22 {offsets = [0, 0], sizes = [2, 16], strides = [1, 1]} : vector<2x48xf32> to vector<2x16xf32>
    %28 = vector.extract_strided_slice %26 {offsets = [0, 0], sizes = [2, 16], strides = [1, 1]} : vector<2x48xf32> to vector<2x16xf32>
    %29 = arith.addf %27, %28 : vector<2x16xf32>
    %30 = arith.negf %29 : vector<2x16xf32>
    %31 = math.exp %30 : vector<2x16xf32>
    %cst_23 = arith.constant 1.000000e+00 : f32
    %32 = vector.broadcast %cst_23 : f32 to vector<2x16xf32>
    %33 = arith.addf %32, %31 : vector<2x16xf32>
    %34 = arith.divf %32, %33 : vector<2x16xf32>
    %35 = vector.extract_strided_slice %22 {offsets = [0, 16], sizes = [2, 16], strides = [1, 1]} : vector<2x48xf32> to vector<2x16xf32>
    %36 = vector.extract_strided_slice %26 {offsets = [0, 16], sizes = [2, 16], strides = [1, 1]} : vector<2x48xf32> to vector<2x16xf32>
    %37 = arith.addf %35, %36 : vector<2x16xf32>
    %38 = arith.negf %37 : vector<2x16xf32>
    %39 = math.exp %38 : vector<2x16xf32>
    %cst_24 = arith.constant 1.000000e+00 : f32
    %40 = vector.broadcast %cst_24 : f32 to vector<2x16xf32>
    %41 = arith.addf %40, %39 : vector<2x16xf32>
    %42 = arith.divf %40, %41 : vector<2x16xf32>
    %43 = vector.extract_strided_slice %22 {offsets = [0, 32], sizes = [2, 16], strides = [1, 1]} : vector<2x48xf32> to vector<2x16xf32>
    %44 = vector.extract_strided_slice %26 {offsets = [0, 32], sizes = [2, 16], strides = [1, 1]} : vector<2x48xf32> to vector<2x16xf32>
    %45 = arith.mulf %34, %44 : vector<2x16xf32>
    %46 = arith.addf %43, %45 : vector<2x16xf32>
    %47 = math.tanh %46 : vector<2x16xf32>
    %cst_25 = arith.constant 1.000000e+00 : f32
    %48 = vector.broadcast %cst_25 : f32 to vector<2x16xf32>
    %49 = arith.subf %48, %42 : vector<2x16xf32>
    %50 = arith.mulf %49, %47 : vector<2x16xf32>
    %51 = arith.mulf %42, %14 : vector<2x16xf32>
    %52 = arith.addf %50, %51 : vector<2x16xf32>
    %53 = vector.extract_strided_slice %21 {offsets = [0, 48], sizes = [2, 48], strides = [1, 1]} : vector<2x96xf32> to vector<2x48xf32>
    %54 = arith.truncf %14 : vector<2x16xf32> to vector<2x16xbf16>
    %cst_26 = arith.constant dense<0.000000e+00> : vector<2x48xf32>
    %55 = tpu.matmul %54, %11, %cst_26 {dimension_numbers = #tpu.dot_dimension_numbers<[1], [0], [0], [1], [0, 0, 1, 1], [], []>} : vector<2x16xbf16>, vector<16x48xbf16>, vector<2x48xf32> -> vector<2x48xf32>
    %56 = vector.broadcast %13 : vector<1x48xf32> to vector<2x48xf32>
    %57 = arith.addf %55, %56 : vector<2x48xf32>
    %58 = vector.extract_strided_slice %53 {offsets = [0, 0], sizes = [2, 16], strides = [1, 1]} : vector<2x48xf32> to vector<2x16xf32>
    %59 = vector.extract_strided_slice %57 {offsets = [0, 0], sizes = [2, 16], strides = [1, 1]} : vector<2x48xf32> to vector<2x16xf32>
    %60 = arith.addf %58, %59 : vector<2x16xf32>
    %61 = arith.negf %60 : vector<2x16xf32>
    %62 = math.exp %61 : vector<2x16xf32>
    %cst_27 = arith.constant 1.000000e+00 : f32
    %63 = vector.broadcast %cst_27 : f32 to vector<2x16xf32>
    %64 = arith.addf %63, %62 : vector<2x16xf32>
    %65 = arith.divf %63, %64 : vector<2x16xf32>
    %66 = vector.extract_strided_slice %53 {offsets = [0, 16], sizes = [2, 16], strides = [1, 1]} : vector<2x48xf32> to vector<2x16xf32>
    %67 = vector.extract_strided_slice %57 {offsets = [0, 16], sizes = [2, 16], strides = [1, 1]} : vector<2x48xf32> to vector<2x16xf32>
    %68 = arith.addf %66, %67 : vector<2x16xf32>
    %69 = arith.negf %68 : vector<2x16xf32>
    %70 = math.exp %69 : vector<2x16xf32>
    %cst_28 = arith.constant 1.000000e+00 : f32
    %71 = vector.broadcast %cst_28 : f32 to vector<2x16xf32>
    %72 = arith.addf %71, %70 : vector<2x16xf32>
    %73 = arith.divf %71, %72 : vector<2x16xf32>
    %74 = vector.extract_strided_slice %53 {offsets = [0, 32], sizes = [2, 16], strides = [1, 1]} : vector<2x48xf32> to vector<2x16xf32>
    %75 = vector.extract_strided_slice %57 {offsets = [0, 32], sizes = [2, 16], strides = [1, 1]} : vector<2x48xf32> to vector<2x16xf32>
    %76 = arith.mulf %65, %75 : vector<2x16xf32>
    %77 = arith.addf %74, %76 : vector<2x16xf32>
    %78 = math.tanh %77 : vector<2x16xf32>
    %cst_29 = arith.constant 1.000000e+00 : f32
    %79 = vector.broadcast %cst_29 : f32 to vector<2x16xf32>
    %80 = arith.subf %79, %73 : vector<2x16xf32>
    %81 = arith.mulf %80, %78 : vector<2x16xf32>
    %82 = arith.mulf %73, %14 : vector<2x16xf32>
    %83 = arith.addf %81, %82 : vector<2x16xf32>
    %84 = arith.index_cast %c0_i32 : i32 to index
    %c0_30 = arith.constant 0 : index
    %c0_31 = arith.constant 0 : index
    %85 = vector.load %arg9[%84, %c0_30, %c0_31] : memref<16x2x16xf32, #tpu.memory_space<vmem>>, vector<1x2x16xf32>
    %86 = vector.shape_cast %85 : vector<1x2x16xf32> to vector<2x16xf32>
    %87 = vector.shape_cast %52 : vector<2x16xf32> to vector<1x2x16xf32>
    tpu.vector_store %arg9[%84, %c0_30, %c0_31], %87 {strides = array<i32>} : memref<16x2x16xf32, #tpu.memory_space<vmem>>, vector<1x2x16xf32>,
    %88 = arith.index_cast %15 : i32 to index
    %c0_32 = arith.constant 0 : index
    %c0_33 = arith.constant 0 : index
    %89 = vector.load %arg10[%88, %c0_32, %c0_33] : memref<16x2x16xf32, #tpu.memory_space<vmem>>, vector<1x2x16xf32>
    %90 = vector.shape_cast %89 : vector<1x2x16xf32> to vector<2x16xf32>
    %91 = vector.shape_cast %83 : vector<2x16xf32> to vector<1x2x16xf32>
    tpu.vector_store %arg10[%88, %c0_32, %c0_33], %91 {strides = array<i32>} : memref<16x2x16xf32, #tpu.memory_space<vmem>>, vector<1x2x16xf32>,
    %c1_i32 = arith.constant 1 : i32
    %c15_i32_34 = arith.constant 15 : i32
    %92 = arith.subi %c15_i32_34, %c1_i32 : i32
    %93 = arith.index_cast %c1_i32 : i32 to index
    %c0_35 = arith.constant 0 : index
    %c0_36 = arith.constant 0 : index
    %94 = vector.load %arg8[%93, %c0_35, %c0_36] : memref<16x2x96xf32, #tpu.memory_space<vmem>>, vector<1x2x96xf32>
    %95 = vector.shape_cast %94 : vector<1x2x96xf32> to vector<2x96xf32>
    %96 = arith.index_cast %92 : i32 to index
    %c0_37 = arith.constant 0 : index
    %c0_38 = arith.constant 0 : index
    %97 = vector.load %arg8[%96, %c0_37, %c0_38] : memref<16x2x96xf32, #tpu.memory_space<vmem>>, vector<1x2x96xf32>
    %98 = vector.shape_cast %97 : vector<1x2x96xf32> to vector<2x96xf32>
    %99 = vector.extract_strided_slice %95 {offsets = [0, 0], sizes = [2, 48], strides = [1, 1]} : vector<2x96xf32> to vector<2x48xf32>
    %100 = arith.truncf %52 : vector<2x16xf32> to vector<2x16xbf16>
    %cst_39 = arith.constant dense<0.000000e+00> : vector<2x48xf32>
    %101 = tpu.matmul %100, %10, %cst_39 {dimension_numbers = #tpu.dot_dimension_numbers<[1], [0], [0], [1], [0, 0, 1, 1], [], []>} : vector<2x16xbf16>, vector<16x48xbf16>, vector<2x48xf32> -> vector<2x48xf32>
    %102 = vector.broadcast %12 : vector<1x48xf32> to vector<2x48xf32>
    %103 = arith.addf %101, %102 : vector<2x48xf32>
    %104 = vector.extract_strided_slice %99 {offsets = [0, 0], sizes = [2, 16], strides = [1, 1]} : vector<2x48xf32> to vector<2x16xf32>
    %105 = vector.extract_strided_slice %103 {offsets = [0, 0], sizes = [2, 16], strides = [1, 1]} : vector<2x48xf32> to vector<2x16xf32>
    %106 = arith.addf %104, %105 : vector<2x16xf32>
    %107 = arith.negf %106 : vector<2x16xf32>
    %108 = math.exp %107 : vector<2x16xf32>
    %cst_40 = arith.constant 1.000000e+00 : f32
    %109 = vector.broadcast %cst_40 : f32 to vector<2x16xf32>
    %110 = arith.addf %109, %108 : vector<2x16xf32>
    %111 = arith.divf %109, %110 : vector<2x16xf32>
    %112 = vector.extract_strided_slice %99 {offsets = [0, 16], sizes = [2, 16], strides = [1, 1]} : vector<2x48xf32> to vector<2x16xf32>
    %113 = vector.extract_strided_slice %103 {offsets = [0, 16], sizes = [2, 16], strides = [1, 1]} : vector<2x48xf32> to vector<2x16xf32>
    %114 = arith.addf %112, %113 : vector<2x16xf32>
    %115 = arith.negf %114 : vector<2x16xf32>
    %116 = math.exp %115 : vector<2x16xf32>
    %cst_41 = arith.constant 1.000000e+00 : f32
    %117 = vector.broadcast %cst_41 : f32 to vector<2x16xf32>
    %118 = arith.addf %117, %116 : vector<2x16xf32>
    %119 = arith.divf %117, %118 : vector<2x16xf32>
    %120 = vector.extract_strided_slice %99 {offsets = [0, 32], sizes = [2, 16], strides = [1, 1]} : vector<2x48xf32> to vector<2x16xf32>
    %121 = vector.extract_strided_slice %103 {offsets = [0, 32], sizes = [2, 16], strides = [1, 1]} : vector<2x48xf32> to vector<2x16xf32>
    %122 = arith.mulf %111, %121 : vector<2x16xf32>
    %123 = arith.addf %120, %122 : vector<2x16xf32>
    %124 = math.tanh %123 : vector<2x16xf32>
    %cst_42 = arith.constant 1.000000e+00 : f32
    %125 = vector.broadcast %cst_42 : f32 to vector<2x16xf32>
    %126 = arith.subf %125, %119 : vector<2x16xf32>
    %127 = arith.mulf %126, %124 : vector<2x16xf32>
    %128 = arith.mulf %119, %52 : vector<2x16xf32>
    %129 = arith.addf %127, %128 : vector<2x16xf32>
    %130 = vector.extract_strided_slice %98 {offsets = [0, 48], sizes = [2, 48], strides = [1, 1]} : vector<2x96xf32> to vector<2x48xf32>
    %131 = arith.truncf %83 : vector<2x16xf32> to vector<2x16xbf16>
    %cst_43 = arith.constant dense<0.000000e+00> : vector<2x48xf32>
    %132 = tpu.matmul %131, %11, %cst_43 {dimension_numbers = #tpu.dot_dimension_numbers<[1], [0], [0], [1], [0, 0, 1, 1], [], []>} : vector<2x16xbf16>, vector<16x48xbf16>, vector<2x48xf32> -> vector<2x48xf32>
    %133 = vector.broadcast %13 : vector<1x48xf32> to vector<2x48xf32>
    %134 = arith.addf %132, %133 : vector<2x48xf32>
    %135 = vector.extract_strided_slice %130 {offsets = [0, 0], sizes = [2, 16], strides = [1, 1]} : vector<2x48xf32> to vector<2x16xf32>
    %136 = vector.extract_strided_slice %134 {offsets = [0, 0], sizes = [2, 16], strides = [1, 1]} : vector<2x48xf32> to vector<2x16xf32>
    %137 = arith.addf %135, %136 : vector<2x16xf32>
    %138 = arith.negf %137 : vector<2x16xf32>
    %139 = math.exp %138 : vector<2x16xf32>
    %cst_44 = arith.constant 1.000000e+00 : f32
    %140 = vector.broadcast %cst_44 : f32 to vector<2x16xf32>
    %141 = arith.addf %140, %139 : vector<2x16xf32>
    %142 = arith.divf %140, %141 : vector<2x16xf32>
    %143 = vector.extract_strided_slice %130 {offsets = [0, 16], sizes = [2, 16], strides = [1, 1]} : vector<2x48xf32> to vector<2x16xf32>
    %144 = vector.extract_strided_slice %134 {offsets = [0, 16], sizes = [2, 16], strides = [1, 1]} : vector<2x48xf32> to vector<2x16xf32>
    %145 = arith.addf %143, %144 : vector<2x16xf32>
    %146 = arith.negf %145 : vector<2x16xf32>
    %147 = math.exp %146 : vector<2x16xf32>
    %cst_45 = arith.constant 1.000000e+00 : f32
    %148 = vector.broadcast %cst_45 : f32 to vector<2x16xf32>
    %149 = arith.addf %148, %147 : vector<2x16xf32>
    %150 = arith.divf %148, %149 : vector<2x16xf32>
    %151 = vector.extract_strided_slice %130 {offsets = [0, 32], sizes = [2, 16], strides = [1, 1]} : vector<2x48xf32> to vector<2x16xf32>
    %152 = vector.extract_strided_slice %134 {offsets = [0, 32], sizes = [2, 16], strides = [1, 1]} : vector<2x48xf32> to vector<2x16xf32>
    %153 = arith.mulf %142, %152 : vector<2x16xf32>
    %154 = arith.addf %151, %153 : vector<2x16xf32>
    %155 = math.tanh %154 : vector<2x16xf32>
    %cst_46 = arith.constant 1.000000e+00 : f32
    %156 = vector.broadcast %cst_46 : f32 to vector<2x16xf32>
    %157 = arith.subf %156, %150 : vector<2x16xf32>
    %158 = arith.mulf %157, %155 : vector<2x16xf32>
    %159 = arith.mulf %150, %83 : vector<2x16xf32>
    %160 = arith.addf %158, %159 : vector<2x16xf32>
    %161 = arith.index_cast %c1_i32 : i32 to index
    %c0_47 = arith.constant 0 : index
    %c0_48 = arith.constant 0 : index
    %162 = vector.load %arg9[%161, %c0_47, %c0_48] : memref<16x2x16xf32, #tpu.memory_space<vmem>>, vector<1x2x16xf32>
    %163 = vector.shape_cast %162 : vector<1x2x16xf32> to vector<2x16xf32>
    %164 = vector.shape_cast %129 : vector<2x16xf32> to vector<1x2x16xf32>
    tpu.vector_store %arg9[%161, %c0_47, %c0_48], %164 {strides = array<i32>} : memref<16x2x16xf32, #tpu.memory_space<vmem>>, vector<1x2x16xf32>,
    %165 = arith.index_cast %92 : i32 to index
    %c0_49 = arith.constant 0 : index
    %c0_50 = arith.constant 0 : index
    %166 = vector.load %arg10[%165, %c0_49, %c0_50] : memref<16x2x16xf32, #tpu.memory_space<vmem>>, vector<1x2x16xf32>
    %167 = vector.shape_cast %166 : vector<1x2x16xf32> to vector<2x16xf32>
    %168 = vector.shape_cast %160 : vector<2x16xf32> to vector<1x2x16xf32>
    tpu.vector_store %arg10[%165, %c0_49, %c0_50], %168 {strides = array<i32>} : memref<16x2x16xf32, #tpu.memory_space<vmem>>, vector<1x2x16xf32>,
    %c2_i32 = arith.constant 2 : i32
    %c15_i32_51 = arith.constant 15 : i32
    %169 = arith.subi %c15_i32_51, %c2_i32 : i32
    %170 = arith.index_cast %c2_i32 : i32 to index
    %c0_52 = arith.constant 0 : index
    %c0_53 = arith.constant 0 : index
    %171 = vector.load %arg8[%170, %c0_52, %c0_53] : memref<16x2x96xf32, #tpu.memory_space<vmem>>, vector<1x2x96xf32>
    %172 = vector.shape_cast %171 : vector<1x2x96xf32> to vector<2x96xf32>
    %173 = arith.index_cast %169 : i32 to index
    %c0_54 = arith.constant 0 : index
    %c0_55 = arith.constant 0 : index
    %174 = vector.load %arg8[%173, %c0_54, %c0_55] : memref<16x2x96xf32, #tpu.memory_space<vmem>>, vector<1x2x96xf32>
    %175 = vector.shape_cast %174 : vector<1x2x96xf32> to vector<2x96xf32>
    %176 = vector.extract_strided_slice %172 {offsets = [0, 0], sizes = [2, 48], strides = [1, 1]} : vector<2x96xf32> to vector<2x48xf32>
    %177 = arith.truncf %129 : vector<2x16xf32> to vector<2x16xbf16>
    %cst_56 = arith.constant dense<0.000000e+00> : vector<2x48xf32>
    %178 = tpu.matmul %177, %10, %cst_56 {dimension_numbers = #tpu.dot_dimension_numbers<[1], [0], [0], [1], [0, 0, 1, 1], [], []>} : vector<2x16xbf16>, vector<16x48xbf16>, vector<2x48xf32> -> vector<2x48xf32>
    %179 = vector.broadcast %12 : vector<1x48xf32> to vector<2x48xf32>
    %180 = arith.addf %178, %179 : vector<2x48xf32>
    %181 = vector.extract_strided_slice %176 {offsets = [0, 0], sizes = [2, 16], strides = [1, 1]} : vector<2x48xf32> to vector<2x16xf32>
    %182 = vector.extract_strided_slice %180 {offsets = [0, 0], sizes = [2, 16], strides = [1, 1]} : vector<2x48xf32> to vector<2x16xf32>
    %183 = arith.addf %181, %182 : vector<2x16xf32>
    %184 = arith.negf %183 : vector<2x16xf32>
    %185 = math.exp %184 : vector<2x16xf32>
    %cst_57 = arith.constant 1.000000e+00 : f32
    %186 = vector.broadcast %cst_57 : f32 to vector<2x16xf32>
    %187 = arith.addf %186, %185 : vector<2x16xf32>
    %188 = arith.divf %186, %187 : vector<2x16xf32>
    %189 = vector.extract_strided_slice %176 {offsets = [0, 16], sizes = [2, 16], strides = [1, 1]} : vector<2x48xf32> to vector<2x16xf32>
    %190 = vector.extract_strided_slice %180 {offsets = [0, 16], sizes = [2, 16], strides = [1, 1]} : vector<2x48xf32> to vector<2x16xf32>
    %191 = arith.addf %189, %190 : vector<2x16xf32>
    %192 = arith.negf %191 : vector<2x16xf32>
    %193 = math.exp %192 : vector<2x16xf32>
    %cst_58 = arith.constant 1.000000e+00 : f32
    %194 = vector.broadcast %cst_58 : f32 to vector<2x16xf32>
    %195 = arith.addf %194, %193 : vector<2x16xf32>
    %196 = arith.divf %194, %195 : vector<2x16xf32>
    %197 = vector.extract_strided_slice %176 {offsets = [0, 32], sizes = [2, 16], strides = [1, 1]} : vector<2x48xf32> to vector<2x16xf32>
    %198 = vector.extract_strided_slice %180 {offsets = [0, 32], sizes = [2, 16], strides = [1, 1]} : vector<2x48xf32> to vector<2x16xf32>
    %199 = arith.mulf %188, %198 : vector<2x16xf32>
    %200 = arith.addf %197, %199 : vector<2x16xf32>
    %201 = math.tanh %200 : vector<2x16xf32>
    %cst_59 = arith.constant 1.000000e+00 : f32
    %202 = vector.broadcast %cst_59 : f32 to vector<2x16xf32>
    %203 = arith.subf %202, %196 : vector<2x16xf32>
    %204 = arith.mulf %203, %201 : vector<2x16xf32>
    %205 = arith.mulf %196, %129 : vector<2x16xf32>
    %206 = arith.addf %204, %205 : vector<2x16xf32>
    %207 = vector.extract_strided_slice %175 {offsets = [0, 48], sizes = [2, 48], strides = [1, 1]} : vector<2x96xf32> to vector<2x48xf32>
    %208 = arith.truncf %160 : vector<2x16xf32> to vector<2x16xbf16>
    %cst_60 = arith.constant dense<0.000000e+00> : vector<2x48xf32>
    %209 = tpu.matmul %208, %11, %cst_60 {dimension_numbers = #tpu.dot_dimension_numbers<[1], [0], [0], [1], [0, 0, 1, 1], [], []>} : vector<2x16xbf16>, vector<16x48xbf16>, vector<2x48xf32> -> vector<2x48xf32>
    %210 = vector.broadcast %13 : vector<1x48xf32> to vector<2x48xf32>
    %211 = arith.addf %209, %210 : vector<2x48xf32>
    %212 = vector.extract_strided_slice %207 {offsets = [0, 0], sizes = [2, 16], strides = [1, 1]} : vector<2x48xf32> to vector<2x16xf32>
    %213 = vector.extract_strided_slice %211 {offsets = [0, 0], sizes = [2, 16], strides = [1, 1]} : vector<2x48xf32> to vector<2x16xf32>
    %214 = arith.addf %212, %213 : vector<2x16xf32>
    %215 = arith.negf %214 : vector<2x16xf32>
    %216 = math.exp %215 : vector<2x16xf32>
    %cst_61 = arith.constant 1.000000e+00 : f32
    %217 = vector.broadcast %cst_61 : f32 to vector<2x16xf32>
    %218 = arith.addf %217, %216 : vector<2x16xf32>
    %219 = arith.divf %217, %218 : vector<2x16xf32>
    %220 = vector.extract_strided_slice %207 {offsets = [0, 16], sizes = [2, 16], strides = [1, 1]} : vector<2x48xf32> to vector<2x16xf32>
    %221 = vector.extract_strided_slice %211 {offsets = [0, 16], sizes = [2, 16], strides = [1, 1]} : vector<2x48xf32> to vector<2x16xf32>
    %222 = arith.addf %220, %221 : vector<2x16xf32>
    %223 = arith.negf %222 : vector<2x16xf32>
    %224 = math.exp %223 : vector<2x16xf32>
    %cst_62 = arith.constant 1.000000e+00 : f32
    %225 = vector.broadcast %cst_62 : f32 to vector<2x16xf32>
    %226 = arith.addf %225, %224 : vector<2x16xf32>
    %227 = arith.divf %225, %226 : vector<2x16xf32>
    %228 = vector.extract_strided_slice %207 {offsets = [0, 32], sizes = [2, 16], strides = [1, 1]} : vector<2x48xf32> to vector<2x16xf32>
    %229 = vector.extract_strided_slice %211 {offsets = [0, 32], sizes = [2, 16], strides = [1, 1]} : vector<2x48xf32> to vector<2x16xf32>
    %230 = arith.mulf %219, %229 : vector<2x16xf32>
    %231 = arith.addf %228, %230 : vector<2x16xf32>
    %232 = math.tanh %231 : vector<2x16xf32>
    %cst_63 = arith.constant 1.000000e+00 : f32
    %233 = vector.broadcast %cst_63 : f32 to vector<2x16xf32>
    %234 = arith.subf %233, %227 : vector<2x16xf32>
    %235 = arith.mulf %234, %232 : vector<2x16xf32>
    %236 = arith.mulf %227, %160 : vector<2x16xf32>
    %237 = arith.addf %235, %236 : vector<2x16xf32>
    %238 = arith.index_cast %c2_i32 : i32 to index
    %c0_64 = arith.constant 0 : index
    %c0_65 = arith.constant 0 : index
    %239 = vector.load %arg9[%238, %c0_64, %c0_65] : memref<16x2x16xf32, #tpu.memory_space<vmem>>, vector<1x2x16xf32>
    %240 = vector.shape_cast %239 : vector<1x2x16xf32> to vector<2x16xf32>
    %241 = vector.shape_cast %206 : vector<2x16xf32> to vector<1x2x16xf32>
    tpu.vector_store %arg9[%238, %c0_64, %c0_65], %241 {strides = array<i32>} : memref<16x2x16xf32, #tpu.memory_space<vmem>>, vector<1x2x16xf32>,
    %242 = arith.index_cast %169 : i32 to index
    %c0_66 = arith.constant 0 : index
    %c0_67 = arith.constant 0 : index
    %243 = vector.load %arg10[%242, %c0_66, %c0_67] : memref<16x2x16xf32, #tpu.memory_space<vmem>>, vector<1x2x16xf32>
    %244 = vector.shape_cast %243 : vector<1x2x16xf32> to vector<2x16xf32>
    %245 = vector.shape_cast %237 : vector<2x16xf32> to vector<1x2x16xf32>
    tpu.vector_store %arg10[%242, %c0_66, %c0_67], %245 {strides = array<i32>} : memref<16x2x16xf32, #tpu.memory_space<vmem>>, vector<1x2x16xf32>,
    %c3_i32 = arith.constant 3 : i32
    %c15_i32_68 = arith.constant 15 : i32
    %246 = arith.subi %c15_i32_68, %c3_i32 : i32
    %247 = arith.index_cast %c3_i32 : i32 to index
    %c0_69 = arith.constant 0 : index
    %c0_70 = arith.constant 0 : index
    %248 = vector.load %arg8[%247, %c0_69, %c0_70] : memref<16x2x96xf32, #tpu.memory_space<vmem>>, vector<1x2x96xf32>
    %249 = vector.shape_cast %248 : vector<1x2x96xf32> to vector<2x96xf32>
    %250 = arith.index_cast %246 : i32 to index
    %c0_71 = arith.constant 0 : index
    %c0_72 = arith.constant 0 : index
    %251 = vector.load %arg8[%250, %c0_71, %c0_72] : memref<16x2x96xf32, #tpu.memory_space<vmem>>, vector<1x2x96xf32>
    %252 = vector.shape_cast %251 : vector<1x2x96xf32> to vector<2x96xf32>
    %253 = vector.extract_strided_slice %249 {offsets = [0, 0], sizes = [2, 48], strides = [1, 1]} : vector<2x96xf32> to vector<2x48xf32>
    %254 = arith.truncf %206 : vector<2x16xf32> to vector<2x16xbf16>
    %cst_73 = arith.constant dense<0.000000e+00> : vector<2x48xf32>
    %255 = tpu.matmul %254, %10, %cst_73 {dimension_numbers = #tpu.dot_dimension_numbers<[1], [0], [0], [1], [0, 0, 1, 1], [], []>} : vector<2x16xbf16>, vector<16x48xbf16>, vector<2x48xf32> -> vector<2x48xf32>
    %256 = vector.broadcast %12 : vector<1x48xf32> to vector<2x48xf32>
    %257 = arith.addf %255, %256 : vector<2x48xf32>
    %258 = vector.extract_strided_slice %253 {offsets = [0, 0], sizes = [2, 16], strides = [1, 1]} : vector<2x48xf32> to vector<2x16xf32>
    %259 = vector.extract_strided_slice %257 {offsets = [0, 0], sizes = [2, 16], strides = [1, 1]} : vector<2x48xf32> to vector<2x16xf32>
    %260 = arith.addf %258, %259 : vector<2x16xf32>
    %261 = arith.negf %260 : vector<2x16xf32>
    %262 = math.exp %261 : vector<2x16xf32>
    %cst_74 = arith.constant 1.000000e+00 : f32
    %263 = vector.broadcast %cst_74 : f32 to vector<2x16xf32>
    %264 = arith.addf %263, %262 : vector<2x16xf32>
    %265 = arith.divf %263, %264 : vector<2x16xf32>
    %266 = vector.extract_strided_slice %253 {offsets = [0, 16], sizes = [2, 16], strides = [1, 1]} : vector<2x48xf32> to vector<2x16xf32>
    %267 = vector.extract_strided_slice %257 {offsets = [0, 16], sizes = [2, 16], strides = [1, 1]} : vector<2x48xf32> to vector<2x16xf32>
    %268 = arith.addf %266, %267 : vector<2x16xf32>
    %269 = arith.negf %268 : vector<2x16xf32>
    %270 = math.exp %269 : vector<2x16xf32>
    %cst_75 = arith.constant 1.000000e+00 : f32
    %271 = vector.broadcast %cst_75 : f32 to vector<2x16xf32>
    %272 = arith.addf %271, %270 : vector<2x16xf32>
    %273 = arith.divf %271, %272 : vector<2x16xf32>
    %274 = vector.extract_strided_slice %253 {offsets = [0, 32], sizes = [2, 16], strides = [1, 1]} : vector<2x48xf32> to vector<2x16xf32>
    %275 = vector.extract_strided_slice %257 {offsets = [0, 32], sizes = [2, 16], strides = [1, 1]} : vector<2x48xf32> to vector<2x16xf32>
    %276 = arith.mulf %265, %275 : vector<2x16xf32>
    %277 = arith.addf %274, %276 : vector<2x16xf32>
    %278 = math.tanh %277 : vector<2x16xf32>
    %cst_76 = arith.constant 1.000000e+00 : f32
    %279 = vector.broadcast %cst_76 : f32 to vector<2x16xf32>
    %280 = arith.subf %279, %273 : vector<2x16xf32>
    %281 = arith.mulf %280, %278 : vector<2x16xf32>
    %282 = arith.mulf %273, %206 : vector<2x16xf32>
    %283 = arith.addf %281, %282 : vector<2x16xf32>
    %284 = vector.extract_strided_slice %252 {offsets = [0, 48], sizes = [2, 48], strides = [1, 1]} : vector<2x96xf32> to vector<2x48xf32>
    %285 = arith.truncf %237 : vector<2x16xf32> to vector<2x16xbf16>
    %cst_77 = arith.constant dense<0.000000e+00> : vector<2x48xf32>
    %286 = tpu.matmul %285, %11, %cst_77 {dimension_numbers = #tpu.dot_dimension_numbers<[1], [0], [0], [1], [0, 0, 1, 1], [], []>} : vector<2x16xbf16>, vector<16x48xbf16>, vector<2x48xf32> -> vector<2x48xf32>
    %287 = vector.broadcast %13 : vector<1x48xf32> to vector<2x48xf32>
    %288 = arith.addf %286, %287 : vector<2x48xf32>
    %289 = vector.extract_strided_slice %284 {offsets = [0, 0], sizes = [2, 16], strides = [1, 1]} : vector<2x48xf32> to vector<2x16xf32>
    %290 = vector.extract_strided_slice %288 {offsets = [0, 0], sizes = [2, 16], strides = [1, 1]} : vector<2x48xf32> to vector<2x16xf32>
    %291 = arith.addf %289, %290 : vector<2x16xf32>
    %292 = arith.negf %291 : vector<2x16xf32>
    %293 = math.exp %292 : vector<2x16xf32>
    %cst_78 = arith.constant 1.000000e+00 : f32
    %294 = vector.broadcast %cst_78 : f32 to vector<2x16xf32>
    %295 = arith.addf %294, %293 : vector<2x16xf32>
    %296 = arith.divf %294, %295 : vector<2x16xf32>
    %297 = vector.extract_strided_slice %284 {offsets = [0, 16], sizes = [2, 16], strides = [1, 1]} : vector<2x48xf32> to vector<2x16xf32>
    %298 = vector.extract_strided_slice %288 {offsets = [0, 16], sizes = [2, 16], strides = [1, 1]} : vector<2x48xf32> to vector<2x16xf32>
    %299 = arith.addf %297, %298 : vector<2x16xf32>
    %300 = arith.negf %299 : vector<2x16xf32>
    %301 = math.exp %300 : vector<2x16xf32>
    %cst_79 = arith.constant 1.000000e+00 : f32
    %302 = vector.broadcast %cst_79 : f32 to vector<2x16xf32>
    %303 = arith.addf %302, %301 : vector<2x16xf32>
    %304 = arith.divf %302, %303 : vector<2x16xf32>
    %305 = vector.extract_strided_slice %284 {offsets = [0, 32], sizes = [2, 16], strides = [1, 1]} : vector<2x48xf32> to vector<2x16xf32>
    %306 = vector.extract_strided_slice %288 {offsets = [0, 32], sizes = [2, 16], strides = [1, 1]} : vector<2x48xf32> to vector<2x16xf32>
    %307 = arith.mulf %296, %306 : vector<2x16xf32>
    %308 = arith.addf %305, %307 : vector<2x16xf32>
    %309 = math.tanh %308 : vector<2x16xf32>
    %cst_80 = arith.constant 1.000000e+00 : f32
    %310 = vector.broadcast %cst_80 : f32 to vector<2x16xf32>
    %311 = arith.subf %310, %304 : vector<2x16xf32>
    %312 = arith.mulf %311, %309 : vector<2x16xf32>
    %313 = arith.mulf %304, %237 : vector<2x16xf32>
    %314 = arith.addf %312, %313 : vector<2x16xf32>
    %315 = arith.index_cast %c3_i32 : i32 to index
    %c0_81 = arith.constant 0 : index
    %c0_82 = arith.constant 0 : index
    %316 = vector.load %arg9[%315, %c0_81, %c0_82] : memref<16x2x16xf32, #tpu.memory_space<vmem>>, vector<1x2x16xf32>
    %317 = vector.shape_cast %316 : vector<1x2x16xf32> to vector<2x16xf32>
    %318 = vector.shape_cast %283 : vector<2x16xf32> to vector<1x2x16xf32>
    tpu.vector_store %arg9[%315, %c0_81, %c0_82], %318 {strides = array<i32>} : memref<16x2x16xf32, #tpu.memory_space<vmem>>, vector<1x2x16xf32>,
    %319 = arith.index_cast %246 : i32 to index
    %c0_83 = arith.constant 0 : index
    %c0_84 = arith.constant 0 : index
    %320 = vector.load %arg10[%319, %c0_83, %c0_84] : memref<16x2x16xf32, #tpu.memory_space<vmem>>, vector<1x2x16xf32>
    %321 = vector.shape_cast %320 : vector<1x2x16xf32> to vector<2x16xf32>
    %322 = vector.shape_cast %314 : vector<2x16xf32> to vector<1x2x16xf32>
    tpu.vector_store %arg10[%319, %c0_83, %c0_84], %322 {strides = array<i32>} : memref<16x2x16xf32, #tpu.memory_space<vmem>>, vector<1x2x16xf32>,
    %c4_i32 = arith.constant 4 : i32
    %c15_i32_85 = arith.constant 15 : i32
    %323 = arith.subi %c15_i32_85, %c4_i32 : i32
    %324 = arith.index_cast %c4_i32 : i32 to index
    %c0_86 = arith.constant 0 : index
    %c0_87 = arith.constant 0 : index
    %325 = vector.load %arg8[%324, %c0_86, %c0_87] : memref<16x2x96xf32, #tpu.memory_space<vmem>>, vector<1x2x96xf32>
    %326 = vector.shape_cast %325 : vector<1x2x96xf32> to vector<2x96xf32>
    %327 = arith.index_cast %323 : i32 to index
    %c0_88 = arith.constant 0 : index
    %c0_89 = arith.constant 0 : index
    %328 = vector.load %arg8[%327, %c0_88, %c0_89] : memref<16x2x96xf32, #tpu.memory_space<vmem>>, vector<1x2x96xf32>
    %329 = vector.shape_cast %328 : vector<1x2x96xf32> to vector<2x96xf32>
    %330 = vector.extract_strided_slice %326 {offsets = [0, 0], sizes = [2, 48], strides = [1, 1]} : vector<2x96xf32> to vector<2x48xf32>
    %331 = arith.truncf %283 : vector<2x16xf32> to vector<2x16xbf16>
    %cst_90 = arith.constant dense<0.000000e+00> : vector<2x48xf32>
    %332 = tpu.matmul %331, %10, %cst_90 {dimension_numbers = #tpu.dot_dimension_numbers<[1], [0], [0], [1], [0, 0, 1, 1], [], []>} : vector<2x16xbf16>, vector<16x48xbf16>, vector<2x48xf32> -> vector<2x48xf32>
    %333 = vector.broadcast %12 : vector<1x48xf32> to vector<2x48xf32>
    %334 = arith.addf %332, %333 : vector<2x48xf32>
    %335 = vector.extract_strided_slice %330 {offsets = [0, 0], sizes = [2, 16], strides = [1, 1]} : vector<2x48xf32> to vector<2x16xf32>
    %336 = vector.extract_strided_slice %334 {offsets = [0, 0], sizes = [2, 16], strides = [1, 1]} : vector<2x48xf32> to vector<2x16xf32>
    %337 = arith.addf %335, %336 : vector<2x16xf32>
    %338 = arith.negf %337 : vector<2x16xf32>
    %339 = math.exp %338 : vector<2x16xf32>
    %cst_91 = arith.constant 1.000000e+00 : f32
    %340 = vector.broadcast %cst_91 : f32 to vector<2x16xf32>
    %341 = arith.addf %340, %339 : vector<2x16xf32>
    %342 = arith.divf %340, %341 : vector<2x16xf32>
    %343 = vector.extract_strided_slice %330 {offsets = [0, 16], sizes = [2, 16], strides = [1, 1]} : vector<2x48xf32> to vector<2x16xf32>
    %344 = vector.extract_strided_slice %334 {offsets = [0, 16], sizes = [2, 16], strides = [1, 1]} : vector<2x48xf32> to vector<2x16xf32>
    %345 = arith.addf %343, %344 : vector<2x16xf32>
    %346 = arith.negf %345 : vector<2x16xf32>
    %347 = math.exp %346 : vector<2x16xf32>
    %cst_92 = arith.constant 1.000000e+00 : f32
    %348 = vector.broadcast %cst_92 : f32 to vector<2x16xf32>
    %349 = arith.addf %348, %347 : vector<2x16xf32>
    %350 = arith.divf %348, %349 : vector<2x16xf32>
    %351 = vector.extract_strided_slice %330 {offsets = [0, 32], sizes = [2, 16], strides = [1, 1]} : vector<2x48xf32> to vector<2x16xf32>
    %352 = vector.extract_strided_slice %334 {offsets = [0, 32], sizes = [2, 16], strides = [1, 1]} : vector<2x48xf32> to vector<2x16xf32>
    %353 = arith.mulf %342, %352 : vector<2x16xf32>
    %354 = arith.addf %351, %353 : vector<2x16xf32>
    %355 = math.tanh %354 : vector<2x16xf32>
    %cst_93 = arith.constant 1.000000e+00 : f32
    %356 = vector.broadcast %cst_93 : f32 to vector<2x16xf32>
    %357 = arith.subf %356, %350 : vector<2x16xf32>
    %358 = arith.mulf %357, %355 : vector<2x16xf32>
    %359 = arith.mulf %350, %283 : vector<2x16xf32>
    %360 = arith.addf %358, %359 : vector<2x16xf32>
    %361 = vector.extract_strided_slice %329 {offsets = [0, 48], sizes = [2, 48], strides = [1, 1]} : vector<2x96xf32> to vector<2x48xf32>
    %362 = arith.truncf %314 : vector<2x16xf32> to vector<2x16xbf16>
    %cst_94 = arith.constant dense<0.000000e+00> : vector<2x48xf32>
    %363 = tpu.matmul %362, %11, %cst_94 {dimension_numbers = #tpu.dot_dimension_numbers<[1], [0], [0], [1], [0, 0, 1, 1], [], []>} : vector<2x16xbf16>, vector<16x48xbf16>, vector<2x48xf32> -> vector<2x48xf32>
    %364 = vector.broadcast %13 : vector<1x48xf32> to vector<2x48xf32>
    %365 = arith.addf %363, %364 : vector<2x48xf32>
    %366 = vector.extract_strided_slice %361 {offsets = [0, 0], sizes = [2, 16], strides = [1, 1]} : vector<2x48xf32> to vector<2x16xf32>
    %367 = vector.extract_strided_slice %365 {offsets = [0, 0], sizes = [2, 16], strides = [1, 1]} : vector<2x48xf32> to vector<2x16xf32>
    %368 = arith.addf %366, %367 : vector<2x16xf32>
    %369 = arith.negf %368 : vector<2x16xf32>
    %370 = math.exp %369 : vector<2x16xf32>
    %cst_95 = arith.constant 1.000000e+00 : f32
    %371 = vector.broadcast %cst_95 : f32 to vector<2x16xf32>
    %372 = arith.addf %371, %370 : vector<2x16xf32>
    %373 = arith.divf %371, %372 : vector<2x16xf32>
    %374 = vector.extract_strided_slice %361 {offsets = [0, 16], sizes = [2, 16], strides = [1, 1]} : vector<2x48xf32> to vector<2x16xf32>
    %375 = vector.extract_strided_slice %365 {offsets = [0, 16], sizes = [2, 16], strides = [1, 1]} : vector<2x48xf32> to vector<2x16xf32>
    %376 = arith.addf %374, %375 : vector<2x16xf32>
    %377 = arith.negf %376 : vector<2x16xf32>
    %378 = math.exp %377 : vector<2x16xf32>
    %cst_96 = arith.constant 1.000000e+00 : f32
    %379 = vector.broadcast %cst_96 : f32 to vector<2x16xf32>
    %380 = arith.addf %379, %378 : vector<2x16xf32>
    %381 = arith.divf %379, %380 : vector<2x16xf32>
    %382 = vector.extract_strided_slice %361 {offsets = [0, 32], sizes = [2, 16], strides = [1, 1]} : vector<2x48xf32> to vector<2x16xf32>
    %383 = vector.extract_strided_slice %365 {offsets = [0, 32], sizes = [2, 16], strides = [1, 1]} : vector<2x48xf32> to vector<2x16xf32>
    %384 = arith.mulf %373, %383 : vector<2x16xf32>
    %385 = arith.addf %382, %384 : vector<2x16xf32>
    %386 = math.tanh %385 : vector<2x16xf32>
    %cst_97 = arith.constant 1.000000e+00 : f32
    %387 = vector.broadcast %cst_97 : f32 to vector<2x16xf32>
    %388 = arith.subf %387, %381 : vector<2x16xf32>
    %389 = arith.mulf %388, %386 : vector<2x16xf32>
    %390 = arith.mulf %381, %314 : vector<2x16xf32>
    %391 = arith.addf %389, %390 : vector<2x16xf32>
    %392 = arith.index_cast %c4_i32 : i32 to index
    %c0_98 = arith.constant 0 : index
    %c0_99 = arith.constant 0 : index
    %393 = vector.load %arg9[%392, %c0_98, %c0_99] : memref<16x2x16xf32, #tpu.memory_space<vmem>>, vector<1x2x16xf32>
    %394 = vector.shape_cast %393 : vector<1x2x16xf32> to vector<2x16xf32>
    %395 = vector.shape_cast %360 : vector<2x16xf32> to vector<1x2x16xf32>
    tpu.vector_store %arg9[%392, %c0_98, %c0_99], %395 {strides = array<i32>} : memref<16x2x16xf32, #tpu.memory_space<vmem>>, vector<1x2x16xf32>,
    %396 = arith.index_cast %323 : i32 to index
    %c0_100 = arith.constant 0 : index
    %c0_101 = arith.constant 0 : index
    %397 = vector.load %arg10[%396, %c0_100, %c0_101] : memref<16x2x16xf32, #tpu.memory_space<vmem>>, vector<1x2x16xf32>
    %398 = vector.shape_cast %397 : vector<1x2x16xf32> to vector<2x16xf32>
    %399 = vector.shape_cast %391 : vector<2x16xf32> to vector<1x2x16xf32>
    tpu.vector_store %arg10[%396, %c0_100, %c0_101], %399 {strides = array<i32>} : memref<16x2x16xf32, #tpu.memory_space<vmem>>, vector<1x2x16xf32>,
    %c5_i32 = arith.constant 5 : i32
    %c15_i32_102 = arith.constant 15 : i32
    %400 = arith.subi %c15_i32_102, %c5_i32 : i32
    %401 = arith.index_cast %c5_i32 : i32 to index
    %c0_103 = arith.constant 0 : index
    %c0_104 = arith.constant 0 : index
    %402 = vector.load %arg8[%401, %c0_103, %c0_104] : memref<16x2x96xf32, #tpu.memory_space<vmem>>, vector<1x2x96xf32>
    %403 = vector.shape_cast %402 : vector<1x2x96xf32> to vector<2x96xf32>
    %404 = arith.index_cast %400 : i32 to index
    %c0_105 = arith.constant 0 : index
    %c0_106 = arith.constant 0 : index
    %405 = vector.load %arg8[%404, %c0_105, %c0_106] : memref<16x2x96xf32, #tpu.memory_space<vmem>>, vector<1x2x96xf32>
    %406 = vector.shape_cast %405 : vector<1x2x96xf32> to vector<2x96xf32>
    %407 = vector.extract_strided_slice %403 {offsets = [0, 0], sizes = [2, 48], strides = [1, 1]} : vector<2x96xf32> to vector<2x48xf32>
    %408 = arith.truncf %360 : vector<2x16xf32> to vector<2x16xbf16>
    %cst_107 = arith.constant dense<0.000000e+00> : vector<2x48xf32>
    %409 = tpu.matmul %408, %10, %cst_107 {dimension_numbers = #tpu.dot_dimension_numbers<[1], [0], [0], [1], [0, 0, 1, 1], [], []>} : vector<2x16xbf16>, vector<16x48xbf16>, vector<2x48xf32> -> vector<2x48xf32>
    %410 = vector.broadcast %12 : vector<1x48xf32> to vector<2x48xf32>
    %411 = arith.addf %409, %410 : vector<2x48xf32>
    %412 = vector.extract_strided_slice %407 {offsets = [0, 0], sizes = [2, 16], strides = [1, 1]} : vector<2x48xf32> to vector<2x16xf32>
    %413 = vector.extract_strided_slice %411 {offsets = [0, 0], sizes = [2, 16], strides = [1, 1]} : vector<2x48xf32> to vector<2x16xf32>
    %414 = arith.addf %412, %413 : vector<2x16xf32>
    %415 = arith.negf %414 : vector<2x16xf32>
    %416 = math.exp %415 : vector<2x16xf32>
    %cst_108 = arith.constant 1.000000e+00 : f32
    %417 = vector.broadcast %cst_108 : f32 to vector<2x16xf32>
    %418 = arith.addf %417, %416 : vector<2x16xf32>
    %419 = arith.divf %417, %418 : vector<2x16xf32>
    %420 = vector.extract_strided_slice %407 {offsets = [0, 16], sizes = [2, 16], strides = [1, 1]} : vector<2x48xf32> to vector<2x16xf32>
    %421 = vector.extract_strided_slice %411 {offsets = [0, 16], sizes = [2, 16], strides = [1, 1]} : vector<2x48xf32> to vector<2x16xf32>
    %422 = arith.addf %420, %421 : vector<2x16xf32>
    %423 = arith.negf %422 : vector<2x16xf32>
    %424 = math.exp %423 : vector<2x16xf32>
    %cst_109 = arith.constant 1.000000e+00 : f32
    %425 = vector.broadcast %cst_109 : f32 to vector<2x16xf32>
    %426 = arith.addf %425, %424 : vector<2x16xf32>
    %427 = arith.divf %425, %426 : vector<2x16xf32>
    %428 = vector.extract_strided_slice %407 {offsets = [0, 32], sizes = [2, 16], strides = [1, 1]} : vector<2x48xf32> to vector<2x16xf32>
    %429 = vector.extract_strided_slice %411 {offsets = [0, 32], sizes = [2, 16], strides = [1, 1]} : vector<2x48xf32> to vector<2x16xf32>
    %430 = arith.mulf %419, %429 : vector<2x16xf32>
    %431 = arith.addf %428, %430 : vector<2x16xf32>
    %432 = math.tanh %431 : vector<2x16xf32>
    %cst_110 = arith.constant 1.000000e+00 : f32
    %433 = vector.broadcast %cst_110 : f32 to vector<2x16xf32>
    %434 = arith.subf %433, %427 : vector<2x16xf32>
    %435 = arith.mulf %434, %432 : vector<2x16xf32>
    %436 = arith.mulf %427, %360 : vector<2x16xf32>
    %437 = arith.addf %435, %436 : vector<2x16xf32>
    %438 = vector.extract_strided_slice %406 {offsets = [0, 48], sizes = [2, 48], strides = [1, 1]} : vector<2x96xf32> to vector<2x48xf32>
    %439 = arith.truncf %391 : vector<2x16xf32> to vector<2x16xbf16>
    %cst_111 = arith.constant dense<0.000000e+00> : vector<2x48xf32>
    %440 = tpu.matmul %439, %11, %cst_111 {dimension_numbers = #tpu.dot_dimension_numbers<[1], [0], [0], [1], [0, 0, 1, 1], [], []>} : vector<2x16xbf16>, vector<16x48xbf16>, vector<2x48xf32> -> vector<2x48xf32>
    %441 = vector.broadcast %13 : vector<1x48xf32> to vector<2x48xf32>
    %442 = arith.addf %440, %441 : vector<2x48xf32>
    %443 = vector.extract_strided_slice %438 {offsets = [0, 0], sizes = [2, 16], strides = [1, 1]} : vector<2x48xf32> to vector<2x16xf32>
    %444 = vector.extract_strided_slice %442 {offsets = [0, 0], sizes = [2, 16], strides = [1, 1]} : vector<2x48xf32> to vector<2x16xf32>
    %445 = arith.addf %443, %444 : vector<2x16xf32>
    %446 = arith.negf %445 : vector<2x16xf32>
    %447 = math.exp %446 : vector<2x16xf32>
    %cst_112 = arith.constant 1.000000e+00 : f32
    %448 = vector.broadcast %cst_112 : f32 to vector<2x16xf32>
    %449 = arith.addf %448, %447 : vector<2x16xf32>
    %450 = arith.divf %448, %449 : vector<2x16xf32>
    %451 = vector.extract_strided_slice %438 {offsets = [0, 16], sizes = [2, 16], strides = [1, 1]} : vector<2x48xf32> to vector<2x16xf32>
    %452 = vector.extract_strided_slice %442 {offsets = [0, 16], sizes = [2, 16], strides = [1, 1]} : vector<2x48xf32> to vector<2x16xf32>
    %453 = arith.addf %451, %452 : vector<2x16xf32>
    %454 = arith.negf %453 : vector<2x16xf32>
    %455 = math.exp %454 : vector<2x16xf32>
    %cst_113 = arith.constant 1.000000e+00 : f32
    %456 = vector.broadcast %cst_113 : f32 to vector<2x16xf32>
    %457 = arith.addf %456, %455 : vector<2x16xf32>
    %458 = arith.divf %456, %457 : vector<2x16xf32>
    %459 = vector.extract_strided_slice %438 {offsets = [0, 32], sizes = [2, 16], strides = [1, 1]} : vector<2x48xf32> to vector<2x16xf32>
    %460 = vector.extract_strided_slice %442 {offsets = [0, 32], sizes = [2, 16], strides = [1, 1]} : vector<2x48xf32> to vector<2x16xf32>
    %461 = arith.mulf %450, %460 : vector<2x16xf32>
    %462 = arith.addf %459, %461 : vector<2x16xf32>
    %463 = math.tanh %462 : vector<2x16xf32>
    %cst_114 = arith.constant 1.000000e+00 : f32
    %464 = vector.broadcast %cst_114 : f32 to vector<2x16xf32>
    %465 = arith.subf %464, %458 : vector<2x16xf32>
    %466 = arith.mulf %465, %463 : vector<2x16xf32>
    %467 = arith.mulf %458, %391 : vector<2x16xf32>
    %468 = arith.addf %466, %467 : vector<2x16xf32>
    %469 = arith.index_cast %c5_i32 : i32 to index
    %c0_115 = arith.constant 0 : index
    %c0_116 = arith.constant 0 : index
    %470 = vector.load %arg9[%469, %c0_115, %c0_116] : memref<16x2x16xf32, #tpu.memory_space<vmem>>, vector<1x2x16xf32>
    %471 = vector.shape_cast %470 : vector<1x2x16xf32> to vector<2x16xf32>
    %472 = vector.shape_cast %437 : vector<2x16xf32> to vector<1x2x16xf32>
    tpu.vector_store %arg9[%469, %c0_115, %c0_116], %472 {strides = array<i32>} : memref<16x2x16xf32, #tpu.memory_space<vmem>>, vector<1x2x16xf32>,
    %473 = arith.index_cast %400 : i32 to index
    %c0_117 = arith.constant 0 : index
    %c0_118 = arith.constant 0 : index
    %474 = vector.load %arg10[%473, %c0_117, %c0_118] : memref<16x2x16xf32, #tpu.memory_space<vmem>>, vector<1x2x16xf32>
    %475 = vector.shape_cast %474 : vector<1x2x16xf32> to vector<2x16xf32>
    %476 = vector.shape_cast %468 : vector<2x16xf32> to vector<1x2x16xf32>
    tpu.vector_store %arg10[%473, %c0_117, %c0_118], %476 {strides = array<i32>} : memref<16x2x16xf32, #tpu.memory_space<vmem>>, vector<1x2x16xf32>,
    %c6_i32 = arith.constant 6 : i32
    %c15_i32_119 = arith.constant 15 : i32
    %477 = arith.subi %c15_i32_119, %c6_i32 : i32
    %478 = arith.index_cast %c6_i32 : i32 to index
    %c0_120 = arith.constant 0 : index
    %c0_121 = arith.constant 0 : index
    %479 = vector.load %arg8[%478, %c0_120, %c0_121] : memref<16x2x96xf32, #tpu.memory_space<vmem>>, vector<1x2x96xf32>
    %480 = vector.shape_cast %479 : vector<1x2x96xf32> to vector<2x96xf32>
    %481 = arith.index_cast %477 : i32 to index
    %c0_122 = arith.constant 0 : index
    %c0_123 = arith.constant 0 : index
    %482 = vector.load %arg8[%481, %c0_122, %c0_123] : memref<16x2x96xf32, #tpu.memory_space<vmem>>, vector<1x2x96xf32>
    %483 = vector.shape_cast %482 : vector<1x2x96xf32> to vector<2x96xf32>
    %484 = vector.extract_strided_slice %480 {offsets = [0, 0], sizes = [2, 48], strides = [1, 1]} : vector<2x96xf32> to vector<2x48xf32>
    %485 = arith.truncf %437 : vector<2x16xf32> to vector<2x16xbf16>
    %cst_124 = arith.constant dense<0.000000e+00> : vector<2x48xf32>
    %486 = tpu.matmul %485, %10, %cst_124 {dimension_numbers = #tpu.dot_dimension_numbers<[1], [0], [0], [1], [0, 0, 1, 1], [], []>} : vector<2x16xbf16>, vector<16x48xbf16>, vector<2x48xf32> -> vector<2x48xf32>
    %487 = vector.broadcast %12 : vector<1x48xf32> to vector<2x48xf32>
    %488 = arith.addf %486, %487 : vector<2x48xf32>
    %489 = vector.extract_strided_slice %484 {offsets = [0, 0], sizes = [2, 16], strides = [1, 1]} : vector<2x48xf32> to vector<2x16xf32>
    %490 = vector.extract_strided_slice %488 {offsets = [0, 0], sizes = [2, 16], strides = [1, 1]} : vector<2x48xf32> to vector<2x16xf32>
    %491 = arith.addf %489, %490 : vector<2x16xf32>
    %492 = arith.negf %491 : vector<2x16xf32>
    %493 = math.exp %492 : vector<2x16xf32>
    %cst_125 = arith.constant 1.000000e+00 : f32
    %494 = vector.broadcast %cst_125 : f32 to vector<2x16xf32>
    %495 = arith.addf %494, %493 : vector<2x16xf32>
    %496 = arith.divf %494, %495 : vector<2x16xf32>
    %497 = vector.extract_strided_slice %484 {offsets = [0, 16], sizes = [2, 16], strides = [1, 1]} : vector<2x48xf32> to vector<2x16xf32>
    %498 = vector.extract_strided_slice %488 {offsets = [0, 16], sizes = [2, 16], strides = [1, 1]} : vector<2x48xf32> to vector<2x16xf32>
    %499 = arith.addf %497, %498 : vector<2x16xf32>
    %500 = arith.negf %499 : vector<2x16xf32>
    %501 = math.exp %500 : vector<2x16xf32>
    %cst_126 = arith.constant 1.000000e+00 : f32
    %502 = vector.broadcast %cst_126 : f32 to vector<2x16xf32>
    %503 = arith.addf %502, %501 : vector<2x16xf32>
    %504 = arith.divf %502, %503 : vector<2x16xf32>
    %505 = vector.extract_strided_slice %484 {offsets = [0, 32], sizes = [2, 16], strides = [1, 1]} : vector<2x48xf32> to vector<2x16xf32>
    %506 = vector.extract_strided_slice %488 {offsets = [0, 32], sizes = [2, 16], strides = [1, 1]} : vector<2x48xf32> to vector<2x16xf32>
    %507 = arith.mulf %496, %506 : vector<2x16xf32>
    %508 = arith.addf %505, %507 : vector<2x16xf32>
    %509 = math.tanh %508 : vector<2x16xf32>
    %cst_127 = arith.constant 1.000000e+00 : f32
    %510 = vector.broadcast %cst_127 : f32 to vector<2x16xf32>
    %511 = arith.subf %510, %504 : vector<2x16xf32>
    %512 = arith.mulf %511, %509 : vector<2x16xf32>
    %513 = arith.mulf %504, %437 : vector<2x16xf32>
    %514 = arith.addf %512, %513 : vector<2x16xf32>
    %515 = vector.extract_strided_slice %483 {offsets = [0, 48], sizes = [2, 48], strides = [1, 1]} : vector<2x96xf32> to vector<2x48xf32>
    %516 = arith.truncf %468 : vector<2x16xf32> to vector<2x16xbf16>
    %cst_128 = arith.constant dense<0.000000e+00> : vector<2x48xf32>
    %517 = tpu.matmul %516, %11, %cst_128 {dimension_numbers = #tpu.dot_dimension_numbers<[1], [0], [0], [1], [0, 0, 1, 1], [], []>} : vector<2x16xbf16>, vector<16x48xbf16>, vector<2x48xf32> -> vector<2x48xf32>
    %518 = vector.broadcast %13 : vector<1x48xf32> to vector<2x48xf32>
    %519 = arith.addf %517, %518 : vector<2x48xf32>
    %520 = vector.extract_strided_slice %515 {offsets = [0, 0], sizes = [2, 16], strides = [1, 1]} : vector<2x48xf32> to vector<2x16xf32>
    %521 = vector.extract_strided_slice %519 {offsets = [0, 0], sizes = [2, 16], strides = [1, 1]} : vector<2x48xf32> to vector<2x16xf32>
    %522 = arith.addf %520, %521 : vector<2x16xf32>
    %523 = arith.negf %522 : vector<2x16xf32>
    %524 = math.exp %523 : vector<2x16xf32>
    %cst_129 = arith.constant 1.000000e+00 : f32
    %525 = vector.broadcast %cst_129 : f32 to vector<2x16xf32>
    %526 = arith.addf %525, %524 : vector<2x16xf32>
    %527 = arith.divf %525, %526 : vector<2x16xf32>
    %528 = vector.extract_strided_slice %515 {offsets = [0, 16], sizes = [2, 16], strides = [1, 1]} : vector<2x48xf32> to vector<2x16xf32>
    %529 = vector.extract_strided_slice %519 {offsets = [0, 16], sizes = [2, 16], strides = [1, 1]} : vector<2x48xf32> to vector<2x16xf32>
    %530 = arith.addf %528, %529 : vector<2x16xf32>
    %531 = arith.negf %530 : vector<2x16xf32>
    %532 = math.exp %531 : vector<2x16xf32>
    %cst_130 = arith.constant 1.000000e+00 : f32
    %533 = vector.broadcast %cst_130 : f32 to vector<2x16xf32>
    %534 = arith.addf %533, %532 : vector<2x16xf32>
    %535 = arith.divf %533, %534 : vector<2x16xf32>
    %536 = vector.extract_strided_slice %515 {offsets = [0, 32], sizes = [2, 16], strides = [1, 1]} : vector<2x48xf32> to vector<2x16xf32>
    %537 = vector.extract_strided_slice %519 {offsets = [0, 32], sizes = [2, 16], strides = [1, 1]} : vector<2x48xf32> to vector<2x16xf32>
    %538 = arith.mulf %527, %537 : vector<2x16xf32>
    %539 = arith.addf %536, %538 : vector<2x16xf32>
    %540 = math.tanh %539 : vector<2x16xf32>
    %cst_131 = arith.constant 1.000000e+00 : f32
    %541 = vector.broadcast %cst_131 : f32 to vector<2x16xf32>
    %542 = arith.subf %541, %535 : vector<2x16xf32>
    %543 = arith.mulf %542, %540 : vector<2x16xf32>
    %544 = arith.mulf %535, %468 : vector<2x16xf32>
    %545 = arith.addf %543, %544 : vector<2x16xf32>
    %546 = arith.index_cast %c6_i32 : i32 to index
    %c0_132 = arith.constant 0 : index
    %c0_133 = arith.constant 0 : index
    %547 = vector.load %arg9[%546, %c0_132, %c0_133] : memref<16x2x16xf32, #tpu.memory_space<vmem>>, vector<1x2x16xf32>
    %548 = vector.shape_cast %547 : vector<1x2x16xf32> to vector<2x16xf32>
    %549 = vector.shape_cast %514 : vector<2x16xf32> to vector<1x2x16xf32>
    tpu.vector_store %arg9[%546, %c0_132, %c0_133], %549 {strides = array<i32>} : memref<16x2x16xf32, #tpu.memory_space<vmem>>, vector<1x2x16xf32>,
    %550 = arith.index_cast %477 : i32 to index
    %c0_134 = arith.constant 0 : index
    %c0_135 = arith.constant 0 : index
    %551 = vector.load %arg10[%550, %c0_134, %c0_135] : memref<16x2x16xf32, #tpu.memory_space<vmem>>, vector<1x2x16xf32>
    %552 = vector.shape_cast %551 : vector<1x2x16xf32> to vector<2x16xf32>
    %553 = vector.shape_cast %545 : vector<2x16xf32> to vector<1x2x16xf32>
    tpu.vector_store %arg10[%550, %c0_134, %c0_135], %553 {strides = array<i32>} : memref<16x2x16xf32, #tpu.memory_space<vmem>>, vector<1x2x16xf32>,
    %c7_i32 = arith.constant 7 : i32
    %c15_i32_136 = arith.constant 15 : i32
    %554 = arith.subi %c15_i32_136, %c7_i32 : i32
    %555 = arith.index_cast %c7_i32 : i32 to index
    %c0_137 = arith.constant 0 : index
    %c0_138 = arith.constant 0 : index
    %556 = vector.load %arg8[%555, %c0_137, %c0_138] : memref<16x2x96xf32, #tpu.memory_space<vmem>>, vector<1x2x96xf32>
    %557 = vector.shape_cast %556 : vector<1x2x96xf32> to vector<2x96xf32>
    %558 = arith.index_cast %554 : i32 to index
    %c0_139 = arith.constant 0 : index
    %c0_140 = arith.constant 0 : index
    %559 = vector.load %arg8[%558, %c0_139, %c0_140] : memref<16x2x96xf32, #tpu.memory_space<vmem>>, vector<1x2x96xf32>
    %560 = vector.shape_cast %559 : vector<1x2x96xf32> to vector<2x96xf32>
    %561 = vector.extract_strided_slice %557 {offsets = [0, 0], sizes = [2, 48], strides = [1, 1]} : vector<2x96xf32> to vector<2x48xf32>
    %562 = arith.truncf %514 : vector<2x16xf32> to vector<2x16xbf16>
    %cst_141 = arith.constant dense<0.000000e+00> : vector<2x48xf32>
    %563 = tpu.matmul %562, %10, %cst_141 {dimension_numbers = #tpu.dot_dimension_numbers<[1], [0], [0], [1], [0, 0, 1, 1], [], []>} : vector<2x16xbf16>, vector<16x48xbf16>, vector<2x48xf32> -> vector<2x48xf32>
    %564 = vector.broadcast %12 : vector<1x48xf32> to vector<2x48xf32>
    %565 = arith.addf %563, %564 : vector<2x48xf32>
    %566 = vector.extract_strided_slice %561 {offsets = [0, 0], sizes = [2, 16], strides = [1, 1]} : vector<2x48xf32> to vector<2x16xf32>
    %567 = vector.extract_strided_slice %565 {offsets = [0, 0], sizes = [2, 16], strides = [1, 1]} : vector<2x48xf32> to vector<2x16xf32>
    %568 = arith.addf %566, %567 : vector<2x16xf32>
    %569 = arith.negf %568 : vector<2x16xf32>
    %570 = math.exp %569 : vector<2x16xf32>
    %cst_142 = arith.constant 1.000000e+00 : f32
    %571 = vector.broadcast %cst_142 : f32 to vector<2x16xf32>
    %572 = arith.addf %571, %570 : vector<2x16xf32>
    %573 = arith.divf %571, %572 : vector<2x16xf32>
    %574 = vector.extract_strided_slice %561 {offsets = [0, 16], sizes = [2, 16], strides = [1, 1]} : vector<2x48xf32> to vector<2x16xf32>
    %575 = vector.extract_strided_slice %565 {offsets = [0, 16], sizes = [2, 16], strides = [1, 1]} : vector<2x48xf32> to vector<2x16xf32>
    %576 = arith.addf %574, %575 : vector<2x16xf32>
    %577 = arith.negf %576 : vector<2x16xf32>
    %578 = math.exp %577 : vector<2x16xf32>
    %cst_143 = arith.constant 1.000000e+00 : f32
    %579 = vector.broadcast %cst_143 : f32 to vector<2x16xf32>
    %580 = arith.addf %579, %578 : vector<2x16xf32>
    %581 = arith.divf %579, %580 : vector<2x16xf32>
    %582 = vector.extract_strided_slice %561 {offsets = [0, 32], sizes = [2, 16], strides = [1, 1]} : vector<2x48xf32> to vector<2x16xf32>
    %583 = vector.extract_strided_slice %565 {offsets = [0, 32], sizes = [2, 16], strides = [1, 1]} : vector<2x48xf32> to vector<2x16xf32>
    %584 = arith.mulf %573, %583 : vector<2x16xf32>
    %585 = arith.addf %582, %584 : vector<2x16xf32>
    %586 = math.tanh %585 : vector<2x16xf32>
    %cst_144 = arith.constant 1.000000e+00 : f32
    %587 = vector.broadcast %cst_144 : f32 to vector<2x16xf32>
    %588 = arith.subf %587, %581 : vector<2x16xf32>
    %589 = arith.mulf %588, %586 : vector<2x16xf32>
    %590 = arith.mulf %581, %514 : vector<2x16xf32>
    %591 = arith.addf %589, %590 : vector<2x16xf32>
    %592 = vector.extract_strided_slice %560 {offsets = [0, 48], sizes = [2, 48], strides = [1, 1]} : vector<2x96xf32> to vector<2x48xf32>
    %593 = arith.truncf %545 : vector<2x16xf32> to vector<2x16xbf16>
    %cst_145 = arith.constant dense<0.000000e+00> : vector<2x48xf32>
    %594 = tpu.matmul %593, %11, %cst_145 {dimension_numbers = #tpu.dot_dimension_numbers<[1], [0], [0], [1], [0, 0, 1, 1], [], []>} : vector<2x16xbf16>, vector<16x48xbf16>, vector<2x48xf32> -> vector<2x48xf32>
    %595 = vector.broadcast %13 : vector<1x48xf32> to vector<2x48xf32>
    %596 = arith.addf %594, %595 : vector<2x48xf32>
    %597 = vector.extract_strided_slice %592 {offsets = [0, 0], sizes = [2, 16], strides = [1, 1]} : vector<2x48xf32> to vector<2x16xf32>
    %598 = vector.extract_strided_slice %596 {offsets = [0, 0], sizes = [2, 16], strides = [1, 1]} : vector<2x48xf32> to vector<2x16xf32>
    %599 = arith.addf %597, %598 : vector<2x16xf32>
    %600 = arith.negf %599 : vector<2x16xf32>
    %601 = math.exp %600 : vector<2x16xf32>
    %cst_146 = arith.constant 1.000000e+00 : f32
    %602 = vector.broadcast %cst_146 : f32 to vector<2x16xf32>
    %603 = arith.addf %602, %601 : vector<2x16xf32>
    %604 = arith.divf %602, %603 : vector<2x16xf32>
    %605 = vector.extract_strided_slice %592 {offsets = [0, 16], sizes = [2, 16], strides = [1, 1]} : vector<2x48xf32> to vector<2x16xf32>
    %606 = vector.extract_strided_slice %596 {offsets = [0, 16], sizes = [2, 16], strides = [1, 1]} : vector<2x48xf32> to vector<2x16xf32>
    %607 = arith.addf %605, %606 : vector<2x16xf32>
    %608 = arith.negf %607 : vector<2x16xf32>
    %609 = math.exp %608 : vector<2x16xf32>
    %cst_147 = arith.constant 1.000000e+00 : f32
    %610 = vector.broadcast %cst_147 : f32 to vector<2x16xf32>
    %611 = arith.addf %610, %609 : vector<2x16xf32>
    %612 = arith.divf %610, %611 : vector<2x16xf32>
    %613 = vector.extract_strided_slice %592 {offsets = [0, 32], sizes = [2, 16], strides = [1, 1]} : vector<2x48xf32> to vector<2x16xf32>
    %614 = vector.extract_strided_slice %596 {offsets = [0, 32], sizes = [2, 16], strides = [1, 1]} : vector<2x48xf32> to vector<2x16xf32>
    %615 = arith.mulf %604, %614 : vector<2x16xf32>
    %616 = arith.addf %613, %615 : vector<2x16xf32>
    %617 = math.tanh %616 : vector<2x16xf32>
    %cst_148 = arith.constant 1.000000e+00 : f32
    %618 = vector.broadcast %cst_148 : f32 to vector<2x16xf32>
    %619 = arith.subf %618, %612 : vector<2x16xf32>
    %620 = arith.mulf %619, %617 : vector<2x16xf32>
    %621 = arith.mulf %612, %545 : vector<2x16xf32>
    %622 = arith.addf %620, %621 : vector<2x16xf32>
    %623 = arith.index_cast %c7_i32 : i32 to index
    %c0_149 = arith.constant 0 : index
    %c0_150 = arith.constant 0 : index
    %624 = vector.load %arg9[%623, %c0_149, %c0_150] : memref<16x2x16xf32, #tpu.memory_space<vmem>>, vector<1x2x16xf32>
    %625 = vector.shape_cast %624 : vector<1x2x16xf32> to vector<2x16xf32>
    %626 = vector.shape_cast %591 : vector<2x16xf32> to vector<1x2x16xf32>
    tpu.vector_store %arg9[%623, %c0_149, %c0_150], %626 {strides = array<i32>} : memref<16x2x16xf32, #tpu.memory_space<vmem>>, vector<1x2x16xf32>,
    %627 = arith.index_cast %554 : i32 to index
    %c0_151 = arith.constant 0 : index
    %c0_152 = arith.constant 0 : index
    %628 = vector.load %arg10[%627, %c0_151, %c0_152] : memref<16x2x16xf32, #tpu.memory_space<vmem>>, vector<1x2x16xf32>
    %629 = vector.shape_cast %628 : vector<1x2x16xf32> to vector<2x16xf32>
    %630 = vector.shape_cast %622 : vector<2x16xf32> to vector<1x2x16xf32>
    tpu.vector_store %arg10[%627, %c0_151, %c0_152], %630 {strides = array<i32>} : memref<16x2x16xf32, #tpu.memory_space<vmem>>, vector<1x2x16xf32>,
    %c8_i32 = arith.constant 8 : i32
    %c15_i32_153 = arith.constant 15 : i32
    %631 = arith.subi %c15_i32_153, %c8_i32 : i32
    %632 = arith.index_cast %c8_i32 : i32 to index
    %c0_154 = arith.constant 0 : index
    %c0_155 = arith.constant 0 : index
    %633 = vector.load %arg8[%632, %c0_154, %c0_155] : memref<16x2x96xf32, #tpu.memory_space<vmem>>, vector<1x2x96xf32>
    %634 = vector.shape_cast %633 : vector<1x2x96xf32> to vector<2x96xf32>
    %635 = arith.index_cast %631 : i32 to index
    %c0_156 = arith.constant 0 : index
    %c0_157 = arith.constant 0 : index
    %636 = vector.load %arg8[%635, %c0_156, %c0_157] : memref<16x2x96xf32, #tpu.memory_space<vmem>>, vector<1x2x96xf32>
    %637 = vector.shape_cast %636 : vector<1x2x96xf32> to vector<2x96xf32>
    %638 = vector.extract_strided_slice %634 {offsets = [0, 0], sizes = [2, 48], strides = [1, 1]} : vector<2x96xf32> to vector<2x48xf32>
    %639 = arith.truncf %591 : vector<2x16xf32> to vector<2x16xbf16>
    %cst_158 = arith.constant dense<0.000000e+00> : vector<2x48xf32>
    %640 = tpu.matmul %639, %10, %cst_158 {dimension_numbers = #tpu.dot_dimension_numbers<[1], [0], [0], [1], [0, 0, 1, 1], [], []>} : vector<2x16xbf16>, vector<16x48xbf16>, vector<2x48xf32> -> vector<2x48xf32>
    %641 = vector.broadcast %12 : vector<1x48xf32> to vector<2x48xf32>
    %642 = arith.addf %640, %641 : vector<2x48xf32>
    %643 = vector.extract_strided_slice %638 {offsets = [0, 0], sizes = [2, 16], strides = [1, 1]} : vector<2x48xf32> to vector<2x16xf32>
    %644 = vector.extract_strided_slice %642 {offsets = [0, 0], sizes = [2, 16], strides = [1, 1]} : vector<2x48xf32> to vector<2x16xf32>
    %645 = arith.addf %643, %644 : vector<2x16xf32>
    %646 = arith.negf %645 : vector<2x16xf32>
    %647 = math.exp %646 : vector<2x16xf32>
    %cst_159 = arith.constant 1.000000e+00 : f32
    %648 = vector.broadcast %cst_159 : f32 to vector<2x16xf32>
    %649 = arith.addf %648, %647 : vector<2x16xf32>
    %650 = arith.divf %648, %649 : vector<2x16xf32>
    %651 = vector.extract_strided_slice %638 {offsets = [0, 16], sizes = [2, 16], strides = [1, 1]} : vector<2x48xf32> to vector<2x16xf32>
    %652 = vector.extract_strided_slice %642 {offsets = [0, 16], sizes = [2, 16], strides = [1, 1]} : vector<2x48xf32> to vector<2x16xf32>
    %653 = arith.addf %651, %652 : vector<2x16xf32>
    %654 = arith.negf %653 : vector<2x16xf32>
    %655 = math.exp %654 : vector<2x16xf32>
    %cst_160 = arith.constant 1.000000e+00 : f32
    %656 = vector.broadcast %cst_160 : f32 to vector<2x16xf32>
    %657 = arith.addf %656, %655 : vector<2x16xf32>
    %658 = arith.divf %656, %657 : vector<2x16xf32>
    %659 = vector.extract_strided_slice %638 {offsets = [0, 32], sizes = [2, 16], strides = [1, 1]} : vector<2x48xf32> to vector<2x16xf32>
    %660 = vector.extract_strided_slice %642 {offsets = [0, 32], sizes = [2, 16], strides = [1, 1]} : vector<2x48xf32> to vector<2x16xf32>
    %661 = arith.mulf %650, %660 : vector<2x16xf32>
    %662 = arith.addf %659, %661 : vector<2x16xf32>
    %663 = math.tanh %662 : vector<2x16xf32>
    %cst_161 = arith.constant 1.000000e+00 : f32
    %664 = vector.broadcast %cst_161 : f32 to vector<2x16xf32>
    %665 = arith.subf %664, %658 : vector<2x16xf32>
    %666 = arith.mulf %665, %663 : vector<2x16xf32>
    %667 = arith.mulf %658, %591 : vector<2x16xf32>
    %668 = arith.addf %666, %667 : vector<2x16xf32>
    %669 = vector.extract_strided_slice %637 {offsets = [0, 48], sizes = [2, 48], strides = [1, 1]} : vector<2x96xf32> to vector<2x48xf32>
    %670 = arith.truncf %622 : vector<2x16xf32> to vector<2x16xbf16>
    %cst_162 = arith.constant dense<0.000000e+00> : vector<2x48xf32>
    %671 = tpu.matmul %670, %11, %cst_162 {dimension_numbers = #tpu.dot_dimension_numbers<[1], [0], [0], [1], [0, 0, 1, 1], [], []>} : vector<2x16xbf16>, vector<16x48xbf16>, vector<2x48xf32> -> vector<2x48xf32>
    %672 = vector.broadcast %13 : vector<1x48xf32> to vector<2x48xf32>
    %673 = arith.addf %671, %672 : vector<2x48xf32>
    %674 = vector.extract_strided_slice %669 {offsets = [0, 0], sizes = [2, 16], strides = [1, 1]} : vector<2x48xf32> to vector<2x16xf32>
    %675 = vector.extract_strided_slice %673 {offsets = [0, 0], sizes = [2, 16], strides = [1, 1]} : vector<2x48xf32> to vector<2x16xf32>
    %676 = arith.addf %674, %675 : vector<2x16xf32>
    %677 = arith.negf %676 : vector<2x16xf32>
    %678 = math.exp %677 : vector<2x16xf32>
    %cst_163 = arith.constant 1.000000e+00 : f32
    %679 = vector.broadcast %cst_163 : f32 to vector<2x16xf32>
    %680 = arith.addf %679, %678 : vector<2x16xf32>
    %681 = arith.divf %679, %680 : vector<2x16xf32>
    %682 = vector.extract_strided_slice %669 {offsets = [0, 16], sizes = [2, 16], strides = [1, 1]} : vector<2x48xf32> to vector<2x16xf32>
    %683 = vector.extract_strided_slice %673 {offsets = [0, 16], sizes = [2, 16], strides = [1, 1]} : vector<2x48xf32> to vector<2x16xf32>
    %684 = arith.addf %682, %683 : vector<2x16xf32>
    %685 = arith.negf %684 : vector<2x16xf32>
    %686 = math.exp %685 : vector<2x16xf32>
    %cst_164 = arith.constant 1.000000e+00 : f32
    %687 = vector.broadcast %cst_164 : f32 to vector<2x16xf32>
    %688 = arith.addf %687, %686 : vector<2x16xf32>
    %689 = arith.divf %687, %688 : vector<2x16xf32>
    %690 = vector.extract_strided_slice %669 {offsets = [0, 32], sizes = [2, 16], strides = [1, 1]} : vector<2x48xf32> to vector<2x16xf32>
    %691 = vector.extract_strided_slice %673 {offsets = [0, 32], sizes = [2, 16], strides = [1, 1]} : vector<2x48xf32> to vector<2x16xf32>
    %692 = arith.mulf %681, %691 : vector<2x16xf32>
    %693 = arith.addf %690, %692 : vector<2x16xf32>
    %694 = math.tanh %693 : vector<2x16xf32>
    %cst_165 = arith.constant 1.000000e+00 : f32
    %695 = vector.broadcast %cst_165 : f32 to vector<2x16xf32>
    %696 = arith.subf %695, %689 : vector<2x16xf32>
    %697 = arith.mulf %696, %694 : vector<2x16xf32>
    %698 = arith.mulf %689, %622 : vector<2x16xf32>
    %699 = arith.addf %697, %698 : vector<2x16xf32>
    %700 = arith.index_cast %c8_i32 : i32 to index
    %c0_166 = arith.constant 0 : index
    %c0_167 = arith.constant 0 : index
    %701 = vector.load %arg9[%700, %c0_166, %c0_167] : memref<16x2x16xf32, #tpu.memory_space<vmem>>, vector<1x2x16xf32>
    %702 = vector.shape_cast %701 : vector<1x2x16xf32> to vector<2x16xf32>
    %703 = vector.shape_cast %668 : vector<2x16xf32> to vector<1x2x16xf32>
    tpu.vector_store %arg9[%700, %c0_166, %c0_167], %703 {strides = array<i32>} : memref<16x2x16xf32, #tpu.memory_space<vmem>>, vector<1x2x16xf32>,
    %704 = arith.index_cast %631 : i32 to index
    %c0_168 = arith.constant 0 : index
    %c0_169 = arith.constant 0 : index
    %705 = vector.load %arg10[%704, %c0_168, %c0_169] : memref<16x2x16xf32, #tpu.memory_space<vmem>>, vector<1x2x16xf32>
    %706 = vector.shape_cast %705 : vector<1x2x16xf32> to vector<2x16xf32>
    %707 = vector.shape_cast %699 : vector<2x16xf32> to vector<1x2x16xf32>
    tpu.vector_store %arg10[%704, %c0_168, %c0_169], %707 {strides = array<i32>} : memref<16x2x16xf32, #tpu.memory_space<vmem>>, vector<1x2x16xf32>,
    %c9_i32 = arith.constant 9 : i32
    %c15_i32_170 = arith.constant 15 : i32
    %708 = arith.subi %c15_i32_170, %c9_i32 : i32
    %709 = arith.index_cast %c9_i32 : i32 to index
    %c0_171 = arith.constant 0 : index
    %c0_172 = arith.constant 0 : index
    %710 = vector.load %arg8[%709, %c0_171, %c0_172] : memref<16x2x96xf32, #tpu.memory_space<vmem>>, vector<1x2x96xf32>
    %711 = vector.shape_cast %710 : vector<1x2x96xf32> to vector<2x96xf32>
    %712 = arith.index_cast %708 : i32 to index
    %c0_173 = arith.constant 0 : index
    %c0_174 = arith.constant 0 : index
    %713 = vector.load %arg8[%712, %c0_173, %c0_174] : memref<16x2x96xf32, #tpu.memory_space<vmem>>, vector<1x2x96xf32>
    %714 = vector.shape_cast %713 : vector<1x2x96xf32> to vector<2x96xf32>
    %715 = vector.extract_strided_slice %711 {offsets = [0, 0], sizes = [2, 48], strides = [1, 1]} : vector<2x96xf32> to vector<2x48xf32>
    %716 = arith.truncf %668 : vector<2x16xf32> to vector<2x16xbf16>
    %cst_175 = arith.constant dense<0.000000e+00> : vector<2x48xf32>
    %717 = tpu.matmul %716, %10, %cst_175 {dimension_numbers = #tpu.dot_dimension_numbers<[1], [0], [0], [1], [0, 0, 1, 1], [], []>} : vector<2x16xbf16>, vector<16x48xbf16>, vector<2x48xf32> -> vector<2x48xf32>
    %718 = vector.broadcast %12 : vector<1x48xf32> to vector<2x48xf32>
    %719 = arith.addf %717, %718 : vector<2x48xf32>
    %720 = vector.extract_strided_slice %715 {offsets = [0, 0], sizes = [2, 16], strides = [1, 1]} : vector<2x48xf32> to vector<2x16xf32>
    %721 = vector.extract_strided_slice %719 {offsets = [0, 0], sizes = [2, 16], strides = [1, 1]} : vector<2x48xf32> to vector<2x16xf32>
    %722 = arith.addf %720, %721 : vector<2x16xf32>
    %723 = arith.negf %722 : vector<2x16xf32>
    %724 = math.exp %723 : vector<2x16xf32>
    %cst_176 = arith.constant 1.000000e+00 : f32
    %725 = vector.broadcast %cst_176 : f32 to vector<2x16xf32>
    %726 = arith.addf %725, %724 : vector<2x16xf32>
    %727 = arith.divf %725, %726 : vector<2x16xf32>
    %728 = vector.extract_strided_slice %715 {offsets = [0, 16], sizes = [2, 16], strides = [1, 1]} : vector<2x48xf32> to vector<2x16xf32>
    %729 = vector.extract_strided_slice %719 {offsets = [0, 16], sizes = [2, 16], strides = [1, 1]} : vector<2x48xf32> to vector<2x16xf32>
    %730 = arith.addf %728, %729 : vector<2x16xf32>
    %731 = arith.negf %730 : vector<2x16xf32>
    %732 = math.exp %731 : vector<2x16xf32>
    %cst_177 = arith.constant 1.000000e+00 : f32
    %733 = vector.broadcast %cst_177 : f32 to vector<2x16xf32>
    %734 = arith.addf %733, %732 : vector<2x16xf32>
    %735 = arith.divf %733, %734 : vector<2x16xf32>
    %736 = vector.extract_strided_slice %715 {offsets = [0, 32], sizes = [2, 16], strides = [1, 1]} : vector<2x48xf32> to vector<2x16xf32>
    %737 = vector.extract_strided_slice %719 {offsets = [0, 32], sizes = [2, 16], strides = [1, 1]} : vector<2x48xf32> to vector<2x16xf32>
    %738 = arith.mulf %727, %737 : vector<2x16xf32>
    %739 = arith.addf %736, %738 : vector<2x16xf32>
    %740 = math.tanh %739 : vector<2x16xf32>
    %cst_178 = arith.constant 1.000000e+00 : f32
    %741 = vector.broadcast %cst_178 : f32 to vector<2x16xf32>
    %742 = arith.subf %741, %735 : vector<2x16xf32>
    %743 = arith.mulf %742, %740 : vector<2x16xf32>
    %744 = arith.mulf %735, %668 : vector<2x16xf32>
    %745 = arith.addf %743, %744 : vector<2x16xf32>
    %746 = vector.extract_strided_slice %714 {offsets = [0, 48], sizes = [2, 48], strides = [1, 1]} : vector<2x96xf32> to vector<2x48xf32>
    %747 = arith.truncf %699 : vector<2x16xf32> to vector<2x16xbf16>
    %cst_179 = arith.constant dense<0.000000e+00> : vector<2x48xf32>
    %748 = tpu.matmul %747, %11, %cst_179 {dimension_numbers = #tpu.dot_dimension_numbers<[1], [0], [0], [1], [0, 0, 1, 1], [], []>} : vector<2x16xbf16>, vector<16x48xbf16>, vector<2x48xf32> -> vector<2x48xf32>
    %749 = vector.broadcast %13 : vector<1x48xf32> to vector<2x48xf32>
    %750 = arith.addf %748, %749 : vector<2x48xf32>
    %751 = vector.extract_strided_slice %746 {offsets = [0, 0], sizes = [2, 16], strides = [1, 1]} : vector<2x48xf32> to vector<2x16xf32>
    %752 = vector.extract_strided_slice %750 {offsets = [0, 0], sizes = [2, 16], strides = [1, 1]} : vector<2x48xf32> to vector<2x16xf32>
    %753 = arith.addf %751, %752 : vector<2x16xf32>
    %754 = arith.negf %753 : vector<2x16xf32>
    %755 = math.exp %754 : vector<2x16xf32>
    %cst_180 = arith.constant 1.000000e+00 : f32
    %756 = vector.broadcast %cst_180 : f32 to vector<2x16xf32>
    %757 = arith.addf %756, %755 : vector<2x16xf32>
    %758 = arith.divf %756, %757 : vector<2x16xf32>
    %759 = vector.extract_strided_slice %746 {offsets = [0, 16], sizes = [2, 16], strides = [1, 1]} : vector<2x48xf32> to vector<2x16xf32>
    %760 = vector.extract_strided_slice %750 {offsets = [0, 16], sizes = [2, 16], strides = [1, 1]} : vector<2x48xf32> to vector<2x16xf32>
    %761 = arith.addf %759, %760 : vector<2x16xf32>
    %762 = arith.negf %761 : vector<2x16xf32>
    %763 = math.exp %762 : vector<2x16xf32>
    %cst_181 = arith.constant 1.000000e+00 : f32
    %764 = vector.broadcast %cst_181 : f32 to vector<2x16xf32>
    %765 = arith.addf %764, %763 : vector<2x16xf32>
    %766 = arith.divf %764, %765 : vector<2x16xf32>
    %767 = vector.extract_strided_slice %746 {offsets = [0, 32], sizes = [2, 16], strides = [1, 1]} : vector<2x48xf32> to vector<2x16xf32>
    %768 = vector.extract_strided_slice %750 {offsets = [0, 32], sizes = [2, 16], strides = [1, 1]} : vector<2x48xf32> to vector<2x16xf32>
    %769 = arith.mulf %758, %768 : vector<2x16xf32>
    %770 = arith.addf %767, %769 : vector<2x16xf32>
    %771 = math.tanh %770 : vector<2x16xf32>
    %cst_182 = arith.constant 1.000000e+00 : f32
    %772 = vector.broadcast %cst_182 : f32 to vector<2x16xf32>
    %773 = arith.subf %772, %766 : vector<2x16xf32>
    %774 = arith.mulf %773, %771 : vector<2x16xf32>
    %775 = arith.mulf %766, %699 : vector<2x16xf32>
    %776 = arith.addf %774, %775 : vector<2x16xf32>
    %777 = arith.index_cast %c9_i32 : i32 to index
    %c0_183 = arith.constant 0 : index
    %c0_184 = arith.constant 0 : index
    %778 = vector.load %arg9[%777, %c0_183, %c0_184] : memref<16x2x16xf32, #tpu.memory_space<vmem>>, vector<1x2x16xf32>
    %779 = vector.shape_cast %778 : vector<1x2x16xf32> to vector<2x16xf32>
    %780 = vector.shape_cast %745 : vector<2x16xf32> to vector<1x2x16xf32>
    tpu.vector_store %arg9[%777, %c0_183, %c0_184], %780 {strides = array<i32>} : memref<16x2x16xf32, #tpu.memory_space<vmem>>, vector<1x2x16xf32>,
    %781 = arith.index_cast %708 : i32 to index
    %c0_185 = arith.constant 0 : index
    %c0_186 = arith.constant 0 : index
    %782 = vector.load %arg10[%781, %c0_185, %c0_186] : memref<16x2x16xf32, #tpu.memory_space<vmem>>, vector<1x2x16xf32>
    %783 = vector.shape_cast %782 : vector<1x2x16xf32> to vector<2x16xf32>
    %784 = vector.shape_cast %776 : vector<2x16xf32> to vector<1x2x16xf32>
    tpu.vector_store %arg10[%781, %c0_185, %c0_186], %784 {strides = array<i32>} : memref<16x2x16xf32, #tpu.memory_space<vmem>>, vector<1x2x16xf32>,
    %c10_i32 = arith.constant 10 : i32
    %c15_i32_187 = arith.constant 15 : i32
    %785 = arith.subi %c15_i32_187, %c10_i32 : i32
    %786 = arith.index_cast %c10_i32 : i32 to index
    %c0_188 = arith.constant 0 : index
    %c0_189 = arith.constant 0 : index
    %787 = vector.load %arg8[%786, %c0_188, %c0_189] : memref<16x2x96xf32, #tpu.memory_space<vmem>>, vector<1x2x96xf32>
    %788 = vector.shape_cast %787 : vector<1x2x96xf32> to vector<2x96xf32>
    %789 = arith.index_cast %785 : i32 to index
    %c0_190 = arith.constant 0 : index
    %c0_191 = arith.constant 0 : index
    %790 = vector.load %arg8[%789, %c0_190, %c0_191] : memref<16x2x96xf32, #tpu.memory_space<vmem>>, vector<1x2x96xf32>
    %791 = vector.shape_cast %790 : vector<1x2x96xf32> to vector<2x96xf32>
    %792 = vector.extract_strided_slice %788 {offsets = [0, 0], sizes = [2, 48], strides = [1, 1]} : vector<2x96xf32> to vector<2x48xf32>
    %793 = arith.truncf %745 : vector<2x16xf32> to vector<2x16xbf16>
    %cst_192 = arith.constant dense<0.000000e+00> : vector<2x48xf32>
    %794 = tpu.matmul %793, %10, %cst_192 {dimension_numbers = #tpu.dot_dimension_numbers<[1], [0], [0], [1], [0, 0, 1, 1], [], []>} : vector<2x16xbf16>, vector<16x48xbf16>, vector<2x48xf32> -> vector<2x48xf32>
    %795 = vector.broadcast %12 : vector<1x48xf32> to vector<2x48xf32>
    %796 = arith.addf %794, %795 : vector<2x48xf32>
    %797 = vector.extract_strided_slice %792 {offsets = [0, 0], sizes = [2, 16], strides = [1, 1]} : vector<2x48xf32> to vector<2x16xf32>
    %798 = vector.extract_strided_slice %796 {offsets = [0, 0], sizes = [2, 16], strides = [1, 1]} : vector<2x48xf32> to vector<2x16xf32>
    %799 = arith.addf %797, %798 : vector<2x16xf32>
    %800 = arith.negf %799 : vector<2x16xf32>
    %801 = math.exp %800 : vector<2x16xf32>
    %cst_193 = arith.constant 1.000000e+00 : f32
    %802 = vector.broadcast %cst_193 : f32 to vector<2x16xf32>
    %803 = arith.addf %802, %801 : vector<2x16xf32>
    %804 = arith.divf %802, %803 : vector<2x16xf32>
    %805 = vector.extract_strided_slice %792 {offsets = [0, 16], sizes = [2, 16], strides = [1, 1]} : vector<2x48xf32> to vector<2x16xf32>
    %806 = vector.extract_strided_slice %796 {offsets = [0, 16], sizes = [2, 16], strides = [1, 1]} : vector<2x48xf32> to vector<2x16xf32>
    %807 = arith.addf %805, %806 : vector<2x16xf32>
    %808 = arith.negf %807 : vector<2x16xf32>
    %809 = math.exp %808 : vector<2x16xf32>
    %cst_194 = arith.constant 1.000000e+00 : f32
    %810 = vector.broadcast %cst_194 : f32 to vector<2x16xf32>
    %811 = arith.addf %810, %809 : vector<2x16xf32>
    %812 = arith.divf %810, %811 : vector<2x16xf32>
    %813 = vector.extract_strided_slice %792 {offsets = [0, 32], sizes = [2, 16], strides = [1, 1]} : vector<2x48xf32> to vector<2x16xf32>
    %814 = vector.extract_strided_slice %796 {offsets = [0, 32], sizes = [2, 16], strides = [1, 1]} : vector<2x48xf32> to vector<2x16xf32>
    %815 = arith.mulf %804, %814 : vector<2x16xf32>
    %816 = arith.addf %813, %815 : vector<2x16xf32>
    %817 = math.tanh %816 : vector<2x16xf32>
    %cst_195 = arith.constant 1.000000e+00 : f32
    %818 = vector.broadcast %cst_195 : f32 to vector<2x16xf32>
    %819 = arith.subf %818, %812 : vector<2x16xf32>
    %820 = arith.mulf %819, %817 : vector<2x16xf32>
    %821 = arith.mulf %812, %745 : vector<2x16xf32>
    %822 = arith.addf %820, %821 : vector<2x16xf32>
    %823 = vector.extract_strided_slice %791 {offsets = [0, 48], sizes = [2, 48], strides = [1, 1]} : vector<2x96xf32> to vector<2x48xf32>
    %824 = arith.truncf %776 : vector<2x16xf32> to vector<2x16xbf16>
    %cst_196 = arith.constant dense<0.000000e+00> : vector<2x48xf32>
    %825 = tpu.matmul %824, %11, %cst_196 {dimension_numbers = #tpu.dot_dimension_numbers<[1], [0], [0], [1], [0, 0, 1, 1], [], []>} : vector<2x16xbf16>, vector<16x48xbf16>, vector<2x48xf32> -> vector<2x48xf32>
    %826 = vector.broadcast %13 : vector<1x48xf32> to vector<2x48xf32>
    %827 = arith.addf %825, %826 : vector<2x48xf32>
    %828 = vector.extract_strided_slice %823 {offsets = [0, 0], sizes = [2, 16], strides = [1, 1]} : vector<2x48xf32> to vector<2x16xf32>
    %829 = vector.extract_strided_slice %827 {offsets = [0, 0], sizes = [2, 16], strides = [1, 1]} : vector<2x48xf32> to vector<2x16xf32>
    %830 = arith.addf %828, %829 : vector<2x16xf32>
    %831 = arith.negf %830 : vector<2x16xf32>
    %832 = math.exp %831 : vector<2x16xf32>
    %cst_197 = arith.constant 1.000000e+00 : f32
    %833 = vector.broadcast %cst_197 : f32 to vector<2x16xf32>
    %834 = arith.addf %833, %832 : vector<2x16xf32>
    %835 = arith.divf %833, %834 : vector<2x16xf32>
    %836 = vector.extract_strided_slice %823 {offsets = [0, 16], sizes = [2, 16], strides = [1, 1]} : vector<2x48xf32> to vector<2x16xf32>
    %837 = vector.extract_strided_slice %827 {offsets = [0, 16], sizes = [2, 16], strides = [1, 1]} : vector<2x48xf32> to vector<2x16xf32>
    %838 = arith.addf %836, %837 : vector<2x16xf32>
    %839 = arith.negf %838 : vector<2x16xf32>
    %840 = math.exp %839 : vector<2x16xf32>
    %cst_198 = arith.constant 1.000000e+00 : f32
    %841 = vector.broadcast %cst_198 : f32 to vector<2x16xf32>
    %842 = arith.addf %841, %840 : vector<2x16xf32>
    %843 = arith.divf %841, %842 : vector<2x16xf32>
    %844 = vector.extract_strided_slice %823 {offsets = [0, 32], sizes = [2, 16], strides = [1, 1]} : vector<2x48xf32> to vector<2x16xf32>
    %845 = vector.extract_strided_slice %827 {offsets = [0, 32], sizes = [2, 16], strides = [1, 1]} : vector<2x48xf32> to vector<2x16xf32>
    %846 = arith.mulf %835, %845 : vector<2x16xf32>
    %847 = arith.addf %844, %846 : vector<2x16xf32>
    %848 = math.tanh %847 : vector<2x16xf32>
    %cst_199 = arith.constant 1.000000e+00 : f32
    %849 = vector.broadcast %cst_199 : f32 to vector<2x16xf32>
    %850 = arith.subf %849, %843 : vector<2x16xf32>
    %851 = arith.mulf %850, %848 : vector<2x16xf32>
    %852 = arith.mulf %843, %776 : vector<2x16xf32>
    %853 = arith.addf %851, %852 : vector<2x16xf32>
    %854 = arith.index_cast %c10_i32 : i32 to index
    %c0_200 = arith.constant 0 : index
    %c0_201 = arith.constant 0 : index
    %855 = vector.load %arg9[%854, %c0_200, %c0_201] : memref<16x2x16xf32, #tpu.memory_space<vmem>>, vector<1x2x16xf32>
    %856 = vector.shape_cast %855 : vector<1x2x16xf32> to vector<2x16xf32>
    %857 = vector.shape_cast %822 : vector<2x16xf32> to vector<1x2x16xf32>
    tpu.vector_store %arg9[%854, %c0_200, %c0_201], %857 {strides = array<i32>} : memref<16x2x16xf32, #tpu.memory_space<vmem>>, vector<1x2x16xf32>,
    %858 = arith.index_cast %785 : i32 to index
    %c0_202 = arith.constant 0 : index
    %c0_203 = arith.constant 0 : index
    %859 = vector.load %arg10[%858, %c0_202, %c0_203] : memref<16x2x16xf32, #tpu.memory_space<vmem>>, vector<1x2x16xf32>
    %860 = vector.shape_cast %859 : vector<1x2x16xf32> to vector<2x16xf32>
    %861 = vector.shape_cast %853 : vector<2x16xf32> to vector<1x2x16xf32>
    tpu.vector_store %arg10[%858, %c0_202, %c0_203], %861 {strides = array<i32>} : memref<16x2x16xf32, #tpu.memory_space<vmem>>, vector<1x2x16xf32>,
    %c11_i32 = arith.constant 11 : i32
    %c15_i32_204 = arith.constant 15 : i32
    %862 = arith.subi %c15_i32_204, %c11_i32 : i32
    %863 = arith.index_cast %c11_i32 : i32 to index
    %c0_205 = arith.constant 0 : index
    %c0_206 = arith.constant 0 : index
    %864 = vector.load %arg8[%863, %c0_205, %c0_206] : memref<16x2x96xf32, #tpu.memory_space<vmem>>, vector<1x2x96xf32>
    %865 = vector.shape_cast %864 : vector<1x2x96xf32> to vector<2x96xf32>
    %866 = arith.index_cast %862 : i32 to index
    %c0_207 = arith.constant 0 : index
    %c0_208 = arith.constant 0 : index
    %867 = vector.load %arg8[%866, %c0_207, %c0_208] : memref<16x2x96xf32, #tpu.memory_space<vmem>>, vector<1x2x96xf32>
    %868 = vector.shape_cast %867 : vector<1x2x96xf32> to vector<2x96xf32>
    %869 = vector.extract_strided_slice %865 {offsets = [0, 0], sizes = [2, 48], strides = [1, 1]} : vector<2x96xf32> to vector<2x48xf32>
    %870 = arith.truncf %822 : vector<2x16xf32> to vector<2x16xbf16>
    %cst_209 = arith.constant dense<0.000000e+00> : vector<2x48xf32>
    %871 = tpu.matmul %870, %10, %cst_209 {dimension_numbers = #tpu.dot_dimension_numbers<[1], [0], [0], [1], [0, 0, 1, 1], [], []>} : vector<2x16xbf16>, vector<16x48xbf16>, vector<2x48xf32> -> vector<2x48xf32>
    %872 = vector.broadcast %12 : vector<1x48xf32> to vector<2x48xf32>
    %873 = arith.addf %871, %872 : vector<2x48xf32>
    %874 = vector.extract_strided_slice %869 {offsets = [0, 0], sizes = [2, 16], strides = [1, 1]} : vector<2x48xf32> to vector<2x16xf32>
    %875 = vector.extract_strided_slice %873 {offsets = [0, 0], sizes = [2, 16], strides = [1, 1]} : vector<2x48xf32> to vector<2x16xf32>
    %876 = arith.addf %874, %875 : vector<2x16xf32>
    %877 = arith.negf %876 : vector<2x16xf32>
    %878 = math.exp %877 : vector<2x16xf32>
    %cst_210 = arith.constant 1.000000e+00 : f32
    %879 = vector.broadcast %cst_210 : f32 to vector<2x16xf32>
    %880 = arith.addf %879, %878 : vector<2x16xf32>
    %881 = arith.divf %879, %880 : vector<2x16xf32>
    %882 = vector.extract_strided_slice %869 {offsets = [0, 16], sizes = [2, 16], strides = [1, 1]} : vector<2x48xf32> to vector<2x16xf32>
    %883 = vector.extract_strided_slice %873 {offsets = [0, 16], sizes = [2, 16], strides = [1, 1]} : vector<2x48xf32> to vector<2x16xf32>
    %884 = arith.addf %882, %883 : vector<2x16xf32>
    %885 = arith.negf %884 : vector<2x16xf32>
    %886 = math.exp %885 : vector<2x16xf32>
    %cst_211 = arith.constant 1.000000e+00 : f32
    %887 = vector.broadcast %cst_211 : f32 to vector<2x16xf32>
    %888 = arith.addf %887, %886 : vector<2x16xf32>
    %889 = arith.divf %887, %888 : vector<2x16xf32>
    %890 = vector.extract_strided_slice %869 {offsets = [0, 32], sizes = [2, 16], strides = [1, 1]} : vector<2x48xf32> to vector<2x16xf32>
    %891 = vector.extract_strided_slice %873 {offsets = [0, 32], sizes = [2, 16], strides = [1, 1]} : vector<2x48xf32> to vector<2x16xf32>
    %892 = arith.mulf %881, %891 : vector<2x16xf32>
    %893 = arith.addf %890, %892 : vector<2x16xf32>
    %894 = math.tanh %893 : vector<2x16xf32>
    %cst_212 = arith.constant 1.000000e+00 : f32
    %895 = vector.broadcast %cst_212 : f32 to vector<2x16xf32>
    %896 = arith.subf %895, %889 : vector<2x16xf32>
    %897 = arith.mulf %896, %894 : vector<2x16xf32>
    %898 = arith.mulf %889, %822 : vector<2x16xf32>
    %899 = arith.addf %897, %898 : vector<2x16xf32>
    %900 = vector.extract_strided_slice %868 {offsets = [0, 48], sizes = [2, 48], strides = [1, 1]} : vector<2x96xf32> to vector<2x48xf32>
    %901 = arith.truncf %853 : vector<2x16xf32> to vector<2x16xbf16>
    %cst_213 = arith.constant dense<0.000000e+00> : vector<2x48xf32>
    %902 = tpu.matmul %901, %11, %cst_213 {dimension_numbers = #tpu.dot_dimension_numbers<[1], [0], [0], [1], [0, 0, 1, 1], [], []>} : vector<2x16xbf16>, vector<16x48xbf16>, vector<2x48xf32> -> vector<2x48xf32>
    %903 = vector.broadcast %13 : vector<1x48xf32> to vector<2x48xf32>
    %904 = arith.addf %902, %903 : vector<2x48xf32>
    %905 = vector.extract_strided_slice %900 {offsets = [0, 0], sizes = [2, 16], strides = [1, 1]} : vector<2x48xf32> to vector<2x16xf32>
    %906 = vector.extract_strided_slice %904 {offsets = [0, 0], sizes = [2, 16], strides = [1, 1]} : vector<2x48xf32> to vector<2x16xf32>
    %907 = arith.addf %905, %906 : vector<2x16xf32>
    %908 = arith.negf %907 : vector<2x16xf32>
    %909 = math.exp %908 : vector<2x16xf32>
    %cst_214 = arith.constant 1.000000e+00 : f32
    %910 = vector.broadcast %cst_214 : f32 to vector<2x16xf32>
    %911 = arith.addf %910, %909 : vector<2x16xf32>
    %912 = arith.divf %910, %911 : vector<2x16xf32>
    %913 = vector.extract_strided_slice %900 {offsets = [0, 16], sizes = [2, 16], strides = [1, 1]} : vector<2x48xf32> to vector<2x16xf32>
    %914 = vector.extract_strided_slice %904 {offsets = [0, 16], sizes = [2, 16], strides = [1, 1]} : vector<2x48xf32> to vector<2x16xf32>
    %915 = arith.addf %913, %914 : vector<2x16xf32>
    %916 = arith.negf %915 : vector<2x16xf32>
    %917 = math.exp %916 : vector<2x16xf32>
    %cst_215 = arith.constant 1.000000e+00 : f32
    %918 = vector.broadcast %cst_215 : f32 to vector<2x16xf32>
    %919 = arith.addf %918, %917 : vector<2x16xf32>
    %920 = arith.divf %918, %919 : vector<2x16xf32>
    %921 = vector.extract_strided_slice %900 {offsets = [0, 32], sizes = [2, 16], strides = [1, 1]} : vector<2x48xf32> to vector<2x16xf32>
    %922 = vector.extract_strided_slice %904 {offsets = [0, 32], sizes = [2, 16], strides = [1, 1]} : vector<2x48xf32> to vector<2x16xf32>
    %923 = arith.mulf %912, %922 : vector<2x16xf32>
    %924 = arith.addf %921, %923 : vector<2x16xf32>
    %925 = math.tanh %924 : vector<2x16xf32>
    %cst_216 = arith.constant 1.000000e+00 : f32
    %926 = vector.broadcast %cst_216 : f32 to vector<2x16xf32>
    %927 = arith.subf %926, %920 : vector<2x16xf32>
    %928 = arith.mulf %927, %925 : vector<2x16xf32>
    %929 = arith.mulf %920, %853 : vector<2x16xf32>
    %930 = arith.addf %928, %929 : vector<2x16xf32>
    %931 = arith.index_cast %c11_i32 : i32 to index
    %c0_217 = arith.constant 0 : index
    %c0_218 = arith.constant 0 : index
    %932 = vector.load %arg9[%931, %c0_217, %c0_218] : memref<16x2x16xf32, #tpu.memory_space<vmem>>, vector<1x2x16xf32>
    %933 = vector.shape_cast %932 : vector<1x2x16xf32> to vector<2x16xf32>
    %934 = vector.shape_cast %899 : vector<2x16xf32> to vector<1x2x16xf32>
    tpu.vector_store %arg9[%931, %c0_217, %c0_218], %934 {strides = array<i32>} : memref<16x2x16xf32, #tpu.memory_space<vmem>>, vector<1x2x16xf32>,
    %935 = arith.index_cast %862 : i32 to index
    %c0_219 = arith.constant 0 : index
    %c0_220 = arith.constant 0 : index
    %936 = vector.load %arg10[%935, %c0_219, %c0_220] : memref<16x2x16xf32, #tpu.memory_space<vmem>>, vector<1x2x16xf32>
    %937 = vector.shape_cast %936 : vector<1x2x16xf32> to vector<2x16xf32>
    %938 = vector.shape_cast %930 : vector<2x16xf32> to vector<1x2x16xf32>
    tpu.vector_store %arg10[%935, %c0_219, %c0_220], %938 {strides = array<i32>} : memref<16x2x16xf32, #tpu.memory_space<vmem>>, vector<1x2x16xf32>,
    %c12_i32 = arith.constant 12 : i32
    %c15_i32_221 = arith.constant 15 : i32
    %939 = arith.subi %c15_i32_221, %c12_i32 : i32
    %940 = arith.index_cast %c12_i32 : i32 to index
    %c0_222 = arith.constant 0 : index
    %c0_223 = arith.constant 0 : index
    %941 = vector.load %arg8[%940, %c0_222, %c0_223] : memref<16x2x96xf32, #tpu.memory_space<vmem>>, vector<1x2x96xf32>
    %942 = vector.shape_cast %941 : vector<1x2x96xf32> to vector<2x96xf32>
    %943 = arith.index_cast %939 : i32 to index
    %c0_224 = arith.constant 0 : index
    %c0_225 = arith.constant 0 : index
    %944 = vector.load %arg8[%943, %c0_224, %c0_225] : memref<16x2x96xf32, #tpu.memory_space<vmem>>, vector<1x2x96xf32>
    %945 = vector.shape_cast %944 : vector<1x2x96xf32> to vector<2x96xf32>
    %946 = vector.extract_strided_slice %942 {offsets = [0, 0], sizes = [2, 48], strides = [1, 1]} : vector<2x96xf32> to vector<2x48xf32>
    %947 = arith.truncf %899 : vector<2x16xf32> to vector<2x16xbf16>
    %cst_226 = arith.constant dense<0.000000e+00> : vector<2x48xf32>
    %948 = tpu.matmul %947, %10, %cst_226 {dimension_numbers = #tpu.dot_dimension_numbers<[1], [0], [0], [1], [0, 0, 1, 1], [], []>} : vector<2x16xbf16>, vector<16x48xbf16>, vector<2x48xf32> -> vector<2x48xf32>
    %949 = vector.broadcast %12 : vector<1x48xf32> to vector<2x48xf32>
    %950 = arith.addf %948, %949 : vector<2x48xf32>
    %951 = vector.extract_strided_slice %946 {offsets = [0, 0], sizes = [2, 16], strides = [1, 1]} : vector<2x48xf32> to vector<2x16xf32>
    %952 = vector.extract_strided_slice %950 {offsets = [0, 0], sizes = [2, 16], strides = [1, 1]} : vector<2x48xf32> to vector<2x16xf32>
    %953 = arith.addf %951, %952 : vector<2x16xf32>
    %954 = arith.negf %953 : vector<2x16xf32>
    %955 = math.exp %954 : vector<2x16xf32>
    %cst_227 = arith.constant 1.000000e+00 : f32
    %956 = vector.broadcast %cst_227 : f32 to vector<2x16xf32>
    %957 = arith.addf %956, %955 : vector<2x16xf32>
    %958 = arith.divf %956, %957 : vector<2x16xf32>
    %959 = vector.extract_strided_slice %946 {offsets = [0, 16], sizes = [2, 16], strides = [1, 1]} : vector<2x48xf32> to vector<2x16xf32>
    %960 = vector.extract_strided_slice %950 {offsets = [0, 16], sizes = [2, 16], strides = [1, 1]} : vector<2x48xf32> to vector<2x16xf32>
    %961 = arith.addf %959, %960 : vector<2x16xf32>
    %962 = arith.negf %961 : vector<2x16xf32>
    %963 = math.exp %962 : vector<2x16xf32>
    %cst_228 = arith.constant 1.000000e+00 : f32
    %964 = vector.broadcast %cst_228 : f32 to vector<2x16xf32>
    %965 = arith.addf %964, %963 : vector<2x16xf32>
    %966 = arith.divf %964, %965 : vector<2x16xf32>
    %967 = vector.extract_strided_slice %946 {offsets = [0, 32], sizes = [2, 16], strides = [1, 1]} : vector<2x48xf32> to vector<2x16xf32>
    %968 = vector.extract_strided_slice %950 {offsets = [0, 32], sizes = [2, 16], strides = [1, 1]} : vector<2x48xf32> to vector<2x16xf32>
    %969 = arith.mulf %958, %968 : vector<2x16xf32>
    %970 = arith.addf %967, %969 : vector<2x16xf32>
    %971 = math.tanh %970 : vector<2x16xf32>
    %cst_229 = arith.constant 1.000000e+00 : f32
    %972 = vector.broadcast %cst_229 : f32 to vector<2x16xf32>
    %973 = arith.subf %972, %966 : vector<2x16xf32>
    %974 = arith.mulf %973, %971 : vector<2x16xf32>
    %975 = arith.mulf %966, %899 : vector<2x16xf32>
    %976 = arith.addf %974, %975 : vector<2x16xf32>
    %977 = vector.extract_strided_slice %945 {offsets = [0, 48], sizes = [2, 48], strides = [1, 1]} : vector<2x96xf32> to vector<2x48xf32>
    %978 = arith.truncf %930 : vector<2x16xf32> to vector<2x16xbf16>
    %cst_230 = arith.constant dense<0.000000e+00> : vector<2x48xf32>
    %979 = tpu.matmul %978, %11, %cst_230 {dimension_numbers = #tpu.dot_dimension_numbers<[1], [0], [0], [1], [0, 0, 1, 1], [], []>} : vector<2x16xbf16>, vector<16x48xbf16>, vector<2x48xf32> -> vector<2x48xf32>
    %980 = vector.broadcast %13 : vector<1x48xf32> to vector<2x48xf32>
    %981 = arith.addf %979, %980 : vector<2x48xf32>
    %982 = vector.extract_strided_slice %977 {offsets = [0, 0], sizes = [2, 16], strides = [1, 1]} : vector<2x48xf32> to vector<2x16xf32>
    %983 = vector.extract_strided_slice %981 {offsets = [0, 0], sizes = [2, 16], strides = [1, 1]} : vector<2x48xf32> to vector<2x16xf32>
    %984 = arith.addf %982, %983 : vector<2x16xf32>
    %985 = arith.negf %984 : vector<2x16xf32>
    %986 = math.exp %985 : vector<2x16xf32>
    %cst_231 = arith.constant 1.000000e+00 : f32
    %987 = vector.broadcast %cst_231 : f32 to vector<2x16xf32>
    %988 = arith.addf %987, %986 : vector<2x16xf32>
    %989 = arith.divf %987, %988 : vector<2x16xf32>
    %990 = vector.extract_strided_slice %977 {offsets = [0, 16], sizes = [2, 16], strides = [1, 1]} : vector<2x48xf32> to vector<2x16xf32>
    %991 = vector.extract_strided_slice %981 {offsets = [0, 16], sizes = [2, 16], strides = [1, 1]} : vector<2x48xf32> to vector<2x16xf32>
    %992 = arith.addf %990, %991 : vector<2x16xf32>
    %993 = arith.negf %992 : vector<2x16xf32>
    %994 = math.exp %993 : vector<2x16xf32>
    %cst_232 = arith.constant 1.000000e+00 : f32
    %995 = vector.broadcast %cst_232 : f32 to vector<2x16xf32>
    %996 = arith.addf %995, %994 : vector<2x16xf32>
    %997 = arith.divf %995, %996 : vector<2x16xf32>
    %998 = vector.extract_strided_slice %977 {offsets = [0, 32], sizes = [2, 16], strides = [1, 1]} : vector<2x48xf32> to vector<2x16xf32>
    %999 = vector.extract_strided_slice %981 {offsets = [0, 32], sizes = [2, 16], strides = [1, 1]} : vector<2x48xf32> to vector<2x16xf32>
    %1000 = arith.mulf %989, %999 : vector<2x16xf32>
    %1001 = arith.addf %998, %1000 : vector<2x16xf32>
    %1002 = math.tanh %1001 : vector<2x16xf32>
    %cst_233 = arith.constant 1.000000e+00 : f32
    %1003 = vector.broadcast %cst_233 : f32 to vector<2x16xf32>
    %1004 = arith.subf %1003, %997 : vector<2x16xf32>
    %1005 = arith.mulf %1004, %1002 : vector<2x16xf32>
    %1006 = arith.mulf %997, %930 : vector<2x16xf32>
    %1007 = arith.addf %1005, %1006 : vector<2x16xf32>
    %1008 = arith.index_cast %c12_i32 : i32 to index
    %c0_234 = arith.constant 0 : index
    %c0_235 = arith.constant 0 : index
    %1009 = vector.load %arg9[%1008, %c0_234, %c0_235] : memref<16x2x16xf32, #tpu.memory_space<vmem>>, vector<1x2x16xf32>
    %1010 = vector.shape_cast %1009 : vector<1x2x16xf32> to vector<2x16xf32>
    %1011 = vector.shape_cast %976 : vector<2x16xf32> to vector<1x2x16xf32>
    tpu.vector_store %arg9[%1008, %c0_234, %c0_235], %1011 {strides = array<i32>} : memref<16x2x16xf32, #tpu.memory_space<vmem>>, vector<1x2x16xf32>,
    %1012 = arith.index_cast %939 : i32 to index
    %c0_236 = arith.constant 0 : index
    %c0_237 = arith.constant 0 : index
    %1013 = vector.load %arg10[%1012, %c0_236, %c0_237] : memref<16x2x16xf32, #tpu.memory_space<vmem>>, vector<1x2x16xf32>
    %1014 = vector.shape_cast %1013 : vector<1x2x16xf32> to vector<2x16xf32>
    %1015 = vector.shape_cast %1007 : vector<2x16xf32> to vector<1x2x16xf32>
    tpu.vector_store %arg10[%1012, %c0_236, %c0_237], %1015 {strides = array<i32>} : memref<16x2x16xf32, #tpu.memory_space<vmem>>, vector<1x2x16xf32>,
    %c13_i32 = arith.constant 13 : i32
    %c15_i32_238 = arith.constant 15 : i32
    %1016 = arith.subi %c15_i32_238, %c13_i32 : i32
    %1017 = arith.index_cast %c13_i32 : i32 to index
    %c0_239 = arith.constant 0 : index
    %c0_240 = arith.constant 0 : index
    %1018 = vector.load %arg8[%1017, %c0_239, %c0_240] : memref<16x2x96xf32, #tpu.memory_space<vmem>>, vector<1x2x96xf32>
    %1019 = vector.shape_cast %1018 : vector<1x2x96xf32> to vector<2x96xf32>
    %1020 = arith.index_cast %1016 : i32 to index
    %c0_241 = arith.constant 0 : index
    %c0_242 = arith.constant 0 : index
    %1021 = vector.load %arg8[%1020, %c0_241, %c0_242] : memref<16x2x96xf32, #tpu.memory_space<vmem>>, vector<1x2x96xf32>
    %1022 = vector.shape_cast %1021 : vector<1x2x96xf32> to vector<2x96xf32>
    %1023 = vector.extract_strided_slice %1019 {offsets = [0, 0], sizes = [2, 48], strides = [1, 1]} : vector<2x96xf32> to vector<2x48xf32>
    %1024 = arith.truncf %976 : vector<2x16xf32> to vector<2x16xbf16>
    %cst_243 = arith.constant dense<0.000000e+00> : vector<2x48xf32>
    %1025 = tpu.matmul %1024, %10, %cst_243 {dimension_numbers = #tpu.dot_dimension_numbers<[1], [0], [0], [1], [0, 0, 1, 1], [], []>} : vector<2x16xbf16>, vector<16x48xbf16>, vector<2x48xf32> -> vector<2x48xf32>
    %1026 = vector.broadcast %12 : vector<1x48xf32> to vector<2x48xf32>
    %1027 = arith.addf %1025, %1026 : vector<2x48xf32>
    %1028 = vector.extract_strided_slice %1023 {offsets = [0, 0], sizes = [2, 16], strides = [1, 1]} : vector<2x48xf32> to vector<2x16xf32>
    %1029 = vector.extract_strided_slice %1027 {offsets = [0, 0], sizes = [2, 16], strides = [1, 1]} : vector<2x48xf32> to vector<2x16xf32>
    %1030 = arith.addf %1028, %1029 : vector<2x16xf32>
    %1031 = arith.negf %1030 : vector<2x16xf32>
    %1032 = math.exp %1031 : vector<2x16xf32>
    %cst_244 = arith.constant 1.000000e+00 : f32
    %1033 = vector.broadcast %cst_244 : f32 to vector<2x16xf32>
    %1034 = arith.addf %1033, %1032 : vector<2x16xf32>
    %1035 = arith.divf %1033, %1034 : vector<2x16xf32>
    %1036 = vector.extract_strided_slice %1023 {offsets = [0, 16], sizes = [2, 16], strides = [1, 1]} : vector<2x48xf32> to vector<2x16xf32>
    %1037 = vector.extract_strided_slice %1027 {offsets = [0, 16], sizes = [2, 16], strides = [1, 1]} : vector<2x48xf32> to vector<2x16xf32>
    %1038 = arith.addf %1036, %1037 : vector<2x16xf32>
    %1039 = arith.negf %1038 : vector<2x16xf32>
    %1040 = math.exp %1039 : vector<2x16xf32>
    %cst_245 = arith.constant 1.000000e+00 : f32
    %1041 = vector.broadcast %cst_245 : f32 to vector<2x16xf32>
    %1042 = arith.addf %1041, %1040 : vector<2x16xf32>
    %1043 = arith.divf %1041, %1042 : vector<2x16xf32>
    %1044 = vector.extract_strided_slice %1023 {offsets = [0, 32], sizes = [2, 16], strides = [1, 1]} : vector<2x48xf32> to vector<2x16xf32>
    %1045 = vector.extract_strided_slice %1027 {offsets = [0, 32], sizes = [2, 16], strides = [1, 1]} : vector<2x48xf32> to vector<2x16xf32>
    %1046 = arith.mulf %1035, %1045 : vector<2x16xf32>
    %1047 = arith.addf %1044, %1046 : vector<2x16xf32>
    %1048 = math.tanh %1047 : vector<2x16xf32>
    %cst_246 = arith.constant 1.000000e+00 : f32
    %1049 = vector.broadcast %cst_246 : f32 to vector<2x16xf32>
    %1050 = arith.subf %1049, %1043 : vector<2x16xf32>
    %1051 = arith.mulf %1050, %1048 : vector<2x16xf32>
    %1052 = arith.mulf %1043, %976 : vector<2x16xf32>
    %1053 = arith.addf %1051, %1052 : vector<2x16xf32>
    %1054 = vector.extract_strided_slice %1022 {offsets = [0, 48], sizes = [2, 48], strides = [1, 1]} : vector<2x96xf32> to vector<2x48xf32>
    %1055 = arith.truncf %1007 : vector<2x16xf32> to vector<2x16xbf16>
    %cst_247 = arith.constant dense<0.000000e+00> : vector<2x48xf32>
    %1056 = tpu.matmul %1055, %11, %cst_247 {dimension_numbers = #tpu.dot_dimension_numbers<[1], [0], [0], [1], [0, 0, 1, 1], [], []>} : vector<2x16xbf16>, vector<16x48xbf16>, vector<2x48xf32> -> vector<2x48xf32>
    %1057 = vector.broadcast %13 : vector<1x48xf32> to vector<2x48xf32>
    %1058 = arith.addf %1056, %1057 : vector<2x48xf32>
    %1059 = vector.extract_strided_slice %1054 {offsets = [0, 0], sizes = [2, 16], strides = [1, 1]} : vector<2x48xf32> to vector<2x16xf32>
    %1060 = vector.extract_strided_slice %1058 {offsets = [0, 0], sizes = [2, 16], strides = [1, 1]} : vector<2x48xf32> to vector<2x16xf32>
    %1061 = arith.addf %1059, %1060 : vector<2x16xf32>
    %1062 = arith.negf %1061 : vector<2x16xf32>
    %1063 = math.exp %1062 : vector<2x16xf32>
    %cst_248 = arith.constant 1.000000e+00 : f32
    %1064 = vector.broadcast %cst_248 : f32 to vector<2x16xf32>
    %1065 = arith.addf %1064, %1063 : vector<2x16xf32>
    %1066 = arith.divf %1064, %1065 : vector<2x16xf32>
    %1067 = vector.extract_strided_slice %1054 {offsets = [0, 16], sizes = [2, 16], strides = [1, 1]} : vector<2x48xf32> to vector<2x16xf32>
    %1068 = vector.extract_strided_slice %1058 {offsets = [0, 16], sizes = [2, 16], strides = [1, 1]} : vector<2x48xf32> to vector<2x16xf32>
    %1069 = arith.addf %1067, %1068 : vector<2x16xf32>
    %1070 = arith.negf %1069 : vector<2x16xf32>
    %1071 = math.exp %1070 : vector<2x16xf32>
    %cst_249 = arith.constant 1.000000e+00 : f32
    %1072 = vector.broadcast %cst_249 : f32 to vector<2x16xf32>
    %1073 = arith.addf %1072, %1071 : vector<2x16xf32>
    %1074 = arith.divf %1072, %1073 : vector<2x16xf32>
    %1075 = vector.extract_strided_slice %1054 {offsets = [0, 32], sizes = [2, 16], strides = [1, 1]} : vector<2x48xf32> to vector<2x16xf32>
    %1076 = vector.extract_strided_slice %1058 {offsets = [0, 32], sizes = [2, 16], strides = [1, 1]} : vector<2x48xf32> to vector<2x16xf32>
    %1077 = arith.mulf %1066, %1076 : vector<2x16xf32>
    %1078 = arith.addf %1075, %1077 : vector<2x16xf32>
    %1079 = math.tanh %1078 : vector<2x16xf32>
    %cst_250 = arith.constant 1.000000e+00 : f32
    %1080 = vector.broadcast %cst_250 : f32 to vector<2x16xf32>
    %1081 = arith.subf %1080, %1074 : vector<2x16xf32>
    %1082 = arith.mulf %1081, %1079 : vector<2x16xf32>
    %1083 = arith.mulf %1074, %1007 : vector<2x16xf32>
    %1084 = arith.addf %1082, %1083 : vector<2x16xf32>
    %1085 = arith.index_cast %c13_i32 : i32 to index
    %c0_251 = arith.constant 0 : index
    %c0_252 = arith.constant 0 : index
    %1086 = vector.load %arg9[%1085, %c0_251, %c0_252] : memref<16x2x16xf32, #tpu.memory_space<vmem>>, vector<1x2x16xf32>
    %1087 = vector.shape_cast %1086 : vector<1x2x16xf32> to vector<2x16xf32>
    %1088 = vector.shape_cast %1053 : vector<2x16xf32> to vector<1x2x16xf32>
    tpu.vector_store %arg9[%1085, %c0_251, %c0_252], %1088 {strides = array<i32>} : memref<16x2x16xf32, #tpu.memory_space<vmem>>, vector<1x2x16xf32>,
    %1089 = arith.index_cast %1016 : i32 to index
    %c0_253 = arith.constant 0 : index
    %c0_254 = arith.constant 0 : index
    %1090 = vector.load %arg10[%1089, %c0_253, %c0_254] : memref<16x2x16xf32, #tpu.memory_space<vmem>>, vector<1x2x16xf32>
    %1091 = vector.shape_cast %1090 : vector<1x2x16xf32> to vector<2x16xf32>
    %1092 = vector.shape_cast %1084 : vector<2x16xf32> to vector<1x2x16xf32>
    tpu.vector_store %arg10[%1089, %c0_253, %c0_254], %1092 {strides = array<i32>} : memref<16x2x16xf32, #tpu.memory_space<vmem>>, vector<1x2x16xf32>,
    %c14_i32 = arith.constant 14 : i32
    %c15_i32_255 = arith.constant 15 : i32
    %1093 = arith.subi %c15_i32_255, %c14_i32 : i32
    %1094 = arith.index_cast %c14_i32 : i32 to index
    %c0_256 = arith.constant 0 : index
    %c0_257 = arith.constant 0 : index
    %1095 = vector.load %arg8[%1094, %c0_256, %c0_257] : memref<16x2x96xf32, #tpu.memory_space<vmem>>, vector<1x2x96xf32>
    %1096 = vector.shape_cast %1095 : vector<1x2x96xf32> to vector<2x96xf32>
    %1097 = arith.index_cast %1093 : i32 to index
    %c0_258 = arith.constant 0 : index
    %c0_259 = arith.constant 0 : index
    %1098 = vector.load %arg8[%1097, %c0_258, %c0_259] : memref<16x2x96xf32, #tpu.memory_space<vmem>>, vector<1x2x96xf32>
    %1099 = vector.shape_cast %1098 : vector<1x2x96xf32> to vector<2x96xf32>
    %1100 = vector.extract_strided_slice %1096 {offsets = [0, 0], sizes = [2, 48], strides = [1, 1]} : vector<2x96xf32> to vector<2x48xf32>
    %1101 = arith.truncf %1053 : vector<2x16xf32> to vector<2x16xbf16>
    %cst_260 = arith.constant dense<0.000000e+00> : vector<2x48xf32>
    %1102 = tpu.matmul %1101, %10, %cst_260 {dimension_numbers = #tpu.dot_dimension_numbers<[1], [0], [0], [1], [0, 0, 1, 1], [], []>} : vector<2x16xbf16>, vector<16x48xbf16>, vector<2x48xf32> -> vector<2x48xf32>
    %1103 = vector.broadcast %12 : vector<1x48xf32> to vector<2x48xf32>
    %1104 = arith.addf %1102, %1103 : vector<2x48xf32>
    %1105 = vector.extract_strided_slice %1100 {offsets = [0, 0], sizes = [2, 16], strides = [1, 1]} : vector<2x48xf32> to vector<2x16xf32>
    %1106 = vector.extract_strided_slice %1104 {offsets = [0, 0], sizes = [2, 16], strides = [1, 1]} : vector<2x48xf32> to vector<2x16xf32>
    %1107 = arith.addf %1105, %1106 : vector<2x16xf32>
    %1108 = arith.negf %1107 : vector<2x16xf32>
    %1109 = math.exp %1108 : vector<2x16xf32>
    %cst_261 = arith.constant 1.000000e+00 : f32
    %1110 = vector.broadcast %cst_261 : f32 to vector<2x16xf32>
    %1111 = arith.addf %1110, %1109 : vector<2x16xf32>
    %1112 = arith.divf %1110, %1111 : vector<2x16xf32>
    %1113 = vector.extract_strided_slice %1100 {offsets = [0, 16], sizes = [2, 16], strides = [1, 1]} : vector<2x48xf32> to vector<2x16xf32>
    %1114 = vector.extract_strided_slice %1104 {offsets = [0, 16], sizes = [2, 16], strides = [1, 1]} : vector<2x48xf32> to vector<2x16xf32>
    %1115 = arith.addf %1113, %1114 : vector<2x16xf32>
    %1116 = arith.negf %1115 : vector<2x16xf32>
    %1117 = math.exp %1116 : vector<2x16xf32>
    %cst_262 = arith.constant 1.000000e+00 : f32
    %1118 = vector.broadcast %cst_262 : f32 to vector<2x16xf32>
    %1119 = arith.addf %1118, %1117 : vector<2x16xf32>
    %1120 = arith.divf %1118, %1119 : vector<2x16xf32>
    %1121 = vector.extract_strided_slice %1100 {offsets = [0, 32], sizes = [2, 16], strides = [1, 1]} : vector<2x48xf32> to vector<2x16xf32>
    %1122 = vector.extract_strided_slice %1104 {offsets = [0, 32], sizes = [2, 16], strides = [1, 1]} : vector<2x48xf32> to vector<2x16xf32>
    %1123 = arith.mulf %1112, %1122 : vector<2x16xf32>
    %1124 = arith.addf %1121, %1123 : vector<2x16xf32>
    %1125 = math.tanh %1124 : vector<2x16xf32>
    %cst_263 = arith.constant 1.000000e+00 : f32
    %1126 = vector.broadcast %cst_263 : f32 to vector<2x16xf32>
    %1127 = arith.subf %1126, %1120 : vector<2x16xf32>
    %1128 = arith.mulf %1127, %1125 : vector<2x16xf32>
    %1129 = arith.mulf %1120, %1053 : vector<2x16xf32>
    %1130 = arith.addf %1128, %1129 : vector<2x16xf32>
    %1131 = vector.extract_strided_slice %1099 {offsets = [0, 48], sizes = [2, 48], strides = [1, 1]} : vector<2x96xf32> to vector<2x48xf32>
    %1132 = arith.truncf %1084 : vector<2x16xf32> to vector<2x16xbf16>
    %cst_264 = arith.constant dense<0.000000e+00> : vector<2x48xf32>
    %1133 = tpu.matmul %1132, %11, %cst_264 {dimension_numbers = #tpu.dot_dimension_numbers<[1], [0], [0], [1], [0, 0, 1, 1], [], []>} : vector<2x16xbf16>, vector<16x48xbf16>, vector<2x48xf32> -> vector<2x48xf32>
    %1134 = vector.broadcast %13 : vector<1x48xf32> to vector<2x48xf32>
    %1135 = arith.addf %1133, %1134 : vector<2x48xf32>
    %1136 = vector.extract_strided_slice %1131 {offsets = [0, 0], sizes = [2, 16], strides = [1, 1]} : vector<2x48xf32> to vector<2x16xf32>
    %1137 = vector.extract_strided_slice %1135 {offsets = [0, 0], sizes = [2, 16], strides = [1, 1]} : vector<2x48xf32> to vector<2x16xf32>
    %1138 = arith.addf %1136, %1137 : vector<2x16xf32>
    %1139 = arith.negf %1138 : vector<2x16xf32>
    %1140 = math.exp %1139 : vector<2x16xf32>
    %cst_265 = arith.constant 1.000000e+00 : f32
    %1141 = vector.broadcast %cst_265 : f32 to vector<2x16xf32>
    %1142 = arith.addf %1141, %1140 : vector<2x16xf32>
    %1143 = arith.divf %1141, %1142 : vector<2x16xf32>
    %1144 = vector.extract_strided_slice %1131 {offsets = [0, 16], sizes = [2, 16], strides = [1, 1]} : vector<2x48xf32> to vector<2x16xf32>
    %1145 = vector.extract_strided_slice %1135 {offsets = [0, 16], sizes = [2, 16], strides = [1, 1]} : vector<2x48xf32> to vector<2x16xf32>
    %1146 = arith.addf %1144, %1145 : vector<2x16xf32>
    %1147 = arith.negf %1146 : vector<2x16xf32>
    %1148 = math.exp %1147 : vector<2x16xf32>
    %cst_266 = arith.constant 1.000000e+00 : f32
    %1149 = vector.broadcast %cst_266 : f32 to vector<2x16xf32>
    %1150 = arith.addf %1149, %1148 : vector<2x16xf32>
    %1151 = arith.divf %1149, %1150 : vector<2x16xf32>
    %1152 = vector.extract_strided_slice %1131 {offsets = [0, 32], sizes = [2, 16], strides = [1, 1]} : vector<2x48xf32> to vector<2x16xf32>
    %1153 = vector.extract_strided_slice %1135 {offsets = [0, 32], sizes = [2, 16], strides = [1, 1]} : vector<2x48xf32> to vector<2x16xf32>
    %1154 = arith.mulf %1143, %1153 : vector<2x16xf32>
    %1155 = arith.addf %1152, %1154 : vector<2x16xf32>
    %1156 = math.tanh %1155 : vector<2x16xf32>
    %cst_267 = arith.constant 1.000000e+00 : f32
    %1157 = vector.broadcast %cst_267 : f32 to vector<2x16xf32>
    %1158 = arith.subf %1157, %1151 : vector<2x16xf32>
    %1159 = arith.mulf %1158, %1156 : vector<2x16xf32>
    %1160 = arith.mulf %1151, %1084 : vector<2x16xf32>
    %1161 = arith.addf %1159, %1160 : vector<2x16xf32>
    %1162 = arith.index_cast %c14_i32 : i32 to index
    %c0_268 = arith.constant 0 : index
    %c0_269 = arith.constant 0 : index
    %1163 = vector.load %arg9[%1162, %c0_268, %c0_269] : memref<16x2x16xf32, #tpu.memory_space<vmem>>, vector<1x2x16xf32>
    %1164 = vector.shape_cast %1163 : vector<1x2x16xf32> to vector<2x16xf32>
    %1165 = vector.shape_cast %1130 : vector<2x16xf32> to vector<1x2x16xf32>
    tpu.vector_store %arg9[%1162, %c0_268, %c0_269], %1165 {strides = array<i32>} : memref<16x2x16xf32, #tpu.memory_space<vmem>>, vector<1x2x16xf32>,
    %1166 = arith.index_cast %1093 : i32 to index
    %c0_270 = arith.constant 0 : index
    %c0_271 = arith.constant 0 : index
    %1167 = vector.load %arg10[%1166, %c0_270, %c0_271] : memref<16x2x16xf32, #tpu.memory_space<vmem>>, vector<1x2x16xf32>
    %1168 = vector.shape_cast %1167 : vector<1x2x16xf32> to vector<2x16xf32>
    %1169 = vector.shape_cast %1161 : vector<2x16xf32> to vector<1x2x16xf32>
    tpu.vector_store %arg10[%1166, %c0_270, %c0_271], %1169 {strides = array<i32>} : memref<16x2x16xf32, #tpu.memory_space<vmem>>, vector<1x2x16xf32>,
    %c15_i32_272 = arith.constant 15 : i32
    %c15_i32_273 = arith.constant 15 : i32
    %1170 = arith.subi %c15_i32_273, %c15_i32_272 : i32
    %1171 = arith.index_cast %c15_i32_272 : i32 to index
    %c0_274 = arith.constant 0 : index
    %c0_275 = arith.constant 0 : index
    %1172 = vector.load %arg8[%1171, %c0_274, %c0_275] : memref<16x2x96xf32, #tpu.memory_space<vmem>>, vector<1x2x96xf32>
    %1173 = vector.shape_cast %1172 : vector<1x2x96xf32> to vector<2x96xf32>
    %1174 = arith.index_cast %1170 : i32 to index
    %c0_276 = arith.constant 0 : index
    %c0_277 = arith.constant 0 : index
    %1175 = vector.load %arg8[%1174, %c0_276, %c0_277] : memref<16x2x96xf32, #tpu.memory_space<vmem>>, vector<1x2x96xf32>
    %1176 = vector.shape_cast %1175 : vector<1x2x96xf32> to vector<2x96xf32>
    %1177 = vector.extract_strided_slice %1173 {offsets = [0, 0], sizes = [2, 48], strides = [1, 1]} : vector<2x96xf32> to vector<2x48xf32>
    %1178 = arith.truncf %1130 : vector<2x16xf32> to vector<2x16xbf16>
    %cst_278 = arith.constant dense<0.000000e+00> : vector<2x48xf32>
    %1179 = tpu.matmul %1178, %10, %cst_278 {dimension_numbers = #tpu.dot_dimension_numbers<[1], [0], [0], [1], [0, 0, 1, 1], [], []>} : vector<2x16xbf16>, vector<16x48xbf16>, vector<2x48xf32> -> vector<2x48xf32>
    %1180 = vector.broadcast %12 : vector<1x48xf32> to vector<2x48xf32>
    %1181 = arith.addf %1179, %1180 : vector<2x48xf32>
    %1182 = vector.extract_strided_slice %1177 {offsets = [0, 0], sizes = [2, 16], strides = [1, 1]} : vector<2x48xf32> to vector<2x16xf32>
    %1183 = vector.extract_strided_slice %1181 {offsets = [0, 0], sizes = [2, 16], strides = [1, 1]} : vector<2x48xf32> to vector<2x16xf32>
    %1184 = arith.addf %1182, %1183 : vector<2x16xf32>
    %1185 = arith.negf %1184 : vector<2x16xf32>
    %1186 = math.exp %1185 : vector<2x16xf32>
    %cst_279 = arith.constant 1.000000e+00 : f32
    %1187 = vector.broadcast %cst_279 : f32 to vector<2x16xf32>
    %1188 = arith.addf %1187, %1186 : vector<2x16xf32>
    %1189 = arith.divf %1187, %1188 : vector<2x16xf32>
    %1190 = vector.extract_strided_slice %1177 {offsets = [0, 16], sizes = [2, 16], strides = [1, 1]} : vector<2x48xf32> to vector<2x16xf32>
    %1191 = vector.extract_strided_slice %1181 {offsets = [0, 16], sizes = [2, 16], strides = [1, 1]} : vector<2x48xf32> to vector<2x16xf32>
    %1192 = arith.addf %1190, %1191 : vector<2x16xf32>
    %1193 = arith.negf %1192 : vector<2x16xf32>
    %1194 = math.exp %1193 : vector<2x16xf32>
    %cst_280 = arith.constant 1.000000e+00 : f32
    %1195 = vector.broadcast %cst_280 : f32 to vector<2x16xf32>
    %1196 = arith.addf %1195, %1194 : vector<2x16xf32>
    %1197 = arith.divf %1195, %1196 : vector<2x16xf32>
    %1198 = vector.extract_strided_slice %1177 {offsets = [0, 32], sizes = [2, 16], strides = [1, 1]} : vector<2x48xf32> to vector<2x16xf32>
    %1199 = vector.extract_strided_slice %1181 {offsets = [0, 32], sizes = [2, 16], strides = [1, 1]} : vector<2x48xf32> to vector<2x16xf32>
    %1200 = arith.mulf %1189, %1199 : vector<2x16xf32>
    %1201 = arith.addf %1198, %1200 : vector<2x16xf32>
    %1202 = math.tanh %1201 : vector<2x16xf32>
    %cst_281 = arith.constant 1.000000e+00 : f32
    %1203 = vector.broadcast %cst_281 : f32 to vector<2x16xf32>
    %1204 = arith.subf %1203, %1197 : vector<2x16xf32>
    %1205 = arith.mulf %1204, %1202 : vector<2x16xf32>
    %1206 = arith.mulf %1197, %1130 : vector<2x16xf32>
    %1207 = arith.addf %1205, %1206 : vector<2x16xf32>
    %1208 = vector.extract_strided_slice %1176 {offsets = [0, 48], sizes = [2, 48], strides = [1, 1]} : vector<2x96xf32> to vector<2x48xf32>
    %1209 = arith.truncf %1161 : vector<2x16xf32> to vector<2x16xbf16>
    %cst_282 = arith.constant dense<0.000000e+00> : vector<2x48xf32>
    %1210 = tpu.matmul %1209, %11, %cst_282 {dimension_numbers = #tpu.dot_dimension_numbers<[1], [0], [0], [1], [0, 0, 1, 1], [], []>} : vector<2x16xbf16>, vector<16x48xbf16>, vector<2x48xf32> -> vector<2x48xf32>
    %1211 = vector.broadcast %13 : vector<1x48xf32> to vector<2x48xf32>
    %1212 = arith.addf %1210, %1211 : vector<2x48xf32>
    %1213 = vector.extract_strided_slice %1208 {offsets = [0, 0], sizes = [2, 16], strides = [1, 1]} : vector<2x48xf32> to vector<2x16xf32>
    %1214 = vector.extract_strided_slice %1212 {offsets = [0, 0], sizes = [2, 16], strides = [1, 1]} : vector<2x48xf32> to vector<2x16xf32>
    %1215 = arith.addf %1213, %1214 : vector<2x16xf32>
    %1216 = arith.negf %1215 : vector<2x16xf32>
    %1217 = math.exp %1216 : vector<2x16xf32>
    %cst_283 = arith.constant 1.000000e+00 : f32
    %1218 = vector.broadcast %cst_283 : f32 to vector<2x16xf32>
    %1219 = arith.addf %1218, %1217 : vector<2x16xf32>
    %1220 = arith.divf %1218, %1219 : vector<2x16xf32>
    %1221 = vector.extract_strided_slice %1208 {offsets = [0, 16], sizes = [2, 16], strides = [1, 1]} : vector<2x48xf32> to vector<2x16xf32>
    %1222 = vector.extract_strided_slice %1212 {offsets = [0, 16], sizes = [2, 16], strides = [1, 1]} : vector<2x48xf32> to vector<2x16xf32>
    %1223 = arith.addf %1221, %1222 : vector<2x16xf32>
    %1224 = arith.negf %1223 : vector<2x16xf32>
    %1225 = math.exp %1224 : vector<2x16xf32>
    %cst_284 = arith.constant 1.000000e+00 : f32
    %1226 = vector.broadcast %cst_284 : f32 to vector<2x16xf32>
    %1227 = arith.addf %1226, %1225 : vector<2x16xf32>
    %1228 = arith.divf %1226, %1227 : vector<2x16xf32>
    %1229 = vector.extract_strided_slice %1208 {offsets = [0, 32], sizes = [2, 16], strides = [1, 1]} : vector<2x48xf32> to vector<2x16xf32>
    %1230 = vector.extract_strided_slice %1212 {offsets = [0, 32], sizes = [2, 16], strides = [1, 1]} : vector<2x48xf32> to vector<2x16xf32>
    %1231 = arith.mulf %1220, %1230 : vector<2x16xf32>
    %1232 = arith.addf %1229, %1231 : vector<2x16xf32>
    %1233 = math.tanh %1232 : vector<2x16xf32>
    %cst_285 = arith.constant 1.000000e+00 : f32
    %1234 = vector.broadcast %cst_285 : f32 to vector<2x16xf32>
    %1235 = arith.subf %1234, %1228 : vector<2x16xf32>
    %1236 = arith.mulf %1235, %1233 : vector<2x16xf32>
    %1237 = arith.mulf %1228, %1161 : vector<2x16xf32>
    %1238 = arith.addf %1236, %1237 : vector<2x16xf32>
    %1239 = arith.index_cast %c15_i32_272 : i32 to index
    %c0_286 = arith.constant 0 : index
    %c0_287 = arith.constant 0 : index
    %1240 = vector.load %arg9[%1239, %c0_286, %c0_287] : memref<16x2x16xf32, #tpu.memory_space<vmem>>, vector<1x2x16xf32>
    %1241 = vector.shape_cast %1240 : vector<1x2x16xf32> to vector<2x16xf32>
    %1242 = vector.shape_cast %1207 : vector<2x16xf32> to vector<1x2x16xf32>
    tpu.vector_store %arg9[%1239, %c0_286, %c0_287], %1242 {strides = array<i32>} : memref<16x2x16xf32, #tpu.memory_space<vmem>>, vector<1x2x16xf32>,
    %1243 = arith.index_cast %1170 : i32 to index
    %c0_288 = arith.constant 0 : index
    %c0_289 = arith.constant 0 : index
    %1244 = vector.load %arg10[%1243, %c0_288, %c0_289] : memref<16x2x16xf32, #tpu.memory_space<vmem>>, vector<1x2x16xf32>
    %1245 = vector.shape_cast %1244 : vector<1x2x16xf32> to vector<2x16xf32>
    %1246 = vector.shape_cast %1238 : vector<2x16xf32> to vector<1x2x16xf32>
    tpu.vector_store %arg10[%1243, %c0_288, %c0_289], %1246 {strides = array<i32>} : memref<16x2x16xf32, #tpu.memory_space<vmem>>, vector<1x2x16xf32>,
    %c16_i32 = arith.constant 16 : i32
    %c0_290 = arith.constant 0 : index
    %c0_291 = arith.constant 0 : index
    %c0_292 = arith.constant 0 : index
    %1247 = vector.load %arg9[%c0_290, %c0_291, %c0_292] : memref<16x2x16xf32, #tpu.memory_space<vmem>>, vector<16x2x16xf32>
    %c0_293 = arith.constant 0 : index
    %c0_294 = arith.constant 0 : index
    %c0_295 = arith.constant 0 : index
    %1248 = vector.load %arg10[%c0_293, %c0_294, %c0_295] : memref<16x2x16xf32, #tpu.memory_space<vmem>>, vector<16x2x16xf32>
    %1249 = tpu.concatenate %1247, %1248 in 2 : vector<16x2x16xf32>, vector<16x2x16xf32> -> vector<16x2x32xf32>
    %c0_296 = arith.constant 0 : index
    %c0_297 = arith.constant 0 : index
    %c0_298 = arith.constant 0 : index
    %1250 = vector.load %arg7[%c0_296, %c0_297, %c0_298] : memref<16x2x32xf32, #tpu.memory_space<vmem>>, vector<16x2x32xf32>
    tpu.vector_store %arg7[%c0_296, %c0_297, %c0_298], %1249 {strides = array<i32>} : memref<16x2x32xf32, #tpu.memory_space<vmem>>, vector<16x2x32xf32>,
    return
  }
}

</mosaic_0001>

<llo_original>
// kernel: encoder_forward.5
$region0: #{encoder_forward.5}
  #allocation0 [shape = 'u32[]', space=smem, size = 0x4, offset = 0x4, fixed_abs, tag = 'smem constant byte address 0x4 - core index']
  #allocation1 [shape = 'u32[144,128]{1,0:T(1,128)}', space=vmem, size = 0x12000, scoped, tag = 'internal scratch']
  %s0 = inlined_call_operand.vmem [shape: f32[32,32], index: 0, kind: input, shape index: {}]
  %s1 = inlined_call_operand.vmem [shape: bf16[32,32], index: 1, kind: input, shape index: {}]
  %s2 = inlined_call_operand.vmem [shape: f32[1,32], index: 2, kind: input, shape index: {}]
  %s3 = inlined_call_operand.vmem [shape: bf16[32,32], index: 3, kind: input, shape index: {}]
  %s4 = inlined_call_operand.vmem [shape: f32[1,32], index: 4, kind: input, shape index: {}]
  %s5 = inlined_call_operand.vmem [shape: f32[32,32], index: 5, kind: output, shape index: {}]
  %s6 = sld [smem:[#allocation0]]
  $region30: #{encoder_forward.5} parent=0
    _
  %s8 = ssub.s32 1, %s6
  %s9 = scalar_select 0, %s8, %s6
  // Predicated region
  $region2: #{encoder_forward.5} parent=0 // pred_check
    _
  $region3: #{encoder_forward.5} parent=0 // pred_check_branch
    %11 = sbr.rel (0) target = $region5
  $region4: #{encoder_forward.5} parent=0 // pred_region
    _
  $region5: #{encoder_forward.5} parent=0 // pred_fallthru
    _
  // Predicated region
  $region6: #{encoder_forward.5} parent=0 // pred_check
    _
  $region7: #{encoder_forward.5} parent=0 // pred_check_branch
    %13 = sbr.rel (0) target = $region9
  $region8: #{encoder_forward.5} parent=0 // pred_region
    _
  $region9: #{encoder_forward.5} parent=0 // pred_fallthru
    _
  // Predicated region
  $region10: #{encoder_forward.5} parent=0 // pred_check
    _
  $region11: #{encoder_forward.5} parent=0 // pred_check_branch
    %15 = sbr.rel (0) target = $region13
  $region12: #{encoder_forward.5} parent=0 // pred_region
    _
  $region13: #{encoder_forward.5} parent=0 // pred_fallthru
    _
  // Predicated region
  $region14: #{encoder_forward.5} parent=0 // pred_check
    _
  $region15: #{encoder_forward.5} parent=0 // pred_check_branch
    %17 = sbr.rel (0) target = $region17
  $region16: #{encoder_forward.5} parent=0 // pred_region
    _
  $region17: #{encoder_forward.5} parent=0 // pred_fallthru
    _
  // Predicated region
  $region18: #{encoder_forward.5} parent=0 // pred_check
    _
  $region19: #{encoder_forward.5} parent=0 // pred_check_branch
    %19 = sbr.rel (0) target = $region21
  $region20: #{encoder_forward.5} parent=0 // pred_region
    _
  $region21: #{encoder_forward.5} parent=0 // pred_fallthru
    _
  %v21 = vld [vmem:[%s0] sm:$0xff]
  %v22 = vld [vmem:[%s0 + $0x8] sm:$0xff]
  %v23 = vld [vmem:[%s0 + $0x10] sm:$0xff]
  %v24 = vld [vmem:[%s0 + $0x18] sm:$0xff]
  %v25 = vpack.c.bf16 %v22, %v21
  %v26 = vpack.c.bf16 %v24, %v23
  %v27 = vld [vmem:[%s1] sm:$0xf]
  %v28 = vld [vmem:[%s1 + $0x4] sm:$0xf]
  %v29 = vld [vmem:[%s1 + $0x8] sm:$0xf]
  %v30 = vld [vmem:[%s1 + $0xc] sm:$0xf]
  %v31 = vld [vmem:[%s2] sm:$0x1]
  %v33 = vlaneseq
  %v34 = vshrl.u32 %v33, 7
  %v35 = vsub.s32 0, %v34
  %v36 = vrot.slane %v31, %v35
  %v42 = vunpack.c.l.b16 %v27
  %v43 = vunpack.c.l.b16 %v28
  %v44 = vunpack.c.l.b16 %v29
  %v45 = vunpack.c.l.b16 %v30
  %v46 = vpack.c.b16 %v43, %v42
  %v47 = vpack.c.b16 %v45, %v44
  %vm50 = vcmask 261120
  %v52 = vsel %vm50, %v25, 0
  %v55 = vsel %vm50, %v26, 0
  %57 = vmatprep.subr.bf16.mxu0 0
  %58 = vmatpush1.bf16.msra.mxu0 %v46
  %59 = vmatprep.subr.bf16.mxu0 0
  %60 = vmatpush1.bf16.msra.mxu0 %v47
  %61 = vmatprep.subr.bf16.mxu0 0
  %62 = vmatpush1.bf16.msra.mxu0 0
  %63 = vmatprep.subr.bf16.mxu0 0
  %64 = vmatpush1.bf16.msra.mxu0 0
  %65 = vmatprep.subr.bf16.mxu0 0
  %66 = vmatpush1.bf16.msra.mxu0 0
  %67 = vmatprep.subr.bf16.mxu0 0
  %68 = vmatpush1.bf16.msra.mxu0 0
  %69 = vmatprep.subr.bf16.mxu0 0
  %70 = vmatpush1.bf16.msra.mxu0 0
  %71 = vmatprep.subr.bf16.mxu0 0
  %72 = vmatpush1.bf16.msra.mxu0 0
  %73 = vmatprep.subr.bf16.mxu0 0
  %74 = vmatpush1.bf16.msra.mxu0 0
  %75 = vmatprep.subr.bf16.mxu0 0
  %76 = vmatpush1.bf16.msra.mxu0 0
  %77 = vmatprep.subr.bf16.mxu0 0
  %78 = vmatpush1.bf16.msra.mxu0 0
  %79 = vmatprep.subr.bf16.mxu0 0
  %80 = vmatpush1.bf16.msra.mxu0 0
  %81 = vmatprep.subr.bf16.mxu0 0
  %82 = vmatpush1.bf16.msra.mxu0 0
  %83 = vmatprep.subr.bf16.mxu0 0
  %84 = vmatpush1.bf16.msra.mxu0 0
  %85 = vmatprep.subr.bf16.mxu0 0
  %86 = vmatpush1.bf16.msra.mxu0 0
  %87 = vmatprep.subr.bf16.mxu0 0
  %88 = vmatpush1.bf16.msra.mxu0 0
  %89 = vmatprep.mubr.bf16.mxu0 0
  %90 = vmatmul.mubr.bf16.gmra.mrb[0].mxu0 %v52
  %v91 = vpop.f32.mrb[0].mxu0
  %v92 = vadd.f32 %v36, %v91
  %v93 = vpop.f32.mrb[0].mxu0
  %v94 = vpop.f32.mrb[0].mxu0
  %v95 = vadd.f32 %v36, %v94
  %v96 = vpop.f32.mrb[0].mxu0
  %97 = vmatprep.mubr.bf16.mxu0 0
  %98 = vmatmul.mubr.bf16.gmra.mrb[0].mxu0 %v55
  %v99 = vpop.f32.mrb[0].mxu0
  %v100 = vadd.f32 %v36, %v99
  %v101 = vpop.f32.mrb[0].mxu0
  %v102 = vpop.f32.mrb[0].mxu0
  %v103 = vadd.f32 %v36, %v102
  %v104 = vpop.f32.mrb[0].mxu0
  %105 = vdwg.mxu0
  %v106 = vmax.f32 %v92, 0.0
  %v107 = vmax.f32 %v95, 0.0
  %v108 = vmax.f32 %v100, 0.0
  %v109 = vmax.f32 %v103, 0.0
  %v110 = vpack.c.bf16 %v107, %v106
  %v111 = vpack.c.bf16 %v109, %v108
  %v112 = vld [vmem:[%s3] sm:$0xf]
  %v113 = vld [vmem:[%s3 + $0x4] sm:$0xf]
  %v114 = vld [vmem:[%s3 + $0x8] sm:$0xf]
  %v115 = vld [vmem:[%s3 + $0xc] sm:$0xf]
  %v116 = vld [vmem:[%s4] sm:$0x1]
  %v118 = vlaneseq
  %v119 = vshrl.u32 %v118, 7
  %v120 = vsub.s32 0, %v119
  %v121 = vrot.slane %v116, %v120
  %v127 = vunpack.c.l.b16 %v112
  %v128 = vunpack.c.l.b16 %v113
  %v129 = vunpack.c.l.b16 %v114
  %v130 = vunpack.c.l.b16 %v115
  %v131 = vpack.c.b16 %v128, %v127
  %v132 = vpack.c.b16 %v130, %v129
  %v136 = vsel %vm50, %v110, 0
  %v139 = vsel %vm50, %v111, 0
  %141 = vmatprep.subr.bf16.mxu0 0
  %142 = vmatpush1.bf16.msra.mxu0 %v131
  %143 = vmatprep.subr.bf16.mxu0 0
  %144 = vmatpush1.bf16.msra.mxu0 %v132
  %145 = vmatprep.subr.bf16.mxu0 0
  %146 = vmatpush1.bf16.msra.mxu0 0
  %147 = vmatprep.subr.bf16.mxu0 0
  %148 = vmatpush1.bf16.msra.mxu0 0
  %149 = vmatprep.subr.bf16.mxu0 0
  %150 = vmatpush1.bf16.msra.mxu0 0
  %151 = vmatprep.subr.bf16.mxu0 0
  %152 = vmatpush1.bf16.msra.mxu0 0
  %153 = vmatprep.subr.bf16.mxu0 0
  %154 = vmatpush1.bf16.msra.mxu0 0
  %155 = vmatprep.subr.bf16.mxu0 0
  %156 = vmatpush1.bf16.msra.mxu0 0
  %157 = vmatprep.subr.bf16.mxu0 0
  %158 = vmatpush1.bf16.msra.mxu0 0
  %159 = vmatprep.subr.bf16.mxu0 0
  %160 = vmatpush1.bf16.msra.mxu0 0
  %161 = vmatprep.subr.bf16.mxu0 0
  %162 = vmatpush1.bf16.msra.mxu0 0
  %163 = vmatprep.subr.bf16.mxu0 0
  %164 = vmatpush1.bf16.msra.mxu0 0
  %165 = vmatprep.subr.bf16.mxu0 0
  %166 = vmatpush1.bf16.msra.mxu0 0
  %167 = vmatprep.subr.bf16.mxu0 0
  %168 = vmatpush1.bf16.msra.mxu0 0
  %169 = vmatprep.subr.bf16.mxu0 0
  %170 = vmatpush1.bf16.msra.mxu0 0
  %171 = vmatprep.subr.bf16.mxu0 0
  %172 = vmatpush1.bf16.msra.mxu0 0
  %173 = vmatprep.mubr.bf16.mxu0 0
  %174 = vmatmul.mubr.bf16.gmra.mrb[0].mxu0 %v136
  %v175 = vpop.f32.mrb[0].mxu0
  %v176 = vadd.f32 %v121, %v175
  %v177 = vpop.f32.mrb[0].mxu0
  %v178 = vpop.f32.mrb[0].mxu0
  %v179 = vadd.f32 %v121, %v178
  %v180 = vpop.f32.mrb[0].mxu0
  %181 = vmatprep.mubr.bf16.mxu0 0
  %182 = vmatmul.mubr.bf16.gmra.mrb[0].mxu0 %v139
  %v183 = vpop.f32.mrb[0].mxu0
  %v184 = vadd.f32 %v121, %v183
  %v185 = vpop.f32.mrb[0].mxu0
  %v186 = vpop.f32.mrb[0].mxu0
  %v187 = vadd.f32 %v121, %v186
  %v188 = vpop.f32.mrb[0].mxu0
  %189 = vdwg.mxu0
  %v190 = vmax.f32 %v176, 0.0
  %v191 = vmax.f32 %v179, 0.0
  %v192 = vmax.f32 %v184, 0.0
  %v193 = vmax.f32 %v187, 0.0
  %194 = vst.msk [vmem:[%s5] sm:$0xff] %vm50, %v190
  %195 = vst.msk [vmem:[%s5 + $0x8] sm:$0xff] %vm50, %v191
  %196 = vst.msk [vmem:[%s5 + $0x10] sm:$0xff] %vm50, %v192
  %197 = vst.msk [vmem:[%s5 + $0x18] sm:$0xff] %vm50, %v193
  // Predicated region
  $region22: #{encoder_forward.5} parent=0 // pred_check
    _
  $region23: #{encoder_forward.5} parent=0 // pred_check_branch
    %199 = sbr.rel (0) target = $region25
  $region24: #{encoder_forward.5} parent=0 // pred_region
    _
  $region25: #{encoder_forward.5} parent=0 // pred_fallthru
    _
  // Predicated region
  $region26: #{encoder_forward.5} parent=0 // pred_check
    _
  $region27: #{encoder_forward.5} parent=0 // pred_check_branch
    %201 = sbr.rel (0) target = $region29
  $region28: #{encoder_forward.5} parent=0 // pred_region
    _
  $region29: #{encoder_forward.5} parent=0 // pred_fallthru
    _

// kernel: encoder_forward.8
$region0: #{encoder_forward.8}
  #allocation0 [shape = 'u32[]', space=smem, size = 0x4, offset = 0x4, fixed_abs, tag = 'smem constant byte address 0x4 - core index']
  #allocation1 [shape = 'u32[144,128]{1,0:T(1,128)}', space=vmem, size = 0x12000, scoped, tag = 'internal scratch']
  %s0 = inlined_call_operand.vmem [shape: f32[32,32], index: 0, kind: input, shape index: {}]
  %s1 = inlined_call_operand.vmem [shape: bf16[2,32,32], index: 1, kind: input, shape index: {}]
  %s2 = inlined_call_operand.vmem [shape: f32[2,1,32], index: 2, kind: input, shape index: {}]
  %s3 = inlined_call_operand.vmem [shape: bf16[2,32,32], index: 3, kind: input, shape index: {}]
  %s4 = inlined_call_operand.vmem [shape: f32[2,1,32], index: 4, kind: input, shape index: {}]
  %s5 = inlined_call_operand.vmem [shape: f32[32,32], index: 5, kind: output, shape index: {}]
  %s6 = sld [smem:[#allocation0]]
  $region30: #{encoder_forward.8} parent=0
    _
  %s8 = ssub.s32 1, %s6
  %s9 = scalar_select 0, %s8, %s6
  // Predicated region
  $region2: #{encoder_forward.8} parent=0 // pred_check
    _
  $region3: #{encoder_forward.8} parent=0 // pred_check_branch
    %11 = sbr.rel (0) target = $region5
  $region4: #{encoder_forward.8} parent=0 // pred_region
    _
  $region5: #{encoder_forward.8} parent=0 // pred_fallthru
    _
  // Predicated region
  $region6: #{encoder_forward.8} parent=0 // pred_check
    _
  $region7: #{encoder_forward.8} parent=0 // pred_check_branch
    %13 = sbr.rel (0) target = $region9
  $region8: #{encoder_forward.8} parent=0 // pred_region
    _
  $region9: #{encoder_forward.8} parent=0 // pred_fallthru
    _
  // Predicated region
  $region10: #{encoder_forward.8} parent=0 // pred_check
    _
  $region11: #{encoder_forward.8} parent=0 // pred_check_branch
    %15 = sbr.rel (0) target = $region13
  $region12: #{encoder_forward.8} parent=0 // pred_region
    _
  $region13: #{encoder_forward.8} parent=0 // pred_fallthru
    _
  // Predicated region
  $region14: #{encoder_forward.8} parent=0 // pred_check
    _
  $region15: #{encoder_forward.8} parent=0 // pred_check_branch
    %17 = sbr.rel (0) target = $region17
  $region16: #{encoder_forward.8} parent=0 // pred_region
    _
  $region17: #{encoder_forward.8} parent=0 // pred_fallthru
    _
  // Predicated region
  $region18: #{encoder_forward.8} parent=0 // pred_check
    _
  $region19: #{encoder_forward.8} parent=0 // pred_check_branch
    %19 = sbr.rel (0) target = $region21
  $region20: #{encoder_forward.8} parent=0 // pred_region
    _
  $region21: #{encoder_forward.8} parent=0 // pred_fallthru
    _
  %v21 = vld [vmem:[%s0] sm:$0xff]
  %v22 = vld [vmem:[%s0 + $0x8] sm:$0xff]
  %v23 = vld [vmem:[%s0 + $0x10] sm:$0xff]
  %v24 = vld [vmem:[%s0 + $0x18] sm:$0xff]
  %v25 = vpack.c.bf16 %v22, %v21
  %v26 = vpack.c.bf16 %v24, %v23
  %v27 = vld [vmem:[%s1] sm:$0xf]
  %v28 = vld [vmem:[%s1 + $0x4] sm:$0xf]
  %v29 = vld [vmem:[%s1 + $0x8] sm:$0xf]
  %v30 = vld [vmem:[%s1 + $0xc] sm:$0xf]
  %v31 = vld [vmem:[%s2] sm:$0x1]
  %v33 = vlaneseq
  %v34 = vshrl.u32 %v33, 7
  %v35 = vsub.s32 0, %v34
  %v36 = vrot.slane %v31, %v35
  %v42 = vunpack.c.l.b16 %v27
  %v43 = vunpack.c.l.b16 %v28
  %v44 = vunpack.c.l.b16 %v29
  %v45 = vunpack.c.l.b16 %v30
  %v46 = vpack.c.b16 %v43, %v42
  %v47 = vpack.c.b16 %v45, %v44
  %vm50 = vcmask 261120
  %v52 = vsel %vm50, %v25, 0
  %v55 = vsel %vm50, %v26, 0
  %57 = vmatprep.subr.bf16.mxu0 0
  %58 = vmatpush1.bf16.msra.mxu0 %v46
  %59 = vmatprep.subr.bf16.mxu0 0
  %60 = vmatpush1.bf16.msra.mxu0 %v47
  %61 = vmatprep.subr.bf16.mxu0 0
  %62 = vmatpush1.bf16.msra.mxu0 0
  %63 = vmatprep.subr.bf16.mxu0 0
  %64 = vmatpush1.bf16.msra.mxu0 0
  %65 = vmatprep.subr.bf16.mxu0 0
  %66 = vmatpush1.bf16.msra.mxu0 0
  %67 = vmatprep.subr.bf16.mxu0 0
  %68 = vmatpush1.bf16.msra.mxu0 0
  %69 = vmatprep.subr.bf16.mxu0 0
  %70 = vmatpush1.bf16.msra.mxu0 0
  %71 = vmatprep.subr.bf16.mxu0 0
  %72 = vmatpush1.bf16.msra.mxu0 0
  %73 = vmatprep.subr.bf16.mxu0 0
  %74 = vmatpush1.bf16.msra.mxu0 0
  %75 = vmatprep.subr.bf16.mxu0 0
  %76 = vmatpush1.bf16.msra.mxu0 0
  %77 = vmatprep.subr.bf16.mxu0 0
  %78 = vmatpush1.bf16.msra.mxu0 0
  %79 = vmatprep.subr.bf16.mxu0 0
  %80 = vmatpush1.bf16.msra.mxu0 0
  %81 = vmatprep.subr.bf16.mxu0 0
  %82 = vmatpush1.bf16.msra.mxu0 0
  %83 = vmatprep.subr.bf16.mxu0 0
  %84 = vmatpush1.bf16.msra.mxu0 0
  %85 = vmatprep.subr.bf16.mxu0 0
  %86 = vmatpush1.bf16.msra.mxu0 0
  %87 = vmatprep.subr.bf16.mxu0 0
  %88 = vmatpush1.bf16.msra.mxu0 0
  %89 = vmatprep.mubr.bf16.mxu0 0
  %90 = vmatmul.mubr.bf16.gmra.mrb[0].mxu0 %v52
  %v91 = vpop.f32.mrb[0].mxu0
  %v92 = vadd.f32 %v36, %v91
  %v93 = vpop.f32.mrb[0].mxu0
  %v94 = vpop.f32.mrb[0].mxu0
  %v95 = vadd.f32 %v36, %v94
  %v96 = vpop.f32.mrb[0].mxu0
  %97 = vmatprep.mubr.bf16.mxu0 0
  %98 = vmatmul.mubr.bf16.gmra.mrb[0].mxu0 %v55
  %v99 = vpop.f32.mrb[0].mxu0
  %v100 = vadd.f32 %v36, %v99
  %v101 = vpop.f32.mrb[0].mxu0
  %v102 = vpop.f32.mrb[0].mxu0
  %v103 = vadd.f32 %v36, %v102
  %v104 = vpop.f32.mrb[0].mxu0
  %105 = vdwg.mxu0
  %v106 = vmax.f32 %v92, 0.0
  %v107 = vmax.f32 %v95, 0.0
  %v108 = vmax.f32 %v100, 0.0
  %v109 = vmax.f32 %v103, 0.0
  %v110 = vld [vmem:[%s3] sm:$0xf]
  %v111 = vld [vmem:[%s3 + $0x4] sm:$0xf]
  %v112 = vld [vmem:[%s3 + $0x8] sm:$0xf]
  %v113 = vld [vmem:[%s3 + $0xc] sm:$0xf]
  %v114 = vld [vmem:[%s4] sm:$0x1]
  %v116 = vlaneseq
  %v117 = vshrl.u32 %v116, 7
  %v118 = vsub.s32 0, %v117
  %v119 = vrot.slane %v114, %v118
  %v125 = vunpack.c.l.b16 %v110
  %v126 = vunpack.c.l.b16 %v111
  %v127 = vunpack.c.l.b16 %v112
  %v128 = vunpack.c.l.b16 %v113
  %v129 = vpack.c.b16 %v126, %v125
  %v130 = vpack.c.b16 %v128, %v127
  %133 = vmatprep.subr.bf16.mxu0 0
  %134 = vmatpush1.bf16.msra.mxu0 %v129
  %135 = vmatprep.subr.bf16.mxu0 0
  %136 = vmatpush1.bf16.msra.mxu0 %v130
  %137 = vmatprep.subr.bf16.mxu0 0
  %138 = vmatpush1.bf16.msra.mxu0 0
  %139 = vmatprep.subr.bf16.mxu0 0
  %140 = vmatpush1.bf16.msra.mxu0 0
  %141 = vmatprep.subr.bf16.mxu0 0
  %142 = vmatpush1.bf16.msra.mxu0 0
  %143 = vmatprep.subr.bf16.mxu0 0
  %144 = vmatpush1.bf16.msra.mxu0 0
  %145 = vmatprep.subr.bf16.mxu0 0
  %146 = vmatpush1.bf16.msra.mxu0 0
  %147 = vmatprep.subr.bf16.mxu0 0
  %148 = vmatpush1.bf16.msra.mxu0 0
  %149 = vmatprep.subr.bf16.mxu0 0
  %150 = vmatpush1.bf16.msra.mxu0 0
  %151 = vmatprep.subr.bf16.mxu0 0
  %152 = vmatpush1.bf16.msra.mxu0 0
  %153 = vmatprep.subr.bf16.mxu0 0
  %154 = vmatpush1.bf16.msra.mxu0 0
  %155 = vmatprep.subr.bf16.mxu0 0
  %156 = vmatpush1.bf16.msra.mxu0 0
  %157 = vmatprep.subr.bf16.mxu0 0
  %158 = vmatpush1.bf16.msra.mxu0 0
  %159 = vmatprep.subr.bf16.mxu0 0
  %160 = vmatpush1.bf16.msra.mxu0 0
  %161 = vmatprep.subr.bf16.mxu0 0
  %162 = vmatpush1.bf16.msra.mxu0 0
  %163 = vmatprep.subr.bf16.mxu0 0
  %164 = vmatpush1.bf16.msra.mxu0 0
  %165 = vmatprep.mubr.bf16.mxu0 0
  %166 = vmatmul.mubr.bf16.gmra.mrb[0].mxu0 %v52
  %v167 = vpop.f32.mrb[0].mxu0
  %v168 = vadd.f32 %v119, %v167
  %v169 = vpop.f32.mrb[0].mxu0
  %v170 = vpop.f32.mrb[0].mxu0
  %v171 = vadd.f32 %v119, %v170
  %v172 = vpop.f32.mrb[0].mxu0
  %173 = vmatprep.mubr.bf16.mxu0 0
  %174 = vmatmul.mubr.bf16.gmra.mrb[0].mxu0 %v55
  %v175 = vpop.f32.mrb[0].mxu0
  %v176 = vadd.f32 %v119, %v175
  %v177 = vpop.f32.mrb[0].mxu0
  %v178 = vpop.f32.mrb[0].mxu0
  %v179 = vadd.f32 %v119, %v178
  %v180 = vpop.f32.mrb[0].mxu0
  %181 = vdwg.mxu0
  %v182 = vxor.u32 %v168, 2147483648
  %v183 = vxor.u32 %v171, 2147483648
  %v184 = vxor.u32 %v176, 2147483648
  %v185 = vxor.u32 %v179, 2147483648
  %v186 = vmul.f32 %v182, 1.442695
  %v187 = vpow.pop %v186
  %v188 = vmul.f32 %v183, 1.442695
  %v189 = vpow.pop %v188
  %v190 = vmul.f32 %v184, 1.442695
  %v191 = vpow.pop %v190
  %v192 = vmul.f32 %v185, 1.442695
  %v193 = vpow.pop %v192
  %v194 = vadd.f32 %v187, 1.0
  %v195 = vadd.f32 %v189, 1.0
  %v196 = vadd.f32 %v191, 1.0
  %v197 = vadd.f32 %v193, 1.0
  %v198 = vrcp.pop %v194
  %v199 = vmul.f32 1.0, %v198
  %v200 = vrcp.pop %v195
  %v201 = vmul.f32 1.0, %v200
  %v202 = vrcp.pop %v196
  %v203 = vmul.f32 1.0, %v202
  %v204 = vrcp.pop %v197
  %v205 = vmul.f32 1.0, %v204
  %v206 = vmul.f32 %v199, %v106
  %v207 = vmul.f32 %v201, %v107
  %v208 = vmul.f32 %v203, %v108
  %v209 = vmul.f32 %v205, %v109
  %v210 = vsub.f32 1.0, %v199
  %v211 = vsub.f32 1.0, %v201
  %v212 = vsub.f32 1.0, %v203
  %v213 = vsub.f32 1.0, %v205
  %v214 = vmul.f32 %v210, %v21
  %v215 = vmul.f32 %v211, %v22
  %v216 = vmul.f32 %v212, %v23
  %v217 = vmul.f32 %v213, %v24
  %v218 = vadd.f32 %v206, %v214
  %v219 = vadd.f32 %v207, %v215
  %v220 = vadd.f32 %v208, %v216
  %v221 = vadd.f32 %v209, %v217
  %v222 = vpack.c.bf16 %v219, %v218
  %v223 = vpack.c.bf16 %v221, %v220
  %s224 = scalar_lea.vmem %s1, 16
  %v225 = vld [vmem:[%s224] sm:$0xf]
  %v226 = vld [vmem:[%s224 + $0x4] sm:$0xf]
  %v227 = vld [vmem:[%s224 + $0x8] sm:$0xf]
  %v228 = vld [vmem:[%s224 + $0xc] sm:$0xf]
  %s229 = scalar_lea.vmem %s2, 1
  %v230 = vld [vmem:[%s229] sm:$0x1]
  %v232 = vlaneseq
  %v233 = vshrl.u32 %v232, 7
  %v234 = vsub.s32 0, %v233
  %v235 = vrot.slane %v230, %v234
  %v241 = vunpack.c.l.b16 %v225
  %v242 = vunpack.c.l.b16 %v226
  %v243 = vunpack.c.l.b16 %v227
  %v244 = vunpack.c.l.b16 %v228
  %v245 = vpack.c.b16 %v242, %v241
  %v246 = vpack.c.b16 %v244, %v243
  %v250 = vsel %vm50, %v222, 0
  %v253 = vsel %vm50, %v223, 0
  %255 = vmatprep.subr.bf16.mxu0 0
  %256 = vmatpush1.bf16.msra.mxu0 %v245
  %257 = vmatprep.subr.bf16.mxu0 0
  %258 = vmatpush1.bf16.msra.mxu0 %v246
  %259 = vmatprep.subr.bf16.mxu0 0
  %260 = vmatpush1.bf16.msra.mxu0 0
  %261 = vmatprep.subr.bf16.mxu0 0
  %262 = vmatpush1.bf16.msra.mxu0 0
  %263 = vmatprep.subr.bf16.mxu0 0
  %264 = vmatpush1.bf16.msra.mxu0 0
  %265 = vmatprep.subr.bf16.mxu0 0
  %266 = vmatpush1.bf16.msra.mxu0 0
  %267 = vmatprep.subr.bf16.mxu0 0
  %268 = vmatpush1.bf16.msra.mxu0 0
  %269 = vmatprep.subr.bf16.mxu0 0
  %270 = vmatpush1.bf16.msra.mxu0 0
  %271 = vmatprep.subr.bf16.mxu0 0
  %272 = vmatpush1.bf16.msra.mxu0 0
  %273 = vmatprep.subr.bf16.mxu0 0
  %274 = vmatpush1.bf16.msra.mxu0 0
  %275 = vmatprep.subr.bf16.mxu0 0
  %276 = vmatpush1.bf16.msra.mxu0 0
  %277 = vmatprep.subr.bf16.mxu0 0
  %278 = vmatpush1.bf16.msra.mxu0 0
  %279 = vmatprep.subr.bf16.mxu0 0
  %280 = vmatpush1.bf16.msra.mxu0 0
  %281 = vmatprep.subr.bf16.mxu0 0
  %282 = vmatpush1.bf16.msra.mxu0 0
  %283 = vmatprep.subr.bf16.mxu0 0
  %284 = vmatpush1.bf16.msra.mxu0 0
  %285 = vmatprep.subr.bf16.mxu0 0
  %286 = vmatpush1.bf16.msra.mxu0 0
  %287 = vmatprep.mubr.bf16.mxu0 0
  %288 = vmatmul.mubr.bf16.gmra.mrb[0].mxu0 %v250
  %v289 = vpop.f32.mrb[0].mxu0
  %v290 = vadd.f32 %v235, %v289
  %v291 = vpop.f32.mrb[0].mxu0
  %v292 = vpop.f32.mrb[0].mxu0
  %v293 = vadd.f32 %v235, %v292
  %v294 = vpop.f32.mrb[0].mxu0
  %295 = vmatprep.mubr.bf16.mxu0 0
  %296 = vmatmul.mubr.bf16.gmra.mrb[0].mxu0 %v253
  %v297 = vpop.f32.mrb[0].mxu0
  %v298 = vadd.f32 %v235, %v297
  %v299 = vpop.f32.mrb[0].mxu0
  %v300 = vpop.f32.mrb[0].mxu0
  %v301 = vadd.f32 %v235, %v300
  %v302 = vpop.f32.mrb[0].mxu0
  %303 = vdwg.mxu0
  %v304 = vmax.f32 %v290, 0.0
  %v305 = vmax.f32 %v293, 0.0
  %v306 = vmax.f32 %v298, 0.0
  %v307 = vmax.f32 %v301, 0.0
  %s308 = scalar_lea.vmem %s3, 16
  %v309 = vld [vmem:[%s308] sm:$0xf]
  %v310 = vld [vmem:[%s308 + $0x4] sm:$0xf]
  %v311 = vld [vmem:[%s308 + $0x8] sm:$0xf]
  %v312 = vld [vmem:[%s308 + $0xc] sm:$0xf]
  %s313 = scalar_lea.vmem %s4, 1
  %v314 = vld [vmem:[%s313] sm:$0x1]
  %v316 = vlaneseq
  %v317 = vshrl.u32 %v316, 7
  %v318 = vsub.s32 0, %v317
  %v319 = vrot.slane %v314, %v318
  %v325 = vunpack.c.l.b16 %v309
  %v326 = vunpack.c.l.b16 %v310
  %v327 = vunpack.c.l.b16 %v311
  %v328 = vunpack.c.l.b16 %v312
  %v329 = vpack.c.b16 %v326, %v325
  %v330 = vpack.c.b16 %v328, %v327
  %333 = vmatprep.subr.bf16.mxu0 0
  %334 = vmatpush1.bf16.msra.mxu0 %v329
  %335 = vmatprep.subr.bf16.mxu0 0
  %336 = vmatpush1.bf16.msra.mxu0 %v330
  %337 = vmatprep.subr.bf16.mxu0 0
  %338 = vmatpush1.bf16.msra.mxu0 0
  %339 = vmatprep.subr.bf16.mxu0 0
  %340 = vmatpush1.bf16.msra.mxu0 0
  %341 = vmatprep.subr.bf16.mxu0 0
  %342 = vmatpush1.bf16.msra.mxu0 0
  %343 = vmatprep.subr.bf16.mxu0 0
  %344 = vmatpush1.bf16.msra.mxu0 0
  %345 = vmatprep.subr.bf16.mxu0 0
  %346 = vmatpush1.bf16.msra.mxu0 0
  %347 = vmatprep.subr.bf16.mxu0 0
  %348 = vmatpush1.bf16.msra.mxu0 0
  %349 = vmatprep.subr.bf16.mxu0 0
  %350 = vmatpush1.bf16.msra.mxu0 0
  %351 = vmatprep.subr.bf16.mxu0 0
  %352 = vmatpush1.bf16.msra.mxu0 0
  %353 = vmatprep.subr.bf16.mxu0 0
  %354 = vmatpush1.bf16.msra.mxu0 0
  %355 = vmatprep.subr.bf16.mxu0 0
  %356 = vmatpush1.bf16.msra.mxu0 0
  %357 = vmatprep.subr.bf16.mxu0 0
  %358 = vmatpush1.bf16.msra.mxu0 0
  %359 = vmatprep.subr.bf16.mxu0 0
  %360 = vmatpush1.bf16.msra.mxu0 0
  %361 = vmatprep.subr.bf16.mxu0 0
  %362 = vmatpush1.bf16.msra.mxu0 0
  %363 = vmatprep.subr.bf16.mxu0 0
  %364 = vmatpush1.bf16.msra.mxu0 0
  %365 = vmatprep.mubr.bf16.mxu0 0
  %366 = vmatmul.mubr.bf16.gmra.mrb[0].mxu0 %v250
  %v367 = vpop.f32.mrb[0].mxu0
  %v368 = vadd.f32 %v319, %v367
  %v369 = vpop.f32.mrb[0].mxu0
  %v370 = vpop.f32.mrb[0].mxu0
  %v371 = vadd.f32 %v319, %v370
  %v372 = vpop.f32.mrb[0].mxu0
  %373 = vmatprep.mubr.bf16.mxu0 0
  %374 = vmatmul.mubr.bf16.gmra.mrb[0].mxu0 %v253
  %v375 = vpop.f32.mrb[0].mxu0
  %v376 = vadd.f32 %v319, %v375
  %v377 = vpop.f32.mrb[0].mxu0
  %v378 = vpop.f32.mrb[0].mxu0
  %v379 = vadd.f32 %v319, %v378
  %v380 = vpop.f32.mrb[0].mxu0
  %381 = vdwg.mxu0
  %v382 = vxor.u32 %v368, 2147483648
  %v383 = vxor.u32 %v371, 2147483648
  %v384 = vxor.u32 %v376, 2147483648
  %v385 = vxor.u32 %v379, 2147483648
  %v386 = vmul.f32 %v382, 1.442695
  %v387 = vpow.pop %v386
  %v388 = vmul.f32 %v383, 1.442695
  %v389 = vpow.pop %v388
  %v390 = vmul.f32 %v384, 1.442695
  %v391 = vpow.pop %v390
  %v392 = vmul.f32 %v385, 1.442695
  %v393 = vpow.pop %v392
  %v394 = vadd.f32 %v387, 1.0
  %v395 = vadd.f32 %v389, 1.0
  %v396 = vadd.f32 %v391, 1.0
  %v397 = vadd.f32 %v393, 1.0
  %v398 = vrcp.pop %v394
  %v399 = vmul.f32 1.0, %v398
  %v400 = vrcp.pop %v395
  %v401 = vmul.f32 1.0, %v400
  %v402 = vrcp.pop %v396
  %v403 = vmul.f32 1.0, %v402
  %v404 = vrcp.pop %v397
  %v405 = vmul.f32 1.0, %v404
  %v406 = vmul.f32 %v399, %v304
  %v407 = vmul.f32 %v401, %v305
  %v408 = vmul.f32 %v403, %v306
  %v409 = vmul.f32 %v405, %v307
  %v410 = vsub.f32 1.0, %v399
  %v411 = vsub.f32 1.0, %v401
  %v412 = vsub.f32 1.0, %v403
  %v413 = vsub.f32 1.0, %v405
  %v414 = vmul.f32 %v410, %v218
  %v415 = vmul.f32 %v411, %v219
  %v416 = vmul.f32 %v412, %v220
  %v417 = vmul.f32 %v413, %v221
  %v418 = vadd.f32 %v406, %v414
  %v419 = vadd.f32 %v407, %v415
  %v420 = vadd.f32 %v408, %v416
  %v421 = vadd.f32 %v409, %v417
  %422 = vst.msk [vmem:[%s5] sm:$0xff] %vm50, %v418
  %423 = vst.msk [vmem:[%s5 + $0x8] sm:$0xff] %vm50, %v419
  %424 = vst.msk [vmem:[%s5 + $0x10] sm:$0xff] %vm50, %v420
  %425 = vst.msk [vmem:[%s5 + $0x18] sm:$0xff] %vm50, %v421
  // Predicated region
  $region22: #{encoder_forward.8} parent=0 // pred_check
    _
  $region23: #{encoder_forward.8} parent=0 // pred_check_branch
    %427 = sbr.rel (0) target = $region25
  $region24: #{encoder_forward.8} parent=0 // pred_region
    _
  $region25: #{encoder_forward.8} parent=0 // pred_fallthru
    _
  // Predicated region
  $region26: #{encoder_forward.8} parent=0 // pred_check
    _
  $region27: #{encoder_forward.8} parent=0 // pred_check_branch
    %429 = sbr.rel (0) target = $region29
  $region28: #{encoder_forward.8} parent=0 // pred_region
    _
  $region29: #{encoder_forward.8} parent=0 // pred_fallthru
    _

// kernel: encoder_forward.6
$region0: #{encoder_forward.6}
  #allocation0 [shape = 'u32[]', space=smem, size = 0x4, offset = 0x4, fixed_abs, tag = 'smem constant byte address 0x4 - core index']
  #allocation1 [shape = 'u32[144,128]{1,0:T(1,128)}', space=vmem, size = 0x12000, scoped, tag = 'internal scratch']
  %s0 = inlined_call_operand.vmem [shape: f32[2,16,32], index: 0, kind: input, shape index: {}]
  %s1 = inlined_call_operand.vmem [shape: bf16[32,32], index: 1, kind: input, shape index: {}]
  %s2 = inlined_call_operand.vmem [shape: bf16[64,32], index: 2, kind: input, shape index: {}]
  %s3 = inlined_call_operand.vmem [shape: bf16[96,32], index: 3, kind: input, shape index: {}]
  %s4 = inlined_call_operand.vmem [shape: bf16[128,32], index: 4, kind: input, shape index: {}]
  %s5 = inlined_call_operand.vmem [shape: f32[1,128], index: 5, kind: input, shape index: {}]
  %s6 = inlined_call_operand.vmem [shape: f32[1,128], index: 6, kind: input, shape index: {}]
  %s7 = inlined_call_operand.vmem [shape: f32[2,16,128], index: 7, kind: output, shape index: {}]
  %s8 = sld [smem:[#allocation0]]
  $region38: #{encoder_forward.6} parent=0
    _
  %s10 = ssub.s32 1, %s8
  %s11 = scalar_select 0, %s10, %s8
  // Predicated region
  $region2: #{encoder_forward.6} parent=0 // pred_check
    _
  $region3: #{encoder_forward.6} parent=0 // pred_check_branch
    %13 = sbr.rel (0) target = $region5
  $region4: #{encoder_forward.6} parent=0 // pred_region
    _
  $region5: #{encoder_forward.6} parent=0 // pred_fallthru
    _
  // Predicated region
  $region6: #{encoder_forward.6} parent=0 // pred_check
    _
  $region7: #{encoder_forward.6} parent=0 // pred_check_branch
    %15 = sbr.rel (0) target = $region9
  $region8: #{encoder_forward.6} parent=0 // pred_region
    _
  $region9: #{encoder_forward.6} parent=0 // pred_fallthru
    _
  // Predicated region
  $region10: #{encoder_forward.6} parent=0 // pred_check
    _
  $region11: #{encoder_forward.6} parent=0 // pred_check_branch
    %17 = sbr.rel (0) target = $region13
  $region12: #{encoder_forward.6} parent=0 // pred_region
    _
  $region13: #{encoder_forward.6} parent=0 // pred_fallthru
    _
  // Predicated region
  $region14: #{encoder_forward.6} parent=0 // pred_check
    _
  $region15: #{encoder_forward.6} parent=0 // pred_check_branch
    %19 = sbr.rel (0) target = $region17
  $region16: #{encoder_forward.6} parent=0 // pred_region
    _
  $region17: #{encoder_forward.6} parent=0 // pred_fallthru
    _
  // Predicated region
  $region18: #{encoder_forward.6} parent=0 // pred_check
    _
  $region19: #{encoder_forward.6} parent=0 // pred_check_branch
    %21 = sbr.rel (0) target = $region21
  $region20: #{encoder_forward.6} parent=0 // pred_region
    _
  $region21: #{encoder_forward.6} parent=0 // pred_fallthru
    _
  // Predicated region
  $region22: #{encoder_forward.6} parent=0 // pred_check
    _
  $region23: #{encoder_forward.6} parent=0 // pred_check_branch
    %23 = sbr.rel (0) target = $region25
  $region24: #{encoder_forward.6} parent=0 // pred_region
    _
  $region25: #{encoder_forward.6} parent=0 // pred_fallthru
    _
  // Predicated region
  $region26: #{encoder_forward.6} parent=0 // pred_check
    _
  $region27: #{encoder_forward.6} parent=0 // pred_check_branch
    %25 = sbr.rel (0) target = $region29
  $region28: #{encoder_forward.6} parent=0 // pred_region
    _
  $region29: #{encoder_forward.6} parent=0 // pred_fallthru
    _
  %v27 = vld [vmem:[%s0] sm:$0xff]
  %v28 = vld [vmem:[%s0 + $0x8] sm:$0xff]
  %v29 = vld [vmem:[%s0 + $0x10] sm:$0xff]
  %v30 = vld [vmem:[%s0 + $0x18] sm:$0xff]
  %vm35 = vcmask 1041408
  %v36 = vrot.slane %v27, 6
  %v37 = vrot.slane %v28, 6
  %v38 = vsel %vm35, %v36, %v37
  %v39 = vrot.slane %v29, 6
  %v40 = vrot.slane %v30, 6
  %v41 = vsel %vm35, %v39, %v40
  %v48 = vsel %vm35, 0.0, %v36
  %v49 = vsel %vm35, 0.0, %v39
  %v50 = vsel %vm35, %v37, 0.0
  %v51 = vsel %vm35, %v40, 0.0
  %vm56 = vcmask 1045504
  %v57 = vrot.slane %v48, 2
  %v58 = vrot.slane %v38, 2
  %v59 = vsel %vm56, %v57, %v58
  %v60 = vrot.slane %v50, 2
  %v61 = vsel %vm56, %v58, %v60
  %v62 = vrot.slane %v49, 2
  %v63 = vrot.slane %v41, 2
  %v64 = vsel %vm56, %v62, %v63
  %v65 = vrot.slane %v51, 2
  %v66 = vsel %vm56, %v63, %v65
  %v71 = vpack.c.bf16 %v61, %v59
  %v72 = vpack.c.bf16 %v66, %v64
  %v73 = vld [vmem:[%s1] sm:$0xf]
  %v74 = vld [vmem:[%s1 + $0x4] sm:$0xf]
  %v75 = vld [vmem:[%s1 + $0x8] sm:$0xf]
  %v76 = vld [vmem:[%s1 + $0xc] sm:$0xf]
  %v81 = vunpack.c.l.b16 %v73
  %v82 = vunpack.c.l.b16 %v74
  %v83 = vunpack.c.l.b16 %v75
  %v84 = vunpack.c.l.b16 %v76
  %v85 = vpack.c.b16 %v82, %v81
  %v86 = vpack.c.b16 %v84, %v83
  %vm89 = vcmask 261120
  %v91 = vsel %vm89, %v71, 0
  %v94 = vsel %vm89, %v72, 0
  %96 = vmatprep.subr.bf16.mxu0 0
  %97 = vmatpush1.bf16.msra.mxu0 %v85
  %98 = vmatprep.subr.bf16.mxu0 0
  %99 = vmatpush1.bf16.msra.mxu0 %v86
  %100 = vmatprep.subr.bf16.mxu0 0
  %101 = vmatpush1.bf16.msra.mxu0 0
  %102 = vmatprep.subr.bf16.mxu0 0
  %103 = vmatpush1.bf16.msra.mxu0 0
  %104 = vmatprep.subr.bf16.mxu0 0
  %105 = vmatpush1.bf16.msra.mxu0 0
  %106 = vmatprep.subr.bf16.mxu0 0
  %107 = vmatpush1.bf16.msra.mxu0 0
  %108 = vmatprep.subr.bf16.mxu0 0
  %109 = vmatpush1.bf16.msra.mxu0 0
  %110 = vmatprep.subr.bf16.mxu0 0
  %111 = vmatpush1.bf16.msra.mxu0 0
  %112 = vmatprep.subr.bf16.mxu0 0
  %113 = vmatpush1.bf16.msra.mxu0 0
  %114 = vmatprep.subr.bf16.mxu0 0
  %115 = vmatpush1.bf16.msra.mxu0 0
  %116 = vmatprep.subr.bf16.mxu0 0
  %117 = vmatpush1.bf16.msra.mxu0 0
  %118 = vmatprep.subr.bf16.mxu0 0
  %119 = vmatpush1.bf16.msra.mxu0 0
  %120 = vmatprep.subr.bf16.mxu0 0
  %121 = vmatpush1.bf16.msra.mxu0 0
  %122 = vmatprep.subr.bf16.mxu0 0
  %123 = vmatpush1.bf16.msra.mxu0 0
  %124 = vmatprep.subr.bf16.mxu0 0
  %125 = vmatpush1.bf16.msra.mxu0 0
  %126 = vmatprep.subr.bf16.mxu0 0
  %127 = vmatpush1.bf16.msra.mxu0 0
  %128 = vmatprep.mubr.bf16.mxu0 0
  %129 = vmatmul.mubr.bf16.gmra.mrb[0].mxu0 %v91
  %v130 = vpop.f32.mrb[0].mxu0
  %v131 = vadd.f32 0.0, %v130
  %v132 = vpop.f32.mrb[0].mxu0
  %v133 = vpop.f32.mrb[0].mxu0
  %v134 = vadd.f32 0.0, %v133
  %v135 = vpop.f32.mrb[0].mxu0
  %136 = vmatprep.mubr.bf16.mxu0 0
  %137 = vmatmul.mubr.bf16.gmra.mrb[0].mxu0 %v94
  %v138 = vpop.f32.mrb[0].mxu0
  %v139 = vadd.f32 0.0, %v138
  %v140 = vpop.f32.mrb[0].mxu0
  %v141 = vpop.f32.mrb[0].mxu0
  %v142 = vadd.f32 0.0, %v141
  %v143 = vpop.f32.mrb[0].mxu0
  %144 = vdwg.mxu0
  %vm145 = vcmask 1046528
  %v146 = vrot.slane %v48, 1
  %v147 = vrot.slane %v38, 1
  %v148 = vsel %vm145, %v146, %v147
  %v149 = vrot.slane %v50, 1
  %v150 = vsel %vm145, %v147, %v149
  %v151 = vrot.slane %v49, 1
  %v152 = vrot.slane %v41, 1
  %v153 = vsel %vm145, %v151, %v152
  %v154 = vrot.slane %v51, 1
  %v155 = vsel %vm145, %v152, %v154
  %160 = vrot.lane.b32.xlu0 %v59, 32
  %v161 = vpop.permute.xlu0 %160
  %162 = vrot.lane.b32.xlu0 %v61, 32
  %v163 = vpop.permute.xlu0 %162
  %164 = vrot.lane.b32.xlu0 %v64, 32
  %v165 = vpop.permute.xlu0 %164
  %166 = vrot.lane.b32.xlu0 %v66, 32
  %v167 = vpop.permute.xlu0 %166
  %v172 = vsel %vm89, %v148, %v161
  %v173 = vsel %vm89, %v150, %v163
  %v174 = vsel %vm89, %v153, %v165
  %v175 = vsel %vm89, %v155, %v167
  %v176 = vpack.c.bf16 %v173, %v172
  %v177 = vpack.c.bf16 %v175, %v174
  %v178 = vld [vmem:[%s2] sm:$0xf]
  %v179 = vld [vmem:[%s2 + $0x4] sm:$0xf]
  %v180 = vld [vmem:[%s2 + $0x8] sm:$0xf]
  %v181 = vld [vmem:[%s2 + $0xc] sm:$0xf]
  %v182 = vld [vmem:[%s2 + $0x10] sm:$0xf]
  %v183 = vld [vmem:[%s2 + $0x14] sm:$0xf]
  %v184 = vld [vmem:[%s2 + $0x18] sm:$0xf]
  %v185 = vld [vmem:[%s2 + $0x1c] sm:$0xf]
  %v194 = vunpack.c.l.b16 %v178
  %v195 = vunpack.c.l.b16 %v179
  %v196 = vunpack.c.l.b16 %v180
  %v197 = vunpack.c.l.b16 %v181
  %v198 = vunpack.c.l.b16 %v182
  %v199 = vunpack.c.l.b16 %v183
  %v200 = vunpack.c.l.b16 %v184
  %v201 = vunpack.c.l.b16 %v185
  %v202 = vpack.c.b16 %v195, %v194
  %v203 = vpack.c.b16 %v197, %v196
  %v204 = vpack.c.b16 %v199, %v198
  %v205 = vpack.c.b16 %v201, %v200
  %vm210 = vcmask 523264
  %v212 = vsel %vm210, %v176, 0
  %v215 = vsel %vm210, %v177, 0
  %217 = vmatprep.subr.bf16.mxu0 0
  %218 = vmatpush1.bf16.msra.mxu0 %v202
  %219 = vmatprep.subr.bf16.mxu0 0
  %220 = vmatpush1.bf16.msra.mxu0 %v203
  %221 = vmatprep.subr.bf16.mxu0 0
  %222 = vmatpush1.bf16.msra.mxu0 %v204
  %223 = vmatprep.subr.bf16.mxu0 0
  %224 = vmatpush1.bf16.msra.mxu0 %v205
  %225 = vmatprep.subr.bf16.mxu0 0
  %226 = vmatpush1.bf16.msra.mxu0 0
  %227 = vmatprep.subr.bf16.mxu0 0
  %228 = vmatpush1.bf16.msra.mxu0 0
  %229 = vmatprep.subr.bf16.mxu0 0
  %230 = vmatpush1.bf16.msra.mxu0 0
  %231 = vmatprep.subr.bf16.mxu0 0
  %232 = vmatpush1.bf16.msra.mxu0 0
  %233 = vmatprep.subr.bf16.mxu0 0
  %234 = vmatpush1.bf16.msra.mxu0 0
  %235 = vmatprep.subr.bf16.mxu0 0
  %236 = vmatpush1.bf16.msra.mxu0 0
  %237 = vmatprep.subr.bf16.mxu0 0
  %238 = vmatpush1.bf16.msra.mxu0 0
  %239 = vmatprep.subr.bf16.mxu0 0
  %240 = vmatpush1.bf16.msra.mxu0 0
  %241 = vmatprep.subr.bf16.mxu0 0
  %242 = vmatpush1.bf16.msra.mxu0 0
  %243 = vmatprep.subr.bf16.mxu0 0
  %244 = vmatpush1.bf16.msra.mxu0 0
  %245 = vmatprep.subr.bf16.mxu0 0
  %246 = vmatpush1.bf16.msra.mxu0 0
  %247 = vmatprep.subr.bf16.mxu0 0
  %248 = vmatpush1.bf16.msra.mxu0 0
  %249 = vmatprep.mubr.bf16.mxu0 0
  %250 = vmatmul.mubr.bf16.gmra.mrb[0].mxu0 %v212
  %v251 = vpop.f32.mrb[0].mxu0
  %v252 = vadd.f32 0.0, %v251
  %v253 = vpop.f32.mrb[0].mxu0
  %v254 = vpop.f32.mrb[0].mxu0
  %v255 = vadd.f32 0.0, %v254
  %v256 = vpop.f32.mrb[0].mxu0
  %257 = vmatprep.mubr.bf16.mxu0 0
  %258 = vmatmul.mubr.bf16.gmra.mrb[0].mxu0 %v215
  %v259 = vpop.f32.mrb[0].mxu0
  %v260 = vadd.f32 0.0, %v259
  %v261 = vpop.f32.mrb[0].mxu0
  %v262 = vpop.f32.mrb[0].mxu0
  %v263 = vadd.f32 0.0, %v262
  %v264 = vpop.f32.mrb[0].mxu0
  %265 = vdwg.mxu0
  %vm266 = vcmask 1044480
  %v267 = vrot.slane %v48, 3
  %v268 = vrot.slane %v38, 3
  %v269 = vsel %vm266, %v267, %v268
  %v270 = vrot.slane %v50, 3
  %v271 = vsel %vm266, %v268, %v270
  %v272 = vrot.slane %v49, 3
  %v273 = vrot.slane %v41, 3
  %v274 = vsel %vm266, %v272, %v273
  %v275 = vrot.slane %v51, 3
  %v276 = vsel %vm266, %v273, %v275
  %277 = vrot.lane.b32.xlu0 %v269, 64
  %v278 = vpop.permute.xlu0 %277
  %279 = vrot.lane.b32.xlu0 %v271, 64
  %v280 = vpop.permute.xlu0 %279
  %281 = vrot.lane.b32.xlu0 %v274, 64
  %v282 = vpop.permute.xlu0 %281
  %283 = vrot.lane.b32.xlu0 %v276, 64
  %v284 = vpop.permute.xlu0 %283
  %v289 = vsel %vm210, %v172, %v278
  %v290 = vsel %vm210, %v173, %v280
  %v291 = vsel %vm210, %v174, %v282
  %v292 = vsel %vm210, %v175, %v284
  %v293 = vpack.c.bf16 %v290, %v289
  %v294 = vpack.c.bf16 %v292, %v291
  %v295 = vld [vmem:[%s3] sm:$0xf]
  %v296 = vld [vmem:[%s3 + $0x4] sm:$0xf]
  %v297 = vld [vmem:[%s3 + $0x8] sm:$0xf]
  %v298 = vld [vmem:[%s3 + $0xc] sm:$0xf]
  %v299 = vld [vmem:[%s3 + $0x10] sm:$0xf]
  %v300 = vld [vmem:[%s3 + $0x14] sm:$0xf]
  %v301 = vld [vmem:[%s3 + $0x18] sm:$0xf]
  %v302 = vld [vmem:[%s3 + $0x1c] sm:$0xf]
  %v303 = vld [vmem:[%s3 + $0x20] sm:$0xf]
  %v304 = vld [vmem:[%s3 + $0x24] sm:$0xf]
  %v305 = vld [vmem:[%s3 + $0x28] sm:$0xf]
  %v306 = vld [vmem:[%s3 + $0x2c] sm:$0xf]
  %v319 = vunpack.c.l.b16 %v295
  %v320 = vunpack.c.l.b16 %v296
  %v321 = vunpack.c.l.b16 %v297
  %v322 = vunpack.c.l.b16 %v298
  %v323 = vunpack.c.l.b16 %v299
  %v324 = vunpack.c.l.b16 %v300
  %v325 = vunpack.c.l.b16 %v301
  %v326 = vunpack.c.l.b16 %v302
  %v327 = vunpack.c.l.b16 %v303
  %v328 = vunpack.c.l.b16 %v304
  %v329 = vunpack.c.l.b16 %v305
  %v330 = vunpack.c.l.b16 %v306
  %v331 = vpack.c.b16 %v320, %v319
  %v332 = vpack.c.b16 %v322, %v321
  %v333 = vpack.c.b16 %v324, %v323
  %v334 = vpack.c.b16 %v326, %v325
  %v335 = vpack.c.b16 %v328, %v327
  %v336 = vpack.c.b16 %v330, %v329
  %vm343 = vcmask 785408
  %v345 = vsel %vm343, %v293, 0
  %v348 = vsel %vm343, %v294, 0
  %350 = vmatprep.subr.bf16.mxu0 0
  %351 = vmatpush1.bf16.msra.mxu0 %v331
  %352 = vmatprep.subr.bf16.mxu0 0
  %353 = vmatpush1.bf16.msra.mxu0 %v332
  %354 = vmatprep.subr.bf16.mxu0 0
  %355 = vmatpush1.bf16.msra.mxu0 %v333
  %356 = vmatprep.subr.bf16.mxu0 0
  %357 = vmatpush1.bf16.msra.mxu0 %v334
  %358 = vmatprep.subr.bf16.mxu0 0
  %359 = vmatpush1.bf16.msra.mxu0 %v335
  %360 = vmatprep.subr.bf16.mxu0 0
  %361 = vmatpush1.bf16.msra.mxu0 %v336
  %362 = vmatprep.subr.bf16.mxu0 0
  %363 = vmatpush1.bf16.msra.mxu0 0
  %364 = vmatprep.subr.bf16.mxu0 0
  %365 = vmatpush1.bf16.msra.mxu0 0
  %366 = vmatprep.subr.bf16.mxu0 0
  %367 = vmatpush1.bf16.msra.mxu0 0
  %368 = vmatprep.subr.bf16.mxu0 0
  %369 = vmatpush1.bf16.msra.mxu0 0
  %370 = vmatprep.subr.bf16.mxu0 0
  %371 = vmatpush1.bf16.msra.mxu0 0
  %372 = vmatprep.subr.bf16.mxu0 0
  %373 = vmatpush1.bf16.msra.mxu0 0
  %374 = vmatprep.subr.bf16.mxu0 0
  %375 = vmatpush1.bf16.msra.mxu0 0
  %376 = vmatprep.subr.bf16.mxu0 0
  %377 = vmatpush1.bf16.msra.mxu0 0
  %378 = vmatprep.subr.bf16.mxu0 0
  %379 = vmatpush1.bf16.msra.mxu0 0
  %380 = vmatprep.subr.bf16.mxu0 0
  %381 = vmatpush1.bf16.msra.mxu0 0
  %382 = vmatprep.mubr.bf16.mxu0 0
  %383 = vmatmul.mubr.bf16.gmra.mrb[0].mxu0 %v345
  %v384 = vpop.f32.mrb[0].mxu0
  %v385 = vadd.f32 0.0, %v384
  %v386 = vpop.f32.mrb[0].mxu0
  %v387 = vpop.f32.mrb[0].mxu0
  %v388 = vadd.f32 0.0, %v387
  %v389 = vpop.f32.mrb[0].mxu0
  %390 = vmatprep.mubr.bf16.mxu0 0
  %391 = vmatmul.mubr.bf16.gmra.mrb[0].mxu0 %v348
  %v392 = vpop.f32.mrb[0].mxu0
  %v393 = vadd.f32 0.0, %v392
  %v394 = vpop.f32.mrb[0].mxu0
  %v395 = vpop.f32.mrb[0].mxu0
  %v396 = vadd.f32 0.0, %v395
  %v397 = vpop.f32.mrb[0].mxu0
  %398 = vdwg.mxu0
  %399 = vrot.lane.b32.xlu0 %v148, 32
  %v400 = vpop.permute.xlu0 %399
  %401 = vrot.lane.b32.xlu0 %v150, 32
  %v402 = vpop.permute.xlu0 %401
  %403 = vrot.lane.b32.xlu0 %v153, 32
  %v404 = vpop.permute.xlu0 %403
  %405 = vrot.lane.b32.xlu0 %v155, 32
  %v406 = vpop.permute.xlu0 %405
  %411 = vrot.lane.b32.xlu0 %v59, 64
  %v412 = vpop.permute.xlu0 %411
  %413 = vrot.lane.b32.xlu0 %v61, 64
  %v414 = vpop.permute.xlu0 %413
  %415 = vrot.lane.b32.xlu0 %v64, 64
  %v416 = vpop.permute.xlu0 %415
  %417 = vrot.lane.b32.xlu0 %v66, 64
  %v418 = vpop.permute.xlu0 %417
  %423 = vrot.lane.b32.xlu0 %v269, 96
  %v424 = vpop.permute.xlu0 %423
  %425 = vrot.lane.b32.xlu0 %v271, 96
  %v426 = vpop.permute.xlu0 %425
  %427 = vrot.lane.b32.xlu0 %v274, 96
  %v428 = vpop.permute.xlu0 %427
  %429 = vrot.lane.b32.xlu0 %v276, 96
  %v430 = vpop.permute.xlu0 %429
  %v435 = vsel %vm89, %v48, %v400
  %v436 = vsel %vm89, %v38, %v402
  %v437 = vsel %vm89, %v49, %v404
  %v438 = vsel %vm89, %v41, %v406
  %v439 = vsel %vm210, %v435, %v412
  %v440 = vsel %vm210, %v436, %v414
  %v441 = vsel %vm210, %v437, %v416
  %v442 = vsel %vm210, %v438, %v418
  %v443 = vsel %vm343, %v439, %v424
  %v444 = vsel %vm343, %v440, %v426
  %v445 = vsel %vm343, %v441, %v428
  %v446 = vsel %vm343, %v442, %v430
  %v447 = vpack.c.bf16 %v444, %v443
  %v448 = vpack.c.bf16 %v446, %v445
  %v449 = vld [vmem:[%s4] sm:$0xf]
  %v450 = vld [vmem:[%s4 + $0x4] sm:$0xf]
  %v451 = vld [vmem:[%s4 + $0x8] sm:$0xf]
  %v452 = vld [vmem:[%s4 + $0xc] sm:$0xf]
  %v453 = vld [vmem:[%s4 + $0x10] sm:$0xf]
  %v454 = vld [vmem:[%s4 + $0x14] sm:$0xf]
  %v455 = vld [vmem:[%s4 + $0x18] sm:$0xf]
  %v456 = vld [vmem:[%s4 + $0x1c] sm:$0xf]
  %v457 = vld [vmem:[%s4 + $0x20] sm:$0xf]
  %v458 = vld [vmem:[%s4 + $0x24] sm:$0xf]
  %v459 = vld [vmem:[%s4 + $0x28] sm:$0xf]
  %v460 = vld [vmem:[%s4 + $0x2c] sm:$0xf]
  %v461 = vld [vmem:[%s4 + $0x30] sm:$0xf]
  %v462 = vld [vmem:[%s4 + $0x34] sm:$0xf]
  %v463 = vld [vmem:[%s4 + $0x38] sm:$0xf]
  %v464 = vld [vmem:[%s4 + $0x3c] sm:$0xf]
  %v481 = vunpack.c.l.b16 %v449
  %v482 = vunpack.c.l.b16 %v450
  %v483 = vunpack.c.l.b16 %v451
  %v484 = vunpack.c.l.b16 %v452
  %v485 = vunpack.c.l.b16 %v453
  %v486 = vunpack.c.l.b16 %v454
  %v487 = vunpack.c.l.b16 %v455
  %v488 = vunpack.c.l.b16 %v456
  %v489 = vunpack.c.l.b16 %v457
  %v490 = vunpack.c.l.b16 %v458
  %v491 = vunpack.c.l.b16 %v459
  %v492 = vunpack.c.l.b16 %v460
  %v493 = vunpack.c.l.b16 %v461
  %v494 = vunpack.c.l.b16 %v462
  %v495 = vunpack.c.l.b16 %v463
  %v496 = vunpack.c.l.b16 %v464
  %v497 = vpack.c.b16 %v482, %v481
  %v498 = vpack.c.b16 %v484, %v483
  %v499 = vpack.c.b16 %v486, %v485
  %v500 = vpack.c.b16 %v488, %v487
  %v501 = vpack.c.b16 %v490, %v489
  %v502 = vpack.c.b16 %v492, %v491
  %v503 = vpack.c.b16 %v494, %v493
  %v504 = vpack.c.b16 %v496, %v495
  %513 = vmatprep.subr.bf16.mxu0 0
  %514 = vmatpush1.bf16.msra.mxu0 %v497
  %515 = vmatprep.subr.bf16.mxu0 0
  %516 = vmatpush1.bf16.msra.mxu0 %v498
  %517 = vmatprep.subr.bf16.mxu0 0
  %518 = vmatpush1.bf16.msra.mxu0 %v499
  %519 = vmatprep.subr.bf16.mxu0 0
  %520 = vmatpush1.bf16.msra.mxu0 %v500
  %521 = vmatprep.subr.bf16.mxu0 0
  %522 = vmatpush1.bf16.msra.mxu0 %v501
  %523 = vmatprep.subr.bf16.mxu0 0
  %524 = vmatpush1.bf16.msra.mxu0 %v502
  %525 = vmatprep.subr.bf16.mxu0 0
  %526 = vmatpush1.bf16.msra.mxu0 %v503
  %527 = vmatprep.subr.bf16.mxu0 0
  %528 = vmatpush1.bf16.msra.mxu0 %v504
  %529 = vmatprep.subr.bf16.mxu0 0
  %530 = vmatpush1.bf16.msra.mxu0 0
  %531 = vmatprep.subr.bf16.mxu0 0
  %532 = vmatpush1.bf16.msra.mxu0 0
  %533 = vmatprep.subr.bf16.mxu0 0
  %534 = vmatpush1.bf16.msra.mxu0 0
  %535 = vmatprep.subr.bf16.mxu0 0
  %536 = vmatpush1.bf16.msra.mxu0 0
  %537 = vmatprep.subr.bf16.mxu0 0
  %538 = vmatpush1.bf16.msra.mxu0 0
  %539 = vmatprep.subr.bf16.mxu0 0
  %540 = vmatpush1.bf16.msra.mxu0 0
  %541 = vmatprep.subr.bf16.mxu0 0
  %542 = vmatpush1.bf16.msra.mxu0 0
  %543 = vmatprep.subr.bf16.mxu0 0
  %544 = vmatpush1.bf16.msra.mxu0 0
  %545 = vmatprep.mubr.bf16.mxu0 0
  %546 = vmatmul.mubr.bf16.gmra.mrb[0].mxu0 %v447
  %v547 = vpop.f32.mrb[0].mxu0
  %v548 = vadd.f32 0.0, %v547
  %v549 = vpop.f32.mrb[0].mxu0
  %v550 = vpop.f32.mrb[0].mxu0
  %v551 = vadd.f32 0.0, %v550
  %v552 = vpop.f32.mrb[0].mxu0
  %553 = vmatprep.mubr.bf16.mxu0 0
  %554 = vmatmul.mubr.bf16.gmra.mrb[0].mxu0 %v448
  %v555 = vpop.f32.mrb[0].mxu0
  %v556 = vadd.f32 0.0, %v555
  %v557 = vpop.f32.mrb[0].mxu0
  %v558 = vpop.f32.mrb[0].mxu0
  %v559 = vadd.f32 0.0, %v558
  %v560 = vpop.f32.mrb[0].mxu0
  %561 = vdwg.mxu0
  %566 = vrot.lane.b32.xlu0 %v252, 32
  %v567 = vpop.permute.xlu0 %566
  %568 = vrot.lane.b32.xlu0 %v255, 32
  %v569 = vpop.permute.xlu0 %568
  %570 = vrot.lane.b32.xlu0 %v260, 32
  %v571 = vpop.permute.xlu0 %570
  %572 = vrot.lane.b32.xlu0 %v263, 32
  %v573 = vpop.permute.xlu0 %572
  %582 = vrot.lane.b32.xlu0 %v385, 64
  %v583 = vpop.permute.xlu0 %582
  %584 = vrot.lane.b32.xlu0 %v388, 64
  %v585 = vpop.permute.xlu0 %584
  %586 = vrot.lane.b32.xlu0 %v393, 64
  %v587 = vpop.permute.xlu0 %586
  %588 = vrot.lane.b32.xlu0 %v396, 64
  %v589 = vpop.permute.xlu0 %588
  %598 = vrot.lane.b32.xlu0 %v548, 96
  %v599 = vpop.permute.xlu0 %598
  %600 = vrot.lane.b32.xlu0 %v551, 96
  %v601 = vpop.permute.xlu0 %600
  %602 = vrot.lane.b32.xlu0 %v556, 96
  %v603 = vpop.permute.xlu0 %602
  %604 = vrot.lane.b32.xlu0 %v559, 96
  %v605 = vpop.permute.xlu0 %604
  %v610 = vsel %vm89, %v131, %v567
  %v611 = vsel %vm89, %v134, %v569
  %v612 = vsel %vm89, %v139, %v571
  %v613 = vsel %vm89, %v142, %v573
  %v614 = vsel %vm210, %v610, %v583
  %v615 = vsel %vm210, %v611, %v585
  %v616 = vsel %vm210, %v612, %v587
  %v617 = vsel %vm210, %v613, %v589
  %v618 = vsel %vm343, %v614, %v599
  %v619 = vsel %vm343, %v615, %v601
  %v620 = vsel %vm343, %v616, %v603
  %v621 = vsel %vm343, %v617, %v605
  %v622 = vmax.f32 %v618, 0.0
  %v623 = vmax.f32 %v619, 0.0
  %v624 = vmax.f32 %v620, 0.0
  %v625 = vmax.f32 %v621, 0.0
  %v626 = vadd.f32 %v622, %v623
  %v627 = vadd.f32 %v626, %v624
  %v628 = vadd.f32 %v627, %v625
  %v629 = vrot.slane %v628, 4
  %v630 = vadd.f32 %v628, %v629
  %v631 = vrot.slane %v630, 2
  %v632 = vadd.f32 %v630, %v631
  %v633 = vrot.slane %v632, 1
  %v634 = vadd.f32 %v632, %v633
  %v635 = vrcp.pop 32.0
  %v636 = vmul.f32 %v634, %v635
  %v637 = vsub.f32 %v622, %v636
  %v638 = vsub.f32 %v623, %v636
  %v639 = vsub.f32 %v624, %v636
  %v640 = vsub.f32 %v625, %v636
  %v641 = vmul.f32 %v637, %v637
  %v642 = vmul.f32 %v638, %v638
  %v643 = vmul.f32 %v639, %v639
  %v644 = vmul.f32 %v640, %v640
  %v645 = vadd.f32 %v641, %v642
  %v646 = vadd.f32 %v645, %v643
  %v647 = vadd.f32 %v646, %v644
  %v648 = vrot.slane %v647, 4
  %v649 = vadd.f32 %v647, %v648
  %v650 = vrot.slane %v649, 2
  %v651 = vadd.f32 %v649, %v650
  %v652 = vrot.slane %v651, 1
  %v653 = vadd.f32 %v651, %v652
  %v654 = vmul.f32 %v653, %v635
  %v655 = vadd.f32 %v654, 1e-05
  %v656 = vrsqrt.pop %v655
  %v657 = vmul.f32 %v637, %v656
  %v658 = vmul.f32 %v638, %v656
  %v659 = vmul.f32 %v639, %v656
  %v660 = vmul.f32 %v640, %v656
  %v661 = vld [vmem:[%s5] sm:$0x1]
  %v663 = vlaneseq
  %v664 = vshrl.u32 %v663, 7
  %v665 = vsub.s32 0, %v664
  %v666 = vrot.slane %v661, %v665
  %v668 = vmul.f32 %v657, %v666
  %v669 = vmul.f32 %v658, %v666
  %v670 = vmul.f32 %v659, %v666
  %v671 = vmul.f32 %v660, %v666
  %v672 = vld [vmem:[%s6] sm:$0x1]
  %v674 = vlaneseq
  %v675 = vshrl.u32 %v674, 7
  %v676 = vsub.s32 0, %v675
  %v677 = vrot.slane %v672, %v676
  %v679 = vadd.f32 %v668, %v677
  %v680 = vadd.f32 %v669, %v677
  %v681 = vadd.f32 %v670, %v677
  %v682 = vadd.f32 %v671, %v677
  %vm687 = vcmask 1040384
  %v688 = vrot.slane %v679, 7
  %v689 = vrot.slane %v680, 7
  %v690 = vsel %vm687, %v688, %v689
  %v691 = vrot.slane %v681, 7
  %v692 = vrot.slane %v682, 7
  %v693 = vsel %vm687, %v691, %v692
  %v698 = vsel %vm687, %v679, %v688
  %v699 = vsel %vm687, %v681, %v691
  %v700 = vmax.f32 %v679, %v698
  %v701 = vmax.f32 %v680, %v690
  %v702 = vmax.f32 %v681, %v699
  %v703 = vmax.f32 %v682, %v693
  %704 = vst [vmem:[%s7] sm:$0xff] %v700
  %705 = vst [vmem:[%s7 + $0x8] sm:$0xff] %v701
  %706 = vst [vmem:[%s7 + $0x10] sm:$0xff] %v702
  %707 = vst [vmem:[%s7 + $0x18] sm:$0xff] %v703
  // Predicated region
  $region30: #{encoder_forward.6} parent=0 // pred_check
    _
  $region31: #{encoder_forward.6} parent=0 // pred_check_branch
    %709 = sbr.rel (0) target = $region33
  $region32: #{encoder_forward.6} parent=0 // pred_region
    _
  $region33: #{encoder_forward.6} parent=0 // pred_fallthru
    _
  // Predicated region
  $region34: #{encoder_forward.6} parent=0 // pred_check
    _
  $region35: #{encoder_forward.6} parent=0 // pred_check_branch
    %711 = sbr.rel (0) target = $region37
  $region36: #{encoder_forward.6} parent=0 // pred_region
    _
  $region37: #{encoder_forward.6} parent=0 // pred_fallthru
    _

// kernel: encoder_forward.7
$region0: #{encoder_forward.7}
  #allocation0 [shape = 'u32[]', space=smem, size = 0x4, offset = 0x4, fixed_abs, tag = 'smem constant byte address 0x4 - core index']
  #allocation1 [shape = 'u32[144,128]{1,0:T(1,128)}', space=vmem, size = 0x12000, scoped, tag = 'internal scratch']
  %s0 = inlined_call_operand.vmem [shape: f32[2,16,128], index: 0, kind: input, shape index: {}]
  %s1 = inlined_call_operand.vmem [shape: bf16[384,32], index: 1, kind: input, shape index: {}]
  %s2 = inlined_call_operand.vmem [shape: f32[1,32], index: 2, kind: input, shape index: {}]
  %s3 = inlined_call_operand.vmem [shape: f32[1,32], index: 3, kind: input, shape index: {}]
  %s4 = inlined_call_operand.vmem [shape: bf16[96,32], index: 4, kind: input, shape index: {}]
  %s5 = inlined_call_operand.vmem [shape: f32[1,32], index: 5, kind: input, shape index: {}]
  %s6 = inlined_call_operand.vmem [shape: f32[1,32], index: 6, kind: input, shape index: {}]
  %s7 = inlined_call_operand.vmem [shape: f32[32,32], index: 7, kind: input, shape index: {}]
  %s8 = inlined_call_operand.vmem [shape: f32[32,32], index: 8, kind: output, shape index: {}]
  %s9 = sld [smem:[#allocation0]]
  $region42: #{encoder_forward.7} parent=0
    _
  %s11 = ssub.s32 1, %s9
  %s12 = scalar_select 0, %s11, %s9
  // Predicated region
  $region2: #{encoder_forward.7} parent=0 // pred_check
    _
  $region3: #{encoder_forward.7} parent=0 // pred_check_branch
    %14 = sbr.rel (0) target = $region5
  $region4: #{encoder_forward.7} parent=0 // pred_region
    _
  $region5: #{encoder_forward.7} parent=0 // pred_fallthru
    _
  // Predicated region
  $region6: #{encoder_forward.7} parent=0 // pred_check
    _
  $region7: #{encoder_forward.7} parent=0 // pred_check_branch
    %16 = sbr.rel (0) target = $region9
  $region8: #{encoder_forward.7} parent=0 // pred_region
    _
  $region9: #{encoder_forward.7} parent=0 // pred_fallthru
    _
  // Predicated region
  $region10: #{encoder_forward.7} parent=0 // pred_check
    _
  $region11: #{encoder_forward.7} parent=0 // pred_check_branch
    %18 = sbr.rel (0) target = $region13
  $region12: #{encoder_forward.7} parent=0 // pred_region
    _
  $region13: #{encoder_forward.7} parent=0 // pred_fallthru
    _
  // Predicated region
  $region14: #{encoder_forward.7} parent=0 // pred_check
    _
  $region15: #{encoder_forward.7} parent=0 // pred_check_branch
    %20 = sbr.rel (0) target = $region17
  $region16: #{encoder_forward.7} parent=0 // pred_region
    _
  $region17: #{encoder_forward.7} parent=0 // pred_fallthru
    _
  // Predicated region
  $region18: #{encoder_forward.7} parent=0 // pred_check
    _
  $region19: #{encoder_forward.7} parent=0 // pred_check_branch
    %22 = sbr.rel (0) target = $region21
  $region20: #{encoder_forward.7} parent=0 // pred_region
    _
  $region21: #{encoder_forward.7} parent=0 // pred_fallthru
    _
  // Predicated region
  $region22: #{encoder_forward.7} parent=0 // pred_check
    _
  $region23: #{encoder_forward.7} parent=0 // pred_check_branch
    %24 = sbr.rel (0) target = $region25
  $region24: #{encoder_forward.7} parent=0 // pred_region
    _
  $region25: #{encoder_forward.7} parent=0 // pred_fallthru
    _
  // Predicated region
  $region26: #{encoder_forward.7} parent=0 // pred_check
    _
  $region27: #{encoder_forward.7} parent=0 // pred_check_branch
    %26 = sbr.rel (0) target = $region29
  $region28: #{encoder_forward.7} parent=0 // pred_region
    _
  $region29: #{encoder_forward.7} parent=0 // pred_fallthru
    _
  // Predicated region
  $region30: #{encoder_forward.7} parent=0 // pred_check
    _
  $region31: #{encoder_forward.7} parent=0 // pred_check_branch
    %28 = sbr.rel (0) target = $region33
  $region32: #{encoder_forward.7} parent=0 // pred_region
    _
  $region33: #{encoder_forward.7} parent=0 // pred_fallthru
    _
  %v30 = vld [vmem:[%s0] sm:$0xff]
  %v31 = vld [vmem:[%s0 + $0x8] sm:$0xff]
  %v32 = vld [vmem:[%s0 + $0x10] sm:$0xff]
  %v33 = vld [vmem:[%s0 + $0x18] sm:$0xff]
  %v34 = vld [vmem:[%s1] sm:$0xf]
  %v35 = vld [vmem:[%s1 + $0x4] sm:$0xf]
  %v36 = vld [vmem:[%s1 + $0x8] sm:$0xf]
  %v37 = vld [vmem:[%s1 + $0xc] sm:$0xf]
  %v38 = vld [vmem:[%s1 + $0x10] sm:$0xf]
  %v39 = vld [vmem:[%s1 + $0x14] sm:$0xf]
  %v40 = vld [vmem:[%s1 + $0x18] sm:$0xf]
  %v41 = vld [vmem:[%s1 + $0x1c] sm:$0xf]
  %v42 = vld [vmem:[%s1 + $0x20] sm:$0xf]
  %v43 = vld [vmem:[%s1 + $0x24] sm:$0xf]
  %v44 = vld [vmem:[%s1 + $0x28] sm:$0xf]
  %v45 = vld [vmem:[%s1 + $0x2c] sm:$0xf]
  %v46 = vld [vmem:[%s1 + $0x30] sm:$0xf]
  %v47 = vld [vmem:[%s1 + $0x34] sm:$0xf]
  %v48 = vld [vmem:[%s1 + $0x38] sm:$0xf]
  %v49 = vld [vmem:[%s1 + $0x3c] sm:$0xf]
  %v50 = vld [vmem:[%s1 + $0x40] sm:$0xf]
  %v51 = vld [vmem:[%s1 + $0x44] sm:$0xf]
  %v52 = vld [vmem:[%s1 + $0x48] sm:$0xf]
  %v53 = vld [vmem:[%s1 + $0x4c] sm:$0xf]
  %v54 = vld [vmem:[%s1 + $0x50] sm:$0xf]
  %v55 = vld [vmem:[%s1 + $0x54] sm:$0xf]
  %v56 = vld [vmem:[%s1 + $0x58] sm:$0xf]
  %v57 = vld [vmem:[%s1 + $0x5c] sm:$0xf]
  %v58 = vld [vmem:[%s1 + $0x60] sm:$0xf]
  %v59 = vld [vmem:[%s1 + $0x64] sm:$0xf]
  %v60 = vld [vmem:[%s1 + $0x68] sm:$0xf]
  %v61 = vld [vmem:[%s1 + $0x6c] sm:$0xf]
  %v62 = vld [vmem:[%s1 + $0x70] sm:$0xf]
  %v63 = vld [vmem:[%s1 + $0x74] sm:$0xf]
  %v64 = vld [vmem:[%s1 + $0x78] sm:$0xf]
  %v65 = vld [vmem:[%s1 + $0x7c] sm:$0xf]
  %v66 = vld [vmem:[%s1 + $0x80] sm:$0xf]
  %v67 = vld [vmem:[%s1 + $0x84] sm:$0xf]
  %v68 = vld [vmem:[%s1 + $0x88] sm:$0xf]
  %v69 = vld [vmem:[%s1 + $0x8c] sm:$0xf]
  %v70 = vld [vmem:[%s1 + $0x90] sm:$0xf]
  %v71 = vld [vmem:[%s1 + $0x94] sm:$0xf]
  %v72 = vld [vmem:[%s1 + $0x98] sm:$0xf]
  %v73 = vld [vmem:[%s1 + $0x9c] sm:$0xf]
  %v74 = vld [vmem:[%s1 + $0xa0] sm:$0xf]
  %v75 = vld [vmem:[%s1 + $0xa4] sm:$0xf]
  %v76 = vld [vmem:[%s1 + $0xa8] sm:$0xf]
  %v77 = vld [vmem:[%s1 + $0xac] sm:$0xf]
  %v78 = vld [vmem:[%s1 + $0xb0] sm:$0xf]
  %v79 = vld [vmem:[%s1 + $0xb4] sm:$0xf]
  %v80 = vld [vmem:[%s1 + $0xb8] sm:$0xf]
  %v81 = vld [vmem:[%s1 + $0xbc] sm:$0xf]
  %v82 = vld [vmem:[%s2] sm:$0x1]
  %v83 = vld [vmem:[%s3] sm:$0x1]
  %vm88 = vcmask 1040384
  %v89 = vrot.slane %v30, 7
  %v90 = vrot.slane %v31, 7
  %v91 = vsel %vm88, %v89, %v90
  %v92 = vrot.slane %v32, 7
  %v93 = vrot.slane %v33, 7
  %v94 = vsel %vm88, %v92, %v93
  %v101 = vsel %vm88, 0.0, %v89
  %v102 = vsel %vm88, 0.0, %v92
  %v103 = vsel %vm88, %v90, 0.0
  %v104 = vsel %vm88, %v93, 0.0
  %vm109 = vcmask 1046528
  %v110 = vrot.slane %v101, 1
  %v111 = vrot.slane %v91, 1
  %v112 = vsel %vm109, %v110, %v111
  %v113 = vrot.slane %v103, 1
  %v114 = vsel %vm109, %v111, %v113
  %v115 = vrot.slane %v102, 1
  %v116 = vrot.slane %v94, 1
  %v117 = vsel %vm109, %v115, %v116
  %v118 = vrot.slane %v104, 1
  %v119 = vsel %vm109, %v116, %v118
  %vm124 = vcmask 1045504
  %v125 = vrot.slane %v101, 2
  %v126 = vrot.slane %v91, 2
  %v127 = vsel %vm124, %v125, %v126
  %v128 = vrot.slane %v103, 2
  %v129 = vsel %vm124, %v126, %v128
  %v130 = vrot.slane %v102, 2
  %v131 = vrot.slane %v94, 2
  %v132 = vsel %vm124, %v130, %v131
  %v133 = vrot.slane %v104, 2
  %v134 = vsel %vm124, %v131, %v133
  %v139 = vpack.c.bf16 %v91, %v101
  %v140 = vpack.c.bf16 %v114, %v112
  %v141 = vpack.c.bf16 %v129, %v127
  %v142 = vpack.c.bf16 %v94, %v102
  %v143 = vpack.c.bf16 %v119, %v117
  %v144 = vpack.c.bf16 %v134, %v132
  %v193 = vunpack.c.l.b16 %v34
  %v194 = vunpack.c.l.b16 %v35
  %v195 = vunpack.c.l.b16 %v36
  %v196 = vunpack.c.l.b16 %v37
  %v197 = vunpack.c.l.b16 %v38
  %v198 = vunpack.c.l.b16 %v39
  %v199 = vunpack.c.l.b16 %v40
  %v200 = vunpack.c.l.b16 %v41
  %v201 = vunpack.c.l.b16 %v42
  %v202 = vunpack.c.l.b16 %v43
  %v203 = vunpack.c.l.b16 %v44
  %v204 = vunpack.c.l.b16 %v45
  %v205 = vunpack.c.l.b16 %v46
  %v206 = vunpack.c.l.b16 %v47
  %v207 = vunpack.c.l.b16 %v48
  %v208 = vunpack.c.l.b16 %v49
  %v209 = vunpack.c.l.b16 %v50
  %v210 = vunpack.c.l.b16 %v51
  %v211 = vunpack.c.l.b16 %v52
  %v212 = vunpack.c.l.b16 %v53
  %v213 = vunpack.c.l.b16 %v54
  %v214 = vunpack.c.l.b16 %v55
  %v215 = vunpack.c.l.b16 %v56
  %v216 = vunpack.c.l.b16 %v57
  %v217 = vunpack.c.l.b16 %v58
  %v218 = vunpack.c.l.b16 %v59
  %v219 = vunpack.c.l.b16 %v60
  %v220 = vunpack.c.l.b16 %v61
  %v221 = vunpack.c.l.b16 %v62
  %v222 = vunpack.c.l.b16 %v63
  %v223 = vunpack.c.l.b16 %v64
  %v224 = vunpack.c.l.b16 %v65
  %v225 = vunpack.c.l.b16 %v66
  %v226 = vunpack.c.l.b16 %v67
  %v227 = vunpack.c.l.b16 %v68
  %v228 = vunpack.c.l.b16 %v69
  %v229 = vunpack.c.l.b16 %v70
  %v230 = vunpack.c.l.b16 %v71
  %v231 = vunpack.c.l.b16 %v72
  %v232 = vunpack.c.l.b16 %v73
  %v233 = vunpack.c.l.b16 %v74
  %v234 = vunpack.c.l.b16 %v75
  %v235 = vunpack.c.l.b16 %v76
  %v236 = vunpack.c.l.b16 %v77
  %v237 = vunpack.c.l.b16 %v78
  %v238 = vunpack.c.l.b16 %v79
  %v239 = vunpack.c.l.b16 %v80
  %v240 = vunpack.c.l.b16 %v81
  %v241 = vpack.c.b16 %v194, %v193
  %v242 = vpack.c.b16 %v196, %v195
  %v243 = vpack.c.b16 %v198, %v197
  %v244 = vpack.c.b16 %v200, %v199
  %v245 = vpack.c.b16 %v202, %v201
  %v246 = vpack.c.b16 %v204, %v203
  %v247 = vpack.c.b16 %v206, %v205
  %v248 = vpack.c.b16 %v208, %v207
  %v249 = vpack.c.b16 %v210, %v209
  %v250 = vpack.c.b16 %v212, %v211
  %v251 = vpack.c.b16 %v214, %v213
  %v252 = vpack.c.b16 %v216, %v215
  %v253 = vpack.c.b16 %v218, %v217
  %v254 = vpack.c.b16 %v220, %v219
  %v255 = vpack.c.b16 %v222, %v221
  %v256 = vpack.c.b16 %v224, %v223
  %v257 = vpack.c.b16 %v226, %v225
  %v258 = vpack.c.b16 %v228, %v227
  %v259 = vpack.c.b16 %v230, %v229
  %v260 = vpack.c.b16 %v232, %v231
  %v261 = vpack.c.b16 %v234, %v233
  %v262 = vpack.c.b16 %v236, %v235
  %v263 = vpack.c.b16 %v238, %v237
  %v264 = vpack.c.b16 %v240, %v239
  %289 = vmatprep.subr.bf16.mxu0 0
  %290 = vmatpush1.bf16.msra.mxu0 %v241
  %291 = vmatprep.subr.bf16.mxu0 0
  %292 = vmatpush1.bf16.msra.mxu0 %v242
  %293 = vmatprep.subr.bf16.mxu0 0
  %294 = vmatpush1.bf16.msra.mxu0 %v243
  %295 = vmatprep.subr.bf16.mxu0 0
  %296 = vmatpush1.bf16.msra.mxu0 %v244
  %297 = vmatprep.subr.bf16.mxu0 0
  %298 = vmatpush1.bf16.msra.mxu0 %v245
  %299 = vmatprep.subr.bf16.mxu0 0
  %300 = vmatpush1.bf16.msra.mxu0 %v246
  %301 = vmatprep.subr.bf16.mxu0 0
  %302 = vmatpush1.bf16.msra.mxu0 %v247
  %303 = vmatprep.subr.bf16.mxu0 0
  %304 = vmatpush1.bf16.msra.mxu0 %v248
  %305 = vmatprep.subr.bf16.mxu0 0
  %306 = vmatpush1.bf16.msra.mxu0 %v249
  %307 = vmatprep.subr.bf16.mxu0 0
  %308 = vmatpush1.bf16.msra.mxu0 %v250
  %309 = vmatprep.subr.bf16.mxu0 0
  %310 = vmatpush1.bf16.msra.mxu0 %v251
  %311 = vmatprep.subr.bf16.mxu0 0
  %312 = vmatpush1.bf16.msra.mxu0 %v252
  %313 = vmatprep.subr.bf16.mxu0 0
  %314 = vmatpush1.bf16.msra.mxu0 %v253
  %315 = vmatprep.subr.bf16.mxu0 0
  %316 = vmatpush1.bf16.msra.mxu0 %v254
  %317 = vmatprep.subr.bf16.mxu0 0
  %318 = vmatpush1.bf16.msra.mxu0 %v255
  %319 = vmatprep.subr.bf16.mxu0 0
  %320 = vmatpush1.bf16.msra.mxu0 %v256
  %321 = vmatprep.mubr.bf16.mxu0 %v140
  %322 = vmatmul.mubr.bf16.gmra.mrb[0].mxu0 %v139
  %v323 = vpop.f32.mrb[0].mxu0
  %v324 = vadd.f32 0.0, %v323
  %v325 = vpop.f32.mrb[0].mxu0
  %v326 = vpop.f32.mrb[0].mxu0
  %v327 = vadd.f32 0.0, %v326
  %v328 = vpop.f32.mrb[0].mxu0
  %329 = vmatprep.mubr.bf16.mxu0 %v143
  %330 = vmatmul.mubr.bf16.gmra.mrb[0].mxu0 %v142
  %v331 = vpop.f32.mrb[0].mxu0
  %v332 = vadd.f32 0.0, %v331
  %v333 = vpop.f32.mrb[0].mxu0
  %v334 = vpop.f32.mrb[0].mxu0
  %v335 = vadd.f32 0.0, %v334
  %v336 = vpop.f32.mrb[0].mxu0
  %337 = vdwg.mxu0
  %338 = vmatprep.subr.bf16.mxu0 0
  %339 = vmatpush1.bf16.msra.mxu0 %v257
  %340 = vmatprep.subr.bf16.mxu0 0
  %341 = vmatpush1.bf16.msra.mxu0 %v258
  %342 = vmatprep.subr.bf16.mxu0 0
  %343 = vmatpush1.bf16.msra.mxu0 %v259
  %344 = vmatprep.subr.bf16.mxu0 0
  %345 = vmatpush1.bf16.msra.mxu0 %v260
  %346 = vmatprep.subr.bf16.mxu0 0
  %347 = vmatpush1.bf16.msra.mxu0 %v261
  %348 = vmatprep.subr.bf16.mxu0 0
  %349 = vmatpush1.bf16.msra.mxu0 %v262
  %350 = vmatprep.subr.bf16.mxu0 0
  %351 = vmatpush1.bf16.msra.mxu0 %v263
  %352 = vmatprep.subr.bf16.mxu0 0
  %353 = vmatpush1.bf16.msra.mxu0 %v264
  %354 = vmatprep.subr.bf16.mxu0 0
  %355 = vmatpush1.bf16.msra.mxu0 0
  %356 = vmatprep.subr.bf16.mxu0 0
  %357 = vmatpush1.bf16.msra.mxu0 0
  %358 = vmatprep.subr.bf16.mxu0 0
  %359 = vmatpush1.bf16.msra.mxu0 0
  %360 = vmatprep.subr.bf16.mxu0 0
  %361 = vmatpush1.bf16.msra.mxu0 0
  %362 = vmatprep.subr.bf16.mxu0 0
  %363 = vmatpush1.bf16.msra.mxu0 0
  %364 = vmatprep.subr.bf16.mxu0 0
  %365 = vmatpush1.bf16.msra.mxu0 0
  %366 = vmatprep.subr.bf16.mxu0 0
  %367 = vmatpush1.bf16.msra.mxu0 0
  %368 = vmatprep.subr.bf16.mxu0 0
  %369 = vmatpush1.bf16.msra.mxu0 0
  %370 = vmatprep.mubr.bf16.mxu0 0
  %371 = vmatmul.mubr.bf16.gmra.mrb[0].mxu0 %v141
  %v372 = vpop.f32.mrb[0].mxu0
  %v373 = vadd.f32 %v324, %v372
  %v374 = vpop.f32.mrb[0].mxu0
  %v375 = vpop.f32.mrb[0].mxu0
  %v376 = vadd.f32 %v327, %v375
  %v377 = vpop.f32.mrb[0].mxu0
  %378 = vmatprep.mubr.bf16.mxu0 0
  %379 = vmatmul.mubr.bf16.gmra.mrb[0].mxu0 %v144
  %v380 = vpop.f32.mrb[0].mxu0
  %v381 = vadd.f32 %v332, %v380
  %v382 = vpop.f32.mrb[0].mxu0
  %v383 = vpop.f32.mrb[0].mxu0
  %v384 = vadd.f32 %v335, %v383
  %v385 = vpop.f32.mrb[0].mxu0
  %386 = vdwg.mxu0
  %v387 = vmax.f32 %v373, 0.0
  %v388 = vmax.f32 %v376, 0.0
  %v389 = vmax.f32 %v381, 0.0
  %v390 = vmax.f32 %v384, 0.0
  %vm391 = vcmask 261120
  %v392 = vsel %vm391, %v387, 0.0
  %v393 = vsel %vm391, %v388, 0.0
  %v394 = vadd.f32 %v392, %v393
  %v395 = vsel %vm391, %v389, 0.0
  %v396 = vadd.f32 %v394, %v395
  %v397 = vsel %vm391, %v390, 0.0
  %v398 = vadd.f32 %v396, %v397
  %v399 = vrot.slane %v398, 4
  %v400 = vadd.f32 %v398, %v399
  %v401 = vrot.slane %v400, 2
  %v402 = vadd.f32 %v400, %v401
  %v403 = vrot.slane %v402, 1
  %v404 = vadd.f32 %v402, %v403
  %v405 = vrcp.pop 32.0
  %v406 = vmul.f32 %v404, %v405
  %v407 = vsub.f32 %v387, %v406
  %v408 = vsub.f32 %v388, %v406
  %v409 = vsub.f32 %v389, %v406
  %v410 = vsub.f32 %v390, %v406
  %v411 = vmul.f32 %v407, %v407
  %v412 = vmul.f32 %v408, %v408
  %v413 = vmul.f32 %v409, %v409
  %v414 = vmul.f32 %v410, %v410
  %v415 = vsel %vm391, %v411, 0.0
  %v416 = vsel %vm391, %v412, 0.0
  %v417 = vadd.f32 %v415, %v416
  %v418 = vsel %vm391, %v413, 0.0
  %v419 = vadd.f32 %v417, %v418
  %v420 = vsel %vm391, %v414, 0.0
  %v421 = vadd.f32 %v419, %v420
  %v422 = vrot.slane %v421, 4
  %v423 = vadd.f32 %v421, %v422
  %v424 = vrot.slane %v423, 2
  %v425 = vadd.f32 %v423, %v424
  %v426 = vrot.slane %v425, 1
  %v427 = vadd.f32 %v425, %v426
  %v428 = vmul.f32 %v427, %v405
  %v429 = vadd.f32 %v428, 1e-05
  %v430 = vrsqrt.pop %v429
  %v431 = vmul.f32 %v407, %v430
  %v432 = vmul.f32 %v408, %v430
  %v433 = vmul.f32 %v409, %v430
  %v434 = vmul.f32 %v410, %v430
  %v436 = vlaneseq
  %v437 = vshrl.u32 %v436, 7
  %v438 = vsub.s32 0, %v437
  %v439 = vrot.slane %v82, %v438
  %v441 = vmul.f32 %v431, %v439
  %v442 = vmul.f32 %v432, %v439
  %v443 = vmul.f32 %v433, %v439
  %v444 = vmul.f32 %v434, %v439
  %v446 = vlaneseq
  %v447 = vshrl.u32 %v446, 7
  %v448 = vsub.s32 0, %v447
  %v449 = vrot.slane %v83, %v448
  %v451 = vadd.f32 %v441, %v449
  %v452 = vadd.f32 %v442, %v449
  %v453 = vadd.f32 %v443, %v449
  %v454 = vadd.f32 %v444, %v449
  %v455 = vld [vmem:[%s4] sm:$0xf]
  %v456 = vld [vmem:[%s4 + $0x4] sm:$0xf]
  %v457 = vld [vmem:[%s4 + $0x8] sm:$0xf]
  %v458 = vld [vmem:[%s4 + $0xc] sm:$0xf]
  %v459 = vld [vmem:[%s4 + $0x10] sm:$0xf]
  %v460 = vld [vmem:[%s4 + $0x14] sm:$0xf]
  %v461 = vld [vmem:[%s4 + $0x18] sm:$0xf]
  %v462 = vld [vmem:[%s4 + $0x1c] sm:$0xf]
  %v463 = vld [vmem:[%s4 + $0x20] sm:$0xf]
  %v464 = vld [vmem:[%s4 + $0x24] sm:$0xf]
  %v465 = vld [vmem:[%s4 + $0x28] sm:$0xf]
  %v466 = vld [vmem:[%s4 + $0x2c] sm:$0xf]
  %v467 = vld [vmem:[%s5] sm:$0x1]
  %v468 = vld [vmem:[%s6] sm:$0x1]
  %v473 = vrot.slane %v451, 7
  %v474 = vrot.slane %v452, 7
  %v475 = vsel %vm88, %v473, %v474
  %v476 = vrot.slane %v453, 7
  %v477 = vrot.slane %v454, 7
  %v478 = vsel %vm88, %v476, %v477
  %v485 = vsel %vm88, 0.0, %v473
  %v486 = vsel %vm88, 0.0, %v476
  %v487 = vsel %vm88, %v474, 0.0
  %v488 = vsel %vm88, %v477, 0.0
  %v493 = vrot.slane %v485, 1
  %v494 = vrot.slane %v475, 1
  %v495 = vsel %vm109, %v493, %v494
  %v496 = vrot.slane %v487, 1
  %v497 = vsel %vm109, %v494, %v496
  %v498 = vrot.slane %v486, 1
  %v499 = vrot.slane %v478, 1
  %v500 = vsel %vm109, %v498, %v499
  %v501 = vrot.slane %v488, 1
  %v502 = vsel %vm109, %v499, %v501
  %v503 = vrot.slane %v485, 2
  %v504 = vrot.slane %v475, 2
  %v505 = vsel %vm124, %v503, %v504
  %v506 = vrot.slane %v487, 2
  %v507 = vsel %vm124, %v504, %v506
  %v508 = vrot.slane %v486, 2
  %v509 = vrot.slane %v478, 2
  %v510 = vsel %vm124, %v508, %v509
  %v511 = vrot.slane %v488, 2
  %v512 = vsel %vm124, %v509, %v511
  %513 = vrot.lane.b32.xlu0 %v495, 32
  %v514 = vpop.permute.xlu0 %513
  %515 = vrot.lane.b32.xlu0 %v497, 32
  %v516 = vpop.permute.xlu0 %515
  %517 = vrot.lane.b32.xlu0 %v500, 32
  %v518 = vpop.permute.xlu0 %517
  %519 = vrot.lane.b32.xlu0 %v502, 32
  %v520 = vpop.permute.xlu0 %519
  %525 = vrot.lane.b32.xlu0 %v505, 64
  %v526 = vpop.permute.xlu0 %525
  %527 = vrot.lane.b32.xlu0 %v507, 64
  %v528 = vpop.permute.xlu0 %527
  %529 = vrot.lane.b32.xlu0 %v510, 64
  %v530 = vpop.permute.xlu0 %529
  %531 = vrot.lane.b32.xlu0 %v512, 64
  %v532 = vpop.permute.xlu0 %531
  %v537 = vsel %vm391, %v485, %v514
  %v538 = vsel %vm391, %v475, %v516
  %v539 = vsel %vm391, %v486, %v518
  %v540 = vsel %vm391, %v478, %v520
  %vm541 = vcmask 523264
  %v542 = vsel %vm541, %v537, %v526
  %v543 = vsel %vm541, %v538, %v528
  %v544 = vsel %vm541, %v539, %v530
  %v545 = vsel %vm541, %v540, %v532
  %v546 = vpack.c.bf16 %v543, %v542
  %v547 = vpack.c.bf16 %v545, %v544
  %v560 = vunpack.c.l.b16 %v455
  %v561 = vunpack.c.l.b16 %v456
  %v562 = vunpack.c.l.b16 %v457
  %v563 = vunpack.c.l.b16 %v458
  %v564 = vunpack.c.l.b16 %v459
  %v565 = vunpack.c.l.b16 %v460
  %v566 = vunpack.c.l.b16 %v461
  %v567 = vunpack.c.l.b16 %v462
  %v568 = vunpack.c.l.b16 %v463
  %v569 = vunpack.c.l.b16 %v464
  %v570 = vunpack.c.l.b16 %v465
  %v571 = vunpack.c.l.b16 %v466
  %v572 = vpack.c.b16 %v561, %v560
  %v573 = vpack.c.b16 %v563, %v562
  %v574 = vpack.c.b16 %v565, %v564
  %v575 = vpack.c.b16 %v567, %v566
  %v576 = vpack.c.b16 %v569, %v568
  %v577 = vpack.c.b16 %v571, %v570
  %vm584 = vcmask 785408
  %v586 = vsel %vm584, %v546, 0
  %v589 = vsel %vm584, %v547, 0
  %591 = vmatprep.subr.bf16.mxu0 0
  %592 = vmatpush1.bf16.msra.mxu0 %v572
  %593 = vmatprep.subr.bf16.mxu0 0
  %594 = vmatpush1.bf16.msra.mxu0 %v573
  %595 = vmatprep.subr.bf16.mxu0 0
  %596 = vmatpush1.bf16.msra.mxu0 %v574
  %597 = vmatprep.subr.bf16.mxu0 0
  %598 = vmatpush1.bf16.msra.mxu0 %v575
  %599 = vmatprep.subr.bf16.mxu0 0
  %600 = vmatpush1.bf16.msra.mxu0 %v576
  %601 = vmatprep.subr.bf16.mxu0 0
  %602 = vmatpush1.bf16.msra.mxu0 %v577
  %603 = vmatprep.subr.bf16.mxu0 0
  %604 = vmatpush1.bf16.msra.mxu0 0
  %605 = vmatprep.subr.bf16.mxu0 0
  %606 = vmatpush1.bf16.msra.mxu0 0
  %607 = vmatprep.subr.bf16.mxu0 0
  %608 = vmatpush1.bf16.msra.mxu0 0
  %609 = vmatprep.subr.bf16.mxu0 0
  %610 = vmatpush1.bf16.msra.mxu0 0
  %611 = vmatprep.subr.bf16.mxu0 0
  %612 = vmatpush1.bf16.msra.mxu0 0
  %613 = vmatprep.subr.bf16.mxu0 0
  %614 = vmatpush1.bf16.msra.mxu0 0
  %615 = vmatprep.subr.bf16.mxu0 0
  %616 = vmatpush1.bf16.msra.mxu0 0
  %617 = vmatprep.subr.bf16.mxu0 0
  %618 = vmatpush1.bf16.msra.mxu0 0
  %619 = vmatprep.subr.bf16.mxu0 0
  %620 = vmatpush1.bf16.msra.mxu0 0
  %621 = vmatprep.subr.bf16.mxu0 0
  %622 = vmatpush1.bf16.msra.mxu0 0
  %623 = vmatprep.mubr.bf16.mxu0 0
  %624 = vmatmul.mubr.bf16.gmra.mrb[0].mxu0 %v586
  %v625 = vpop.f32.mrb[0].mxu0
  %v626 = vadd.f32 0.0, %v625
  %v627 = vpop.f32.mrb[0].mxu0
  %v628 = vpop.f32.mrb[0].mxu0
  %v629 = vadd.f32 0.0, %v628
  %v630 = vpop.f32.mrb[0].mxu0
  %631 = vmatprep.mubr.bf16.mxu0 0
  %632 = vmatmul.mubr.bf16.gmra.mrb[0].mxu0 %v589
  %v633 = vpop.f32.mrb[0].mxu0
  %v634 = vadd.f32 0.0, %v633
  %v635 = vpop.f32.mrb[0].mxu0
  %v636 = vpop.f32.mrb[0].mxu0
  %v637 = vadd.f32 0.0, %v636
  %v638 = vpop.f32.mrb[0].mxu0
  %639 = vdwg.mxu0
  %v640 = vsel %vm391, %v626, 0.0
  %v641 = vsel %vm391, %v629, 0.0
  %v642 = vadd.f32 %v640, %v641
  %v643 = vsel %vm391, %v634, 0.0
  %v644 = vadd.f32 %v642, %v643
  %v645 = vsel %vm391, %v637, 0.0
  %v646 = vadd.f32 %v644, %v645
  %v647 = vrot.slane %v646, 4
  %v648 = vadd.f32 %v646, %v647
  %v649 = vrot.slane %v648, 2
  %v650 = vadd.f32 %v648, %v649
  %v651 = vrot.slane %v650, 1
  %v652 = vadd.f32 %v650, %v651
  %v653 = vmul.f32 %v652, %v405
  %v654 = vsub.f32 %v626, %v653
  %v655 = vsub.f32 %v629, %v653
  %v656 = vsub.f32 %v634, %v653
  %v657 = vsub.f32 %v637, %v653
  %v658 = vmul.f32 %v654, %v654
  %v659 = vmul.f32 %v655, %v655
  %v660 = vmul.f32 %v656, %v656
  %v661 = vmul.f32 %v657, %v657
  %v662 = vsel %vm391, %v658, 0.0
  %v663 = vsel %vm391, %v659, 0.0
  %v664 = vadd.f32 %v662, %v663
  %v665 = vsel %vm391, %v660, 0.0
  %v666 = vadd.f32 %v664, %v665
  %v667 = vsel %vm391, %v661, 0.0
  %v668 = vadd.f32 %v666, %v667
  %v669 = vrot.slane %v668, 4
  %v670 = vadd.f32 %v668, %v669
  %v671 = vrot.slane %v670, 2
  %v672 = vadd.f32 %v670, %v671
  %v673 = vrot.slane %v672, 1
  %v674 = vadd.f32 %v672, %v673
  %v675 = vmul.f32 %v674, %v405
  %v676 = vadd.f32 %v675, 1e-05
  %v677 = vrsqrt.pop %v676
  %v678 = vmul.f32 %v654, %v677
  %v679 = vmul.f32 %v655, %v677
  %v680 = vmul.f32 %v656, %v677
  %v681 = vmul.f32 %v657, %v677
  %v683 = vlaneseq
  %v684 = vshrl.u32 %v683, 7
  %v685 = vsub.s32 0, %v684
  %v686 = vrot.slane %v467, %v685
  %v688 = vmul.f32 %v678, %v686
  %v689 = vmul.f32 %v679, %v686
  %v690 = vmul.f32 %v680, %v686
  %v691 = vmul.f32 %v681, %v686
  %v693 = vlaneseq
  %v694 = vshrl.u32 %v693, 7
  %v695 = vsub.s32 0, %v694
  %v696 = vrot.slane %v468, %v695
  %v698 = vadd.f32 %v688, %v696
  %v699 = vadd.f32 %v689, %v696
  %v700 = vadd.f32 %v690, %v696
  %v701 = vadd.f32 %v691, %v696
  %v702 = vld [vmem:[%s7] sm:$0xff]
  %v703 = vld [vmem:[%s7 + $0x8] sm:$0xff]
  %v704 = vld [vmem:[%s7 + $0x10] sm:$0xff]
  %v705 = vld [vmem:[%s7 + $0x18] sm:$0xff]
  %v706 = vadd.f32 %v698, %v702
  %v707 = vadd.f32 %v699, %v703
  %v708 = vadd.f32 %v700, %v704
  %v709 = vadd.f32 %v701, %v705
  %710 = vst.msk [vmem:[%s8] sm:$0xff] %vm391, %v706
  %711 = vst.msk [vmem:[%s8 + $0x8] sm:$0xff] %vm391, %v707
  %712 = vst.msk [vmem:[%s8 + $0x10] sm:$0xff] %vm391, %v708
  %713 = vst.msk [vmem:[%s8 + $0x18] sm:$0xff] %vm391, %v709
  // Predicated region
  $region34: #{encoder_forward.7} parent=0 // pred_check
    _
  $region35: #{encoder_forward.7} parent=0 // pred_check_branch
    %715 = sbr.rel (0) target = $region37
  $region36: #{encoder_forward.7} parent=0 // pred_region
    _
  $region37: #{encoder_forward.7} parent=0 // pred_fallthru
    _
  // Predicated region
  $region38: #{encoder_forward.7} parent=0 // pred_check
    _
  $region39: #{encoder_forward.7} parent=0 // pred_check_branch
    %717 = sbr.rel (0) target = $region41
  $region40: #{encoder_forward.7} parent=0 // pred_region
    _
  $region41: #{encoder_forward.7} parent=0 // pred_fallthru
    _

// kernel: encoder_forward.9
$region0: #{encoder_forward.9}
  #allocation0 [shape = 'u32[]', space=smem, size = 0x4, offset = 0x4, fixed_abs, tag = 'smem constant byte address 0x4 - core index']
  #allocation1 [shape = 'u32[144,128]{1,0:T(1,128)}', space=vmem, size = 0x12000, scoped, tag = 'internal scratch']
  #allocation2 [shape = 'f32[16,2,96]{2,1,0:T(2,128)}', space=vmem, size = 0x4000, scoped, tag = 'scratch operand']
  #allocation3 [shape = 'f32[16,2,16]{2,1,0:T(2,128)}', space=vmem, size = 0x4000, scoped, tag = 'scratch operand']
  #allocation4 [shape = 'f32[16,2,16]{2,1,0:T(2,128)}', space=vmem, size = 0x4000, scoped, tag = 'scratch operand']
  %s0 = inlined_call_operand.vmem [shape: f32[16,2,32], index: 0, kind: input, shape index: {}]
  %s1 = inlined_call_operand.vmem [shape: bf16[32,96], index: 1, kind: input, shape index: {}]
  %s2 = inlined_call_operand.vmem [shape: f32[1,96], index: 2, kind: input, shape index: {}]
  %s3 = inlined_call_operand.vmem [shape: bf16[16,48], index: 3, kind: input, shape index: {}]
  %s4 = inlined_call_operand.vmem [shape: f32[1,48], index: 4, kind: input, shape index: {}]
  %s5 = inlined_call_operand.vmem [shape: bf16[16,48], index: 5, kind: input, shape index: {}]
  %s6 = inlined_call_operand.vmem [shape: f32[1,48], index: 6, kind: input, shape index: {}]
  %s7 = inlined_call_operand.vmem [shape: f32[16,2,32], index: 7, kind: output, shape index: {}]
  %s8 = sld [smem:[#allocation0]]
  $region38: #{encoder_forward.9} parent=0
    _
  %s10 = ssub.s32 1, %s8
  %s11 = scalar_select 0, %s10, %s8
  // Predicated region
  $region2: #{encoder_forward.9} parent=0 // pred_check
    _
  $region3: #{encoder_forward.9} parent=0 // pred_check_branch
    %13 = sbr.rel (0) target = $region5
  $region4: #{encoder_forward.9} parent=0 // pred_region
    _
  $region5: #{encoder_forward.9} parent=0 // pred_fallthru
    _
  // Predicated region
  $region6: #{encoder_forward.9} parent=0 // pred_check
    _
  $region7: #{encoder_forward.9} parent=0 // pred_check_branch
    %15 = sbr.rel (0) target = $region9
  $region8: #{encoder_forward.9} parent=0 // pred_region
    _
  $region9: #{encoder_forward.9} parent=0 // pred_fallthru
    _
  // Predicated region
  $region10: #{encoder_forward.9} parent=0 // pred_check
    _
  $region11: #{encoder_forward.9} parent=0 // pred_check_branch
    %17 = sbr.rel (0) target = $region13
  $region12: #{encoder_forward.9} parent=0 // pred_region
    _
  $region13: #{encoder_forward.9} parent=0 // pred_fallthru
    _
  // Predicated region
  $region14: #{encoder_forward.9} parent=0 // pred_check
    _
  $region15: #{encoder_forward.9} parent=0 // pred_check_branch
    %19 = sbr.rel (0) target = $region17
  $region16: #{encoder_forward.9} parent=0 // pred_region
    _
  $region17: #{encoder_forward.9} parent=0 // pred_fallthru
    _
  // Predicated region
  $region18: #{encoder_forward.9} parent=0 // pred_check
    _
  $region19: #{encoder_forward.9} parent=0 // pred_check_branch
    %21 = sbr.rel (0) target = $region21
  $region20: #{encoder_forward.9} parent=0 // pred_region
    _
  $region21: #{encoder_forward.9} parent=0 // pred_fallthru
    _
  // Predicated region
  $region22: #{encoder_forward.9} parent=0 // pred_check
    _
  $region23: #{encoder_forward.9} parent=0 // pred_check_branch
    %23 = sbr.rel (0) target = $region25
  $region24: #{encoder_forward.9} parent=0 // pred_region
    _
  $region25: #{encoder_forward.9} parent=0 // pred_fallthru
    _
  // Predicated region
  $region26: #{encoder_forward.9} parent=0 // pred_check
    _
  $region27: #{encoder_forward.9} parent=0 // pred_check_branch
    %25 = sbr.rel (0) target = $region29
  $region28: #{encoder_forward.9} parent=0 // pred_region
    _
  $region29: #{encoder_forward.9} parent=0 // pred_fallthru
    _
  %v27 = vld [vmem:[%s0] sm:$0x3]
  %v28 = vld [vmem:[%s0 + $0x2] sm:$0x3]
  %v29 = vld [vmem:[%s0 + $0x4] sm:$0x3]
  %v30 = vld [vmem:[%s0 + $0x6] sm:$0x3]
  %v31 = vld [vmem:[%s0 + $0x8] sm:$0x3]
  %v32 = vld [vmem:[%s0 + $0xa] sm:$0x3]
  %v33 = vld [vmem:[%s0 + $0xc] sm:$0x3]
  %v34 = vld [vmem:[%s0 + $0xe] sm:$0x3]
  %v35 = vld [vmem:[%s0 + $0x10] sm:$0x3]
  %v36 = vld [vmem:[%s0 + $0x12] sm:$0x3]
  %v37 = vld [vmem:[%s0 + $0x14] sm:$0x3]
  %v38 = vld [vmem:[%s0 + $0x16] sm:$0x3]
  %v39 = vld [vmem:[%s0 + $0x18] sm:$0x3]
  %v40 = vld [vmem:[%s0 + $0x1a] sm:$0x3]
  %v41 = vld [vmem:[%s0 + $0x1c] sm:$0x3]
  %v42 = vld [vmem:[%s0 + $0x1e] sm:$0x3]
  %v59 = vcombine.low %v27, %v28
  %v60 = vcombine.low %v29, %v30
  %v62 = vunpack.c.l.s4 1983009808
  %v63 = vunpack.c.0.s8 %v62
  %v64 = vlaneseq
  %v65 = vshrl.u32 %v64, 7
  %v66 = vsub.s32 %v63, %v65
  %v67 = vrot.slane %v59, %v66
  %v69 = vunpack.c.l.s4 1983009808
  %v70 = vunpack.c.0.s8 %v69
  %v71 = vlaneseq
  %v72 = vshrl.u32 %v71, 7
  %v73 = vsub.s32 %v70, %v72
  %v74 = vrot.slane %v60, %v73
  %v75 = vcombine.low %v67, %v74
  %v76 = vcombine.low %v31, %v32
  %v77 = vcombine.low %v33, %v34
  %v79 = vunpack.c.l.s4 1983009808
  %v80 = vunpack.c.0.s8 %v79
  %v81 = vlaneseq
  %v82 = vshrl.u32 %v81, 7
  %v83 = vsub.s32 %v80, %v82
  %v84 = vrot.slane %v76, %v83
  %v86 = vunpack.c.l.s4 1983009808
  %v87 = vunpack.c.0.s8 %v86
  %v88 = vlaneseq
  %v89 = vshrl.u32 %v88, 7
  %v90 = vsub.s32 %v87, %v89
  %v91 = vrot.slane %v77, %v90
  %v92 = vcombine.low %v84, %v91
  %v93 = vcombine.low %v35, %v36
  %v94 = vcombine.low %v37, %v38
  %v96 = vunpack.c.l.s4 1983009808
  %v97 = vunpack.c.0.s8 %v96
  %v98 = vlaneseq
  %v99 = vshrl.u32 %v98, 7
  %v100 = vsub.s32 %v97, %v99
  %v101 = vrot.slane %v93, %v100
  %v103 = vunpack.c.l.s4 1983009808
  %v104 = vunpack.c.0.s8 %v103
  %v105 = vlaneseq
  %v106 = vshrl.u32 %v105, 7
  %v107 = vsub.s32 %v104, %v106
  %v108 = vrot.slane %v94, %v107
  %v109 = vcombine.low %v101, %v108
  %v110 = vcombine.low %v39, %v40
  %v111 = vcombine.low %v41, %v42
  %v113 = vunpack.c.l.s4 1983009808
  %v114 = vunpack.c.0.s8 %v113
  %v115 = vlaneseq
  %v116 = vshrl.u32 %v115, 7
  %v117 = vsub.s32 %v114, %v116
  %v118 = vrot.slane %v110, %v117
  %v120 = vunpack.c.l.s4 1983009808
  %v121 = vunpack.c.0.s8 %v120
  %v122 = vlaneseq
  %v123 = vshrl.u32 %v122, 7
  %v124 = vsub.s32 %v121, %v123
  %v125 = vrot.slane %v111, %v124
  %v126 = vcombine.low %v118, %v125
  %v131 = vpack.c.bf16 %v92, %v75
  %v132 = vpack.c.bf16 %v126, %v109
  %v133 = vld [vmem:[%s1] sm:$0xf]
  %v134 = vld [vmem:[%s1 + $0x4] sm:$0xf]
  %v135 = vld [vmem:[%s1 + $0x8] sm:$0xf]
  %v136 = vld [vmem:[%s1 + $0xc] sm:$0xf]
  %v137 = vld [vmem:[%s2] sm:$0x1]
  %v139 = vlaneseq
  %v140 = vshrl.u32 %v139, 7
  %v141 = vsub.s32 0, %v140
  %v142 = vrot.slane %v137, %v141
  %v148 = vunpack.c.l.b16 %v133
  %v149 = vunpack.c.l.b16 %v134
  %v150 = vunpack.c.l.b16 %v135
  %v151 = vunpack.c.l.b16 %v136
  %v152 = vpack.c.b16 %v149, %v148
  %v153 = vpack.c.b16 %v151, %v150
  %vm156 = vcmask 261120
  %v158 = vsel %vm156, %v131, 0
  %v161 = vsel %vm156, %v132, 0
  %163 = vmatprep.subr.bf16.mxu0 0
  %164 = vmatpush1.bf16.msra.mxu0 %v152
  %165 = vmatprep.subr.bf16.mxu0 0
  %166 = vmatpush1.bf16.msra.mxu0 %v153
  %167 = vmatprep.subr.bf16.mxu0 0
  %168 = vmatpush1.bf16.msra.mxu0 0
  %169 = vmatprep.subr.bf16.mxu0 0
  %170 = vmatpush1.bf16.msra.mxu0 0
  %171 = vmatprep.subr.bf16.mxu0 0
  %172 = vmatpush1.bf16.msra.mxu0 0
  %173 = vmatprep.subr.bf16.mxu0 0
  %174 = vmatpush1.bf16.msra.mxu0 0
  %175 = vmatprep.subr.bf16.mxu0 0
  %176 = vmatpush1.bf16.msra.mxu0 0
  %177 = vmatprep.subr.bf16.mxu0 0
  %178 = vmatpush1.bf16.msra.mxu0 0
  %179 = vmatprep.subr.bf16.mxu0 0
  %180 = vmatpush1.bf16.msra.mxu0 0
  %181 = vmatprep.subr.bf16.mxu0 0
  %182 = vmatpush1.bf16.msra.mxu0 0
  %183 = vmatprep.subr.bf16.mxu0 0
  %184 = vmatpush1.bf16.msra.mxu0 0
  %185 = vmatprep.subr.bf16.mxu0 0
  %186 = vmatpush1.bf16.msra.mxu0 0
  %187 = vmatprep.subr.bf16.mxu0 0
  %188 = vmatpush1.bf16.msra.mxu0 0
  %189 = vmatprep.subr.bf16.mxu0 0
  %190 = vmatpush1.bf16.msra.mxu0 0
  %191 = vmatprep.subr.bf16.mxu0 0
  %192 = vmatpush1.bf16.msra.mxu0 0
  %193 = vmatprep.subr.bf16.mxu0 0
  %194 = vmatpush1.bf16.msra.mxu0 0
  %195 = vmatprep.mubr.bf16.mxu0 0
  %196 = vmatmul.mubr.bf16.gmra.mrb[0].mxu0 %v158
  %v197 = vpop.f32.mrb[0].mxu0
  %v198 = vadd.f32 %v142, %v197
  %v199 = vpop.f32.mrb[0].mxu0
  %v200 = vpop.f32.mrb[0].mxu0
  %v201 = vadd.f32 %v142, %v200
  %v202 = vpop.f32.mrb[0].mxu0
  %203 = vmatprep.mubr.bf16.mxu0 0
  %204 = vmatmul.mubr.bf16.gmra.mrb[0].mxu0 %v161
  %v205 = vpop.f32.mrb[0].mxu0
  %v206 = vadd.f32 %v142, %v205
  %v207 = vpop.f32.mrb[0].mxu0
  %v208 = vpop.f32.mrb[0].mxu0
  %v209 = vadd.f32 %v142, %v208
  %v210 = vpop.f32.mrb[0].mxu0
  %211 = vdwg.mxu0
  %v216 = vcombine.high %v198, %v198
  %v218 = vunpack.c.l.s4 1983009808
  %v219 = vunpack.c.0.s8 %v218
  %v220 = vlaneseq
  %v221 = vshrl.u32 %v220, 7
  %v222 = vsub.s32 %v219, %v221
  %v223 = vrot.slane %v198, %v222
  %v225 = vunpack.c.l.s4 1983009808
  %v226 = vunpack.c.0.s8 %v225
  %v227 = vlaneseq
  %v228 = vshrl.u32 %v227, 7
  %v229 = vsub.s32 %v226, %v228
  %v230 = vrot.slane %v216, %v229
  %v231 = vcombine.high %v223, %v223
  %v232 = vcombine.high %v230, %v230
  %v233 = vcombine.high %v201, %v201
  %v235 = vunpack.c.l.s4 1983009808
  %v236 = vunpack.c.0.s8 %v235
  %v237 = vlaneseq
  %v238 = vshrl.u32 %v237, 7
  %v239 = vsub.s32 %v236, %v238
  %v240 = vrot.slane %v201, %v239
  %v242 = vunpack.c.l.s4 1983009808
  %v243 = vunpack.c.0.s8 %v242
  %v244 = vlaneseq
  %v245 = vshrl.u32 %v244, 7
  %v246 = vsub.s32 %v243, %v245
  %v247 = vrot.slane %v233, %v246
  %v248 = vcombine.high %v240, %v240
  %v249 = vcombine.high %v247, %v247
  %v250 = vcombine.high %v206, %v206
  %v252 = vunpack.c.l.s4 1983009808
  %v253 = vunpack.c.0.s8 %v252
  %v254 = vlaneseq
  %v255 = vshrl.u32 %v254, 7
  %v256 = vsub.s32 %v253, %v255
  %v257 = vrot.slane %v206, %v256
  %v259 = vunpack.c.l.s4 1983009808
  %v260 = vunpack.c.0.s8 %v259
  %v261 = vlaneseq
  %v262 = vshrl.u32 %v261, 7
  %v263 = vsub.s32 %v260, %v262
  %v264 = vrot.slane %v250, %v263
  %v265 = vcombine.high %v257, %v257
  %v266 = vcombine.high %v264, %v264
  %v267 = vcombine.high %v209, %v209
  %v269 = vunpack.c.l.s4 1983009808
  %v270 = vunpack.c.0.s8 %v269
  %v271 = vlaneseq
  %v272 = vshrl.u32 %v271, 7
  %v273 = vsub.s32 %v270, %v272
  %v274 = vrot.slane %v209, %v273
  %v276 = vunpack.c.l.s4 1983009808
  %v277 = vunpack.c.0.s8 %v276
  %v278 = vlaneseq
  %v279 = vshrl.u32 %v278, 7
  %v280 = vsub.s32 %v277, %v279
  %v281 = vrot.slane %v267, %v280
  %v282 = vcombine.high %v274, %v274
  %v283 = vcombine.high %v281, %v281
  %vm300 = vcmask 779264
  %301 = vst.msk [vmem:[#allocation2] sm:$0x3] %vm300, %v223
  %302 = vst.msk [vmem:[#allocation2 + $0x2] sm:$0x3] %vm300, %v231
  %303 = vst.msk [vmem:[#allocation2 + $0x4] sm:$0x3] %vm300, %v230
  %304 = vst.msk [vmem:[#allocation2 + $0x6] sm:$0x3] %vm300, %v232
  %305 = vst.msk [vmem:[#allocation2 + $0x8] sm:$0x3] %vm300, %v240
  %306 = vst.msk [vmem:[#allocation2 + $0xa] sm:$0x3] %vm300, %v248
  %307 = vst.msk [vmem:[#allocation2 + $0xc] sm:$0x3] %vm300, %v247
  %308 = vst.msk [vmem:[#allocation2 + $0xe] sm:$0x3] %vm300, %v249
  %309 = vst.msk [vmem:[#allocation2 + $0x10] sm:$0x3] %vm300, %v257
  %310 = vst.msk [vmem:[#allocation2 + $0x12] sm:$0x3] %vm300, %v265
  %311 = vst.msk [vmem:[#allocation2 + $0x14] sm:$0x3] %vm300, %v264
  %312 = vst.msk [vmem:[#allocation2 + $0x16] sm:$0x3] %vm300, %v266
  %313 = vst.msk [vmem:[#allocation2 + $0x18] sm:$0x3] %vm300, %v274
  %314 = vst.msk [vmem:[#allocation2 + $0x1a] sm:$0x3] %vm300, %v282
  %315 = vst.msk [vmem:[#allocation2 + $0x1c] sm:$0x3] %vm300, %v281
  %316 = vst.msk [vmem:[#allocation2 + $0x1e] sm:$0x3] %vm300, %v283
  %v317 = vld [vmem:[%s3] sm:$0xf]
  %v318 = vld [vmem:[%s3 + $0x4] sm:$0xf]
  %v319 = vld [vmem:[%s5] sm:$0xf]
  %v320 = vld [vmem:[%s5 + $0x4] sm:$0xf]
  %v321 = vld [vmem:[%s4] sm:$0x1]
  %v322 = vld [vmem:[%s6] sm:$0x1]
  %v323 = vld [vmem:[#allocation2] sm:$0x3]
  %s324 = scalar_lea.vmem [#allocation2], 30
  %v325 = vld [vmem:[%s324] sm:$0x3]
  %v327 = vlaneseq
  %v328 = vshrl.u32 %v327, 7
  %v329 = vsub.s32 0, %v328
  %v330 = vrot.slane %v321, %v329
  %v334 = vunpack.c.l.b16 %v317
  %v335 = vunpack.c.l.b16 %v318
  %v336 = vpack.c.b16 %v335, %v334
  %vm338 = vcmask 130048
  %v340 = vsel %vm338, 0, 0
  %342 = vmatprep.subr.bf16.mxu0 0
  %343 = vmatpush1.bf16.msra.mxu0 %v336
  %344 = vmatprep.subr.bf16.mxu0 0
  %345 = vmatpush1.bf16.msra.mxu0 0
  %346 = vmatprep.subr.bf16.mxu0 0
  %347 = vmatpush1.bf16.msra.mxu0 0
  %348 = vmatprep.subr.bf16.mxu0 0
  %349 = vmatpush1.bf16.msra.mxu0 0
  %350 = vmatprep.subr.bf16.mxu0 0
  %351 = vmatpush1.bf16.msra.mxu0 0
  %352 = vmatprep.subr.bf16.mxu0 0
  %353 = vmatpush1.bf16.msra.mxu0 0
  %354 = vmatprep.subr.bf16.mxu0 0
  %355 = vmatpush1.bf16.msra.mxu0 0
  %356 = vmatprep.subr.bf16.mxu0 0
  %357 = vmatpush1.bf16.msra.mxu0 0
  %358 = vmatprep.subr.bf16.mxu0 0
  %359 = vmatpush1.bf16.msra.mxu0 0
  %360 = vmatprep.subr.bf16.mxu0 0
  %361 = vmatpush1.bf16.msra.mxu0 0
  %362 = vmatprep.subr.bf16.mxu0 0
  %363 = vmatpush1.bf16.msra.mxu0 0
  %364 = vmatprep.subr.bf16.mxu0 0
  %365 = vmatpush1.bf16.msra.mxu0 0
  %366 = vmatprep.subr.bf16.mxu0 0
  %367 = vmatpush1.bf16.msra.mxu0 0
  %368 = vmatprep.subr.bf16.mxu0 0
  %369 = vmatpush1.bf16.msra.mxu0 0
  %370 = vmatprep.subr.bf16.mxu0 0
  %371 = vmatpush1.bf16.msra.mxu0 0
  %372 = vmatprep.subr.bf16.mxu0 0
  %373 = vmatpush1.bf16.msra.mxu0 0
  %374 = vmatprep.mubr.bf16.mxu0 0
  %375 = vmatmul.mubr.bf16.gmra.mrb[0].mxu0 %v340
  %v376 = vpop.f32.mrb[0].mxu0
  %v377 = vadd.f32 %v330, %v376
  %v378 = vpop.f32.mrb[0].mxu0
  %v379 = vpop.f32.mrb[0].mxu0
  %v380 = vpop.f32.mrb[0].mxu0
  %381 = vdwg.mxu0
  %v382 = vadd.f32 %v323, %v377
  %v383 = vxor.u32 %v382, 2147483648
  %v384 = vmul.f32 %v383, 1.442695
  %v385 = vpow.pop %v384
  %v386 = vadd.f32 %v385, 1.0
  %v387 = vrcp.pop %v386
  %v388 = vmul.f32 1.0, %v387
  %390 = vrot.lane.b32.xlu0 %v377, 96
  %v391 = vpop.permute.xlu0 %390
  %v393 = vmul.f32 %v388, %v391
  %395 = vrot.lane.b32.xlu0 %v393, 32
  %v396 = vpop.permute.xlu0 %395
  %v398 = vadd.f32 %v323, %v396
  %v399 = vtanh.pop %v398
  %v400 = vsub.f32 1.0, %v388
  %402 = vrot.lane.b32.xlu0 %v399, 112
  %v403 = vpop.permute.xlu0 %402
  %v405 = vmul.f32 %v400, %v403
  %v406 = vmul.f32 %v388, 0.0
  %v407 = vadd.f32 %v405, %v406
  %v409 = vlaneseq
  %v410 = vshrl.u32 %v409, 7
  %v411 = vsub.s32 0, %v410
  %v412 = vrot.slane %v322, %v411
  %v416 = vunpack.c.l.b16 %v319
  %v417 = vunpack.c.l.b16 %v320
  %v418 = vpack.c.b16 %v417, %v416
  %420 = vmatprep.subr.bf16.mxu0 0
  %421 = vmatpush1.bf16.msra.mxu0 %v418
  %422 = vmatprep.subr.bf16.mxu0 0
  %423 = vmatpush1.bf16.msra.mxu0 0
  %424 = vmatprep.subr.bf16.mxu0 0
  %425 = vmatpush1.bf16.msra.mxu0 0
  %426 = vmatprep.subr.bf16.mxu0 0
  %427 = vmatpush1.bf16.msra.mxu0 0
  %428 = vmatprep.subr.bf16.mxu0 0
  %429 = vmatpush1.bf16.msra.mxu0 0
  %430 = vmatprep.subr.bf16.mxu0 0
  %431 = vmatpush1.bf16.msra.mxu0 0
  %432 = vmatprep.subr.bf16.mxu0 0
  %433 = vmatpush1.bf16.msra.mxu0 0
  %434 = vmatprep.subr.bf16.mxu0 0
  %435 = vmatpush1.bf16.msra.mxu0 0
  %436 = vmatprep.subr.bf16.mxu0 0
  %437 = vmatpush1.bf16.msra.mxu0 0
  %438 = vmatprep.subr.bf16.mxu0 0
  %439 = vmatpush1.bf16.msra.mxu0 0
  %440 = vmatprep.subr.bf16.mxu0 0
  %441 = vmatpush1.bf16.msra.mxu0 0
  %442 = vmatprep.subr.bf16.mxu0 0
  %443 = vmatpush1.bf16.msra.mxu0 0
  %444 = vmatprep.subr.bf16.mxu0 0
  %445 = vmatpush1.bf16.msra.mxu0 0
  %446 = vmatprep.subr.bf16.mxu0 0
  %447 = vmatpush1.bf16.msra.mxu0 0
  %448 = vmatprep.subr.bf16.mxu0 0
  %449 = vmatpush1.bf16.msra.mxu0 0
  %450 = vmatprep.subr.bf16.mxu0 0
  %451 = vmatpush1.bf16.msra.mxu0 0
  %452 = vmatprep.mubr.bf16.mxu0 0
  %453 = vmatmul.mubr.bf16.gmra.mrb[0].mxu0 %v340
  %v454 = vpop.f32.mrb[0].mxu0
  %v455 = vadd.f32 %v412, %v454
  %v456 = vpop.f32.mrb[0].mxu0
  %v457 = vpop.f32.mrb[0].mxu0
  %v458 = vpop.f32.mrb[0].mxu0
  %459 = vdwg.mxu0
  %461 = vrot.lane.b32.xlu0 %v455, 48
  %v462 = vpop.permute.xlu0 %461
  %v464 = vadd.f32 %v325, %v462
  %v465 = vxor.u32 %v464, 2147483648
  %v466 = vmul.f32 %v465, 1.442695
  %v467 = vpow.pop %v466
  %v468 = vadd.f32 %v467, 1.0
  %v469 = vrcp.pop %v468
  %v470 = vmul.f32 1.0, %v469
  %471 = vrot.lane.b32.xlu0 %v455, 16
  %v472 = vpop.permute.xlu0 %471
  %v474 = vmul.f32 %v470, %v472
  %476 = vrot.lane.b32.xlu0 %v474, 32
  %v477 = vpop.permute.xlu0 %476
  %v479 = vadd.f32 %v325, %v477
  %v480 = vtanh.pop %v479
  %v481 = vsub.f32 1.0, %v470
  %483 = vrot.lane.b32.xlu0 %v480, 112
  %v484 = vpop.permute.xlu0 %483
  %v486 = vmul.f32 %v481, %v484
  %v487 = vmul.f32 %v470, 0.0
  %v488 = vadd.f32 %v486, %v487
  %490 = vrot.lane.b32.xlu0 %v407, 112
  %v491 = vpop.permute.xlu0 %490
  %vm493 = vcmask 123904
  %494 = vst.msk [vmem:[#allocation3] sm:$0x3] %vm493, %v491
  %496 = vrot.lane.b32.xlu0 %v488, 64
  %v497 = vpop.permute.xlu0 %496
  %s499 = scalar_lea.vmem [#allocation4], 30
  %500 = vst.msk [vmem:[%s499] sm:$0x3] %vm493, %v497
  %s501 = scalar_lea.vmem [#allocation2], 2
  %v502 = vld [vmem:[%s501] sm:$0x3]
  %s503 = scalar_lea.vmem [#allocation2], 28
  %v504 = vld [vmem:[%s503] sm:$0x3]
  %v505 = vpack.c.bf16 %v407, %v407
  %507 = vrot.lane.b32.xlu0 %v505, 112
  %v508 = vpop.permute.xlu0 %507
  %v510 = vsel %vm338, %v508, 0
  %512 = vmatprep.subr.bf16.mxu0 0
  %513 = vmatpush1.bf16.msra.mxu0 %v336
  %514 = vmatprep.subr.bf16.mxu0 0
  %515 = vmatpush1.bf16.msra.mxu0 0
  %516 = vmatprep.subr.bf16.mxu0 0
  %517 = vmatpush1.bf16.msra.mxu0 0
  %518 = vmatprep.subr.bf16.mxu0 0
  %519 = vmatpush1.bf16.msra.mxu0 0
  %520 = vmatprep.subr.bf16.mxu0 0
  %521 = vmatpush1.bf16.msra.mxu0 0
  %522 = vmatprep.subr.bf16.mxu0 0
  %523 = vmatpush1.bf16.msra.mxu0 0
  %524 = vmatprep.subr.bf16.mxu0 0
  %525 = vmatpush1.bf16.msra.mxu0 0
  %526 = vmatprep.subr.bf16.mxu0 0
  %527 = vmatpush1.bf16.msra.mxu0 0
  %528 = vmatprep.subr.bf16.mxu0 0
  %529 = vmatpush1.bf16.msra.mxu0 0
  %530 = vmatprep.subr.bf16.mxu0 0
  %531 = vmatpush1.bf16.msra.mxu0 0
  %532 = vmatprep.subr.bf16.mxu0 0
  %533 = vmatpush1.bf16.msra.mxu0 0
  %534 = vmatprep.subr.bf16.mxu0 0
  %535 = vmatpush1.bf16.msra.mxu0 0
  %536 = vmatprep.subr.bf16.mxu0 0
  %537 = vmatpush1.bf16.msra.mxu0 0
  %538 = vmatprep.subr.bf16.mxu0 0
  %539 = vmatpush1.bf16.msra.mxu0 0
  %540 = vmatprep.subr.bf16.mxu0 0
  %541 = vmatpush1.bf16.msra.mxu0 0
  %542 = vmatprep.subr.bf16.mxu0 0
  %543 = vmatpush1.bf16.msra.mxu0 0
  %544 = vmatprep.mubr.bf16.mxu0 0
  %545 = vmatmul.mubr.bf16.gmra.mrb[0].mxu0 %v510
  %v546 = vpop.f32.mrb[0].mxu0
  %v547 = vadd.f32 %v330, %v546
  %v548 = vpop.f32.mrb[0].mxu0
  %v549 = vpop.f32.mrb[0].mxu0
  %v550 = vpop.f32.mrb[0].mxu0
  %551 = vdwg.mxu0
  %v552 = vadd.f32 %v502, %v547
  %v553 = vxor.u32 %v552, 2147483648
  %v554 = vmul.f32 %v553, 1.442695
  %v555 = vpow.pop %v554
  %v556 = vadd.f32 %v555, 1.0
  %v557 = vrcp.pop %v556
  %v558 = vmul.f32 1.0, %v557
  %560 = vrot.lane.b32.xlu0 %v547, 96
  %v561 = vpop.permute.xlu0 %560
  %v563 = vmul.f32 %v558, %v561
  %565 = vrot.lane.b32.xlu0 %v563, 32
  %v566 = vpop.permute.xlu0 %565
  %v568 = vadd.f32 %v502, %v566
  %v569 = vtanh.pop %v568
  %v570 = vsub.f32 1.0, %v558
  %572 = vrot.lane.b32.xlu0 %v569, 112
  %v573 = vpop.permute.xlu0 %572
  %v575 = vmul.f32 %v570, %v573
  %v576 = vmul.f32 %v558, %v407
  %v577 = vadd.f32 %v575, %v576
  %v578 = vpack.c.bf16 %v488, %v488
  %580 = vrot.lane.b32.xlu0 %v578, 64
  %v581 = vpop.permute.xlu0 %580
  %v583 = vsel %vm338, %v581, 0
  %585 = vmatprep.subr.bf16.mxu0 0
  %586 = vmatpush1.bf16.msra.mxu0 %v418
  %587 = vmatprep.subr.bf16.mxu0 0
  %588 = vmatpush1.bf16.msra.mxu0 0
  %589 = vmatprep.subr.bf16.mxu0 0
  %590 = vmatpush1.bf16.msra.mxu0 0
  %591 = vmatprep.subr.bf16.mxu0 0
  %592 = vmatpush1.bf16.msra.mxu0 0
  %593 = vmatprep.subr.bf16.mxu0 0
  %594 = vmatpush1.bf16.msra.mxu0 0
  %595 = vmatprep.subr.bf16.mxu0 0
  %596 = vmatpush1.bf16.msra.mxu0 0
  %597 = vmatprep.subr.bf16.mxu0 0
  %598 = vmatpush1.bf16.msra.mxu0 0
  %599 = vmatprep.subr.bf16.mxu0 0
  %600 = vmatpush1.bf16.msra.mxu0 0
  %601 = vmatprep.subr.bf16.mxu0 0
  %602 = vmatpush1.bf16.msra.mxu0 0
  %603 = vmatprep.subr.bf16.mxu0 0
  %604 = vmatpush1.bf16.msra.mxu0 0
  %605 = vmatprep.subr.bf16.mxu0 0
  %606 = vmatpush1.bf16.msra.mxu0 0
  %607 = vmatprep.subr.bf16.mxu0 0
  %608 = vmatpush1.bf16.msra.mxu0 0
  %609 = vmatprep.subr.bf16.mxu0 0
  %610 = vmatpush1.bf16.msra.mxu0 0
  %611 = vmatprep.subr.bf16.mxu0 0
  %612 = vmatpush1.bf16.msra.mxu0 0
  %613 = vmatprep.subr.bf16.mxu0 0
  %614 = vmatpush1.bf16.msra.mxu0 0
  %615 = vmatprep.subr.bf16.mxu0 0
  %616 = vmatpush1.bf16.msra.mxu0 0
  %617 = vmatprep.mubr.bf16.mxu0 0
  %618 = vmatmul.mubr.bf16.gmra.mrb[0].mxu0 %v583
  %v619 = vpop.f32.mrb[0].mxu0
  %v620 = vadd.f32 %v412, %v619
  %v621 = vpop.f32.mrb[0].mxu0
  %v622 = vpop.f32.mrb[0].mxu0
  %v623 = vpop.f32.mrb[0].mxu0
  %624 = vdwg.mxu0
  %626 = vrot.lane.b32.xlu0 %v620, 48
  %v627 = vpop.permute.xlu0 %626
  %v629 = vadd.f32 %v504, %v627
  %v630 = vxor.u32 %v629, 2147483648
  %v631 = vmul.f32 %v630, 1.442695
  %v632 = vpow.pop %v631
  %v633 = vadd.f32 %v632, 1.0
  %v634 = vrcp.pop %v633
  %v635 = vmul.f32 1.0, %v634
  %636 = vrot.lane.b32.xlu0 %v620, 16
  %v637 = vpop.permute.xlu0 %636
  %v639 = vmul.f32 %v635, %v637
  %641 = vrot.lane.b32.xlu0 %v639, 32
  %v642 = vpop.permute.xlu0 %641
  %v644 = vadd.f32 %v504, %v642
  %v645 = vtanh.pop %v644
  %v646 = vsub.f32 1.0, %v635
  %648 = vrot.lane.b32.xlu0 %v645, 112
  %v649 = vpop.permute.xlu0 %648
  %v651 = vmul.f32 %v646, %v649
  %v652 = vmul.f32 %v635, %v488
  %v653 = vadd.f32 %v651, %v652
  %655 = vrot.lane.b32.xlu0 %v577, 112
  %v656 = vpop.permute.xlu0 %655
  %s658 = scalar_lea.vmem [#allocation3], 2
  %659 = vst.msk [vmem:[%s658] sm:$0x3] %vm493, %v656
  %661 = vrot.lane.b32.xlu0 %v653, 64
  %v662 = vpop.permute.xlu0 %661
  %s664 = scalar_lea.vmem [#allocation4], 28
  %665 = vst.msk [vmem:[%s664] sm:$0x3] %vm493, %v662
  %s666 = scalar_lea.vmem [#allocation2], 4
  %v667 = vld [vmem:[%s666] sm:$0x3]
  %s668 = scalar_lea.vmem [#allocation2], 26
  %v669 = vld [vmem:[%s668] sm:$0x3]
  %v670 = vpack.c.bf16 %v577, %v577
  %672 = vrot.lane.b32.xlu0 %v670, 112
  %v673 = vpop.permute.xlu0 %672
  %v675 = vsel %vm338, %v673, 0
  %677 = vmatprep.subr.bf16.mxu0 0
  %678 = vmatpush1.bf16.msra.mxu0 %v336
  %679 = vmatprep.subr.bf16.mxu0 0
  %680 = vmatpush1.bf16.msra.mxu0 0
  %681 = vmatprep.subr.bf16.mxu0 0
  %682 = vmatpush1.bf16.msra.mxu0 0
  %683 = vmatprep.subr.bf16.mxu0 0
  %684 = vmatpush1.bf16.msra.mxu0 0
  %685 = vmatprep.subr.bf16.mxu0 0
  %686 = vmatpush1.bf16.msra.mxu0 0
  %687 = vmatprep.subr.bf16.mxu0 0
  %688 = vmatpush1.bf16.msra.mxu0 0
  %689 = vmatprep.subr.bf16.mxu0 0
  %690 = vmatpush1.bf16.msra.mxu0 0
  %691 = vmatprep.subr.bf16.mxu0 0
  %692 = vmatpush1.bf16.msra.mxu0 0
  %693 = vmatprep.subr.bf16.mxu0 0
  %694 = vmatpush1.bf16.msra.mxu0 0
  %695 = vmatprep.subr.bf16.mxu0 0
  %696 = vmatpush1.bf16.msra.mxu0 0
  %697 = vmatprep.subr.bf16.mxu0 0
  %698 = vmatpush1.bf16.msra.mxu0 0
  %699 = vmatprep.subr.bf16.mxu0 0
  %700 = vmatpush1.bf16.msra.mxu0 0
  %701 = vmatprep.subr.bf16.mxu0 0
  %702 = vmatpush1.bf16.msra.mxu0 0
  %703 = vmatprep.subr.bf16.mxu0 0
  %704 = vmatpush1.bf16.msra.mxu0 0
  %705 = vmatprep.subr.bf16.mxu0 0
  %706 = vmatpush1.bf16.msra.mxu0 0
  %707 = vmatprep.subr.bf16.mxu0 0
  %708 = vmatpush1.bf16.msra.mxu0 0
  %709 = vmatprep.mubr.bf16.mxu0 0
  %710 = vmatmul.mubr.bf16.gmra.mrb[0].mxu0 %v675
  %v711 = vpop.f32.mrb[0].mxu0
  %v712 = vadd.f32 %v330, %v711
  %v713 = vpop.f32.mrb[0].mxu0
  %v714 = vpop.f32.mrb[0].mxu0
  %v715 = vpop.f32.mrb[0].mxu0
  %716 = vdwg.mxu0
  %v717 = vadd.f32 %v667, %v712
  %v718 = vxor.u32 %v717, 2147483648
  %v719 = vmul.f32 %v718, 1.442695
  %v720 = vpow.pop %v719
  %v721 = vadd.f32 %v720, 1.0
  %v722 = vrcp.pop %v721
  %v723 = vmul.f32 1.0, %v722
  %725 = vrot.lane.b32.xlu0 %v712, 96
  %v726 = vpop.permute.xlu0 %725
  %v728 = vmul.f32 %v723, %v726
  %730 = vrot.lane.b32.xlu0 %v728, 32
  %v731 = vpop.permute.xlu0 %730
  %v733 = vadd.f32 %v667, %v731
  %v734 = vtanh.pop %v733
  %v735 = vsub.f32 1.0, %v723
  %737 = vrot.lane.b32.xlu0 %v734, 112
  %v738 = vpop.permute.xlu0 %737
  %v740 = vmul.f32 %v735, %v738
  %v741 = vmul.f32 %v723, %v577
  %v742 = vadd.f32 %v740, %v741
  %v743 = vpack.c.bf16 %v653, %v653
  %745 = vrot.lane.b32.xlu0 %v743, 64
  %v746 = vpop.permute.xlu0 %745
  %v748 = vsel %vm338, %v746, 0
  %750 = vmatprep.subr.bf16.mxu0 0
  %751 = vmatpush1.bf16.msra.mxu0 %v418
  %752 = vmatprep.subr.bf16.mxu0 0
  %753 = vmatpush1.bf16.msra.mxu0 0
  %754 = vmatprep.subr.bf16.mxu0 0
  %755 = vmatpush1.bf16.msra.mxu0 0
  %756 = vmatprep.subr.bf16.mxu0 0
  %757 = vmatpush1.bf16.msra.mxu0 0
  %758 = vmatprep.subr.bf16.mxu0 0
  %759 = vmatpush1.bf16.msra.mxu0 0
  %760 = vmatprep.subr.bf16.mxu0 0
  %761 = vmatpush1.bf16.msra.mxu0 0
  %762 = vmatprep.subr.bf16.mxu0 0
  %763 = vmatpush1.bf16.msra.mxu0 0
  %764 = vmatprep.subr.bf16.mxu0 0
  %765 = vmatpush1.bf16.msra.mxu0 0
  %766 = vmatprep.subr.bf16.mxu0 0
  %767 = vmatpush1.bf16.msra.mxu0 0
  %768 = vmatprep.subr.bf16.mxu0 0
  %769 = vmatpush1.bf16.msra.mxu0 0
  %770 = vmatprep.subr.bf16.mxu0 0
  %771 = vmatpush1.bf16.msra.mxu0 0
  %772 = vmatprep.subr.bf16.mxu0 0
  %773 = vmatpush1.bf16.msra.mxu0 0
  %774 = vmatprep.subr.bf16.mxu0 0
  %775 = vmatpush1.bf16.msra.mxu0 0
  %776 = vmatprep.subr.bf16.mxu0 0
  %777 = vmatpush1.bf16.msra.mxu0 0
  %778 = vmatprep.subr.bf16.mxu0 0
  %779 = vmatpush1.bf16.msra.mxu0 0
  %780 = vmatprep.subr.bf16.mxu0 0
  %781 = vmatpush1.bf16.msra.mxu0 0
  %782 = vmatprep.mubr.bf16.mxu0 0
  %783 = vmatmul.mubr.bf16.gmra.mrb[0].mxu0 %v748
  %v784 = vpop.f32.mrb[0].mxu0
  %v785 = vadd.f32 %v412, %v784
  %v786 = vpop.f32.mrb[0].mxu0
  %v787 = vpop.f32.mrb[0].mxu0
  %v788 = vpop.f32.mrb[0].mxu0
  %789 = vdwg.mxu0
  %791 = vrot.lane.b32.xlu0 %v785, 48
  %v792 = vpop.permute.xlu0 %791
  %v794 = vadd.f32 %v669, %v792
  %v795 = vxor.u32 %v794, 2147483648
  %v796 = vmul.f32 %v795, 1.442695
  %v797 = vpow.pop %v796
  %v798 = vadd.f32 %v797, 1.0
  %v799 = vrcp.pop %v798
  %v800 = vmul.f32 1.0, %v799
  %801 = vrot.lane.b32.xlu0 %v785, 16
  %v802 = vpop.permute.xlu0 %801
  %v804 = vmul.f32 %v800, %v802
  %806 = vrot.lane.b32.xlu0 %v804, 32
  %v807 = vpop.permute.xlu0 %806
  %v809 = vadd.f32 %v669, %v807
  %v810 = vtanh.pop %v809
  %v811 = vsub.f32 1.0, %v800
  %813 = vrot.lane.b32.xlu0 %v810, 112
  %v814 = vpop.permute.xlu0 %813
  %v816 = vmul.f32 %v811, %v814
  %v817 = vmul.f32 %v800, %v653
  %v818 = vadd.f32 %v816, %v817
  %820 = vrot.lane.b32.xlu0 %v742, 112
  %v821 = vpop.permute.xlu0 %820
  %s823 = scalar_lea.vmem [#allocation3], 4
  %824 = vst.msk [vmem:[%s823] sm:$0x3] %vm493, %v821
  %826 = vrot.lane.b32.xlu0 %v818, 64
  %v827 = vpop.permute.xlu0 %826
  %s829 = scalar_lea.vmem [#allocation4], 26
  %830 = vst.msk [vmem:[%s829] sm:$0x3] %vm493, %v827
  %s831 = scalar_lea.vmem [#allocation2], 6
  %v832 = vld [vmem:[%s831] sm:$0x3]
  %s833 = scalar_lea.vmem [#allocation2], 24
  %v834 = vld [vmem:[%s833] sm:$0x3]
  %v835 = vpack.c.bf16 %v742, %v742
  %837 = vrot.lane.b32.xlu0 %v835, 112
  %v838 = vpop.permute.xlu0 %837
  %v840 = vsel %vm338, %v838, 0
  %842 = vmatprep.subr.bf16.mxu0 0
  %843 = vmatpush1.bf16.msra.mxu0 %v336
  %844 = vmatprep.subr.bf16.mxu0 0
  %845 = vmatpush1.bf16.msra.mxu0 0
  %846 = vmatprep.subr.bf16.mxu0 0
  %847 = vmatpush1.bf16.msra.mxu0 0
  %848 = vmatprep.subr.bf16.mxu0 0
  %849 = vmatpush1.bf16.msra.mxu0 0
  %850 = vmatprep.subr.bf16.mxu0 0
  %851 = vmatpush1.bf16.msra.mxu0 0
  %852 = vmatprep.subr.bf16.mxu0 0
  %853 = vmatpush1.bf16.msra.mxu0 0
  %854 = vmatprep.subr.bf16.mxu0 0
  %855 = vmatpush1.bf16.msra.mxu0 0
  %856 = vmatprep.subr.bf16.mxu0 0
  %857 = vmatpush1.bf16.msra.mxu0 0
  %858 = vmatprep.subr.bf16.mxu0 0
  %859 = vmatpush1.bf16.msra.mxu0 0
  %860 = vmatprep.subr.bf16.mxu0 0
  %861 = vmatpush1.bf16.msra.mxu0 0
  %862 = vmatprep.subr.bf16.mxu0 0
  %863 = vmatpush1.bf16.msra.mxu0 0
  %864 = vmatprep.subr.bf16.mxu0 0
  %865 = vmatpush1.bf16.msra.mxu0 0
  %866 = vmatprep.subr.bf16.mxu0 0
  %867 = vmatpush1.bf16.msra.mxu0 0
  %868 = vmatprep.subr.bf16.mxu0 0
  %869 = vmatpush1.bf16.msra.mxu0 0
  %870 = vmatprep.subr.bf16.mxu0 0
  %871 = vmatpush1.bf16.msra.mxu0 0
  %872 = vmatprep.subr.bf16.mxu0 0
  %873 = vmatpush1.bf16.msra.mxu0 0
  %874 = vmatprep.mubr.bf16.mxu0 0
  %875 = vmatmul.mubr.bf16.gmra.mrb[0].mxu0 %v840
  %v876 = vpop.f32.mrb[0].mxu0
  %v877 = vadd.f32 %v330, %v876
  %v878 = vpop.f32.mrb[0].mxu0
  %v879 = vpop.f32.mrb[0].mxu0
  %v880 = vpop.f32.mrb[0].mxu0
  %881 = vdwg.mxu0
  %v882 = vadd.f32 %v832, %v877
  %v883 = vxor.u32 %v882, 2147483648
  %v884 = vmul.f32 %v883, 1.442695
  %v885 = vpow.pop %v884
  %v886 = vadd.f32 %v885, 1.0
  %v887 = vrcp.pop %v886
  %v888 = vmul.f32 1.0, %v887
  %890 = vrot.lane.b32.xlu0 %v877, 96
  %v891 = vpop.permute.xlu0 %890
  %v893 = vmul.f32 %v888, %v891
  %895 = vrot.lane.b32.xlu0 %v893, 32
  %v896 = vpop.permute.xlu0 %895
  %v898 = vadd.f32 %v832, %v896
  %v899 = vtanh.pop %v898
  %v900 = vsub.f32 1.0, %v888
  %902 = vrot.lane.b32.xlu0 %v899, 112
  %v903 = vpop.permute.xlu0 %902
  %v905 = vmul.f32 %v900, %v903
  %v906 = vmul.f32 %v888, %v742
  %v907 = vadd.f32 %v905, %v906
  %v908 = vpack.c.bf16 %v818, %v818
  %910 = vrot.lane.b32.xlu0 %v908, 64
  %v911 = vpop.permute.xlu0 %910
  %v913 = vsel %vm338, %v911, 0
  %915 = vmatprep.subr.bf16.mxu0 0
  %916 = vmatpush1.bf16.msra.mxu0 %v418
  %917 = vmatprep.subr.bf16.mxu0 0
  %918 = vmatpush1.bf16.msra.mxu0 0
  %919 = vmatprep.subr.bf16.mxu0 0
  %920 = vmatpush1.bf16.msra.mxu0 0
  %921 = vmatprep.subr.bf16.mxu0 0
  %922 = vmatpush1.bf16.msra.mxu0 0
  %923 = vmatprep.subr.bf16.mxu0 0
  %924 = vmatpush1.bf16.msra.mxu0 0
  %925 = vmatprep.subr.bf16.mxu0 0
  %926 = vmatpush1.bf16.msra.mxu0 0
  %927 = vmatprep.subr.bf16.mxu0 0
  %928 = vmatpush1.bf16.msra.mxu0 0
  %929 = vmatprep.subr.bf16.mxu0 0
  %930 = vmatpush1.bf16.msra.mxu0 0
  %931 = vmatprep.subr.bf16.mxu0 0
  %932 = vmatpush1.bf16.msra.mxu0 0
  %933 = vmatprep.subr.bf16.mxu0 0
  %934 = vmatpush1.bf16.msra.mxu0 0
  %935 = vmatprep.subr.bf16.mxu0 0
  %936 = vmatpush1.bf16.msra.mxu0 0
  %937 = vmatprep.subr.bf16.mxu0 0
  %938 = vmatpush1.bf16.msra.mxu0 0
  %939 = vmatprep.subr.bf16.mxu0 0
  %940 = vmatpush1.bf16.msra.mxu0 0
  %941 = vmatprep.subr.bf16.mxu0 0
  %942 = vmatpush1.bf16.msra.mxu0 0
  %943 = vmatprep.subr.bf16.mxu0 0
  %944 = vmatpush1.bf16.msra.mxu0 0
  %945 = vmatprep.subr.bf16.mxu0 0
  %946 = vmatpush1.bf16.msra.mxu0 0
  %947 = vmatprep.mubr.bf16.mxu0 0
  %948 = vmatmul.mubr.bf16.gmra.mrb[0].mxu0 %v913
  %v949 = vpop.f32.mrb[0].mxu0
  %v950 = vadd.f32 %v412, %v949
  %v951 = vpop.f32.mrb[0].mxu0
  %v952 = vpop.f32.mrb[0].mxu0
  %v953 = vpop.f32.mrb[0].mxu0
  %954 = vdwg.mxu0
  %956 = vrot.lane.b32.xlu0 %v950, 48
  %v957 = vpop.permute.xlu0 %956
  %v959 = vadd.f32 %v834, %v957
  %v960 = vxor.u32 %v959, 2147483648
  %v961 = vmul.f32 %v960, 1.442695
  %v962 = vpow.pop %v961
  %v963 = vadd.f32 %v962, 1.0
  %v964 = vrcp.pop %v963
  %v965 = vmul.f32 1.0, %v964
  %966 = vrot.lane.b32.xlu0 %v950, 16
  %v967 = vpop.permute.xlu0 %966
  %v969 = vmul.f32 %v965, %v967
  %971 = vrot.lane.b32.xlu0 %v969, 32
  %v972 = vpop.permute.xlu0 %971
  %v974 = vadd.f32 %v834, %v972
  %v975 = vtanh.pop %v974
  %v976 = vsub.f32 1.0, %v965
  %978 = vrot.lane.b32.xlu0 %v975, 112
  %v979 = vpop.permute.xlu0 %978
  %v981 = vmul.f32 %v976, %v979
  %v982 = vmul.f32 %v965, %v818
  %v983 = vadd.f32 %v981, %v982
  %985 = vrot.lane.b32.xlu0 %v907, 112
  %v986 = vpop.permute.xlu0 %985
  %s988 = scalar_lea.vmem [#allocation3], 6
  %989 = vst.msk [vmem:[%s988] sm:$0x3] %vm493, %v986
  %991 = vrot.lane.b32.xlu0 %v983, 64
  %v992 = vpop.permute.xlu0 %991
  %s994 = scalar_lea.vmem [#allocation4], 24
  %995 = vst.msk [vmem:[%s994] sm:$0x3] %vm493, %v992
  %s996 = scalar_lea.vmem [#allocation2], 8
  %v997 = vld [vmem:[%s996] sm:$0x3]
  %s998 = scalar_lea.vmem [#allocation2], 22
  %v999 = vld [vmem:[%s998] sm:$0x3]
  %v1000 = vpack.c.bf16 %v907, %v907
  %1002 = vrot.lane.b32.xlu0 %v1000, 112
  %v1003 = vpop.permute.xlu0 %1002
  %v1005 = vsel %vm338, %v1003, 0
  %1007 = vmatprep.subr.bf16.mxu0 0
  %1008 = vmatpush1.bf16.msra.mxu0 %v336
  %1009 = vmatprep.subr.bf16.mxu0 0
  %1010 = vmatpush1.bf16.msra.mxu0 0
  %1011 = vmatprep.subr.bf16.mxu0 0
  %1012 = vmatpush1.bf16.msra.mxu0 0
  %1013 = vmatprep.subr.bf16.mxu0 0
  %1014 = vmatpush1.bf16.msra.mxu0 0
  %1015 = vmatprep.subr.bf16.mxu0 0
  %1016 = vmatpush1.bf16.msra.mxu0 0
  %1017 = vmatprep.subr.bf16.mxu0 0
  %1018 = vmatpush1.bf16.msra.mxu0 0
  %1019 = vmatprep.subr.bf16.mxu0 0
  %1020 = vmatpush1.bf16.msra.mxu0 0
  %1021 = vmatprep.subr.bf16.mxu0 0
  %1022 = vmatpush1.bf16.msra.mxu0 0
  %1023 = vmatprep.subr.bf16.mxu0 0
  %1024 = vmatpush1.bf16.msra.mxu0 0
  %1025 = vmatprep.subr.bf16.mxu0 0
  %1026 = vmatpush1.bf16.msra.mxu0 0
  %1027 = vmatprep.subr.bf16.mxu0 0
  %1028 = vmatpush1.bf16.msra.mxu0 0
  %1029 = vmatprep.subr.bf16.mxu0 0
  %1030 = vmatpush1.bf16.msra.mxu0 0
  %1031 = vmatprep.subr.bf16.mxu0 0
  %1032 = vmatpush1.bf16.msra.mxu0 0
  %1033 = vmatprep.subr.bf16.mxu0 0
  %1034 = vmatpush1.bf16.msra.mxu0 0
  %1035 = vmatprep.subr.bf16.mxu0 0
  %1036 = vmatpush1.bf16.msra.mxu0 0
  %1037 = vmatprep.subr.bf16.mxu0 0
  %1038 = vmatpush1.bf16.msra.mxu0 0
  %1039 = vmatprep.mubr.bf16.mxu0 0
  %1040 = vmatmul.mubr.bf16.gmra.mrb[0].mxu0 %v1005
  %v1041 = vpop.f32.mrb[0].mxu0
  %v1042 = vadd.f32 %v330, %v1041
  %v1043 = vpop.f32.mrb[0].mxu0
  %v1044 = vpop.f32.mrb[0].mxu0
  %v1045 = vpop.f32.mrb[0].mxu0
  %1046 = vdwg.mxu0
  %v1047 = vadd.f32 %v997, %v1042
  %v1048 = vxor.u32 %v1047, 2147483648
  %v1049 = vmul.f32 %v1048, 1.442695
  %v1050 = vpow.pop %v1049
  %v1051 = vadd.f32 %v1050, 1.0
  %v1052 = vrcp.pop %v1051
  %v1053 = vmul.f32 1.0, %v1052
  %1055 = vrot.lane.b32.xlu0 %v1042, 96
  %v1056 = vpop.permute.xlu0 %1055
  %v1058 = vmul.f32 %v1053, %v1056
  %1060 = vrot.lane.b32.xlu0 %v1058, 32
  %v1061 = vpop.permute.xlu0 %1060
  %v1063 = vadd.f32 %v997, %v1061
  %v1064 = vtanh.pop %v1063
  %v1065 = vsub.f32 1.0, %v1053
  %1067 = vrot.lane.b32.xlu0 %v1064, 112
  %v1068 = vpop.permute.xlu0 %1067
  %v1070 = vmul.f32 %v1065, %v1068
  %v1071 = vmul.f32 %v1053, %v907
  %v1072 = vadd.f32 %v1070, %v1071
  %v1073 = vpack.c.bf16 %v983, %v983
  %1075 = vrot.lane.b32.xlu0 %v1073, 64
  %v1076 = vpop.permute.xlu0 %1075
  %v1078 = vsel %vm338, %v1076, 0
  %1080 = vmatprep.subr.bf16.mxu0 0
  %1081 = vmatpush1.bf16.msra.mxu0 %v418
  %1082 = vmatprep.subr.bf16.mxu0 0
  %1083 = vmatpush1.bf16.msra.mxu0 0
  %1084 = vmatprep.subr.bf16.mxu0 0
  %1085 = vmatpush1.bf16.msra.mxu0 0
  %1086 = vmatprep.subr.bf16.mxu0 0
  %1087 = vmatpush1.bf16.msra.mxu0 0
  %1088 = vmatprep.subr.bf16.mxu0 0
  %1089 = vmatpush1.bf16.msra.mxu0 0
  %1090 = vmatprep.subr.bf16.mxu0 0
  %1091 = vmatpush1.bf16.msra.mxu0 0
  %1092 = vmatprep.subr.bf16.mxu0 0
  %1093 = vmatpush1.bf16.msra.mxu0 0
  %1094 = vmatprep.subr.bf16.mxu0 0
  %1095 = vmatpush1.bf16.msra.mxu0 0
  %1096 = vmatprep.subr.bf16.mxu0 0
  %1097 = vmatpush1.bf16.msra.mxu0 0
  %1098 = vmatprep.subr.bf16.mxu0 0
  %1099 = vmatpush1.bf16.msra.mxu0 0
  %1100 = vmatprep.subr.bf16.mxu0 0
  %1101 = vmatpush1.bf16.msra.mxu0 0
  %1102 = vmatprep.subr.bf16.mxu0 0
  %1103 = vmatpush1.bf16.msra.mxu0 0
  %1104 = vmatprep.subr.bf16.mxu0 0
  %1105 = vmatpush1.bf16.msra.mxu0 0
  %1106 = vmatprep.subr.bf16.mxu0 0
  %1107 = vmatpush1.bf16.msra.mxu0 0
  %1108 = vmatprep.subr.bf16.mxu0 0
  %1109 = vmatpush1.bf16.msra.mxu0 0
  %1110 = vmatprep.subr.bf16.mxu0 0
  %1111 = vmatpush1.bf16.msra.mxu0 0
  %1112 = vmatprep.mubr.bf16.mxu0 0
  %1113 = vmatmul.mubr.bf16.gmra.mrb[0].mxu0 %v1078
  %v1114 = vpop.f32.mrb[0].mxu0
  %v1115 = vadd.f32 %v412, %v1114
  %v1116 = vpop.f32.mrb[0].mxu0
  %v1117 = vpop.f32.mrb[0].mxu0
  %v1118 = vpop.f32.mrb[0].mxu0
  %1119 = vdwg.mxu0
  %1121 = vrot.lane.b32.xlu0 %v1115, 48
  %v1122 = vpop.permute.xlu0 %1121
  %v1124 = vadd.f32 %v999, %v1122
  %v1125 = vxor.u32 %v1124, 2147483648
  %v1126 = vmul.f32 %v1125, 1.442695
  %v1127 = vpow.pop %v1126
  %v1128 = vadd.f32 %v1127, 1.0
  %v1129 = vrcp.pop %v1128
  %v1130 = vmul.f32 1.0, %v1129
  %1131 = vrot.lane.b32.xlu0 %v1115, 16
  %v1132 = vpop.permute.xlu0 %1131
  %v1134 = vmul.f32 %v1130, %v1132
  %1136 = vrot.lane.b32.xlu0 %v1134, 32
  %v1137 = vpop.permute.xlu0 %1136
  %v1139 = vadd.f32 %v999, %v1137
  %v1140 = vtanh.pop %v1139
  %v1141 = vsub.f32 1.0, %v1130
  %1143 = vrot.lane.b32.xlu0 %v1140, 112
  %v1144 = vpop.permute.xlu0 %1143
  %v1146 = vmul.f32 %v1141, %v1144
  %v1147 = vmul.f32 %v1130, %v983
  %v1148 = vadd.f32 %v1146, %v1147
  %1150 = vrot.lane.b32.xlu0 %v1072, 112
  %v1151 = vpop.permute.xlu0 %1150
  %s1153 = scalar_lea.vmem [#allocation3], 8
  %1154 = vst.msk [vmem:[%s1153] sm:$0x3] %vm493, %v1151
  %1156 = vrot.lane.b32.xlu0 %v1148, 64
  %v1157 = vpop.permute.xlu0 %1156
  %s1159 = scalar_lea.vmem [#allocation4], 22
  %1160 = vst.msk [vmem:[%s1159] sm:$0x3] %vm493, %v1157
  %s1161 = scalar_lea.vmem [#allocation2], 10
  %v1162 = vld [vmem:[%s1161] sm:$0x3]
  %s1163 = scalar_lea.vmem [#allocation2], 20
  %v1164 = vld [vmem:[%s1163] sm:$0x3]
  %v1165 = vpack.c.bf16 %v1072, %v1072
  %1167 = vrot.lane.b32.xlu0 %v1165, 112
  %v1168 = vpop.permute.xlu0 %1167
  %v1170 = vsel %vm338, %v1168, 0
  %1172 = vmatprep.subr.bf16.mxu0 0
  %1173 = vmatpush1.bf16.msra.mxu0 %v336
  %1174 = vmatprep.subr.bf16.mxu0 0
  %1175 = vmatpush1.bf16.msra.mxu0 0
  %1176 = vmatprep.subr.bf16.mxu0 0
  %1177 = vmatpush1.bf16.msra.mxu0 0
  %1178 = vmatprep.subr.bf16.mxu0 0
  %1179 = vmatpush1.bf16.msra.mxu0 0
  %1180 = vmatprep.subr.bf16.mxu0 0
  %1181 = vmatpush1.bf16.msra.mxu0 0
  %1182 = vmatprep.subr.bf16.mxu0 0
  %1183 = vmatpush1.bf16.msra.mxu0 0
  %1184 = vmatprep.subr.bf16.mxu0 0
  %1185 = vmatpush1.bf16.msra.mxu0 0
  %1186 = vmatprep.subr.bf16.mxu0 0
  %1187 = vmatpush1.bf16.msra.mxu0 0
  %1188 = vmatprep.subr.bf16.mxu0 0
  %1189 = vmatpush1.bf16.msra.mxu0 0
  %1190 = vmatprep.subr.bf16.mxu0 0
  %1191 = vmatpush1.bf16.msra.mxu0 0
  %1192 = vmatprep.subr.bf16.mxu0 0
  %1193 = vmatpush1.bf16.msra.mxu0 0
  %1194 = vmatprep.subr.bf16.mxu0 0
  %1195 = vmatpush1.bf16.msra.mxu0 0
  %1196 = vmatprep.subr.bf16.mxu0 0
  %1197 = vmatpush1.bf16.msra.mxu0 0
  %1198 = vmatprep.subr.bf16.mxu0 0
  %1199 = vmatpush1.bf16.msra.mxu0 0
  %1200 = vmatprep.subr.bf16.mxu0 0
  %1201 = vmatpush1.bf16.msra.mxu0 0
  %1202 = vmatprep.subr.bf16.mxu0 0
  %1203 = vmatpush1.bf16.msra.mxu0 0
  %1204 = vmatprep.mubr.bf16.mxu0 0
  %1205 = vmatmul.mubr.bf16.gmra.mrb[0].mxu0 %v1170
  %v1206 = vpop.f32.mrb[0].mxu0
  %v1207 = vadd.f32 %v330, %v1206
  %v1208 = vpop.f32.mrb[0].mxu0
  %v1209 = vpop.f32.mrb[0].mxu0
  %v1210 = vpop.f32.mrb[0].mxu0
  %1211 = vdwg.mxu0
  %v1212 = vadd.f32 %v1162, %v1207
  %v1213 = vxor.u32 %v1212, 2147483648
  %v1214 = vmul.f32 %v1213, 1.442695
  %v1215 = vpow.pop %v1214
  %v1216 = vadd.f32 %v1215, 1.0
  %v1217 = vrcp.pop %v1216
  %v1218 = vmul.f32 1.0, %v1217
  %1220 = vrot.lane.b32.xlu0 %v1207, 96
  %v1221 = vpop.permute.xlu0 %1220
  %v1223 = vmul.f32 %v1218, %v1221
  %1225 = vrot.lane.b32.xlu0 %v1223, 32
  %v1226 = vpop.permute.xlu0 %1225
  %v1228 = vadd.f32 %v1162, %v1226
  %v1229 = vtanh.pop %v1228
  %v1230 = vsub.f32 1.0, %v1218
  %1232 = vrot.lane.b32.xlu0 %v1229, 112
  %v1233 = vpop.permute.xlu0 %1232
  %v1235 = vmul.f32 %v1230, %v1233
  %v1236 = vmul.f32 %v1218, %v1072
  %v1237 = vadd.f32 %v1235, %v1236
  %v1238 = vpack.c.bf16 %v1148, %v1148
  %1240 = vrot.lane.b32.xlu0 %v1238, 64
  %v1241 = vpop.permute.xlu0 %1240
  %v1243 = vsel %vm338, %v1241, 0
  %1245 = vmatprep.subr.bf16.mxu0 0
  %1246 = vmatpush1.bf16.msra.mxu0 %v418
  %1247 = vmatprep.subr.bf16.mxu0 0
  %1248 = vmatpush1.bf16.msra.mxu0 0
  %1249 = vmatprep.subr.bf16.mxu0 0
  %1250 = vmatpush1.bf16.msra.mxu0 0
  %1251 = vmatprep.subr.bf16.mxu0 0
  %1252 = vmatpush1.bf16.msra.mxu0 0
  %1253 = vmatprep.subr.bf16.mxu0 0
  %1254 = vmatpush1.bf16.msra.mxu0 0
  %1255 = vmatprep.subr.bf16.mxu0 0
  %1256 = vmatpush1.bf16.msra.mxu0 0
  %1257 = vmatprep.subr.bf16.mxu0 0
  %1258 = vmatpush1.bf16.msra.mxu0 0
  %1259 = vmatprep.subr.bf16.mxu0 0
  %1260 = vmatpush1.bf16.msra.mxu0 0
  %1261 = vmatprep.subr.bf16.mxu0 0
  %1262 = vmatpush1.bf16.msra.mxu0 0
  %1263 = vmatprep.subr.bf16.mxu0 0
  %1264 = vmatpush1.bf16.msra.mxu0 0
  %1265 = vmatprep.subr.bf16.mxu0 0
  %1266 = vmatpush1.bf16.msra.mxu0 0
  %1267 = vmatprep.subr.bf16.mxu0 0
  %1268 = vmatpush1.bf16.msra.mxu0 0
  %1269 = vmatprep.subr.bf16.mxu0 0
  %1270 = vmatpush1.bf16.msra.mxu0 0
  %1271 = vmatprep.subr.bf16.mxu0 0
  %1272 = vmatpush1.bf16.msra.mxu0 0
  %1273 = vmatprep.subr.bf16.mxu0 0
  %1274 = vmatpush1.bf16.msra.mxu0 0
  %1275 = vmatprep.subr.bf16.mxu0 0
  %1276 = vmatpush1.bf16.msra.mxu0 0
  %1277 = vmatprep.mubr.bf16.mxu0 0
  %1278 = vmatmul.mubr.bf16.gmra.mrb[0].mxu0 %v1243
  %v1279 = vpop.f32.mrb[0].mxu0
  %v1280 = vadd.f32 %v412, %v1279
  %v1281 = vpop.f32.mrb[0].mxu0
  %v1282 = vpop.f32.mrb[0].mxu0
  %v1283 = vpop.f32.mrb[0].mxu0
  %1284 = vdwg.mxu0
  %1286 = vrot.lane.b32.xlu0 %v1280, 48
  %v1287 = vpop.permute.xlu0 %1286
  %v1289 = vadd.f32 %v1164, %v1287
  %v1290 = vxor.u32 %v1289, 2147483648
  %v1291 = vmul.f32 %v1290, 1.442695
  %v1292 = vpow.pop %v1291
  %v1293 = vadd.f32 %v1292, 1.0
  %v1294 = vrcp.pop %v1293
  %v1295 = vmul.f32 1.0, %v1294
  %1296 = vrot.lane.b32.xlu0 %v1280, 16
  %v1297 = vpop.permute.xlu0 %1296
  %v1299 = vmul.f32 %v1295, %v1297
  %1301 = vrot.lane.b32.xlu0 %v1299, 32
  %v1302 = vpop.permute.xlu0 %1301
  %v1304 = vadd.f32 %v1164, %v1302
  %v1305 = vtanh.pop %v1304
  %v1306 = vsub.f32 1.0, %v1295
  %1308 = vrot.lane.b32.xlu0 %v1305, 112
  %v1309 = vpop.permute.xlu0 %1308
  %v1311 = vmul.f32 %v1306, %v1309
  %v1312 = vmul.f32 %v1295, %v1148
  %v1313 = vadd.f32 %v1311, %v1312
  %1315 = vrot.lane.b32.xlu0 %v1237, 112
  %v1316 = vpop.permute.xlu0 %1315
  %s1318 = scalar_lea.vmem [#allocation3], 10
  %1319 = vst.msk [vmem:[%s1318] sm:$0x3] %vm493, %v1316
  %1321 = vrot.lane.b32.xlu0 %v1313, 64
  %v1322 = vpop.permute.xlu0 %1321
  %s1324 = scalar_lea.vmem [#allocation4], 20
  %1325 = vst.msk [vmem:[%s1324] sm:$0x3] %vm493, %v1322
  %s1326 = scalar_lea.vmem [#allocation2], 12
  %v1327 = vld [vmem:[%s1326] sm:$0x3]
  %s1328 = scalar_lea.vmem [#allocation2], 18
  %v1329 = vld [vmem:[%s1328] sm:$0x3]
  %v1330 = vpack.c.bf16 %v1237, %v1237
  %1332 = vrot.lane.b32.xlu0 %v1330, 112
  %v1333 = vpop.permute.xlu0 %1332
  %v1335 = vsel %vm338, %v1333, 0
  %1337 = vmatprep.subr.bf16.mxu0 0
  %1338 = vmatpush1.bf16.msra.mxu0 %v336
  %1339 = vmatprep.subr.bf16.mxu0 0
  %1340 = vmatpush1.bf16.msra.mxu0 0
  %1341 = vmatprep.subr.bf16.mxu0 0
  %1342 = vmatpush1.bf16.msra.mxu0 0
  %1343 = vmatprep.subr.bf16.mxu0 0
  %1344 = vmatpush1.bf16.msra.mxu0 0
  %1345 = vmatprep.subr.bf16.mxu0 0
  %1346 = vmatpush1.bf16.msra.mxu0 0
  %1347 = vmatprep.subr.bf16.mxu0 0
  %1348 = vmatpush1.bf16.msra.mxu0 0
  %1349 = vmatprep.subr.bf16.mxu0 0
  %1350 = vmatpush1.bf16.msra.mxu0 0
  %1351 = vmatprep.subr.bf16.mxu0 0
  %1352 = vmatpush1.bf16.msra.mxu0 0
  %1353 = vmatprep.subr.bf16.mxu0 0
  %1354 = vmatpush1.bf16.msra.mxu0 0
  %1355 = vmatprep.subr.bf16.mxu0 0
  %1356 = vmatpush1.bf16.msra.mxu0 0
  %1357 = vmatprep.subr.bf16.mxu0 0
  %1358 = vmatpush1.bf16.msra.mxu0 0
  %1359 = vmatprep.subr.bf16.mxu0 0
  %1360 = vmatpush1.bf16.msra.mxu0 0
  %1361 = vmatprep.subr.bf16.mxu0 0
  %1362 = vmatpush1.bf16.msra.mxu0 0
  %1363 = vmatprep.subr.bf16.mxu0 0
  %1364 = vmatpush1.bf16.msra.mxu0 0
  %1365 = vmatprep.subr.bf16.mxu0 0
  %1366 = vmatpush1.bf16.msra.mxu0 0
  %1367 = vmatprep.subr.bf16.mxu0 0
  %1368 = vmatpush1.bf16.msra.mxu0 0
  %1369 = vmatprep.mubr.bf16.mxu0 0
  %1370 = vmatmul.mubr.bf16.gmra.mrb[0].mxu0 %v1335
  %v1371 = vpop.f32.mrb[0].mxu0
  %v1372 = vadd.f32 %v330, %v1371
  %v1373 = vpop.f32.mrb[0].mxu0
  %v1374 = vpop.f32.mrb[0].mxu0
  %v1375 = vpop.f32.mrb[0].mxu0
  %1376 = vdwg.mxu0
  %v1377 = vadd.f32 %v1327, %v1372
  %v1378 = vxor.u32 %v1377, 2147483648
  %v1379 = vmul.f32 %v1378, 1.442695
  %v1380 = vpow.pop %v1379
  %v1381 = vadd.f32 %v1380, 1.0
  %v1382 = vrcp.pop %v1381
  %v1383 = vmul.f32 1.0, %v1382
  %1385 = vrot.lane.b32.xlu0 %v1372, 96
  %v1386 = vpop.permute.xlu0 %1385
  %v1388 = vmul.f32 %v1383, %v1386
  %1390 = vrot.lane.b32.xlu0 %v1388, 32
  %v1391 = vpop.permute.xlu0 %1390
  %v1393 = vadd.f32 %v1327, %v1391
  %v1394 = vtanh.pop %v1393
  %v1395 = vsub.f32 1.0, %v1383
  %1397 = vrot.lane.b32.xlu0 %v1394, 112
  %v1398 = vpop.permute.xlu0 %1397
  %v1400 = vmul.f32 %v1395, %v1398
  %v1401 = vmul.f32 %v1383, %v1237
  %v1402 = vadd.f32 %v1400, %v1401
  %v1403 = vpack.c.bf16 %v1313, %v1313
  %1405 = vrot.lane.b32.xlu0 %v1403, 64
  %v1406 = vpop.permute.xlu0 %1405
  %v1408 = vsel %vm338, %v1406, 0
  %1410 = vmatprep.subr.bf16.mxu0 0
  %1411 = vmatpush1.bf16.msra.mxu0 %v418
  %1412 = vmatprep.subr.bf16.mxu0 0
  %1413 = vmatpush1.bf16.msra.mxu0 0
  %1414 = vmatprep.subr.bf16.mxu0 0
  %1415 = vmatpush1.bf16.msra.mxu0 0
  %1416 = vmatprep.subr.bf16.mxu0 0
  %1417 = vmatpush1.bf16.msra.mxu0 0
  %1418 = vmatprep.subr.bf16.mxu0 0
  %1419 = vmatpush1.bf16.msra.mxu0 0
  %1420 = vmatprep.subr.bf16.mxu0 0
  %1421 = vmatpush1.bf16.msra.mxu0 0
  %1422 = vmatprep.subr.bf16.mxu0 0
  %1423 = vmatpush1.bf16.msra.mxu0 0
  %1424 = vmatprep.subr.bf16.mxu0 0
  %1425 = vmatpush1.bf16.msra.mxu0 0
  %1426 = vmatprep.subr.bf16.mxu0 0
  %1427 = vmatpush1.bf16.msra.mxu0 0
  %1428 = vmatprep.subr.bf16.mxu0 0
  %1429 = vmatpush1.bf16.msra.mxu0 0
  %1430 = vmatprep.subr.bf16.mxu0 0
  %1431 = vmatpush1.bf16.msra.mxu0 0
  %1432 = vmatprep.subr.bf16.mxu0 0
  %1433 = vmatpush1.bf16.msra.mxu0 0
  %1434 = vmatprep.subr.bf16.mxu0 0
  %1435 = vmatpush1.bf16.msra.mxu0 0
  %1436 = vmatprep.subr.bf16.mxu0 0
  %1437 = vmatpush1.bf16.msra.mxu0 0
  %1438 = vmatprep.subr.bf16.mxu0 0
  %1439 = vmatpush1.bf16.msra.mxu0 0
  %1440 = vmatprep.subr.bf16.mxu0 0
  %1441 = vmatpush1.bf16.msra.mxu0 0
  %1442 = vmatprep.mubr.bf16.mxu0 0
  %1443 = vmatmul.mubr.bf16.gmra.mrb[0].mxu0 %v1408
  %v1444 = vpop.f32.mrb[0].mxu0
  %v1445 = vadd.f32 %v412, %v1444
  %v1446 = vpop.f32.mrb[0].mxu0
  %v1447 = vpop.f32.mrb[0].mxu0
  %v1448 = vpop.f32.mrb[0].mxu0
  %1449 = vdwg.mxu0
  %1451 = vrot.lane.b32.xlu0 %v1445, 48
  %v1452 = vpop.permute.xlu0 %1451
  %v1454 = vadd.f32 %v1329, %v1452
  %v1455 = vxor.u32 %v1454, 2147483648
  %v1456 = vmul.f32 %v1455, 1.442695
  %v1457 = vpow.pop %v1456
  %v1458 = vadd.f32 %v1457, 1.0
  %v1459 = vrcp.pop %v1458
  %v1460 = vmul.f32 1.0, %v1459
  %1461 = vrot.lane.b32.xlu0 %v1445, 16
  %v1462 = vpop.permute.xlu0 %1461
  %v1464 = vmul.f32 %v1460, %v1462
  %1466 = vrot.lane.b32.xlu0 %v1464, 32
  %v1467 = vpop.permute.xlu0 %1466
  %v1469 = vadd.f32 %v1329, %v1467
  %v1470 = vtanh.pop %v1469
  %v1471 = vsub.f32 1.0, %v1460
  %1473 = vrot.lane.b32.xlu0 %v1470, 112
  %v1474 = vpop.permute.xlu0 %1473
  %v1476 = vmul.f32 %v1471, %v1474
  %v1477 = vmul.f32 %v1460, %v1313
  %v1478 = vadd.f32 %v1476, %v1477
  %1480 = vrot.lane.b32.xlu0 %v1402, 112
  %v1481 = vpop.permute.xlu0 %1480
  %s1483 = scalar_lea.vmem [#allocation3], 12
  %1484 = vst.msk [vmem:[%s1483] sm:$0x3] %vm493, %v1481
  %1486 = vrot.lane.b32.xlu0 %v1478, 64
  %v1487 = vpop.permute.xlu0 %1486
  %s1489 = scalar_lea.vmem [#allocation4], 18
  %1490 = vst.msk [vmem:[%s1489] sm:$0x3] %vm493, %v1487
  %s1491 = scalar_lea.vmem [#allocation2], 14
  %v1492 = vld [vmem:[%s1491] sm:$0x3]
  %s1493 = scalar_lea.vmem [#allocation2], 16
  %v1494 = vld [vmem:[%s1493] sm:$0x3]
  %v1495 = vpack.c.bf16 %v1402, %v1402
  %1497 = vrot.lane.b32.xlu0 %v1495, 112
  %v1498 = vpop.permute.xlu0 %1497
  %v1500 = vsel %vm338, %v1498, 0
  %1502 = vmatprep.subr.bf16.mxu0 0
  %1503 = vmatpush1.bf16.msra.mxu0 %v336
  %1504 = vmatprep.subr.bf16.mxu0 0
  %1505 = vmatpush1.bf16.msra.mxu0 0
  %1506 = vmatprep.subr.bf16.mxu0 0
  %1507 = vmatpush1.bf16.msra.mxu0 0
  %1508 = vmatprep.subr.bf16.mxu0 0
  %1509 = vmatpush1.bf16.msra.mxu0 0
  %1510 = vmatprep.subr.bf16.mxu0 0
  %1511 = vmatpush1.bf16.msra.mxu0 0
  %1512 = vmatprep.subr.bf16.mxu0 0
  %1513 = vmatpush1.bf16.msra.mxu0 0
  %1514 = vmatprep.subr.bf16.mxu0 0
  %1515 = vmatpush1.bf16.msra.mxu0 0
  %1516 = vmatprep.subr.bf16.mxu0 0
  %1517 = vmatpush1.bf16.msra.mxu0 0
  %1518 = vmatprep.subr.bf16.mxu0 0
  %1519 = vmatpush1.bf16.msra.mxu0 0
  %1520 = vmatprep.subr.bf16.mxu0 0
  %1521 = vmatpush1.bf16.msra.mxu0 0
  %1522 = vmatprep.subr.bf16.mxu0 0
  %1523 = vmatpush1.bf16.msra.mxu0 0
  %1524 = vmatprep.subr.bf16.mxu0 0
  %1525 = vmatpush1.bf16.msra.mxu0 0
  %1526 = vmatprep.subr.bf16.mxu0 0
  %1527 = vmatpush1.bf16.msra.mxu0 0
  %1528 = vmatprep.subr.bf16.mxu0 0
  %1529 = vmatpush1.bf16.msra.mxu0 0
  %1530 = vmatprep.subr.bf16.mxu0 0
  %1531 = vmatpush1.bf16.msra.mxu0 0
  %1532 = vmatprep.subr.bf16.mxu0 0
  %1533 = vmatpush1.bf16.msra.mxu0 0
  %1534 = vmatprep.mubr.bf16.mxu0 0
  %1535 = vmatmul.mubr.bf16.gmra.mrb[0].mxu0 %v1500
  %v1536 = vpop.f32.mrb[0].mxu0
  %v1537 = vadd.f32 %v330, %v1536
  %v1538 = vpop.f32.mrb[0].mxu0
  %v1539 = vpop.f32.mrb[0].mxu0
  %v1540 = vpop.f32.mrb[0].mxu0
  %1541 = vdwg.mxu0
  %v1542 = vadd.f32 %v1492, %v1537
  %v1543 = vxor.u32 %v1542, 2147483648
  %v1544 = vmul.f32 %v1543, 1.442695
  %v1545 = vpow.pop %v1544
  %v1546 = vadd.f32 %v1545, 1.0
  %v1547 = vrcp.pop %v1546
  %v1548 = vmul.f32 1.0, %v1547
  %1550 = vrot.lane.b32.xlu0 %v1537, 96
  %v1551 = vpop.permute.xlu0 %1550
  %v1553 = vmul.f32 %v1548, %v1551
  %1555 = vrot.lane.b32.xlu0 %v1553, 32
  %v1556 = vpop.permute.xlu0 %1555
  %v1558 = vadd.f32 %v1492, %v1556
  %v1559 = vtanh.pop %v1558
  %v1560 = vsub.f32 1.0, %v1548
  %1562 = vrot.lane.b32.xlu0 %v1559, 112
  %v1563 = vpop.permute.xlu0 %1562
  %v1565 = vmul.f32 %v1560, %v1563
  %v1566 = vmul.f32 %v1548, %v1402
  %v1567 = vadd.f32 %v1565, %v1566
  %v1568 = vpack.c.bf16 %v1478, %v1478
  %1570 = vrot.lane.b32.xlu0 %v1568, 64
  %v1571 = vpop.permute.xlu0 %1570
  %v1573 = vsel %vm338, %v1571, 0
  %1575 = vmatprep.subr.bf16.mxu0 0
  %1576 = vmatpush1.bf16.msra.mxu0 %v418
  %1577 = vmatprep.subr.bf16.mxu0 0
  %1578 = vmatpush1.bf16.msra.mxu0 0
  %1579 = vmatprep.subr.bf16.mxu0 0
  %1580 = vmatpush1.bf16.msra.mxu0 0
  %1581 = vmatprep.subr.bf16.mxu0 0
  %1582 = vmatpush1.bf16.msra.mxu0 0
  %1583 = vmatprep.subr.bf16.mxu0 0
  %1584 = vmatpush1.bf16.msra.mxu0 0
  %1585 = vmatprep.subr.bf16.mxu0 0
  %1586 = vmatpush1.bf16.msra.mxu0 0
  %1587 = vmatprep.subr.bf16.mxu0 0
  %1588 = vmatpush1.bf16.msra.mxu0 0
  %1589 = vmatprep.subr.bf16.mxu0 0
  %1590 = vmatpush1.bf16.msra.mxu0 0
  %1591 = vmatprep.subr.bf16.mxu0 0
  %1592 = vmatpush1.bf16.msra.mxu0 0
  %1593 = vmatprep.subr.bf16.mxu0 0
  %1594 = vmatpush1.bf16.msra.mxu0 0
  %1595 = vmatprep.subr.bf16.mxu0 0
  %1596 = vmatpush1.bf16.msra.mxu0 0
  %1597 = vmatprep.subr.bf16.mxu0 0
  %1598 = vmatpush1.bf16.msra.mxu0 0
  %1599 = vmatprep.subr.bf16.mxu0 0
  %1600 = vmatpush1.bf16.msra.mxu0 0
  %1601 = vmatprep.subr.bf16.mxu0 0
  %1602 = vmatpush1.bf16.msra.mxu0 0
  %1603 = vmatprep.subr.bf16.mxu0 0
  %1604 = vmatpush1.bf16.msra.mxu0 0
  %1605 = vmatprep.subr.bf16.mxu0 0
  %1606 = vmatpush1.bf16.msra.mxu0 0
  %1607 = vmatprep.mubr.bf16.mxu0 0
  %1608 = vmatmul.mubr.bf16.gmra.mrb[0].mxu0 %v1573
  %v1609 = vpop.f32.mrb[0].mxu0
  %v1610 = vadd.f32 %v412, %v1609
  %v1611 = vpop.f32.mrb[0].mxu0
  %v1612 = vpop.f32.mrb[0].mxu0
  %v1613 = vpop.f32.mrb[0].mxu0
  %1614 = vdwg.mxu0
  %1616 = vrot.lane.b32.xlu0 %v1610, 48
  %v1617 = vpop.permute.xlu0 %1616
  %v1619 = vadd.f32 %v1494, %v1617
  %v1620 = vxor.u32 %v1619, 2147483648
  %v1621 = vmul.f32 %v1620, 1.442695
  %v1622 = vpow.pop %v1621
  %v1623 = vadd.f32 %v1622, 1.0
  %v1624 = vrcp.pop %v1623
  %v1625 = vmul.f32 1.0, %v1624
  %1626 = vrot.lane.b32.xlu0 %v1610, 16
  %v1627 = vpop.permute.xlu0 %1626
  %v1629 = vmul.f32 %v1625, %v1627
  %1631 = vrot.lane.b32.xlu0 %v1629, 32
  %v1632 = vpop.permute.xlu0 %1631
  %v1634 = vadd.f32 %v1494, %v1632
  %v1635 = vtanh.pop %v1634
  %v1636 = vsub.f32 1.0, %v1625
  %1638 = vrot.lane.b32.xlu0 %v1635, 112
  %v1639 = vpop.permute.xlu0 %1638
  %v1641 = vmul.f32 %v1636, %v1639
  %v1642 = vmul.f32 %v1625, %v1478
  %v1643 = vadd.f32 %v1641, %v1642
  %1645 = vrot.lane.b32.xlu0 %v1567, 112
  %v1646 = vpop.permute.xlu0 %1645
  %s1648 = scalar_lea.vmem [#allocation3], 14
  %1649 = vst.msk [vmem:[%s1648] sm:$0x3] %vm493, %v1646
  %1651 = vrot.lane.b32.xlu0 %v1643, 64
  %v1652 = vpop.permute.xlu0 %1651
  %s1654 = scalar_lea.vmem [#allocation4], 16
  %1655 = vst.msk [vmem:[%s1654] sm:$0x3] %vm493, %v1652
  %v1656 = vld [vmem:[%s1493] sm:$0x3]
  %v1657 = vld [vmem:[%s1491] sm:$0x3]
  %v1658 = vpack.c.bf16 %v1567, %v1567
  %1660 = vrot.lane.b32.xlu0 %v1658, 112
  %v1661 = vpop.permute.xlu0 %1660
  %v1663 = vsel %vm338, %v1661, 0
  %1665 = vmatprep.subr.bf16.mxu0 0
  %1666 = vmatpush1.bf16.msra.mxu0 %v336
  %1667 = vmatprep.subr.bf16.mxu0 0
  %1668 = vmatpush1.bf16.msra.mxu0 0
  %1669 = vmatprep.subr.bf16.mxu0 0
  %1670 = vmatpush1.bf16.msra.mxu0 0
  %1671 = vmatprep.subr.bf16.mxu0 0
  %1672 = vmatpush1.bf16.msra.mxu0 0
  %1673 = vmatprep.subr.bf16.mxu0 0
  %1674 = vmatpush1.bf16.msra.mxu0 0
  %1675 = vmatprep.subr.bf16.mxu0 0
  %1676 = vmatpush1.bf16.msra.mxu0 0
  %1677 = vmatprep.subr.bf16.mxu0 0
  %1678 = vmatpush1.bf16.msra.mxu0 0
  %1679 = vmatprep.subr.bf16.mxu0 0
  %1680 = vmatpush1.bf16.msra.mxu0 0
  %1681 = vmatprep.subr.bf16.mxu0 0
  %1682 = vmatpush1.bf16.msra.mxu0 0
  %1683 = vmatprep.subr.bf16.mxu0 0
  %1684 = vmatpush1.bf16.msra.mxu0 0
  %1685 = vmatprep.subr.bf16.mxu0 0
  %1686 = vmatpush1.bf16.msra.mxu0 0
  %1687 = vmatprep.subr.bf16.mxu0 0
  %1688 = vmatpush1.bf16.msra.mxu0 0
  %1689 = vmatprep.subr.bf16.mxu0 0
  %1690 = vmatpush1.bf16.msra.mxu0 0
  %1691 = vmatprep.subr.bf16.mxu0 0
  %1692 = vmatpush1.bf16.msra.mxu0 0
  %1693 = vmatprep.subr.bf16.mxu0 0
  %1694 = vmatpush1.bf16.msra.mxu0 0
  %1695 = vmatprep.subr.bf16.mxu0 0
  %1696 = vmatpush1.bf16.msra.mxu0 0
  %1697 = vmatprep.mubr.bf16.mxu0 0
  %1698 = vmatmul.mubr.bf16.gmra.mrb[0].mxu0 %v1663
  %v1699 = vpop.f32.mrb[0].mxu0
  %v1700 = vadd.f32 %v330, %v1699
  %v1701 = vpop.f32.mrb[0].mxu0
  %v1702 = vpop.f32.mrb[0].mxu0
  %v1703 = vpop.f32.mrb[0].mxu0
  %1704 = vdwg.mxu0
  %v1705 = vadd.f32 %v1656, %v1700
  %v1706 = vxor.u32 %v1705, 2147483648
  %v1707 = vmul.f32 %v1706, 1.442695
  %v1708 = vpow.pop %v1707
  %v1709 = vadd.f32 %v1708, 1.0
  %v1710 = vrcp.pop %v1709
  %v1711 = vmul.f32 1.0, %v1710
  %1713 = vrot.lane.b32.xlu0 %v1700, 96
  %v1714 = vpop.permute.xlu0 %1713
  %v1716 = vmul.f32 %v1711, %v1714
  %1718 = vrot.lane.b32.xlu0 %v1716, 32
  %v1719 = vpop.permute.xlu0 %1718
  %v1721 = vadd.f32 %v1656, %v1719
  %v1722 = vtanh.pop %v1721
  %v1723 = vsub.f32 1.0, %v1711
  %1725 = vrot.lane.b32.xlu0 %v1722, 112
  %v1726 = vpop.permute.xlu0 %1725
  %v1728 = vmul.f32 %v1723, %v1726
  %v1729 = vmul.f32 %v1711, %v1567
  %v1730 = vadd.f32 %v1728, %v1729
  %v1731 = vpack.c.bf16 %v1643, %v1643
  %1733 = vrot.lane.b32.xlu0 %v1731, 64
  %v1734 = vpop.permute.xlu0 %1733
  %v1736 = vsel %vm338, %v1734, 0
  %1738 = vmatprep.subr.bf16.mxu0 0
  %1739 = vmatpush1.bf16.msra.mxu0 %v418
  %1740 = vmatprep.subr.bf16.mxu0 0
  %1741 = vmatpush1.bf16.msra.mxu0 0
  %1742 = vmatprep.subr.bf16.mxu0 0
  %1743 = vmatpush1.bf16.msra.mxu0 0
  %1744 = vmatprep.subr.bf16.mxu0 0
  %1745 = vmatpush1.bf16.msra.mxu0 0
  %1746 = vmatprep.subr.bf16.mxu0 0
  %1747 = vmatpush1.bf16.msra.mxu0 0
  %1748 = vmatprep.subr.bf16.mxu0 0
  %1749 = vmatpush1.bf16.msra.mxu0 0
  %1750 = vmatprep.subr.bf16.mxu0 0
  %1751 = vmatpush1.bf16.msra.mxu0 0
  %1752 = vmatprep.subr.bf16.mxu0 0
  %1753 = vmatpush1.bf16.msra.mxu0 0
  %1754 = vmatprep.subr.bf16.mxu0 0
  %1755 = vmatpush1.bf16.msra.mxu0 0
  %1756 = vmatprep.subr.bf16.mxu0 0
  %1757 = vmatpush1.bf16.msra.mxu0 0
  %1758 = vmatprep.subr.bf16.mxu0 0
  %1759 = vmatpush1.bf16.msra.mxu0 0
  %1760 = vmatprep.subr.bf16.mxu0 0
  %1761 = vmatpush1.bf16.msra.mxu0 0
  %1762 = vmatprep.subr.bf16.mxu0 0
  %1763 = vmatpush1.bf16.msra.mxu0 0
  %1764 = vmatprep.subr.bf16.mxu0 0
  %1765 = vmatpush1.bf16.msra.mxu0 0
  %1766 = vmatprep.subr.bf16.mxu0 0
  %1767 = vmatpush1.bf16.msra.mxu0 0
  %1768 = vmatprep.subr.bf16.mxu0 0
  %1769 = vmatpush1.bf16.msra.mxu0 0
  %1770 = vmatprep.mubr.bf16.mxu0 0
  %1771 = vmatmul.mubr.bf16.gmra.mrb[0].mxu0 %v1736
  %v1772 = vpop.f32.mrb[0].mxu0
  %v1773 = vadd.f32 %v412, %v1772
  %v1774 = vpop.f32.mrb[0].mxu0
  %v1775 = vpop.f32.mrb[0].mxu0
  %v1776 = vpop.f32.mrb[0].mxu0
  %1777 = vdwg.mxu0
  %1779 = vrot.lane.b32.xlu0 %v1773, 48
  %v1780 = vpop.permute.xlu0 %1779
  %v1782 = vadd.f32 %v1657, %v1780
  %v1783 = vxor.u32 %v1782, 2147483648
  %v1784 = vmul.f32 %v1783, 1.442695
  %v1785 = vpow.pop %v1784
  %v1786 = vadd.f32 %v1785, 1.0
  %v1787 = vrcp.pop %v1786
  %v1788 = vmul.f32 1.0, %v1787
  %1789 = vrot.lane.b32.xlu0 %v1773, 16
  %v1790 = vpop.permute.xlu0 %1789
  %v1792 = vmul.f32 %v1788, %v1790
  %1794 = vrot.lane.b32.xlu0 %v1792, 32
  %v1795 = vpop.permute.xlu0 %1794
  %v1797 = vadd.f32 %v1657, %v1795
  %v1798 = vtanh.pop %v1797
  %v1799 = vsub.f32 1.0, %v1788
  %1801 = vrot.lane.b32.xlu0 %v1798, 112
  %v1802 = vpop.permute.xlu0 %1801
  %v1804 = vmul.f32 %v1799, %v1802
  %v1805 = vmul.f32 %v1788, %v1643
  %v1806 = vadd.f32 %v1804, %v1805
  %1808 = vrot.lane.b32.xlu0 %v1730, 112
  %v1809 = vpop.permute.xlu0 %1808
  %s1811 = scalar_lea.vmem [#allocation3], 16
  %1812 = vst.msk [vmem:[%s1811] sm:$0x3] %vm493, %v1809
  %1814 = vrot.lane.b32.xlu0 %v1806, 64
  %v1815 = vpop.permute.xlu0 %1814
  %s1817 = scalar_lea.vmem [#allocation4], 14
  %1818 = vst.msk [vmem:[%s1817] sm:$0x3] %vm493, %v1815
  %v1819 = vld [vmem:[%s1328] sm:$0x3]
  %v1820 = vld [vmem:[%s1326] sm:$0x3]
  %v1821 = vpack.c.bf16 %v1730, %v1730
  %1823 = vrot.lane.b32.xlu0 %v1821, 112
  %v1824 = vpop.permute.xlu0 %1823
  %v1826 = vsel %vm338, %v1824, 0
  %1828 = vmatprep.subr.bf16.mxu0 0
  %1829 = vmatpush1.bf16.msra.mxu0 %v336
  %1830 = vmatprep.subr.bf16.mxu0 0
  %1831 = vmatpush1.bf16.msra.mxu0 0
  %1832 = vmatprep.subr.bf16.mxu0 0
  %1833 = vmatpush1.bf16.msra.mxu0 0
  %1834 = vmatprep.subr.bf16.mxu0 0
  %1835 = vmatpush1.bf16.msra.mxu0 0
  %1836 = vmatprep.subr.bf16.mxu0 0
  %1837 = vmatpush1.bf16.msra.mxu0 0
  %1838 = vmatprep.subr.bf16.mxu0 0
  %1839 = vmatpush1.bf16.msra.mxu0 0
  %1840 = vmatprep.subr.bf16.mxu0 0
  %1841 = vmatpush1.bf16.msra.mxu0 0
  %1842 = vmatprep.subr.bf16.mxu0 0
  %1843 = vmatpush1.bf16.msra.mxu0 0
  %1844 = vmatprep.subr.bf16.mxu0 0
  %1845 = vmatpush1.bf16.msra.mxu0 0
  %1846 = vmatprep.subr.bf16.mxu0 0
  %1847 = vmatpush1.bf16.msra.mxu0 0
  %1848 = vmatprep.subr.bf16.mxu0 0
  %1849 = vmatpush1.bf16.msra.mxu0 0
  %1850 = vmatprep.subr.bf16.mxu0 0
  %1851 = vmatpush1.bf16.msra.mxu0 0
  %1852 = vmatprep.subr.bf16.mxu0 0
  %1853 = vmatpush1.bf16.msra.mxu0 0
  %1854 = vmatprep.subr.bf16.mxu0 0
  %1855 = vmatpush1.bf16.msra.mxu0 0
  %1856 = vmatprep.subr.bf16.mxu0 0
  %1857 = vmatpush1.bf16.msra.mxu0 0
  %1858 = vmatprep.subr.bf16.mxu0 0
  %1859 = vmatpush1.bf16.msra.mxu0 0
  %1860 = vmatprep.mubr.bf16.mxu0 0
  %1861 = vmatmul.mubr.bf16.gmra.mrb[0].mxu0 %v1826
  %v1862 = vpop.f32.mrb[0].mxu0
  %v1863 = vadd.f32 %v330, %v1862
  %v1864 = vpop.f32.mrb[0].mxu0
  %v1865 = vpop.f32.mrb[0].mxu0
  %v1866 = vpop.f32.mrb[0].mxu0
  %1867 = vdwg.mxu0
  %v1868 = vadd.f32 %v1819, %v1863
  %v1869 = vxor.u32 %v1868, 2147483648
  %v1870 = vmul.f32 %v1869, 1.442695
  %v1871 = vpow.pop %v1870
  %v1872 = vadd.f32 %v1871, 1.0
  %v1873 = vrcp.pop %v1872
  %v1874 = vmul.f32 1.0, %v1873
  %1876 = vrot.lane.b32.xlu0 %v1863, 96
  %v1877 = vpop.permute.xlu0 %1876
  %v1879 = vmul.f32 %v1874, %v1877
  %1881 = vrot.lane.b32.xlu0 %v1879, 32
  %v1882 = vpop.permute.xlu0 %1881
  %v1884 = vadd.f32 %v1819, %v1882
  %v1885 = vtanh.pop %v1884
  %v1886 = vsub.f32 1.0, %v1874
  %1888 = vrot.lane.b32.xlu0 %v1885, 112
  %v1889 = vpop.permute.xlu0 %1888
  %v1891 = vmul.f32 %v1886, %v1889
  %v1892 = vmul.f32 %v1874, %v1730
  %v1893 = vadd.f32 %v1891, %v1892
  %v1894 = vpack.c.bf16 %v1806, %v1806
  %1896 = vrot.lane.b32.xlu0 %v1894, 64
  %v1897 = vpop.permute.xlu0 %1896
  %v1899 = vsel %vm338, %v1897, 0
  %1901 = vmatprep.subr.bf16.mxu0 0
  %1902 = vmatpush1.bf16.msra.mxu0 %v418
  %1903 = vmatprep.subr.bf16.mxu0 0
  %1904 = vmatpush1.bf16.msra.mxu0 0
  %1905 = vmatprep.subr.bf16.mxu0 0
  %1906 = vmatpush1.bf16.msra.mxu0 0
  %1907 = vmatprep.subr.bf16.mxu0 0
  %1908 = vmatpush1.bf16.msra.mxu0 0
  %1909 = vmatprep.subr.bf16.mxu0 0
  %1910 = vmatpush1.bf16.msra.mxu0 0
  %1911 = vmatprep.subr.bf16.mxu0 0
  %1912 = vmatpush1.bf16.msra.mxu0 0
  %1913 = vmatprep.subr.bf16.mxu0 0
  %1914 = vmatpush1.bf16.msra.mxu0 0
  %1915 = vmatprep.subr.bf16.mxu0 0
  %1916 = vmatpush1.bf16.msra.mxu0 0
  %1917 = vmatprep.subr.bf16.mxu0 0
  %1918 = vmatpush1.bf16.msra.mxu0 0
  %1919 = vmatprep.subr.bf16.mxu0 0
  %1920 = vmatpush1.bf16.msra.mxu0 0
  %1921 = vmatprep.subr.bf16.mxu0 0
  %1922 = vmatpush1.bf16.msra.mxu0 0
  %1923 = vmatprep.subr.bf16.mxu0 0
  %1924 = vmatpush1.bf16.msra.mxu0 0
  %1925 = vmatprep.subr.bf16.mxu0 0
  %1926 = vmatpush1.bf16.msra.mxu0 0
  %1927 = vmatprep.subr.bf16.mxu0 0
  %1928 = vmatpush1.bf16.msra.mxu0 0
  %1929 = vmatprep.subr.bf16.mxu0 0
  %1930 = vmatpush1.bf16.msra.mxu0 0
  %1931 = vmatprep.subr.bf16.mxu0 0
  %1932 = vmatpush1.bf16.msra.mxu0 0
  %1933 = vmatprep.mubr.bf16.mxu0 0
  %1934 = vmatmul.mubr.bf16.gmra.mrb[0].mxu0 %v1899
  %v1935 = vpop.f32.mrb[0].mxu0
  %v1936 = vadd.f32 %v412, %v1935
  %v1937 = vpop.f32.mrb[0].mxu0
  %v1938 = vpop.f32.mrb[0].mxu0
  %v1939 = vpop.f32.mrb[0].mxu0
  %1940 = vdwg.mxu0
  %1942 = vrot.lane.b32.xlu0 %v1936, 48
  %v1943 = vpop.permute.xlu0 %1942
  %v1945 = vadd.f32 %v1820, %v1943
  %v1946 = vxor.u32 %v1945, 2147483648
  %v1947 = vmul.f32 %v1946, 1.442695
  %v1948 = vpow.pop %v1947
  %v1949 = vadd.f32 %v1948, 1.0
  %v1950 = vrcp.pop %v1949
  %v1951 = vmul.f32 1.0, %v1950
  %1952 = vrot.lane.b32.xlu0 %v1936, 16
  %v1953 = vpop.permute.xlu0 %1952
  %v1955 = vmul.f32 %v1951, %v1953
  %1957 = vrot.lane.b32.xlu0 %v1955, 32
  %v1958 = vpop.permute.xlu0 %1957
  %v1960 = vadd.f32 %v1820, %v1958
  %v1961 = vtanh.pop %v1960
  %v1962 = vsub.f32 1.0, %v1951
  %1964 = vrot.lane.b32.xlu0 %v1961, 112
  %v1965 = vpop.permute.xlu0 %1964
  %v1967 = vmul.f32 %v1962, %v1965
  %v1968 = vmul.f32 %v1951, %v1806
  %v1969 = vadd.f32 %v1967, %v1968
  %1971 = vrot.lane.b32.xlu0 %v1893, 112
  %v1972 = vpop.permute.xlu0 %1971
  %s1974 = scalar_lea.vmem [#allocation3], 18
  %1975 = vst.msk [vmem:[%s1974] sm:$0x3] %vm493, %v1972
  %1977 = vrot.lane.b32.xlu0 %v1969, 64
  %v1978 = vpop.permute.xlu0 %1977
  %s1980 = scalar_lea.vmem [#allocation4], 12
  %1981 = vst.msk [vmem:[%s1980] sm:$0x3] %vm493, %v1978
  %v1982 = vld [vmem:[%s1163] sm:$0x3]
  %v1983 = vld [vmem:[%s1161] sm:$0x3]
  %v1984 = vpack.c.bf16 %v1893, %v1893
  %1986 = vrot.lane.b32.xlu0 %v1984, 112
  %v1987 = vpop.permute.xlu0 %1986
  %v1989 = vsel %vm338, %v1987, 0
  %1991 = vmatprep.subr.bf16.mxu0 0
  %1992 = vmatpush1.bf16.msra.mxu0 %v336
  %1993 = vmatprep.subr.bf16.mxu0 0
  %1994 = vmatpush1.bf16.msra.mxu0 0
  %1995 = vmatprep.subr.bf16.mxu0 0
  %1996 = vmatpush1.bf16.msra.mxu0 0
  %1997 = vmatprep.subr.bf16.mxu0 0
  %1998 = vmatpush1.bf16.msra.mxu0 0
  %1999 = vmatprep.subr.bf16.mxu0 0
  %2000 = vmatpush1.bf16.msra.mxu0 0
  %2001 = vmatprep.subr.bf16.mxu0 0
  %2002 = vmatpush1.bf16.msra.mxu0 0
  %2003 = vmatprep.subr.bf16.mxu0 0
  %2004 = vmatpush1.bf16.msra.mxu0 0
  %2005 = vmatprep.subr.bf16.mxu0 0
  %2006 = vmatpush1.bf16.msra.mxu0 0
  %2007 = vmatprep.subr.bf16.mxu0 0
  %2008 = vmatpush1.bf16.msra.mxu0 0
  %2009 = vmatprep.subr.bf16.mxu0 0
  %2010 = vmatpush1.bf16.msra.mxu0 0
  %2011 = vmatprep.subr.bf16.mxu0 0
  %2012 = vmatpush1.bf16.msra.mxu0 0
  %2013 = vmatprep.subr.bf16.mxu0 0
  %2014 = vmatpush1.bf16.msra.mxu0 0
  %2015 = vmatprep.subr.bf16.mxu0 0
  %2016 = vmatpush1.bf16.msra.mxu0 0
  %2017 = vmatprep.subr.bf16.mxu0 0
  %2018 = vmatpush1.bf16.msra.mxu0 0
  %2019 = vmatprep.subr.bf16.mxu0 0
  %2020 = vmatpush1.bf16.msra.mxu0 0
  %2021 = vmatprep.subr.bf16.mxu0 0
  %2022 = vmatpush1.bf16.msra.mxu0 0
  %2023 = vmatprep.mubr.bf16.mxu0 0
  %2024 = vmatmul.mubr.bf16.gmra.mrb[0].mxu0 %v1989
  %v2025 = vpop.f32.mrb[0].mxu0
  %v2026 = vadd.f32 %v330, %v2025
  %v2027 = vpop.f32.mrb[0].mxu0
  %v2028 = vpop.f32.mrb[0].mxu0
  %v2029 = vpop.f32.mrb[0].mxu0
  %2030 = vdwg.mxu0
  %v2031 = vadd.f32 %v1982, %v2026
  %v2032 = vxor.u32 %v2031, 2147483648
  %v2033 = vmul.f32 %v2032, 1.442695
  %v2034 = vpow.pop %v2033
  %v2035 = vadd.f32 %v2034, 1.0
  %v2036 = vrcp.pop %v2035
  %v2037 = vmul.f32 1.0, %v2036
  %2039 = vrot.lane.b32.xlu0 %v2026, 96
  %v2040 = vpop.permute.xlu0 %2039
  %v2042 = vmul.f32 %v2037, %v2040
  %2044 = vrot.lane.b32.xlu0 %v2042, 32
  %v2045 = vpop.permute.xlu0 %2044
  %v2047 = vadd.f32 %v1982, %v2045
  %v2048 = vtanh.pop %v2047
  %v2049 = vsub.f32 1.0, %v2037
  %2051 = vrot.lane.b32.xlu0 %v2048, 112
  %v2052 = vpop.permute.xlu0 %2051
  %v2054 = vmul.f32 %v2049, %v2052
  %v2055 = vmul.f32 %v2037, %v1893
  %v2056 = vadd.f32 %v2054, %v2055
  %v2057 = vpack.c.bf16 %v1969, %v1969
  %2059 = vrot.lane.b32.xlu0 %v2057, 64
  %v2060 = vpop.permute.xlu0 %2059
  %v2062 = vsel %vm338, %v2060, 0
  %2064 = vmatprep.subr.bf16.mxu0 0
  %2065 = vmatpush1.bf16.msra.mxu0 %v418
  %2066 = vmatprep.subr.bf16.mxu0 0
  %2067 = vmatpush1.bf16.msra.mxu0 0
  %2068 = vmatprep.subr.bf16.mxu0 0
  %2069 = vmatpush1.bf16.msra.mxu0 0
  %2070 = vmatprep.subr.bf16.mxu0 0
  %2071 = vmatpush1.bf16.msra.mxu0 0
  %2072 = vmatprep.subr.bf16.mxu0 0
  %2073 = vmatpush1.bf16.msra.mxu0 0
  %2074 = vmatprep.subr.bf16.mxu0 0
  %2075 = vmatpush1.bf16.msra.mxu0 0
  %2076 = vmatprep.subr.bf16.mxu0 0
  %2077 = vmatpush1.bf16.msra.mxu0 0
  %2078 = vmatprep.subr.bf16.mxu0 0
  %2079 = vmatpush1.bf16.msra.mxu0 0
  %2080 = vmatprep.subr.bf16.mxu0 0
  %2081 = vmatpush1.bf16.msra.mxu0 0
  %2082 = vmatprep.subr.bf16.mxu0 0
  %2083 = vmatpush1.bf16.msra.mxu0 0
  %2084 = vmatprep.subr.bf16.mxu0 0
  %2085 = vmatpush1.bf16.msra.mxu0 0
  %2086 = vmatprep.subr.bf16.mxu0 0
  %2087 = vmatpush1.bf16.msra.mxu0 0
  %2088 = vmatprep.subr.bf16.mxu0 0
  %2089 = vmatpush1.bf16.msra.mxu0 0
  %2090 = vmatprep.subr.bf16.mxu0 0
  %2091 = vmatpush1.bf16.msra.mxu0 0
  %2092 = vmatprep.subr.bf16.mxu0 0
  %2093 = vmatpush1.bf16.msra.mxu0 0
  %2094 = vmatprep.subr.bf16.mxu0 0
  %2095 = vmatpush1.bf16.msra.mxu0 0
  %2096 = vmatprep.mubr.bf16.mxu0 0
  %2097 = vmatmul.mubr.bf16.gmra.mrb[0].mxu0 %v2062
  %v2098 = vpop.f32.mrb[0].mxu0
  %v2099 = vadd.f32 %v412, %v2098
  %v2100 = vpop.f32.mrb[0].mxu0
  %v2101 = vpop.f32.mrb[0].mxu0
  %v2102 = vpop.f32.mrb[0].mxu0
  %2103 = vdwg.mxu0
  %2105 = vrot.lane.b32.xlu0 %v2099, 48
  %v2106 = vpop.permute.xlu0 %2105
  %v2108 = vadd.f32 %v1983, %v2106
  %v2109 = vxor.u32 %v2108, 2147483648
  %v2110 = vmul.f32 %v2109, 1.442695
  %v2111 = vpow.pop %v2110
  %v2112 = vadd.f32 %v2111, 1.0
  %v2113 = vrcp.pop %v2112
  %v2114 = vmul.f32 1.0, %v2113
  %2115 = vrot.lane.b32.xlu0 %v2099, 16
  %v2116 = vpop.permute.xlu0 %2115
  %v2118 = vmul.f32 %v2114, %v2116
  %2120 = vrot.lane.b32.xlu0 %v2118, 32
  %v2121 = vpop.permute.xlu0 %2120
  %v2123 = vadd.f32 %v1983, %v2121
  %v2124 = vtanh.pop %v2123
  %v2125 = vsub.f32 1.0, %v2114
  %2127 = vrot.lane.b32.xlu0 %v2124, 112
  %v2128 = vpop.permute.xlu0 %2127
  %v2130 = vmul.f32 %v2125, %v2128
  %v2131 = vmul.f32 %v2114, %v1969
  %v2132 = vadd.f32 %v2130, %v2131
  %2134 = vrot.lane.b32.xlu0 %v2056, 112
  %v2135 = vpop.permute.xlu0 %2134
  %s2137 = scalar_lea.vmem [#allocation3], 20
  %2138 = vst.msk [vmem:[%s2137] sm:$0x3] %vm493, %v2135
  %2140 = vrot.lane.b32.xlu0 %v2132, 64
  %v2141 = vpop.permute.xlu0 %2140
  %s2143 = scalar_lea.vmem [#allocation4], 10
  %2144 = vst.msk [vmem:[%s2143] sm:$0x3] %vm493, %v2141
  %v2145 = vld [vmem:[%s998] sm:$0x3]
  %v2146 = vld [vmem:[%s996] sm:$0x3]
  %v2147 = vpack.c.bf16 %v2056, %v2056
  %2149 = vrot.lane.b32.xlu0 %v2147, 112
  %v2150 = vpop.permute.xlu0 %2149
  %v2152 = vsel %vm338, %v2150, 0
  %2154 = vmatprep.subr.bf16.mxu0 0
  %2155 = vmatpush1.bf16.msra.mxu0 %v336
  %2156 = vmatprep.subr.bf16.mxu0 0
  %2157 = vmatpush1.bf16.msra.mxu0 0
  %2158 = vmatprep.subr.bf16.mxu0 0
  %2159 = vmatpush1.bf16.msra.mxu0 0
  %2160 = vmatprep.subr.bf16.mxu0 0
  %2161 = vmatpush1.bf16.msra.mxu0 0
  %2162 = vmatprep.subr.bf16.mxu0 0
  %2163 = vmatpush1.bf16.msra.mxu0 0
  %2164 = vmatprep.subr.bf16.mxu0 0
  %2165 = vmatpush1.bf16.msra.mxu0 0
  %2166 = vmatprep.subr.bf16.mxu0 0
  %2167 = vmatpush1.bf16.msra.mxu0 0
  %2168 = vmatprep.subr.bf16.mxu0 0
  %2169 = vmatpush1.bf16.msra.mxu0 0
  %2170 = vmatprep.subr.bf16.mxu0 0
  %2171 = vmatpush1.bf16.msra.mxu0 0
  %2172 = vmatprep.subr.bf16.mxu0 0
  %2173 = vmatpush1.bf16.msra.mxu0 0
  %2174 = vmatprep.subr.bf16.mxu0 0
  %2175 = vmatpush1.bf16.msra.mxu0 0
  %2176 = vmatprep.subr.bf16.mxu0 0
  %2177 = vmatpush1.bf16.msra.mxu0 0
  %2178 = vmatprep.subr.bf16.mxu0 0
  %2179 = vmatpush1.bf16.msra.mxu0 0
  %2180 = vmatprep.subr.bf16.mxu0 0
  %2181 = vmatpush1.bf16.msra.mxu0 0
  %2182 = vmatprep.subr.bf16.mxu0 0
  %2183 = vmatpush1.bf16.msra.mxu0 0
  %2184 = vmatprep.subr.bf16.mxu0 0
  %2185 = vmatpush1.bf16.msra.mxu0 0
  %2186 = vmatprep.mubr.bf16.mxu0 0
  %2187 = vmatmul.mubr.bf16.gmra.mrb[0].mxu0 %v2152
  %v2188 = vpop.f32.mrb[0].mxu0
  %v2189 = vadd.f32 %v330, %v2188
  %v2190 = vpop.f32.mrb[0].mxu0
  %v2191 = vpop.f32.mrb[0].mxu0
  %v2192 = vpop.f32.mrb[0].mxu0
  %2193 = vdwg.mxu0
  %v2194 = vadd.f32 %v2145, %v2189
  %v2195 = vxor.u32 %v2194, 2147483648
  %v2196 = vmul.f32 %v2195, 1.442695
  %v2197 = vpow.pop %v2196
  %v2198 = vadd.f32 %v2197, 1.0
  %v2199 = vrcp.pop %v2198
  %v2200 = vmul.f32 1.0, %v2199
  %2202 = vrot.lane.b32.xlu0 %v2189, 96
  %v2203 = vpop.permute.xlu0 %2202
  %v2205 = vmul.f32 %v2200, %v2203
  %2207 = vrot.lane.b32.xlu0 %v2205, 32
  %v2208 = vpop.permute.xlu0 %2207
  %v2210 = vadd.f32 %v2145, %v2208
  %v2211 = vtanh.pop %v2210
  %v2212 = vsub.f32 1.0, %v2200
  %2214 = vrot.lane.b32.xlu0 %v2211, 112
  %v2215 = vpop.permute.xlu0 %2214
  %v2217 = vmul.f32 %v2212, %v2215
  %v2218 = vmul.f32 %v2200, %v2056
  %v2219 = vadd.f32 %v2217, %v2218
  %v2220 = vpack.c.bf16 %v2132, %v2132
  %2222 = vrot.lane.b32.xlu0 %v2220, 64
  %v2223 = vpop.permute.xlu0 %2222
  %v2225 = vsel %vm338, %v2223, 0
  %2227 = vmatprep.subr.bf16.mxu0 0
  %2228 = vmatpush1.bf16.msra.mxu0 %v418
  %2229 = vmatprep.subr.bf16.mxu0 0
  %2230 = vmatpush1.bf16.msra.mxu0 0
  %2231 = vmatprep.subr.bf16.mxu0 0
  %2232 = vmatpush1.bf16.msra.mxu0 0
  %2233 = vmatprep.subr.bf16.mxu0 0
  %2234 = vmatpush1.bf16.msra.mxu0 0
  %2235 = vmatprep.subr.bf16.mxu0 0
  %2236 = vmatpush1.bf16.msra.mxu0 0
  %2237 = vmatprep.subr.bf16.mxu0 0
  %2238 = vmatpush1.bf16.msra.mxu0 0
  %2239 = vmatprep.subr.bf16.mxu0 0
  %2240 = vmatpush1.bf16.msra.mxu0 0
  %2241 = vmatprep.subr.bf16.mxu0 0
  %2242 = vmatpush1.bf16.msra.mxu0 0
  %2243 = vmatprep.subr.bf16.mxu0 0
  %2244 = vmatpush1.bf16.msra.mxu0 0
  %2245 = vmatprep.subr.bf16.mxu0 0
  %2246 = vmatpush1.bf16.msra.mxu0 0
  %2247 = vmatprep.subr.bf16.mxu0 0
  %2248 = vmatpush1.bf16.msra.mxu0 0
  %2249 = vmatprep.subr.bf16.mxu0 0
  %2250 = vmatpush1.bf16.msra.mxu0 0
  %2251 = vmatprep.subr.bf16.mxu0 0
  %2252 = vmatpush1.bf16.msra.mxu0 0
  %2253 = vmatprep.subr.bf16.mxu0 0
  %2254 = vmatpush1.bf16.msra.mxu0 0
  %2255 = vmatprep.subr.bf16.mxu0 0
  %2256 = vmatpush1.bf16.msra.mxu0 0
  %2257 = vmatprep.subr.bf16.mxu0 0
  %2258 = vmatpush1.bf16.msra.mxu0 0
  %2259 = vmatprep.mubr.bf16.mxu0 0
  %2260 = vmatmul.mubr.bf16.gmra.mrb[0].mxu0 %v2225
  %v2261 = vpop.f32.mrb[0].mxu0
  %v2262 = vadd.f32 %v412, %v2261
  %v2263 = vpop.f32.mrb[0].mxu0
  %v2264 = vpop.f32.mrb[0].mxu0
  %v2265 = vpop.f32.mrb[0].mxu0
  %2266 = vdwg.mxu0
  %2268 = vrot.lane.b32.xlu0 %v2262, 48
  %v2269 = vpop.permute.xlu0 %2268
  %v2271 = vadd.f32 %v2146, %v2269
  %v2272 = vxor.u32 %v2271, 2147483648
  %v2273 = vmul.f32 %v2272, 1.442695
  %v2274 = vpow.pop %v2273
  %v2275 = vadd.f32 %v2274, 1.0
  %v2276 = vrcp.pop %v2275
  %v2277 = vmul.f32 1.0, %v2276
  %2278 = vrot.lane.b32.xlu0 %v2262, 16
  %v2279 = vpop.permute.xlu0 %2278
  %v2281 = vmul.f32 %v2277, %v2279
  %2283 = vrot.lane.b32.xlu0 %v2281, 32
  %v2284 = vpop.permute.xlu0 %2283
  %v2286 = vadd.f32 %v2146, %v2284
  %v2287 = vtanh.pop %v2286
  %v2288 = vsub.f32 1.0, %v2277
  %2290 = vrot.lane.b32.xlu0 %v2287, 112
  %v2291 = vpop.permute.xlu0 %2290
  %v2293 = vmul.f32 %v2288, %v2291
  %v2294 = vmul.f32 %v2277, %v2132
  %v2295 = vadd.f32 %v2293, %v2294
  %2297 = vrot.lane.b32.xlu0 %v2219, 112
  %v2298 = vpop.permute.xlu0 %2297
  %s2300 = scalar_lea.vmem [#allocation3], 22
  %2301 = vst.msk [vmem:[%s2300] sm:$0x3] %vm493, %v2298
  %2303 = vrot.lane.b32.xlu0 %v2295, 64
  %v2304 = vpop.permute.xlu0 %2303
  %s2306 = scalar_lea.vmem [#allocation4], 8
  %2307 = vst.msk [vmem:[%s2306] sm:$0x3] %vm493, %v2304
  %v2308 = vld [vmem:[%s833] sm:$0x3]
  %v2309 = vld [vmem:[%s831] sm:$0x3]
  %v2310 = vpack.c.bf16 %v2219, %v2219
  %2312 = vrot.lane.b32.xlu0 %v2310, 112
  %v2313 = vpop.permute.xlu0 %2312
  %v2315 = vsel %vm338, %v2313, 0
  %2317 = vmatprep.subr.bf16.mxu0 0
  %2318 = vmatpush1.bf16.msra.mxu0 %v336
  %2319 = vmatprep.subr.bf16.mxu0 0
  %2320 = vmatpush1.bf16.msra.mxu0 0
  %2321 = vmatprep.subr.bf16.mxu0 0
  %2322 = vmatpush1.bf16.msra.mxu0 0
  %2323 = vmatprep.subr.bf16.mxu0 0
  %2324 = vmatpush1.bf16.msra.mxu0 0
  %2325 = vmatprep.subr.bf16.mxu0 0
  %2326 = vmatpush1.bf16.msra.mxu0 0
  %2327 = vmatprep.subr.bf16.mxu0 0
  %2328 = vmatpush1.bf16.msra.mxu0 0
  %2329 = vmatprep.subr.bf16.mxu0 0
  %2330 = vmatpush1.bf16.msra.mxu0 0
  %2331 = vmatprep.subr.bf16.mxu0 0
  %2332 = vmatpush1.bf16.msra.mxu0 0
  %2333 = vmatprep.subr.bf16.mxu0 0
  %2334 = vmatpush1.bf16.msra.mxu0 0
  %2335 = vmatprep.subr.bf16.mxu0 0
  %2336 = vmatpush1.bf16.msra.mxu0 0
  %2337 = vmatprep.subr.bf16.mxu0 0
  %2338 = vmatpush1.bf16.msra.mxu0 0
  %2339 = vmatprep.subr.bf16.mxu0 0
  %2340 = vmatpush1.bf16.msra.mxu0 0
  %2341 = vmatprep.subr.bf16.mxu0 0
  %2342 = vmatpush1.bf16.msra.mxu0 0
  %2343 = vmatprep.subr.bf16.mxu0 0
  %2344 = vmatpush1.bf16.msra.mxu0 0
  %2345 = vmatprep.subr.bf16.mxu0 0
  %2346 = vmatpush1.bf16.msra.mxu0 0
  %2347 = vmatprep.subr.bf16.mxu0 0
  %2348 = vmatpush1.bf16.msra.mxu0 0
  %2349 = vmatprep.mubr.bf16.mxu0 0
  %2350 = vmatmul.mubr.bf16.gmra.mrb[0].mxu0 %v2315
  %v2351 = vpop.f32.mrb[0].mxu0
  %v2352 = vadd.f32 %v330, %v2351
  %v2353 = vpop.f32.mrb[0].mxu0
  %v2354 = vpop.f32.mrb[0].mxu0
  %v2355 = vpop.f32.mrb[0].mxu0
  %2356 = vdwg.mxu0
  %v2357 = vadd.f32 %v2308, %v2352
  %v2358 = vxor.u32 %v2357, 2147483648
  %v2359 = vmul.f32 %v2358, 1.442695
  %v2360 = vpow.pop %v2359
  %v2361 = vadd.f32 %v2360, 1.0
  %v2362 = vrcp.pop %v2361
  %v2363 = vmul.f32 1.0, %v2362
  %2365 = vrot.lane.b32.xlu0 %v2352, 96
  %v2366 = vpop.permute.xlu0 %2365
  %v2368 = vmul.f32 %v2363, %v2366
  %2370 = vrot.lane.b32.xlu0 %v2368, 32
  %v2371 = vpop.permute.xlu0 %2370
  %v2373 = vadd.f32 %v2308, %v2371
  %v2374 = vtanh.pop %v2373
  %v2375 = vsub.f32 1.0, %v2363
  %2377 = vrot.lane.b32.xlu0 %v2374, 112
  %v2378 = vpop.permute.xlu0 %2377
  %v2380 = vmul.f32 %v2375, %v2378
  %v2381 = vmul.f32 %v2363, %v2219
  %v2382 = vadd.f32 %v2380, %v2381
  %v2383 = vpack.c.bf16 %v2295, %v2295
  %2385 = vrot.lane.b32.xlu0 %v2383, 64
  %v2386 = vpop.permute.xlu0 %2385
  %v2388 = vsel %vm338, %v2386, 0
  %2390 = vmatprep.subr.bf16.mxu0 0
  %2391 = vmatpush1.bf16.msra.mxu0 %v418
  %2392 = vmatprep.subr.bf16.mxu0 0
  %2393 = vmatpush1.bf16.msra.mxu0 0
  %2394 = vmatprep.subr.bf16.mxu0 0
  %2395 = vmatpush1.bf16.msra.mxu0 0
  %2396 = vmatprep.subr.bf16.mxu0 0
  %2397 = vmatpush1.bf16.msra.mxu0 0
  %2398 = vmatprep.subr.bf16.mxu0 0
  %2399 = vmatpush1.bf16.msra.mxu0 0
  %2400 = vmatprep.subr.bf16.mxu0 0
  %2401 = vmatpush1.bf16.msra.mxu0 0
  %2402 = vmatprep.subr.bf16.mxu0 0
  %2403 = vmatpush1.bf16.msra.mxu0 0
  %2404 = vmatprep.subr.bf16.mxu0 0
  %2405 = vmatpush1.bf16.msra.mxu0 0
  %2406 = vmatprep.subr.bf16.mxu0 0
  %2407 = vmatpush1.bf16.msra.mxu0 0
  %2408 = vmatprep.subr.bf16.mxu0 0
  %2409 = vmatpush1.bf16.msra.mxu0 0
  %2410 = vmatprep.subr.bf16.mxu0 0
  %2411 = vmatpush1.bf16.msra.mxu0 0
  %2412 = vmatprep.subr.bf16.mxu0 0
  %2413 = vmatpush1.bf16.msra.mxu0 0
  %2414 = vmatprep.subr.bf16.mxu0 0
  %2415 = vmatpush1.bf16.msra.mxu0 0
  %2416 = vmatprep.subr.bf16.mxu0 0
  %2417 = vmatpush1.bf16.msra.mxu0 0
  %2418 = vmatprep.subr.bf16.mxu0 0
  %2419 = vmatpush1.bf16.msra.mxu0 0
  %2420 = vmatprep.subr.bf16.mxu0 0
  %2421 = vmatpush1.bf16.msra.mxu0 0
  %2422 = vmatprep.mubr.bf16.mxu0 0
  %2423 = vmatmul.mubr.bf16.gmra.mrb[0].mxu0 %v2388
  %v2424 = vpop.f32.mrb[0].mxu0
  %v2425 = vadd.f32 %v412, %v2424
  %v2426 = vpop.f32.mrb[0].mxu0
  %v2427 = vpop.f32.mrb[0].mxu0
  %v2428 = vpop.f32.mrb[0].mxu0
  %2429 = vdwg.mxu0
  %2431 = vrot.lane.b32.xlu0 %v2425, 48
  %v2432 = vpop.permute.xlu0 %2431
  %v2434 = vadd.f32 %v2309, %v2432
  %v2435 = vxor.u32 %v2434, 2147483648
  %v2436 = vmul.f32 %v2435, 1.442695
  %v2437 = vpow.pop %v2436
  %v2438 = vadd.f32 %v2437, 1.0
  %v2439 = vrcp.pop %v2438
  %v2440 = vmul.f32 1.0, %v2439
  %2441 = vrot.lane.b32.xlu0 %v2425, 16
  %v2442 = vpop.permute.xlu0 %2441
  %v2444 = vmul.f32 %v2440, %v2442
  %2446 = vrot.lane.b32.xlu0 %v2444, 32
  %v2447 = vpop.permute.xlu0 %2446
  %v2449 = vadd.f32 %v2309, %v2447
  %v2450 = vtanh.pop %v2449
  %v2451 = vsub.f32 1.0, %v2440
  %2453 = vrot.lane.b32.xlu0 %v2450, 112
  %v2454 = vpop.permute.xlu0 %2453
  %v2456 = vmul.f32 %v2451, %v2454
  %v2457 = vmul.f32 %v2440, %v2295
  %v2458 = vadd.f32 %v2456, %v2457
  %2460 = vrot.lane.b32.xlu0 %v2382, 112
  %v2461 = vpop.permute.xlu0 %2460
  %s2463 = scalar_lea.vmem [#allocation3], 24
  %2464 = vst.msk [vmem:[%s2463] sm:$0x3] %vm493, %v2461
  %2466 = vrot.lane.b32.xlu0 %v2458, 64
  %v2467 = vpop.permute.xlu0 %2466
  %s2469 = scalar_lea.vmem [#allocation4], 6
  %2470 = vst.msk [vmem:[%s2469] sm:$0x3] %vm493, %v2467
  %v2471 = vld [vmem:[%s668] sm:$0x3]
  %v2472 = vld [vmem:[%s666] sm:$0x3]
  %v2473 = vpack.c.bf16 %v2382, %v2382
  %2475 = vrot.lane.b32.xlu0 %v2473, 112
  %v2476 = vpop.permute.xlu0 %2475
  %v2478 = vsel %vm338, %v2476, 0
  %2480 = vmatprep.subr.bf16.mxu0 0
  %2481 = vmatpush1.bf16.msra.mxu0 %v336
  %2482 = vmatprep.subr.bf16.mxu0 0
  %2483 = vmatpush1.bf16.msra.mxu0 0
  %2484 = vmatprep.subr.bf16.mxu0 0
  %2485 = vmatpush1.bf16.msra.mxu0 0
  %2486 = vmatprep.subr.bf16.mxu0 0
  %2487 = vmatpush1.bf16.msra.mxu0 0
  %2488 = vmatprep.subr.bf16.mxu0 0
  %2489 = vmatpush1.bf16.msra.mxu0 0
  %2490 = vmatprep.subr.bf16.mxu0 0
  %2491 = vmatpush1.bf16.msra.mxu0 0
  %2492 = vmatprep.subr.bf16.mxu0 0
  %2493 = vmatpush1.bf16.msra.mxu0 0
  %2494 = vmatprep.subr.bf16.mxu0 0
  %2495 = vmatpush1.bf16.msra.mxu0 0
  %2496 = vmatprep.subr.bf16.mxu0 0
  %2497 = vmatpush1.bf16.msra.mxu0 0
  %2498 = vmatprep.subr.bf16.mxu0 0
  %2499 = vmatpush1.bf16.msra.mxu0 0
  %2500 = vmatprep.subr.bf16.mxu0 0
  %2501 = vmatpush1.bf16.msra.mxu0 0
  %2502 = vmatprep.subr.bf16.mxu0 0
  %2503 = vmatpush1.bf16.msra.mxu0 0
  %2504 = vmatprep.subr.bf16.mxu0 0
  %2505 = vmatpush1.bf16.msra.mxu0 0
  %2506 = vmatprep.subr.bf16.mxu0 0
  %2507 = vmatpush1.bf16.msra.mxu0 0
  %2508 = vmatprep.subr.bf16.mxu0 0
  %2509 = vmatpush1.bf16.msra.mxu0 0
  %2510 = vmatprep.subr.bf16.mxu0 0
  %2511 = vmatpush1.bf16.msra.mxu0 0
  %2512 = vmatprep.mubr.bf16.mxu0 0
  %2513 = vmatmul.mubr.bf16.gmra.mrb[0].mxu0 %v2478
  %v2514 = vpop.f32.mrb[0].mxu0
  %v2515 = vadd.f32 %v330, %v2514
  %v2516 = vpop.f32.mrb[0].mxu0
  %v2517 = vpop.f32.mrb[0].mxu0
  %v2518 = vpop.f32.mrb[0].mxu0
  %2519 = vdwg.mxu0
  %v2520 = vadd.f32 %v2471, %v2515
  %v2521 = vxor.u32 %v2520, 2147483648
  %v2522 = vmul.f32 %v2521, 1.442695
  %v2523 = vpow.pop %v2522
  %v2524 = vadd.f32 %v2523, 1.0
  %v2525 = vrcp.pop %v2524
  %v2526 = vmul.f32 1.0, %v2525
  %2528 = vrot.lane.b32.xlu0 %v2515, 96
  %v2529 = vpop.permute.xlu0 %2528
  %v2531 = vmul.f32 %v2526, %v2529
  %2533 = vrot.lane.b32.xlu0 %v2531, 32
  %v2534 = vpop.permute.xlu0 %2533
  %v2536 = vadd.f32 %v2471, %v2534
  %v2537 = vtanh.pop %v2536
  %v2538 = vsub.f32 1.0, %v2526
  %2540 = vrot.lane.b32.xlu0 %v2537, 112
  %v2541 = vpop.permute.xlu0 %2540
  %v2543 = vmul.f32 %v2538, %v2541
  %v2544 = vmul.f32 %v2526, %v2382
  %v2545 = vadd.f32 %v2543, %v2544
  %v2546 = vpack.c.bf16 %v2458, %v2458
  %2548 = vrot.lane.b32.xlu0 %v2546, 64
  %v2549 = vpop.permute.xlu0 %2548
  %v2551 = vsel %vm338, %v2549, 0
  %2553 = vmatprep.subr.bf16.mxu0 0
  %2554 = vmatpush1.bf16.msra.mxu0 %v418
  %2555 = vmatprep.subr.bf16.mxu0 0
  %2556 = vmatpush1.bf16.msra.mxu0 0
  %2557 = vmatprep.subr.bf16.mxu0 0
  %2558 = vmatpush1.bf16.msra.mxu0 0
  %2559 = vmatprep.subr.bf16.mxu0 0
  %2560 = vmatpush1.bf16.msra.mxu0 0
  %2561 = vmatprep.subr.bf16.mxu0 0
  %2562 = vmatpush1.bf16.msra.mxu0 0
  %2563 = vmatprep.subr.bf16.mxu0 0
  %2564 = vmatpush1.bf16.msra.mxu0 0
  %2565 = vmatprep.subr.bf16.mxu0 0
  %2566 = vmatpush1.bf16.msra.mxu0 0
  %2567 = vmatprep.subr.bf16.mxu0 0
  %2568 = vmatpush1.bf16.msra.mxu0 0
  %2569 = vmatprep.subr.bf16.mxu0 0
  %2570 = vmatpush1.bf16.msra.mxu0 0
  %2571 = vmatprep.subr.bf16.mxu0 0
  %2572 = vmatpush1.bf16.msra.mxu0 0
  %2573 = vmatprep.subr.bf16.mxu0 0
  %2574 = vmatpush1.bf16.msra.mxu0 0
  %2575 = vmatprep.subr.bf16.mxu0 0
  %2576 = vmatpush1.bf16.msra.mxu0 0
  %2577 = vmatprep.subr.bf16.mxu0 0
  %2578 = vmatpush1.bf16.msra.mxu0 0
  %2579 = vmatprep.subr.bf16.mxu0 0
  %2580 = vmatpush1.bf16.msra.mxu0 0
  %2581 = vmatprep.subr.bf16.mxu0 0
  %2582 = vmatpush1.bf16.msra.mxu0 0
  %2583 = vmatprep.subr.bf16.mxu0 0
  %2584 = vmatpush1.bf16.msra.mxu0 0
  %2585 = vmatprep.mubr.bf16.mxu0 0
  %2586 = vmatmul.mubr.bf16.gmra.mrb[0].mxu0 %v2551
  %v2587 = vpop.f32.mrb[0].mxu0
  %v2588 = vadd.f32 %v412, %v2587
  %v2589 = vpop.f32.mrb[0].mxu0
  %v2590 = vpop.f32.mrb[0].mxu0
  %v2591 = vpop.f32.mrb[0].mxu0
  %2592 = vdwg.mxu0
  %2594 = vrot.lane.b32.xlu0 %v2588, 48
  %v2595 = vpop.permute.xlu0 %2594
  %v2597 = vadd.f32 %v2472, %v2595
  %v2598 = vxor.u32 %v2597, 2147483648
  %v2599 = vmul.f32 %v2598, 1.442695
  %v2600 = vpow.pop %v2599
  %v2601 = vadd.f32 %v2600, 1.0
  %v2602 = vrcp.pop %v2601
  %v2603 = vmul.f32 1.0, %v2602
  %2604 = vrot.lane.b32.xlu0 %v2588, 16
  %v2605 = vpop.permute.xlu0 %2604
  %v2607 = vmul.f32 %v2603, %v2605
  %2609 = vrot.lane.b32.xlu0 %v2607, 32
  %v2610 = vpop.permute.xlu0 %2609
  %v2612 = vadd.f32 %v2472, %v2610
  %v2613 = vtanh.pop %v2612
  %v2614 = vsub.f32 1.0, %v2603
  %2616 = vrot.lane.b32.xlu0 %v2613, 112
  %v2617 = vpop.permute.xlu0 %2616
  %v2619 = vmul.f32 %v2614, %v2617
  %v2620 = vmul.f32 %v2603, %v2458
  %v2621 = vadd.f32 %v2619, %v2620
  %2623 = vrot.lane.b32.xlu0 %v2545, 112
  %v2624 = vpop.permute.xlu0 %2623
  %s2626 = scalar_lea.vmem [#allocation3], 26
  %2627 = vst.msk [vmem:[%s2626] sm:$0x3] %vm493, %v2624
  %2629 = vrot.lane.b32.xlu0 %v2621, 64
  %v2630 = vpop.permute.xlu0 %2629
  %s2632 = scalar_lea.vmem [#allocation4], 4
  %2633 = vst.msk [vmem:[%s2632] sm:$0x3] %vm493, %v2630
  %v2634 = vld [vmem:[%s503] sm:$0x3]
  %v2635 = vld [vmem:[%s501] sm:$0x3]
  %v2636 = vpack.c.bf16 %v2545, %v2545
  %2638 = vrot.lane.b32.xlu0 %v2636, 112
  %v2639 = vpop.permute.xlu0 %2638
  %v2641 = vsel %vm338, %v2639, 0
  %2643 = vmatprep.subr.bf16.mxu0 0
  %2644 = vmatpush1.bf16.msra.mxu0 %v336
  %2645 = vmatprep.subr.bf16.mxu0 0
  %2646 = vmatpush1.bf16.msra.mxu0 0
  %2647 = vmatprep.subr.bf16.mxu0 0
  %2648 = vmatpush1.bf16.msra.mxu0 0
  %2649 = vmatprep.subr.bf16.mxu0 0
  %2650 = vmatpush1.bf16.msra.mxu0 0
  %2651 = vmatprep.subr.bf16.mxu0 0
  %2652 = vmatpush1.bf16.msra.mxu0 0
  %2653 = vmatprep.subr.bf16.mxu0 0
  %2654 = vmatpush1.bf16.msra.mxu0 0
  %2655 = vmatprep.subr.bf16.mxu0 0
  %2656 = vmatpush1.bf16.msra.mxu0 0
  %2657 = vmatprep.subr.bf16.mxu0 0
  %2658 = vmatpush1.bf16.msra.mxu0 0
  %2659 = vmatprep.subr.bf16.mxu0 0
  %2660 = vmatpush1.bf16.msra.mxu0 0
  %2661 = vmatprep.subr.bf16.mxu0 0
  %2662 = vmatpush1.bf16.msra.mxu0 0
  %2663 = vmatprep.subr.bf16.mxu0 0
  %2664 = vmatpush1.bf16.msra.mxu0 0
  %2665 = vmatprep.subr.bf16.mxu0 0
  %2666 = vmatpush1.bf16.msra.mxu0 0
  %2667 = vmatprep.subr.bf16.mxu0 0
  %2668 = vmatpush1.bf16.msra.mxu0 0
  %2669 = vmatprep.subr.bf16.mxu0 0
  %2670 = vmatpush1.bf16.msra.mxu0 0
  %2671 = vmatprep.subr.bf16.mxu0 0
  %2672 = vmatpush1.bf16.msra.mxu0 0
  %2673 = vmatprep.subr.bf16.mxu0 0
  %2674 = vmatpush1.bf16.msra.mxu0 0
  %2675 = vmatprep.mubr.bf16.mxu0 0
  %2676 = vmatmul.mubr.bf16.gmra.mrb[0].mxu0 %v2641
  %v2677 = vpop.f32.mrb[0].mxu0
  %v2678 = vadd.f32 %v330, %v2677
  %v2679 = vpop.f32.mrb[0].mxu0
  %v2680 = vpop.f32.mrb[0].mxu0
  %v2681 = vpop.f32.mrb[0].mxu0
  %2682 = vdwg.mxu0
  %v2683 = vadd.f32 %v2634, %v2678
  %v2684 = vxor.u32 %v2683, 2147483648
  %v2685 = vmul.f32 %v2684, 1.442695
  %v2686 = vpow.pop %v2685
  %v2687 = vadd.f32 %v2686, 1.0
  %v2688 = vrcp.pop %v2687
  %v2689 = vmul.f32 1.0, %v2688
  %2691 = vrot.lane.b32.xlu0 %v2678, 96
  %v2692 = vpop.permute.xlu0 %2691
  %v2694 = vmul.f32 %v2689, %v2692
  %2696 = vrot.lane.b32.xlu0 %v2694, 32
  %v2697 = vpop.permute.xlu0 %2696
  %v2699 = vadd.f32 %v2634, %v2697
  %v2700 = vtanh.pop %v2699
  %v2701 = vsub.f32 1.0, %v2689
  %2703 = vrot.lane.b32.xlu0 %v2700, 112
  %v2704 = vpop.permute.xlu0 %2703
  %v2706 = vmul.f32 %v2701, %v2704
  %v2707 = vmul.f32 %v2689, %v2545
  %v2708 = vadd.f32 %v2706, %v2707
  %v2709 = vpack.c.bf16 %v2621, %v2621
  %2711 = vrot.lane.b32.xlu0 %v2709, 64
  %v2712 = vpop.permute.xlu0 %2711
  %v2714 = vsel %vm338, %v2712, 0
  %2716 = vmatprep.subr.bf16.mxu0 0
  %2717 = vmatpush1.bf16.msra.mxu0 %v418
  %2718 = vmatprep.subr.bf16.mxu0 0
  %2719 = vmatpush1.bf16.msra.mxu0 0
  %2720 = vmatprep.subr.bf16.mxu0 0
  %2721 = vmatpush1.bf16.msra.mxu0 0
  %2722 = vmatprep.subr.bf16.mxu0 0
  %2723 = vmatpush1.bf16.msra.mxu0 0
  %2724 = vmatprep.subr.bf16.mxu0 0
  %2725 = vmatpush1.bf16.msra.mxu0 0
  %2726 = vmatprep.subr.bf16.mxu0 0
  %2727 = vmatpush1.bf16.msra.mxu0 0
  %2728 = vmatprep.subr.bf16.mxu0 0
  %2729 = vmatpush1.bf16.msra.mxu0 0
  %2730 = vmatprep.subr.bf16.mxu0 0
  %2731 = vmatpush1.bf16.msra.mxu0 0
  %2732 = vmatprep.subr.bf16.mxu0 0
  %2733 = vmatpush1.bf16.msra.mxu0 0
  %2734 = vmatprep.subr.bf16.mxu0 0
  %2735 = vmatpush1.bf16.msra.mxu0 0
  %2736 = vmatprep.subr.bf16.mxu0 0
  %2737 = vmatpush1.bf16.msra.mxu0 0
  %2738 = vmatprep.subr.bf16.mxu0 0
  %2739 = vmatpush1.bf16.msra.mxu0 0
  %2740 = vmatprep.subr.bf16.mxu0 0
  %2741 = vmatpush1.bf16.msra.mxu0 0
  %2742 = vmatprep.subr.bf16.mxu0 0
  %2743 = vmatpush1.bf16.msra.mxu0 0
  %2744 = vmatprep.subr.bf16.mxu0 0
  %2745 = vmatpush1.bf16.msra.mxu0 0
  %2746 = vmatprep.subr.bf16.mxu0 0
  %2747 = vmatpush1.bf16.msra.mxu0 0
  %2748 = vmatprep.mubr.bf16.mxu0 0
  %2749 = vmatmul.mubr.bf16.gmra.mrb[0].mxu0 %v2714
  %v2750 = vpop.f32.mrb[0].mxu0
  %v2751 = vadd.f32 %v412, %v2750
  %v2752 = vpop.f32.mrb[0].mxu0
  %v2753 = vpop.f32.mrb[0].mxu0
  %v2754 = vpop.f32.mrb[0].mxu0
  %2755 = vdwg.mxu0
  %2757 = vrot.lane.b32.xlu0 %v2751, 48
  %v2758 = vpop.permute.xlu0 %2757
  %v2760 = vadd.f32 %v2635, %v2758
  %v2761 = vxor.u32 %v2760, 2147483648
  %v2762 = vmul.f32 %v2761, 1.442695
  %v2763 = vpow.pop %v2762
  %v2764 = vadd.f32 %v2763, 1.0
  %v2765 = vrcp.pop %v2764
  %v2766 = vmul.f32 1.0, %v2765
  %2767 = vrot.lane.b32.xlu0 %v2751, 16
  %v2768 = vpop.permute.xlu0 %2767
  %v2770 = vmul.f32 %v2766, %v2768
  %2772 = vrot.lane.b32.xlu0 %v2770, 32
  %v2773 = vpop.permute.xlu0 %2772
  %v2775 = vadd.f32 %v2635, %v2773
  %v2776 = vtanh.pop %v2775
  %v2777 = vsub.f32 1.0, %v2766
  %2779 = vrot.lane.b32.xlu0 %v2776, 112
  %v2780 = vpop.permute.xlu0 %2779
  %v2782 = vmul.f32 %v2777, %v2780
  %v2783 = vmul.f32 %v2766, %v2621
  %v2784 = vadd.f32 %v2782, %v2783
  %2786 = vrot.lane.b32.xlu0 %v2708, 112
  %v2787 = vpop.permute.xlu0 %2786
  %s2789 = scalar_lea.vmem [#allocation3], 28
  %2790 = vst.msk [vmem:[%s2789] sm:$0x3] %vm493, %v2787
  %2792 = vrot.lane.b32.xlu0 %v2784, 64
  %v2793 = vpop.permute.xlu0 %2792
  %s2795 = scalar_lea.vmem [#allocation4], 2
  %2796 = vst.msk [vmem:[%s2795] sm:$0x3] %vm493, %v2793
  %v2797 = vld [vmem:[%s324] sm:$0x3]
  %v2798 = vld [vmem:[#allocation2] sm:$0x3]
  %v2799 = vpack.c.bf16 %v2708, %v2708
  %2801 = vrot.lane.b32.xlu0 %v2799, 112
  %v2802 = vpop.permute.xlu0 %2801
  %v2804 = vsel %vm338, %v2802, 0
  %2806 = vmatprep.subr.bf16.mxu0 0
  %2807 = vmatpush1.bf16.msra.mxu0 %v336
  %2808 = vmatprep.subr.bf16.mxu0 0
  %2809 = vmatpush1.bf16.msra.mxu0 0
  %2810 = vmatprep.subr.bf16.mxu0 0
  %2811 = vmatpush1.bf16.msra.mxu0 0
  %2812 = vmatprep.subr.bf16.mxu0 0
  %2813 = vmatpush1.bf16.msra.mxu0 0
  %2814 = vmatprep.subr.bf16.mxu0 0
  %2815 = vmatpush1.bf16.msra.mxu0 0
  %2816 = vmatprep.subr.bf16.mxu0 0
  %2817 = vmatpush1.bf16.msra.mxu0 0
  %2818 = vmatprep.subr.bf16.mxu0 0
  %2819 = vmatpush1.bf16.msra.mxu0 0
  %2820 = vmatprep.subr.bf16.mxu0 0
  %2821 = vmatpush1.bf16.msra.mxu0 0
  %2822 = vmatprep.subr.bf16.mxu0 0
  %2823 = vmatpush1.bf16.msra.mxu0 0
  %2824 = vmatprep.subr.bf16.mxu0 0
  %2825 = vmatpush1.bf16.msra.mxu0 0
  %2826 = vmatprep.subr.bf16.mxu0 0
  %2827 = vmatpush1.bf16.msra.mxu0 0
  %2828 = vmatprep.subr.bf16.mxu0 0
  %2829 = vmatpush1.bf16.msra.mxu0 0
  %2830 = vmatprep.subr.bf16.mxu0 0
  %2831 = vmatpush1.bf16.msra.mxu0 0
  %2832 = vmatprep.subr.bf16.mxu0 0
  %2833 = vmatpush1.bf16.msra.mxu0 0
  %2834 = vmatprep.subr.bf16.mxu0 0
  %2835 = vmatpush1.bf16.msra.mxu0 0
  %2836 = vmatprep.subr.bf16.mxu0 0
  %2837 = vmatpush1.bf16.msra.mxu0 0
  %2838 = vmatprep.mubr.bf16.mxu0 0
  %2839 = vmatmul.mubr.bf16.gmra.mrb[0].mxu0 %v2804
  %v2840 = vpop.f32.mrb[0].mxu0
  %v2841 = vadd.f32 %v330, %v2840
  %v2842 = vpop.f32.mrb[0].mxu0
  %v2843 = vpop.f32.mrb[0].mxu0
  %v2844 = vpop.f32.mrb[0].mxu0
  %2845 = vdwg.mxu0
  %v2846 = vadd.f32 %v2797, %v2841
  %v2847 = vxor.u32 %v2846, 2147483648
  %v2848 = vmul.f32 %v2847, 1.442695
  %v2849 = vpow.pop %v2848
  %v2850 = vadd.f32 %v2849, 1.0
  %v2851 = vrcp.pop %v2850
  %v2852 = vmul.f32 1.0, %v2851
  %2854 = vrot.lane.b32.xlu0 %v2841, 96
  %v2855 = vpop.permute.xlu0 %2854
  %v2857 = vmul.f32 %v2852, %v2855
  %2859 = vrot.lane.b32.xlu0 %v2857, 32
  %v2860 = vpop.permute.xlu0 %2859
  %v2862 = vadd.f32 %v2797, %v2860
  %v2863 = vtanh.pop %v2862
  %v2864 = vsub.f32 1.0, %v2852
  %2866 = vrot.lane.b32.xlu0 %v2863, 112
  %v2867 = vpop.permute.xlu0 %2866
  %v2869 = vmul.f32 %v2864, %v2867
  %v2870 = vmul.f32 %v2852, %v2708
  %v2871 = vadd.f32 %v2869, %v2870
  %v2872 = vpack.c.bf16 %v2784, %v2784
  %2874 = vrot.lane.b32.xlu0 %v2872, 64
  %v2875 = vpop.permute.xlu0 %2874
  %v2877 = vsel %vm338, %v2875, 0
  %2879 = vmatprep.subr.bf16.mxu0 0
  %2880 = vmatpush1.bf16.msra.mxu0 %v418
  %2881 = vmatprep.subr.bf16.mxu0 0
  %2882 = vmatpush1.bf16.msra.mxu0 0
  %2883 = vmatprep.subr.bf16.mxu0 0
  %2884 = vmatpush1.bf16.msra.mxu0 0
  %2885 = vmatprep.subr.bf16.mxu0 0
  %2886 = vmatpush1.bf16.msra.mxu0 0
  %2887 = vmatprep.subr.bf16.mxu0 0
  %2888 = vmatpush1.bf16.msra.mxu0 0
  %2889 = vmatprep.subr.bf16.mxu0 0
  %2890 = vmatpush1.bf16.msra.mxu0 0
  %2891 = vmatprep.subr.bf16.mxu0 0
  %2892 = vmatpush1.bf16.msra.mxu0 0
  %2893 = vmatprep.subr.bf16.mxu0 0
  %2894 = vmatpush1.bf16.msra.mxu0 0
  %2895 = vmatprep.subr.bf16.mxu0 0
  %2896 = vmatpush1.bf16.msra.mxu0 0
  %2897 = vmatprep.subr.bf16.mxu0 0
  %2898 = vmatpush1.bf16.msra.mxu0 0
  %2899 = vmatprep.subr.bf16.mxu0 0
  %2900 = vmatpush1.bf16.msra.mxu0 0
  %2901 = vmatprep.subr.bf16.mxu0 0
  %2902 = vmatpush1.bf16.msra.mxu0 0
  %2903 = vmatprep.subr.bf16.mxu0 0
  %2904 = vmatpush1.bf16.msra.mxu0 0
  %2905 = vmatprep.subr.bf16.mxu0 0
  %2906 = vmatpush1.bf16.msra.mxu0 0
  %2907 = vmatprep.subr.bf16.mxu0 0
  %2908 = vmatpush1.bf16.msra.mxu0 0
  %2909 = vmatprep.subr.bf16.mxu0 0
  %2910 = vmatpush1.bf16.msra.mxu0 0
  %2911 = vmatprep.mubr.bf16.mxu0 0
  %2912 = vmatmul.mubr.bf16.gmra.mrb[0].mxu0 %v2877
  %v2913 = vpop.f32.mrb[0].mxu0
  %v2914 = vadd.f32 %v412, %v2913
  %v2915 = vpop.f32.mrb[0].mxu0
  %v2916 = vpop.f32.mrb[0].mxu0
  %v2917 = vpop.f32.mrb[0].mxu0
  %2918 = vdwg.mxu0
  %2920 = vrot.lane.b32.xlu0 %v2914, 48
  %v2921 = vpop.permute.xlu0 %2920
  %v2923 = vadd.f32 %v2798, %v2921
  %v2924 = vxor.u32 %v2923, 2147483648
  %v2925 = vmul.f32 %v2924, 1.442695
  %v2926 = vpow.pop %v2925
  %v2927 = vadd.f32 %v2926, 1.0
  %v2928 = vrcp.pop %v2927
  %v2929 = vmul.f32 1.0, %v2928
  %2930 = vrot.lane.b32.xlu0 %v2914, 16
  %v2931 = vpop.permute.xlu0 %2930
  %v2933 = vmul.f32 %v2929, %v2931
  %2935 = vrot.lane.b32.xlu0 %v2933, 32
  %v2936 = vpop.permute.xlu0 %2935
  %v2938 = vadd.f32 %v2798, %v2936
  %v2939 = vtanh.pop %v2938
  %v2940 = vsub.f32 1.0, %v2929
  %2942 = vrot.lane.b32.xlu0 %v2939, 112
  %v2943 = vpop.permute.xlu0 %2942
  %v2945 = vmul.f32 %v2940, %v2943
  %v2946 = vmul.f32 %v2929, %v2784
  %v2947 = vadd.f32 %v2945, %v2946
  %2949 = vrot.lane.b32.xlu0 %v2871, 112
  %v2950 = vpop.permute.xlu0 %2949
  %s2952 = scalar_lea.vmem [#allocation3], 30
  %2953 = vst.msk [vmem:[%s2952] sm:$0x3] %vm493, %v2950
  %2955 = vrot.lane.b32.xlu0 %v2947, 64
  %v2956 = vpop.permute.xlu0 %2955
  %2958 = vst.msk [vmem:[#allocation4] sm:$0x3] %vm493, %v2956
  %v2959 = vld [vmem:[#allocation3] sm:$0x3]
  %v2960 = vld [vmem:[#allocation3 + $0x2] sm:$0x3]
  %v2961 = vld [vmem:[#allocation3 + $0x4] sm:$0x3]
  %v2962 = vld [vmem:[#allocation3 + $0x6] sm:$0x3]
  %v2963 = vld [vmem:[#allocation3 + $0x8] sm:$0x3]
  %v2964 = vld [vmem:[#allocation3 + $0xa] sm:$0x3]
  %v2965 = vld [vmem:[#allocation3 + $0xc] sm:$0x3]
  %v2966 = vld [vmem:[#allocation3 + $0xe] sm:$0x3]
  %v2967 = vld [vmem:[#allocation3 + $0x10] sm:$0x3]
  %v2968 = vld [vmem:[#allocation3 + $0x12] sm:$0x3]
  %v2969 = vld [vmem:[#allocation3 + $0x14] sm:$0x3]
  %v2970 = vld [vmem:[#allocation3 + $0x16] sm:$0x3]
  %v2971 = vld [vmem:[#allocation3 + $0x18] sm:$0x3]
  %v2972 = vld [vmem:[#allocation3 + $0x1a] sm:$0x3]
  %v2973 = vld [vmem:[#allocation3 + $0x1c] sm:$0x3]
  %v2974 = vld [vmem:[#allocation3 + $0x1e] sm:$0x3]
  %v2975 = vld [vmem:[#allocation4] sm:$0x3]
  %v2976 = vld [vmem:[#allocation4 + $0x2] sm:$0x3]
  %v2977 = vld [vmem:[#allocation4 + $0x4] sm:$0x3]
  %v2978 = vld [vmem:[#allocation4 + $0x6] sm:$0x3]
  %v2979 = vld [vmem:[#allocation4 + $0x8] sm:$0x3]
  %v2980 = vld [vmem:[#allocation4 + $0xa] sm:$0x3]
  %v2981 = vld [vmem:[#allocation4 + $0xc] sm:$0x3]
  %v2982 = vld [vmem:[#allocation4 + $0xe] sm:$0x3]
  %v2983 = vld [vmem:[#allocation4 + $0x10] sm:$0x3]
  %v2984 = vld [vmem:[#allocation4 + $0x12] sm:$0x3]
  %v2985 = vld [vmem:[#allocation4 + $0x14] sm:$0x3]
  %v2986 = vld [vmem:[#allocation4 + $0x16] sm:$0x3]
  %v2987 = vld [vmem:[#allocation4 + $0x18] sm:$0x3]
  %v2988 = vld [vmem:[#allocation4 + $0x1a] sm:$0x3]
  %v2989 = vld [vmem:[#allocation4 + $0x1c] sm:$0x3]
  %v2990 = vld [vmem:[#allocation4 + $0x1e] sm:$0x3]
  %3007 = vrot.lane.b32.xlu0 %v2975, 16
  %v3008 = vpop.permute.xlu0 %3007
  %3009 = vrot.lane.b32.xlu0 %v2976, 16
  %v3010 = vpop.permute.xlu0 %3009
  %3011 = vrot.lane.b32.xlu0 %v2977, 16
  %v3012 = vpop.permute.xlu0 %3011
  %3013 = vrot.lane.b32.xlu0 %v2978, 16
  %v3014 = vpop.permute.xlu0 %3013
  %3015 = vrot.lane.b32.xlu0 %v2979, 16
  %v3016 = vpop.permute.xlu0 %3015
  %3017 = vrot.lane.b32.xlu0 %v2980, 16
  %v3018 = vpop.permute.xlu0 %3017
  %3019 = vrot.lane.b32.xlu0 %v2981, 16
  %v3020 = vpop.permute.xlu0 %3019
  %3021 = vrot.lane.b32.xlu0 %v2982, 16
  %v3022 = vpop.permute.xlu0 %3021
  %3023 = vrot.lane.b32.xlu0 %v2983, 16
  %v3024 = vpop.permute.xlu0 %3023
  %3025 = vrot.lane.b32.xlu0 %v2984, 16
  %v3026 = vpop.permute.xlu0 %3025
  %3027 = vrot.lane.b32.xlu0 %v2985, 16
  %v3028 = vpop.permute.xlu0 %3027
  %3029 = vrot.lane.b32.xlu0 %v2986, 16
  %v3030 = vpop.permute.xlu0 %3029
  %3031 = vrot.lane.b32.xlu0 %v2987, 16
  %v3032 = vpop.permute.xlu0 %3031
  %3033 = vrot.lane.b32.xlu0 %v2988, 16
  %v3034 = vpop.permute.xlu0 %3033
  %3035 = vrot.lane.b32.xlu0 %v2989, 16
  %v3036 = vpop.permute.xlu0 %3035
  %3037 = vrot.lane.b32.xlu0 %v2990, 16
  %v3038 = vpop.permute.xlu0 %3037
  %v3055 = vsel %vm338, %v2959, %v3008
  %v3056 = vsel %vm338, %v2960, %v3010
  %v3057 = vsel %vm338, %v2961, %v3012
  %v3058 = vsel %vm338, %v2962, %v3014
  %v3059 = vsel %vm338, %v2963, %v3016
  %v3060 = vsel %vm338, %v2964, %v3018
  %v3061 = vsel %vm338, %v2965, %v3020
  %v3062 = vsel %vm338, %v2966, %v3022
  %v3063 = vsel %vm338, %v2967, %v3024
  %v3064 = vsel %vm338, %v2968, %v3026
  %v3065 = vsel %vm338, %v2969, %v3028
  %v3066 = vsel %vm338, %v2970, %v3030
  %v3067 = vsel %vm338, %v2971, %v3032
  %v3068 = vsel %vm338, %v2972, %v3034
  %v3069 = vsel %vm338, %v2973, %v3036
  %v3070 = vsel %vm338, %v2974, %v3038
  %vm3071 = vcmask 254976
  %3072 = vst.msk [vmem:[%s7] sm:$0x3] %vm3071, %v3055
  %3073 = vst.msk [vmem:[%s7 + $0x2] sm:$0x3] %vm3071, %v3056
  %3074 = vst.msk [vmem:[%s7 + $0x4] sm:$0x3] %vm3071, %v3057
  %3075 = vst.msk [vmem:[%s7 + $0x6] sm:$0x3] %vm3071, %v3058
  %3076 = vst.msk [vmem:[%s7 + $0x8] sm:$0x3] %vm3071, %v3059
  %3077 = vst.msk [vmem:[%s7 + $0xa] sm:$0x3] %vm3071, %v3060
  %3078 = vst.msk [vmem:[%s7 + $0xc] sm:$0x3] %vm3071, %v3061
  %3079 = vst.msk [vmem:[%s7 + $0xe] sm:$0x3] %vm3071, %v3062
  %3080 = vst.msk [vmem:[%s7 + $0x10] sm:$0x3] %vm3071, %v3063
  %3081 = vst.msk [vmem:[%s7 + $0x12] sm:$0x3] %vm3071, %v3064
  %3082 = vst.msk [vmem:[%s7 + $0x14] sm:$0x3] %vm3071, %v3065
  %3083 = vst.msk [vmem:[%s7 + $0x16] sm:$0x3] %vm3071, %v3066
  %3084 = vst.msk [vmem:[%s7 + $0x18] sm:$0x3] %vm3071, %v3067
  %3085 = vst.msk [vmem:[%s7 + $0x1a] sm:$0x3] %vm3071, %v3068
  %3086 = vst.msk [vmem:[%s7 + $0x1c] sm:$0x3] %vm3071, %v3069
  %3087 = vst.msk [vmem:[%s7 + $0x1e] sm:$0x3] %vm3071, %v3070
  // Predicated region
  $region30: #{encoder_forward.9} parent=0 // pred_check
    _
  $region31: #{encoder_forward.9} parent=0 // pred_check_branch
    %3089 = sbr.rel (0) target = $region33
  $region32: #{encoder_forward.9} parent=0 // pred_region
    _
  $region33: #{encoder_forward.9} parent=0 // pred_fallthru
    _
  // Predicated region
  $region34: #{encoder_forward.9} parent=0 // pred_check
    _
  $region35: #{encoder_forward.9} parent=0 // pred_check_branch
    %3091 = sbr.rel (0) target = $region37
  $region36: #{encoder_forward.9} parent=0 // pred_region
    _
  $region37: #{encoder_forward.9} parent=0 // pred_fallthru
    _

</llo_original>
